<compile_context>
chip_gen: v6e
topology: v6e:2x2x1
jax: 0.10.0
libtpu: 0.0.40
codegen_flags: <defaults>
</compile_context>

<pallas_src>
import jax
import jax.numpy as jnp
from jax.experimental import pallas as pl
from jax.experimental.pallas import tpu as pltpu


# ----------------------------- fused kernel ---------------------------------

def _make_inception_kernel(W, M_img, Mb, kinds, branch_sizes, pool_branch):
    """Builds the fused kernel body.

    Each grid step processes `Mb` raster-order rows (= Mb // (H*W) whole
    images flattened into the matmul M dimension), channels-last.

    Ref order per grid step:
      x_ref   : (Mb, Cin) bf16
      for each conv layer i (branch order): w_ref_i (K*Cin_i, Cout_i) bf16,
                                            aff_ref_i (3, Cout_i) f32
                                            rows = [conv bias, bn scale, bn shift]
      out_ref : (Mb, 512) f32
    """

    def kernel(x_ref, *rest):
        *param_refs, out_ref = rest

        # (Mb, 1) boundary masks, built once; lane-broadcast inside jnp.where.
        r = jax.lax.broadcasted_iota(jnp.int32, (Mb, 1), 0)
        r_img = r % M_img                     # row index within its own image
        w_pos = r % W                         # column index within its row
        h_prev_ok = r_img >= W                # row h-1 exists (same image)
        h_next_ok = r_img < M_img - W         # row h+1 exists (same image)
        w_prev_ok = w_pos >= 1                # col w-1 exists
        w_next_ok = w_pos < W - 1             # col w+1 exists

        def mxu(a_bf16, w_bf16):
            return jnp.dot(a_bf16, w_bf16, preferred_element_type=jnp.float32)

        def relu_bn(acc, aff_ref, out_dtype):
            y = jnp.maximum(acc + aff_ref[0:1, :], 0.0)      # conv bias + ReLU
            y = y * aff_ref[1:2, :] + aff_ref[2:3, :]        # BatchNorm (eval)
            return y.astype(out_dtype)

        def conv_layer(i, a, out_dtype):
            w_ref = param_refs[2 * i]
            aff_ref = param_refs[2 * i + 1]
            kind = kinds[i]
            if kind == "1x1":
                return relu_bn(mxu(a, w_ref[...]), aff_ref, out_dtype)
            # 3-tap conv: a row-shift commutes with the matmul along the row
            # axis, so feed the SAME bf16 activation to three MXU calls and
            # shift the prev/next f32 partial outputs on the XLU.  Boundary
            # rows (image edges / cross-image wrap) are masked to zero.
            c = a.shape[1]
            shift = 1 if kind == "1x3" else W
            prev_ok = w_prev_ok if kind == "1x3" else h_prev_ok
            next_ok = w_next_ok if kind == "1x3" else h_next_ok
            y_prev = mxu(a, w_ref[0:c, :])             # tap k=0  (h-1 / w-1)
            acc = mxu(a, w_ref[c:2 * c, :])            # tap k=1  (center)
            y_next = mxu(a, w_ref[2 * c:3 * c, :])     # tap k=2  (h+1 / w+1)
            acc = acc + jnp.where(
                prev_ok, pltpu.roll(y_prev, shift=shift, axis=0), 0.0)
            acc = acc + jnp.where(
                next_ok, pltpu.roll(y_next, shift=Mb - shift, axis=0), 0.0)
            # TODO(synk): at large M, stack the 3 taps along K into one
            # (M, 3c)x(3c, Cout) dot to fill the 256-deep MXU on v6e/v7x.
            return relu_bn(acc, aff_ref, out_dtype)

        def maxpool3x3(a_bf16):
            # Separable 3x3/stride-1 max pool: 3-tap max along W then along H,
            # -inf at borders.  Rolls are done on a 32-bit copy (values stay
            # exact bf16 values, so the later bf16 cast is lossless).
            neg = float("-inf")
            a = a_bf16.astype(jnp.float32)
            pw = jnp.maximum(a, jnp.maximum(
                jnp.where(w_prev_ok, pltpu.roll(a, shift=1, axis=0), neg),
                jnp.where(w_next_ok, pltpu.roll(a, shift=Mb - 1, axis=0), neg)))
            ph = jnp.maximum(pw, jnp.maximum(
                jnp.where(h_prev_ok, pltpu.roll(pw, shift=W, axis=0), neg),
                jnp.where(h_next_ok, pltpu.roll(pw, shift=Mb - W, axis=0), neg)))
            return ph.astype(jnp.bfloat16)

        x = x_ref[...]                                       # (Mb, Cin) bf16

        off = 0
        li = 0
        for bi, n_layers in enumerate(branch_sizes):
            a = maxpool3x3(x) if bi == pool_branch else x
            for j in range(n_layers):
                last = j == n_layers - 1
                a = conv_layer(li, a, jnp.float32 if last else jnp.bfloat16)
                li += 1
            c = a.shape[1]
            out_ref[:, off:off + c] = a                      # channel-offset store
            off += c

    return kernel


# ----------------------------- forward wrapper --------------------------------

def make_inception_forward(kinds, branch_sizes, pool_branch=3):
    """Returns a jitted forward(x_nchw, weights, affs) for pre-packed params."""

    @jax.jit
    def forward(x_nchw, weights, affs):
        n, cin, h, w = x_nchw.shape
        m = h * w
        couts = [int(a.shape[1]) for a in affs]

        # Total output channels = last layer of every branch (torch.cat order).
        c_total = 0
        li = 0
        for n_layers in branch_sizes:
            li += n_layers
            c_total += couts[li - 1]

        # Collapse whole images into the matmul M dimension so each MXU call
        # sees >= ~256 rows (or as many rows as the batch allows); per-image
        # boundary masks inside the kernel keep taps from leaking across
        # images.  TODO(synk): for large H*W, switch to a spatial-tile grid
        # axis with a 1-row halo and set vmem_limit_bytes per generation
        # (v7x has only 64 MiB physical VMEM).
        nb = min(n, max(1, -(-256 // m)))
        while n % nb:
            nb -= 1
        if (nb * m) % 8 and nb != n:
            nb = n                            # keep block rows sublane-aligned
        mb = nb * m

        x = jnp.transpose(x_nchw, (0, 2, 3, 1)).reshape(n * m, cin)
        x = x.astype(jnp.bfloat16)
        # TODO(synk): if downstream tolerates NHWC / bf16, drop the
        # NCHW<->NHWC transposes and the f32 output to save two full HBM
        # layout passes and halve output writeback.

        in_specs = [pl.BlockSpec((mb, cin), lambda i: (i, 0))]
        flat_params = []
        for wm, aff in zip(weights, affs):
            in_specs.append(pl.BlockSpec(wm.shape, lambda i: (0, 0)))
            in_specs.append(pl.BlockSpec(aff.shape, lambda i: (0, 0)))
            flat_params += [wm, aff]

        kernel = _make_inception_kernel(w, m, mb, kinds, branch_sizes,
                                        pool_branch)
        out = pl.pallas_call(
            kernel,
            out_shape=jax.ShapeDtypeStruct((n * m, c_total), jnp.float32),
            grid=(n // nb,),
            in_specs=in_specs,
            out_specs=pl.BlockSpec((mb, c_total), lambda i: (i, 0)),
            compiler_params=pltpu.CompilerParams(
                dimension_semantics=("parallel",)),
        )(x, *flat_params)

        out = out.reshape(n, h, w, c_total)
        return jnp.transpose(out, (0, 3, 1, 2))              # NHWC -> NCHW

    return forward


# ----------------------------- parameter packing ------------------------------

def pack_layer(w, b, scale, shift):
    """OIHW conv weight + folded-BN affine -> (K*Cin, Cout) bf16 + (3, Cout) f32."""
    cout, cin, kh, kw = w.shape
    if kh == 1 and kw == 1:
        kind, taps = "1x1", [w[:, :, 0, 0]]
    elif kw == 1:  # kernel (3,1), padding (1,0): taps k=0,1,2 ~ dh=-1,0,+1
        kind, taps = "3x1", [w[:, :, k, 0] for k in range(kh)]
    else:          # kernel (1,3), padding (0,1): taps k=0,1,2 ~ dw=-1,0,+1
        kind, taps = "1x3", [w[:, :, 0, k] for k in range(kw)]
    wmat = jnp.concatenate([t.T for t in taps], axis=0).astype(jnp.bfloat16)
    aff = jnp.stack([b, scale, shift], axis=0).astype(jnp.float32)
    return wmat, aff, kind


def pack_params(params):
    """Once-per-parameter-set preprocessing, hoisted out of the forward pass."""
    weights, affs, kinds, branch_sizes = [], [], [], []
    for branch in ("b1", "b2", "b3", "b4"):
        branch_sizes.append(len(params[branch]))
        for layer in params[branch]:
            wmat, aff, kind = pack_layer(*layer)
            weights.append(wmat)
            affs.append(aff)
            kinds.append(kind)
    return tuple(weights), tuple(affs), tuple(kinds), tuple(branch_sizes)


# ----------------------------- synthetic parameters ---------------------------

def make_layer_params(key, cin, cout, kh, kw):
    """Deterministic synthetic Conv + BatchNorm(eval) parameters, BN folded."""
    k1, k2, k3, k4, k5, k6 = jax.random.split(key, 6)
    w = jax.random.normal(k1, (cout, cin, kh, kw), jnp.float32) * 0.05
    b = jax.random.normal(k2, (cout,), jnp.float32) * 0.05
    gamma = jax.random.uniform(k3, (cout,), jnp.float32, minval=0.5, maxval=1.5)
    beta = jax.random.normal(k4, (cout,), jnp.float32) * 0.1
    mean = jax.random.normal(k5, (cout,), jnp.float32) * 0.1
    var = jax.random.uniform(k6, (cout,), jnp.float32, minval=0.5, maxval=1.5)
    eps = 1e-5
    scale = gamma / jnp.sqrt(var + eps)
    shift = beta - mean * scale
    return (w, b, scale, shift)


def make_inception_params(key, in_channels=128):
    ks = iter(jax.random.split(key, 16))
    return {
        "b1": [make_layer_params(next(ks), in_channels, 128, 1, 1)],
        "b2": [make_layer_params(next(ks), in_channels, 96, 1, 1),
               make_layer_params(next(ks), 96, 128, 3, 1),
               make_layer_params(next(ks), 128, 128, 1, 3)],
        "b3": [make_layer_params(next(ks), in_channels, 64, 1, 1),
               make_layer_params(next(ks), 64, 96, 3, 1),
               make_layer_params(next(ks), 96, 96, 1, 3),
               make_layer_params(next(ks), 96, 192, 3, 1),
               make_layer_params(next(ks), 192, 192, 1, 3)],
        "b4": [make_layer_params(next(ks), in_channels, 64, 1, 1)],
    }


# ----------------------------- pure-JAX reference -----------------------------
# Matches the kernel's numerics: bf16 MXU operands, f32 accumulation/epilogue.

def _ref_conv_relu_bn(x, w, b, scale, shift):
    cout, cin, kh, kw = w.shape
    y = jax.lax.conv_general_dilated(
        x.astype(jnp.bfloat16),
        jnp.transpose(w, (2, 3, 1, 0)).astype(jnp.bfloat16),
        window_strides=(1, 1),
        padding=((kh // 2, kh // 2), (kw // 2, kw // 2)),
        dimension_numbers=("NHWC", "HWIO", "NHWC"),
        preferred_element_type=jnp.float32)
    y = jnp.maximum(y + b, 0.0)
    return y * scale + shift


def _ref_maxpool(x):
    return jax.lax.reduce_window(
        x, -jnp.inf, jax.lax.max,
        window_dimensions=(1, 3, 3, 1), window_strides=(1, 1, 1, 1),
        padding=((0, 0), (1, 1), (1, 1), (0, 0)))


def inception_block_ref(x_nchw, params):
    x = jnp.transpose(x_nchw, (0, 2, 3, 1))
    x = x.astype(jnp.bfloat16).astype(jnp.float32)   # match kernel's bf16 input
    b1 = _ref_conv_relu_bn(x, *params["b1"][0])
    t = x
    for layer in params["b2"]:
        t = _ref_conv_relu_bn(t, *layer)
    b2 = t
    t = x
    for layer in params["b3"]:
        t = _ref_conv_relu_bn(t, *layer)
    b3 = t
    b4 = _ref_conv_relu_bn(_ref_maxpool(x), *params["b4"][0])
    out = jnp.concatenate([b1, b2, b3, b4], axis=-1)
    return jnp.transpose(out, (0, 3, 1, 2))


# ----------------------------- main -------------------------------------------

if __name__ == "__main__":
    key = jax.random.PRNGKey(0)
    k_x, k_p = jax.random.split(key)

    N, C_IN, H, W = 2, 128, 8, 8          # module default in_channels=128
    x = jax.random.normal(k_x, (N, C_IN, H, W), jnp.float32)
    params = make_inception_params(k_p, in_channels=C_IN)

    # Parameter packing is hoisted out of the forward pass (done once).
    weights, affs, kinds, branch_sizes = pack_params(params)
    forward = make_inception_forward(kinds, branch_sizes, pool_branch=3)

    out = jax.block_until_ready(forward(x, weights, affs))
    assert out.shape == (N, 512, H, W), out.shape

    ref = jax.block_until_ready(inception_block_ref(x, params))
    max_err = float(jnp.max(jnp.abs(out - ref)))
    assert jnp.allclose(out, ref, atol=1e-2, rtol=1e-2), max_err

    print("KERNEL_OK")
</pallas_src>

<mosaic_0001>
module attributes {stable_mosaic.version = 11 : i64} {
  func.func @kernel(%arg0: i32, %arg1: memref<128x128xbf16, #tpu.memory_space<vmem>>, %arg2: memref<128x128xbf16, #tpu.memory_space<vmem>>, %arg3: memref<3x128xf32, #tpu.memory_space<vmem>>, %arg4: memref<128x96xbf16, #tpu.memory_space<vmem>>, %arg5: memref<3x96xf32, #tpu.memory_space<vmem>>, %arg6: memref<288x128xbf16, #tpu.memory_space<vmem>>, %arg7: memref<3x128xf32, #tpu.memory_space<vmem>>, %arg8: memref<384x128xbf16, #tpu.memory_space<vmem>>, %arg9: memref<3x128xf32, #tpu.memory_space<vmem>>, %arg10: memref<128x64xbf16, #tpu.memory_space<vmem>>, %arg11: memref<3x64xf32, #tpu.memory_space<vmem>>, %arg12: memref<192x96xbf16, #tpu.memory_space<vmem>>, %arg13: memref<3x96xf32, #tpu.memory_space<vmem>>, %arg14: memref<288x96xbf16, #tpu.memory_space<vmem>>, %arg15: memref<3x96xf32, #tpu.memory_space<vmem>>, %arg16: memref<288x192xbf16, #tpu.memory_space<vmem>>, %arg17: memref<3x192xf32, #tpu.memory_space<vmem>>, %arg18: memref<576x192xbf16, #tpu.memory_space<vmem>>, %arg19: memref<3x192xf32, #tpu.memory_space<vmem>>, %arg20: memref<128x64xbf16, #tpu.memory_space<vmem>>, %arg21: memref<3x64xf32, #tpu.memory_space<vmem>>, %arg22: memref<128x512xf32, #tpu.memory_space<vmem>>) attributes {dimension_semantics = [#tpu.dimension_semantics<parallel>], iteration_bounds = array<i64: 1>, scalar_prefetch = 0 : i64, scratch_operands = 0 : i64, tpu.core_type = #tpu.core_type<tc>, window_params = [{transform_indices = @transform_0, window_bounds = array<i64: 128, 128>}, {pipeline_mode = #tpu.pipeline_mode<synchronous>, transform_indices = @transform_1, window_bounds = array<i64: 128, 128>}, {pipeline_mode = #tpu.pipeline_mode<synchronous>, transform_indices = @transform_2, window_bounds = array<i64: 3, 128>}, {pipeline_mode = #tpu.pipeline_mode<synchronous>, transform_indices = @transform_3, window_bounds = array<i64: 128, 96>}, {pipeline_mode = #tpu.pipeline_mode<synchronous>, transform_indices = @transform_4, window_bounds = array<i64: 3, 96>}, {pipeline_mode = #tpu.pipeline_mode<synchronous>, transform_indices = @transform_5, window_bounds = array<i64: 288, 128>}, {pipeline_mode = #tpu.pipeline_mode<synchronous>, transform_indices = @transform_6, window_bounds = array<i64: 3, 128>}, {pipeline_mode = #tpu.pipeline_mode<synchronous>, transform_indices = @transform_7, window_bounds = array<i64: 384, 128>}, {pipeline_mode = #tpu.pipeline_mode<synchronous>, transform_indices = @transform_8, window_bounds = array<i64: 3, 128>}, {pipeline_mode = #tpu.pipeline_mode<synchronous>, transform_indices = @transform_9, window_bounds = array<i64: 128, 64>}, {pipeline_mode = #tpu.pipeline_mode<synchronous>, transform_indices = @transform_10, window_bounds = array<i64: 3, 64>}, {pipeline_mode = #tpu.pipeline_mode<synchronous>, transform_indices = @transform_11, window_bounds = array<i64: 192, 96>}, {pipeline_mode = #tpu.pipeline_mode<synchronous>, transform_indices = @transform_12, window_bounds = array<i64: 3, 96>}, {pipeline_mode = #tpu.pipeline_mode<synchronous>, transform_indices = @transform_13, window_bounds = array<i64: 288, 96>}, {pipeline_mode = #tpu.pipeline_mode<synchronous>, transform_indices = @transform_14, window_bounds = array<i64: 3, 96>}, {pipeline_mode = #tpu.pipeline_mode<synchronous>, transform_indices = @transform_15, window_bounds = array<i64: 288, 192>}, {pipeline_mode = #tpu.pipeline_mode<synchronous>, transform_indices = @transform_16, window_bounds = array<i64: 3, 192>}, {pipeline_mode = #tpu.pipeline_mode<synchronous>, transform_indices = @transform_17, window_bounds = array<i64: 576, 192>}, {pipeline_mode = #tpu.pipeline_mode<synchronous>, transform_indices = @transform_18, window_bounds = array<i64: 3, 192>}, {pipeline_mode = #tpu.pipeline_mode<synchronous>, transform_indices = @transform_19, window_bounds = array<i64: 128, 64>}, {pipeline_mode = #tpu.pipeline_mode<synchronous>, transform_indices = @transform_20, window_bounds = array<i64: 3, 64>}, {transform_indices = @transform_21, window_bounds = array<i64: 128, 512>}]} {
    %0 = tpu.iota {dimensions = array<i32: 0>} : vector<128x1xi32>
    %c64_i32 = arith.constant 64 : i32
    %c0_i32 = arith.constant 0 : i32
    %1 = arith.cmpi eq, %c64_i32, %c0_i32 : i32
    %c1_i32 = arith.constant 1 : i32
    %2 = arith.select %1, %c1_i32, %c64_i32 : i32
    %3 = vector.broadcast %2 : i32 to vector<128x1xi32>
    %4 = arith.remsi %0, %3 : vector<128x1xi32>
    %c0_i32_0 = arith.constant 0 : i32
    %5 = vector.broadcast %c0_i32_0 : i32 to vector<128x1xi32>
    %6 = arith.cmpi ne, %4, %5 : vector<128x1xi32>
    %c0_i32_1 = arith.constant 0 : i32
    %7 = vector.broadcast %c0_i32_1 : i32 to vector<128x1xi32>
    %8 = arith.cmpi slt, %4, %7 : vector<128x1xi32>
    %c0_i32_2 = arith.constant 0 : i32
    %9 = arith.cmpi slt, %2, %c0_i32_2 : i32
    %10 = vector.broadcast %9 : i1 to vector<128x1xi1>
    %11 = vector.broadcast %10 : vector<128x1xi1> to vector<128x1xi1>
    %12 = arith.xori %8, %11 : vector<128x1xi1>
    %13 = arith.andi %12, %6 : vector<128x1xi1>
    %14 = vector.broadcast %2 : i32 to vector<128x1xi32>
    %15 = arith.addi %4, %14 : vector<128x1xi32>
    %16 = arith.select %13, %15, %4 : vector<128x1xi1>, vector<128x1xi32>
    %c8_i32 = arith.constant 8 : i32
    %c0_i32_3 = arith.constant 0 : i32
    %17 = arith.cmpi eq, %c8_i32, %c0_i32_3 : i32
    %c1_i32_4 = arith.constant 1 : i32
    %18 = arith.select %17, %c1_i32_4, %c8_i32 : i32
    %19 = vector.broadcast %18 : i32 to vector<128x1xi32>
    %20 = arith.remsi %0, %19 : vector<128x1xi32>
    %c0_i32_5 = arith.constant 0 : i32
    %21 = vector.broadcast %c0_i32_5 : i32 to vector<128x1xi32>
    %22 = arith.cmpi ne, %20, %21 : vector<128x1xi32>
    %c0_i32_6 = arith.constant 0 : i32
    %23 = vector.broadcast %c0_i32_6 : i32 to vector<128x1xi32>
    %24 = arith.cmpi slt, %20, %23 : vector<128x1xi32>
    %c0_i32_7 = arith.constant 0 : i32
    %25 = arith.cmpi slt, %18, %c0_i32_7 : i32
    %26 = vector.broadcast %25 : i1 to vector<128x1xi1>
    %27 = vector.broadcast %26 : vector<128x1xi1> to vector<128x1xi1>
    %28 = arith.xori %24, %27 : vector<128x1xi1>
    %29 = arith.andi %28, %22 : vector<128x1xi1>
    %30 = vector.broadcast %18 : i32 to vector<128x1xi32>
    %31 = arith.addi %20, %30 : vector<128x1xi32>
    %32 = arith.select %29, %31, %20 : vector<128x1xi1>, vector<128x1xi32>
    %c8_i32_8 = arith.constant 8 : i32
    %33 = vector.broadcast %c8_i32_8 : i32 to vector<128x1xi32>
    %34 = arith.cmpi sge, %16, %33 : vector<128x1xi32>
    %c56_i32 = arith.constant 56 : i32
    %35 = vector.broadcast %c56_i32 : i32 to vector<128x1xi32>
    %36 = arith.cmpi slt, %16, %35 : vector<128x1xi32>
    %c1_i32_9 = arith.constant 1 : i32
    %37 = vector.broadcast %c1_i32_9 : i32 to vector<128x1xi32>
    %38 = arith.cmpi sge, %32, %37 : vector<128x1xi32>
    %c7_i32 = arith.constant 7 : i32
    %39 = vector.broadcast %c7_i32 : i32 to vector<128x1xi32>
    %40 = arith.cmpi slt, %32, %39 : vector<128x1xi32>
    %c0 = arith.constant 0 : index
    %c0_10 = arith.constant 0 : index
    %41 = vector.load %arg1[%c0, %c0_10] : memref<128x128xbf16, #tpu.memory_space<vmem>>, vector<128x128xbf16>
    %c0_11 = arith.constant 0 : index
    %c0_12 = arith.constant 0 : index
    %42 = vector.load %arg2[%c0_11, %c0_12] : memref<128x128xbf16, #tpu.memory_space<vmem>>, vector<128x128xbf16>
    %cst = arith.constant dense<0.000000e+00> : vector<128x128xf32>
    %43 = tpu.matmul %41, %42, %cst {dimension_numbers = #tpu.dot_dimension_numbers<[1], [0], [0], [1], [0, 0, 1, 1], [], []>} : vector<128x128xbf16>, vector<128x128xbf16>, vector<128x128xf32> -> vector<128x128xf32>
    %c0_13 = arith.constant 0 : index
    %c0_14 = arith.constant 0 : index
    %44 = vector.load %arg3[%c0_13, %c0_14] : memref<3x128xf32, #tpu.memory_space<vmem>>, vector<1x128xf32>
    %45 = vector.broadcast %44 : vector<1x128xf32> to vector<128x128xf32>
    %46 = arith.addf %43, %45 : vector<128x128xf32>
    %cst_15 = arith.constant 0.000000e+00 : f32
    %47 = vector.broadcast %cst_15 : f32 to vector<128x128xf32>
    %48 = arith.maximumf %46, %47 : vector<128x128xf32>
    %c1 = arith.constant 1 : index
    %c0_16 = arith.constant 0 : index
    %49 = vector.load %arg3[%c1, %c0_16] : memref<3x128xf32, #tpu.memory_space<vmem>>, vector<1x128xf32>
    %50 = vector.broadcast %49 : vector<1x128xf32> to vector<128x128xf32>
    %51 = arith.mulf %48, %50 : vector<128x128xf32>
    %c2 = arith.constant 2 : index
    %c0_17 = arith.constant 0 : index
    %52 = vector.load %arg3[%c2, %c0_17] : memref<3x128xf32, #tpu.memory_space<vmem>>, vector<1x128xf32>
    %53 = vector.broadcast %52 : vector<1x128xf32> to vector<128x128xf32>
    %54 = arith.addf %51, %53 : vector<128x128xf32>
    %c0_18 = arith.constant 0 : index
    %c0_19 = arith.constant 0 : index
    %55 = vector.load %arg22[%c0_18, %c0_19] : memref<128x512xf32, #tpu.memory_space<vmem>>, vector<128x128xf32>
    tpu.vector_store %arg22[%c0_18, %c0_19], %54 {strides = array<i32>} : memref<128x512xf32, #tpu.memory_space<vmem>>, vector<128x128xf32>,
    %c0_20 = arith.constant 0 : index
    %c0_21 = arith.constant 0 : index
    %56 = vector.load %arg4[%c0_20, %c0_21] : memref<128x96xbf16, #tpu.memory_space<vmem>>, vector<128x96xbf16>
    %cst_22 = arith.constant dense<0.000000e+00> : vector<128x96xf32>
    %57 = tpu.matmul %41, %56, %cst_22 {dimension_numbers = #tpu.dot_dimension_numbers<[1], [0], [0], [1], [0, 0, 1, 1], [], []>} : vector<128x128xbf16>, vector<128x96xbf16>, vector<128x96xf32> -> vector<128x96xf32>
    %c0_23 = arith.constant 0 : index
    %c0_24 = arith.constant 0 : index
    %58 = vector.load %arg5[%c0_23, %c0_24] : memref<3x96xf32, #tpu.memory_space<vmem>>, vector<1x96xf32>
    %59 = vector.broadcast %58 : vector<1x96xf32> to vector<128x96xf32>
    %60 = arith.addf %57, %59 : vector<128x96xf32>
    %cst_25 = arith.constant 0.000000e+00 : f32
    %61 = vector.broadcast %cst_25 : f32 to vector<128x96xf32>
    %62 = arith.maximumf %60, %61 : vector<128x96xf32>
    %c1_26 = arith.constant 1 : index
    %c0_27 = arith.constant 0 : index
    %63 = vector.load %arg5[%c1_26, %c0_27] : memref<3x96xf32, #tpu.memory_space<vmem>>, vector<1x96xf32>
    %64 = vector.broadcast %63 : vector<1x96xf32> to vector<128x96xf32>
    %65 = arith.mulf %62, %64 : vector<128x96xf32>
    %c2_28 = arith.constant 2 : index
    %c0_29 = arith.constant 0 : index
    %66 = vector.load %arg5[%c2_28, %c0_29] : memref<3x96xf32, #tpu.memory_space<vmem>>, vector<1x96xf32>
    %67 = vector.broadcast %66 : vector<1x96xf32> to vector<128x96xf32>
    %68 = arith.addf %65, %67 : vector<128x96xf32>
    %69 = arith.truncf %68 : vector<128x96xf32> to vector<128x96xbf16>
    %c0_30 = arith.constant 0 : index
    %c0_31 = arith.constant 0 : index
    %70 = vector.load %arg6[%c0_30, %c0_31] : memref<288x128xbf16, #tpu.memory_space<vmem>>, vector<96x128xbf16>
    %cst_32 = arith.constant dense<0.000000e+00> : vector<128x128xf32>
    %71 = tpu.matmul %69, %70, %cst_32 {dimension_numbers = #tpu.dot_dimension_numbers<[1], [0], [0], [1], [0, 0, 1, 1], [], []>} : vector<128x96xbf16>, vector<96x128xbf16>, vector<128x128xf32> -> vector<128x128xf32>
    %c96 = arith.constant 96 : index
    %c0_33 = arith.constant 0 : index
    %72 = vector.load %arg6[%c96, %c0_33] : memref<288x128xbf16, #tpu.memory_space<vmem>>, vector<96x128xbf16>
    %cst_34 = arith.constant dense<0.000000e+00> : vector<128x128xf32>
    %73 = tpu.matmul %69, %72, %cst_34 {dimension_numbers = #tpu.dot_dimension_numbers<[1], [0], [0], [1], [0, 0, 1, 1], [], []>} : vector<128x96xbf16>, vector<96x128xbf16>, vector<128x128xf32> -> vector<128x128xf32>
    %c192 = arith.constant 192 : index
    %c0_35 = arith.constant 0 : index
    %74 = vector.load %arg6[%c192, %c0_35] : memref<288x128xbf16, #tpu.memory_space<vmem>>, vector<96x128xbf16>
    %cst_36 = arith.constant dense<0.000000e+00> : vector<128x128xf32>
    %75 = tpu.matmul %69, %74, %cst_36 {dimension_numbers = #tpu.dot_dimension_numbers<[1], [0], [0], [1], [0, 0, 1, 1], [], []>} : vector<128x96xbf16>, vector<96x128xbf16>, vector<128x128xf32> -> vector<128x128xf32>
    %c8_i32_37 = arith.constant 8 : i32
    %76 = tpu.dynamic_rotate %71 by %c8_i32_37 dim 0 : vector<128x128xf32>, i32 -> vector<128x128xf32>
    %cst_38 = arith.constant 0.000000e+00 : f32
    %77 = vector.shape_cast %34 : vector<128x1xi1> to vector<128x1xi1>
    %78 = vector.broadcast %77 : vector<128x1xi1> to vector<128x128xi1>
    %79 = vector.broadcast %cst_38 : f32 to vector<128x128xf32>
    %80 = arith.select %78, %76, %79 : vector<128x128xi1>, vector<128x128xf32>
    %81 = arith.addf %73, %80 : vector<128x128xf32>
    %c120_i32 = arith.constant 120 : i32
    %82 = tpu.dynamic_rotate %75 by %c120_i32 dim 0 : vector<128x128xf32>, i32 -> vector<128x128xf32>
    %cst_39 = arith.constant 0.000000e+00 : f32
    %83 = vector.shape_cast %36 : vector<128x1xi1> to vector<128x1xi1>
    %84 = vector.broadcast %83 : vector<128x1xi1> to vector<128x128xi1>
    %85 = vector.broadcast %cst_39 : f32 to vector<128x128xf32>
    %86 = arith.select %84, %82, %85 : vector<128x128xi1>, vector<128x128xf32>
    %87 = arith.addf %81, %86 : vector<128x128xf32>
    %c0_40 = arith.constant 0 : index
    %c0_41 = arith.constant 0 : index
    %88 = vector.load %arg7[%c0_40, %c0_41] : memref<3x128xf32, #tpu.memory_space<vmem>>, vector<1x128xf32>
    %89 = vector.broadcast %88 : vector<1x128xf32> to vector<128x128xf32>
    %90 = arith.addf %87, %89 : vector<128x128xf32>
    %cst_42 = arith.constant 0.000000e+00 : f32
    %91 = vector.broadcast %cst_42 : f32 to vector<128x128xf32>
    %92 = arith.maximumf %90, %91 : vector<128x128xf32>
    %c1_43 = arith.constant 1 : index
    %c0_44 = arith.constant 0 : index
    %93 = vector.load %arg7[%c1_43, %c0_44] : memref<3x128xf32, #tpu.memory_space<vmem>>, vector<1x128xf32>
    %94 = vector.broadcast %93 : vector<1x128xf32> to vector<128x128xf32>
    %95 = arith.mulf %92, %94 : vector<128x128xf32>
    %c2_45 = arith.constant 2 : index
    %c0_46 = arith.constant 0 : index
    %96 = vector.load %arg7[%c2_45, %c0_46] : memref<3x128xf32, #tpu.memory_space<vmem>>, vector<1x128xf32>
    %97 = vector.broadcast %96 : vector<1x128xf32> to vector<128x128xf32>
    %98 = arith.addf %95, %97 : vector<128x128xf32>
    %99 = arith.truncf %98 : vector<128x128xf32> to vector<128x128xbf16>
    %c0_47 = arith.constant 0 : index
    %c0_48 = arith.constant 0 : index
    %100 = vector.load %arg8[%c0_47, %c0_48] : memref<384x128xbf16, #tpu.memory_space<vmem>>, vector<128x128xbf16>
    %cst_49 = arith.constant dense<0.000000e+00> : vector<128x128xf32>
    %101 = tpu.matmul %99, %100, %cst_49 {dimension_numbers = #tpu.dot_dimension_numbers<[1], [0], [0], [1], [0, 0, 1, 1], [], []>} : vector<128x128xbf16>, vector<128x128xbf16>, vector<128x128xf32> -> vector<128x128xf32>
    %c128 = arith.constant 128 : index
    %c0_50 = arith.constant 0 : index
    %102 = vector.load %arg8[%c128, %c0_50] : memref<384x128xbf16, #tpu.memory_space<vmem>>, vector<128x128xbf16>
    %cst_51 = arith.constant dense<0.000000e+00> : vector<128x128xf32>
    %103 = tpu.matmul %99, %102, %cst_51 {dimension_numbers = #tpu.dot_dimension_numbers<[1], [0], [0], [1], [0, 0, 1, 1], [], []>} : vector<128x128xbf16>, vector<128x128xbf16>, vector<128x128xf32> -> vector<128x128xf32>
    %c256 = arith.constant 256 : index
    %c0_52 = arith.constant 0 : index
    %104 = vector.load %arg8[%c256, %c0_52] : memref<384x128xbf16, #tpu.memory_space<vmem>>, vector<128x128xbf16>
    %cst_53 = arith.constant dense<0.000000e+00> : vector<128x128xf32>
    %105 = tpu.matmul %99, %104, %cst_53 {dimension_numbers = #tpu.dot_dimension_numbers<[1], [0], [0], [1], [0, 0, 1, 1], [], []>} : vector<128x128xbf16>, vector<128x128xbf16>, vector<128x128xf32> -> vector<128x128xf32>
    %c1_i32_54 = arith.constant 1 : i32
    %106 = tpu.dynamic_rotate %101 by %c1_i32_54 dim 0 : vector<128x128xf32>, i32 -> vector<128x128xf32>
    %cst_55 = arith.constant 0.000000e+00 : f32
    %107 = vector.shape_cast %38 : vector<128x1xi1> to vector<128x1xi1>
    %108 = vector.broadcast %107 : vector<128x1xi1> to vector<128x128xi1>
    %109 = vector.broadcast %cst_55 : f32 to vector<128x128xf32>
    %110 = arith.select %108, %106, %109 : vector<128x128xi1>, vector<128x128xf32>
    %111 = arith.addf %103, %110 : vector<128x128xf32>
    %c127_i32 = arith.constant 127 : i32
    %112 = tpu.dynamic_rotate %105 by %c127_i32 dim 0 : vector<128x128xf32>, i32 -> vector<128x128xf32>
    %cst_56 = arith.constant 0.000000e+00 : f32
    %113 = vector.shape_cast %40 : vector<128x1xi1> to vector<128x1xi1>
    %114 = vector.broadcast %113 : vector<128x1xi1> to vector<128x128xi1>
    %115 = vector.broadcast %cst_56 : f32 to vector<128x128xf32>
    %116 = arith.select %114, %112, %115 : vector<128x128xi1>, vector<128x128xf32>
    %117 = arith.addf %111, %116 : vector<128x128xf32>
    %c0_57 = arith.constant 0 : index
    %c0_58 = arith.constant 0 : index
    %118 = vector.load %arg9[%c0_57, %c0_58] : memref<3x128xf32, #tpu.memory_space<vmem>>, vector<1x128xf32>
    %119 = vector.broadcast %118 : vector<1x128xf32> to vector<128x128xf32>
    %120 = arith.addf %117, %119 : vector<128x128xf32>
    %cst_59 = arith.constant 0.000000e+00 : f32
    %121 = vector.broadcast %cst_59 : f32 to vector<128x128xf32>
    %122 = arith.maximumf %120, %121 : vector<128x128xf32>
    %c1_60 = arith.constant 1 : index
    %c0_61 = arith.constant 0 : index
    %123 = vector.load %arg9[%c1_60, %c0_61] : memref<3x128xf32, #tpu.memory_space<vmem>>, vector<1x128xf32>
    %124 = vector.broadcast %123 : vector<1x128xf32> to vector<128x128xf32>
    %125 = arith.mulf %122, %124 : vector<128x128xf32>
    %c2_62 = arith.constant 2 : index
    %c0_63 = arith.constant 0 : index
    %126 = vector.load %arg9[%c2_62, %c0_63] : memref<3x128xf32, #tpu.memory_space<vmem>>, vector<1x128xf32>
    %127 = vector.broadcast %126 : vector<1x128xf32> to vector<128x128xf32>
    %128 = arith.addf %125, %127 : vector<128x128xf32>
    %c0_64 = arith.constant 0 : index
    %c128_65 = arith.constant 128 : index
    %129 = vector.load %arg22[%c0_64, %c128_65] : memref<128x512xf32, #tpu.memory_space<vmem>>, vector<128x128xf32>
    tpu.vector_store %arg22[%c0_64, %c128_65], %128 {strides = array<i32>} : memref<128x512xf32, #tpu.memory_space<vmem>>, vector<128x128xf32>,
    %c0_66 = arith.constant 0 : index
    %c0_67 = arith.constant 0 : index
    %130 = vector.load %arg10[%c0_66, %c0_67] : memref<128x64xbf16, #tpu.memory_space<vmem>>, vector<128x64xbf16>
    %cst_68 = arith.constant dense<0.000000e+00> : vector<128x64xf32>
    %131 = tpu.matmul %41, %130, %cst_68 {dimension_numbers = #tpu.dot_dimension_numbers<[1], [0], [0], [1], [0, 0, 1, 1], [], []>} : vector<128x128xbf16>, vector<128x64xbf16>, vector<128x64xf32> -> vector<128x64xf32>
    %c0_69 = arith.constant 0 : index
    %c0_70 = arith.constant 0 : index
    %132 = vector.load %arg11[%c0_69, %c0_70] : memref<3x64xf32, #tpu.memory_space<vmem>>, vector<1x64xf32>
    %133 = vector.broadcast %132 : vector<1x64xf32> to vector<128x64xf32>
    %134 = arith.addf %131, %133 : vector<128x64xf32>
    %cst_71 = arith.constant 0.000000e+00 : f32
    %135 = vector.broadcast %cst_71 : f32 to vector<128x64xf32>
    %136 = arith.maximumf %134, %135 : vector<128x64xf32>
    %c1_72 = arith.constant 1 : index
    %c0_73 = arith.constant 0 : index
    %137 = vector.load %arg11[%c1_72, %c0_73] : memref<3x64xf32, #tpu.memory_space<vmem>>, vector<1x64xf32>
    %138 = vector.broadcast %137 : vector<1x64xf32> to vector<128x64xf32>
    %139 = arith.mulf %136, %138 : vector<128x64xf32>
    %c2_74 = arith.constant 2 : index
    %c0_75 = arith.constant 0 : index
    %140 = vector.load %arg11[%c2_74, %c0_75] : memref<3x64xf32, #tpu.memory_space<vmem>>, vector<1x64xf32>
    %141 = vector.broadcast %140 : vector<1x64xf32> to vector<128x64xf32>
    %142 = arith.addf %139, %141 : vector<128x64xf32>
    %143 = arith.truncf %142 : vector<128x64xf32> to vector<128x64xbf16>
    %c0_76 = arith.constant 0 : index
    %c0_77 = arith.constant 0 : index
    %144 = vector.load %arg12[%c0_76, %c0_77] : memref<192x96xbf16, #tpu.memory_space<vmem>>, vector<64x96xbf16>
    %cst_78 = arith.constant dense<0.000000e+00> : vector<128x96xf32>
    %145 = tpu.matmul %143, %144, %cst_78 {dimension_numbers = #tpu.dot_dimension_numbers<[1], [0], [0], [1], [0, 0, 1, 1], [], []>} : vector<128x64xbf16>, vector<64x96xbf16>, vector<128x96xf32> -> vector<128x96xf32>
    %c64 = arith.constant 64 : index
    %c0_79 = arith.constant 0 : index
    %146 = vector.load %arg12[%c64, %c0_79] : memref<192x96xbf16, #tpu.memory_space<vmem>>, vector<64x96xbf16>
    %cst_80 = arith.constant dense<0.000000e+00> : vector<128x96xf32>
    %147 = tpu.matmul %143, %146, %cst_80 {dimension_numbers = #tpu.dot_dimension_numbers<[1], [0], [0], [1], [0, 0, 1, 1], [], []>} : vector<128x64xbf16>, vector<64x96xbf16>, vector<128x96xf32> -> vector<128x96xf32>
    %c128_81 = arith.constant 128 : index
    %c0_82 = arith.constant 0 : index
    %148 = vector.load %arg12[%c128_81, %c0_82] : memref<192x96xbf16, #tpu.memory_space<vmem>>, vector<64x96xbf16>
    %cst_83 = arith.constant dense<0.000000e+00> : vector<128x96xf32>
    %149 = tpu.matmul %143, %148, %cst_83 {dimension_numbers = #tpu.dot_dimension_numbers<[1], [0], [0], [1], [0, 0, 1, 1], [], []>} : vector<128x64xbf16>, vector<64x96xbf16>, vector<128x96xf32> -> vector<128x96xf32>
    %c8_i32_84 = arith.constant 8 : i32
    %150 = tpu.dynamic_rotate %145 by %c8_i32_84 dim 0 : vector<128x96xf32>, i32 -> vector<128x96xf32>
    %cst_85 = arith.constant 0.000000e+00 : f32
    %151 = vector.shape_cast %34 : vector<128x1xi1> to vector<128x1xi1>
    %152 = vector.broadcast %151 : vector<128x1xi1> to vector<128x96xi1>
    %153 = vector.broadcast %cst_85 : f32 to vector<128x96xf32>
    %154 = arith.select %152, %150, %153 : vector<128x96xi1>, vector<128x96xf32>
    %155 = arith.addf %147, %154 : vector<128x96xf32>
    %c120_i32_86 = arith.constant 120 : i32
    %156 = tpu.dynamic_rotate %149 by %c120_i32_86 dim 0 : vector<128x96xf32>, i32 -> vector<128x96xf32>
    %cst_87 = arith.constant 0.000000e+00 : f32
    %157 = vector.shape_cast %36 : vector<128x1xi1> to vector<128x1xi1>
    %158 = vector.broadcast %157 : vector<128x1xi1> to vector<128x96xi1>
    %159 = vector.broadcast %cst_87 : f32 to vector<128x96xf32>
    %160 = arith.select %158, %156, %159 : vector<128x96xi1>, vector<128x96xf32>
    %161 = arith.addf %155, %160 : vector<128x96xf32>
    %c0_88 = arith.constant 0 : index
    %c0_89 = arith.constant 0 : index
    %162 = vector.load %arg13[%c0_88, %c0_89] : memref<3x96xf32, #tpu.memory_space<vmem>>, vector<1x96xf32>
    %163 = vector.broadcast %162 : vector<1x96xf32> to vector<128x96xf32>
    %164 = arith.addf %161, %163 : vector<128x96xf32>
    %cst_90 = arith.constant 0.000000e+00 : f32
    %165 = vector.broadcast %cst_90 : f32 to vector<128x96xf32>
    %166 = arith.maximumf %164, %165 : vector<128x96xf32>
    %c1_91 = arith.constant 1 : index
    %c0_92 = arith.constant 0 : index
    %167 = vector.load %arg13[%c1_91, %c0_92] : memref<3x96xf32, #tpu.memory_space<vmem>>, vector<1x96xf32>
    %168 = vector.broadcast %167 : vector<1x96xf32> to vector<128x96xf32>
    %169 = arith.mulf %166, %168 : vector<128x96xf32>
    %c2_93 = arith.constant 2 : index
    %c0_94 = arith.constant 0 : index
    %170 = vector.load %arg13[%c2_93, %c0_94] : memref<3x96xf32, #tpu.memory_space<vmem>>, vector<1x96xf32>
    %171 = vector.broadcast %170 : vector<1x96xf32> to vector<128x96xf32>
    %172 = arith.addf %169, %171 : vector<128x96xf32>
    %173 = arith.truncf %172 : vector<128x96xf32> to vector<128x96xbf16>
    %c0_95 = arith.constant 0 : index
    %c0_96 = arith.constant 0 : index
    %174 = vector.load %arg14[%c0_95, %c0_96] : memref<288x96xbf16, #tpu.memory_space<vmem>>, vector<96x96xbf16>
    %cst_97 = arith.constant dense<0.000000e+00> : vector<128x96xf32>
    %175 = tpu.matmul %173, %174, %cst_97 {dimension_numbers = #tpu.dot_dimension_numbers<[1], [0], [0], [1], [0, 0, 1, 1], [], []>} : vector<128x96xbf16>, vector<96x96xbf16>, vector<128x96xf32> -> vector<128x96xf32>
    %c96_98 = arith.constant 96 : index
    %c0_99 = arith.constant 0 : index
    %176 = vector.load %arg14[%c96_98, %c0_99] : memref<288x96xbf16, #tpu.memory_space<vmem>>, vector<96x96xbf16>
    %cst_100 = arith.constant dense<0.000000e+00> : vector<128x96xf32>
    %177 = tpu.matmul %173, %176, %cst_100 {dimension_numbers = #tpu.dot_dimension_numbers<[1], [0], [0], [1], [0, 0, 1, 1], [], []>} : vector<128x96xbf16>, vector<96x96xbf16>, vector<128x96xf32> -> vector<128x96xf32>
    %c192_101 = arith.constant 192 : index
    %c0_102 = arith.constant 0 : index
    %178 = vector.load %arg14[%c192_101, %c0_102] : memref<288x96xbf16, #tpu.memory_space<vmem>>, vector<96x96xbf16>
    %cst_103 = arith.constant dense<0.000000e+00> : vector<128x96xf32>
    %179 = tpu.matmul %173, %178, %cst_103 {dimension_numbers = #tpu.dot_dimension_numbers<[1], [0], [0], [1], [0, 0, 1, 1], [], []>} : vector<128x96xbf16>, vector<96x96xbf16>, vector<128x96xf32> -> vector<128x96xf32>
    %c1_i32_104 = arith.constant 1 : i32
    %180 = tpu.dynamic_rotate %175 by %c1_i32_104 dim 0 : vector<128x96xf32>, i32 -> vector<128x96xf32>
    %cst_105 = arith.constant 0.000000e+00 : f32
    %181 = vector.shape_cast %38 : vector<128x1xi1> to vector<128x1xi1>
    %182 = vector.broadcast %181 : vector<128x1xi1> to vector<128x96xi1>
    %183 = vector.broadcast %cst_105 : f32 to vector<128x96xf32>
    %184 = arith.select %182, %180, %183 : vector<128x96xi1>, vector<128x96xf32>
    %185 = arith.addf %177, %184 : vector<128x96xf32>
    %c127_i32_106 = arith.constant 127 : i32
    %186 = tpu.dynamic_rotate %179 by %c127_i32_106 dim 0 : vector<128x96xf32>, i32 -> vector<128x96xf32>
    %cst_107 = arith.constant 0.000000e+00 : f32
    %187 = vector.shape_cast %40 : vector<128x1xi1> to vector<128x1xi1>
    %188 = vector.broadcast %187 : vector<128x1xi1> to vector<128x96xi1>
    %189 = vector.broadcast %cst_107 : f32 to vector<128x96xf32>
    %190 = arith.select %188, %186, %189 : vector<128x96xi1>, vector<128x96xf32>
    %191 = arith.addf %185, %190 : vector<128x96xf32>
    %c0_108 = arith.constant 0 : index
    %c0_109 = arith.constant 0 : index
    %192 = vector.load %arg15[%c0_108, %c0_109] : memref<3x96xf32, #tpu.memory_space<vmem>>, vector<1x96xf32>
    %193 = vector.broadcast %192 : vector<1x96xf32> to vector<128x96xf32>
    %194 = arith.addf %191, %193 : vector<128x96xf32>
    %cst_110 = arith.constant 0.000000e+00 : f32
    %195 = vector.broadcast %cst_110 : f32 to vector<128x96xf32>
    %196 = arith.maximumf %194, %195 : vector<128x96xf32>
    %c1_111 = arith.constant 1 : index
    %c0_112 = arith.constant 0 : index
    %197 = vector.load %arg15[%c1_111, %c0_112] : memref<3x96xf32, #tpu.memory_space<vmem>>, vector<1x96xf32>
    %198 = vector.broadcast %197 : vector<1x96xf32> to vector<128x96xf32>
    %199 = arith.mulf %196, %198 : vector<128x96xf32>
    %c2_113 = arith.constant 2 : index
    %c0_114 = arith.constant 0 : index
    %200 = vector.load %arg15[%c2_113, %c0_114] : memref<3x96xf32, #tpu.memory_space<vmem>>, vector<1x96xf32>
    %201 = vector.broadcast %200 : vector<1x96xf32> to vector<128x96xf32>
    %202 = arith.addf %199, %201 : vector<128x96xf32>
    %203 = arith.truncf %202 : vector<128x96xf32> to vector<128x96xbf16>
    %c0_115 = arith.constant 0 : index
    %c0_116 = arith.constant 0 : index
    %204 = vector.load %arg16[%c0_115, %c0_116] : memref<288x192xbf16, #tpu.memory_space<vmem>>, vector<96x192xbf16>
    %cst_117 = arith.constant dense<0.000000e+00> : vector<128x192xf32>
    %205 = tpu.matmul %203, %204, %cst_117 {dimension_numbers = #tpu.dot_dimension_numbers<[1], [0], [0], [1], [0, 0, 1, 1], [], []>} : vector<128x96xbf16>, vector<96x192xbf16>, vector<128x192xf32> -> vector<128x192xf32>
    %c96_118 = arith.constant 96 : index
    %c0_119 = arith.constant 0 : index
    %206 = vector.load %arg16[%c96_118, %c0_119] : memref<288x192xbf16, #tpu.memory_space<vmem>>, vector<96x192xbf16>
    %cst_120 = arith.constant dense<0.000000e+00> : vector<128x192xf32>
    %207 = tpu.matmul %203, %206, %cst_120 {dimension_numbers = #tpu.dot_dimension_numbers<[1], [0], [0], [1], [0, 0, 1, 1], [], []>} : vector<128x96xbf16>, vector<96x192xbf16>, vector<128x192xf32> -> vector<128x192xf32>
    %c192_121 = arith.constant 192 : index
    %c0_122 = arith.constant 0 : index
    %208 = vector.load %arg16[%c192_121, %c0_122] : memref<288x192xbf16, #tpu.memory_space<vmem>>, vector<96x192xbf16>
    %cst_123 = arith.constant dense<0.000000e+00> : vector<128x192xf32>
    %209 = tpu.matmul %203, %208, %cst_123 {dimension_numbers = #tpu.dot_dimension_numbers<[1], [0], [0], [1], [0, 0, 1, 1], [], []>} : vector<128x96xbf16>, vector<96x192xbf16>, vector<128x192xf32> -> vector<128x192xf32>
    %c8_i32_124 = arith.constant 8 : i32
    %210 = tpu.dynamic_rotate %205 by %c8_i32_124 dim 0 : vector<128x192xf32>, i32 -> vector<128x192xf32>
    %cst_125 = arith.constant 0.000000e+00 : f32
    %211 = vector.shape_cast %34 : vector<128x1xi1> to vector<128x1xi1>
    %212 = vector.broadcast %211 : vector<128x1xi1> to vector<128x192xi1>
    %213 = vector.broadcast %cst_125 : f32 to vector<128x192xf32>
    %214 = arith.select %212, %210, %213 : vector<128x192xi1>, vector<128x192xf32>
    %215 = arith.addf %207, %214 : vector<128x192xf32>
    %c120_i32_126 = arith.constant 120 : i32
    %216 = tpu.dynamic_rotate %209 by %c120_i32_126 dim 0 : vector<128x192xf32>, i32 -> vector<128x192xf32>
    %cst_127 = arith.constant 0.000000e+00 : f32
    %217 = vector.shape_cast %36 : vector<128x1xi1> to vector<128x1xi1>
    %218 = vector.broadcast %217 : vector<128x1xi1> to vector<128x192xi1>
    %219 = vector.broadcast %cst_127 : f32 to vector<128x192xf32>
    %220 = arith.select %218, %216, %219 : vector<128x192xi1>, vector<128x192xf32>
    %221 = arith.addf %215, %220 : vector<128x192xf32>
    %c0_128 = arith.constant 0 : index
    %c0_129 = arith.constant 0 : index
    %222 = vector.load %arg17[%c0_128, %c0_129] : memref<3x192xf32, #tpu.memory_space<vmem>>, vector<1x192xf32>
    %223 = vector.broadcast %222 : vector<1x192xf32> to vector<128x192xf32>
    %224 = arith.addf %221, %223 : vector<128x192xf32>
    %cst_130 = arith.constant 0.000000e+00 : f32
    %225 = vector.broadcast %cst_130 : f32 to vector<128x192xf32>
    %226 = arith.maximumf %224, %225 : vector<128x192xf32>
    %c1_131 = arith.constant 1 : index
    %c0_132 = arith.constant 0 : index
    %227 = vector.load %arg17[%c1_131, %c0_132] : memref<3x192xf32, #tpu.memory_space<vmem>>, vector<1x192xf32>
    %228 = vector.broadcast %227 : vector<1x192xf32> to vector<128x192xf32>
    %229 = arith.mulf %226, %228 : vector<128x192xf32>
    %c2_133 = arith.constant 2 : index
    %c0_134 = arith.constant 0 : index
    %230 = vector.load %arg17[%c2_133, %c0_134] : memref<3x192xf32, #tpu.memory_space<vmem>>, vector<1x192xf32>
    %231 = vector.broadcast %230 : vector<1x192xf32> to vector<128x192xf32>
    %232 = arith.addf %229, %231 : vector<128x192xf32>
    %233 = arith.truncf %232 : vector<128x192xf32> to vector<128x192xbf16>
    %c0_135 = arith.constant 0 : index
    %c0_136 = arith.constant 0 : index
    %234 = vector.load %arg18[%c0_135, %c0_136] : memref<576x192xbf16, #tpu.memory_space<vmem>>, vector<192x192xbf16>
    %cst_137 = arith.constant dense<0.000000e+00> : vector<128x192xf32>
    %235 = tpu.matmul %233, %234, %cst_137 {dimension_numbers = #tpu.dot_dimension_numbers<[1], [0], [0], [1], [0, 0, 1, 1], [], []>} : vector<128x192xbf16>, vector<192x192xbf16>, vector<128x192xf32> -> vector<128x192xf32>
    %c192_138 = arith.constant 192 : index
    %c0_139 = arith.constant 0 : index
    %236 = vector.load %arg18[%c192_138, %c0_139] : memref<576x192xbf16, #tpu.memory_space<vmem>>, vector<192x192xbf16>
    %cst_140 = arith.constant dense<0.000000e+00> : vector<128x192xf32>
    %237 = tpu.matmul %233, %236, %cst_140 {dimension_numbers = #tpu.dot_dimension_numbers<[1], [0], [0], [1], [0, 0, 1, 1], [], []>} : vector<128x192xbf16>, vector<192x192xbf16>, vector<128x192xf32> -> vector<128x192xf32>
    %c384 = arith.constant 384 : index
    %c0_141 = arith.constant 0 : index
    %238 = vector.load %arg18[%c384, %c0_141] : memref<576x192xbf16, #tpu.memory_space<vmem>>, vector<192x192xbf16>
    %cst_142 = arith.constant dense<0.000000e+00> : vector<128x192xf32>
    %239 = tpu.matmul %233, %238, %cst_142 {dimension_numbers = #tpu.dot_dimension_numbers<[1], [0], [0], [1], [0, 0, 1, 1], [], []>} : vector<128x192xbf16>, vector<192x192xbf16>, vector<128x192xf32> -> vector<128x192xf32>
    %c1_i32_143 = arith.constant 1 : i32
    %240 = tpu.dynamic_rotate %235 by %c1_i32_143 dim 0 : vector<128x192xf32>, i32 -> vector<128x192xf32>
    %cst_144 = arith.constant 0.000000e+00 : f32
    %241 = vector.shape_cast %38 : vector<128x1xi1> to vector<128x1xi1>
    %242 = vector.broadcast %241 : vector<128x1xi1> to vector<128x192xi1>
    %243 = vector.broadcast %cst_144 : f32 to vector<128x192xf32>
    %244 = arith.select %242, %240, %243 : vector<128x192xi1>, vector<128x192xf32>
    %245 = arith.addf %237, %244 : vector<128x192xf32>
    %c127_i32_145 = arith.constant 127 : i32
    %246 = tpu.dynamic_rotate %239 by %c127_i32_145 dim 0 : vector<128x192xf32>, i32 -> vector<128x192xf32>
    %cst_146 = arith.constant 0.000000e+00 : f32
    %247 = vector.shape_cast %40 : vector<128x1xi1> to vector<128x1xi1>
    %248 = vector.broadcast %247 : vector<128x1xi1> to vector<128x192xi1>
    %249 = vector.broadcast %cst_146 : f32 to vector<128x192xf32>
    %250 = arith.select %248, %246, %249 : vector<128x192xi1>, vector<128x192xf32>
    %251 = arith.addf %245, %250 : vector<128x192xf32>
    %c0_147 = arith.constant 0 : index
    %c0_148 = arith.constant 0 : index
    %252 = vector.load %arg19[%c0_147, %c0_148] : memref<3x192xf32, #tpu.memory_space<vmem>>, vector<1x192xf32>
    %253 = vector.broadcast %252 : vector<1x192xf32> to vector<128x192xf32>
    %254 = arith.addf %251, %253 : vector<128x192xf32>
    %cst_149 = arith.constant 0.000000e+00 : f32
    %255 = vector.broadcast %cst_149 : f32 to vector<128x192xf32>
    %256 = arith.maximumf %254, %255 : vector<128x192xf32>
    %c1_150 = arith.constant 1 : index
    %c0_151 = arith.constant 0 : index
    %257 = vector.load %arg19[%c1_150, %c0_151] : memref<3x192xf32, #tpu.memory_space<vmem>>, vector<1x192xf32>
    %258 = vector.broadcast %257 : vector<1x192xf32> to vector<128x192xf32>
    %259 = arith.mulf %256, %258 : vector<128x192xf32>
    %c2_152 = arith.constant 2 : index
    %c0_153 = arith.constant 0 : index
    %260 = vector.load %arg19[%c2_152, %c0_153] : memref<3x192xf32, #tpu.memory_space<vmem>>, vector<1x192xf32>
    %261 = vector.broadcast %260 : vector<1x192xf32> to vector<128x192xf32>
    %262 = arith.addf %259, %261 : vector<128x192xf32>
    %c0_154 = arith.constant 0 : index
    %c256_155 = arith.constant 256 : index
    %263 = vector.load %arg22[%c0_154, %c256_155] : memref<128x512xf32, #tpu.memory_space<vmem>>, vector<128x192xf32>
    tpu.vector_store %arg22[%c0_154, %c256_155], %262 {strides = array<i32>} : memref<128x512xf32, #tpu.memory_space<vmem>>, vector<128x192xf32>,
    %264 = arith.extf %41 : vector<128x128xbf16> to vector<128x128xf32>
    %c1_i32_156 = arith.constant 1 : i32
    %265 = tpu.dynamic_rotate %264 by %c1_i32_156 dim 0 : vector<128x128xf32>, i32 -> vector<128x128xf32>
    %cst_157 = arith.constant 0xFF800000 : f32
    %266 = vector.shape_cast %38 : vector<128x1xi1> to vector<128x1xi1>
    %267 = vector.broadcast %266 : vector<128x1xi1> to vector<128x128xi1>
    %268 = vector.broadcast %cst_157 : f32 to vector<128x128xf32>
    %269 = arith.select %267, %265, %268 : vector<128x128xi1>, vector<128x128xf32>
    %c127_i32_158 = arith.constant 127 : i32
    %270 = tpu.dynamic_rotate %264 by %c127_i32_158 dim 0 : vector<128x128xf32>, i32 -> vector<128x128xf32>
    %cst_159 = arith.constant 0xFF800000 : f32
    %271 = vector.shape_cast %40 : vector<128x1xi1> to vector<128x1xi1>
    %272 = vector.broadcast %271 : vector<128x1xi1> to vector<128x128xi1>
    %273 = vector.broadcast %cst_159 : f32 to vector<128x128xf32>
    %274 = arith.select %272, %270, %273 : vector<128x128xi1>, vector<128x128xf32>
    %275 = arith.maximumf %269, %274 : vector<128x128xf32>
    %276 = arith.maximumf %264, %275 : vector<128x128xf32>
    %c8_i32_160 = arith.constant 8 : i32
    %277 = tpu.dynamic_rotate %276 by %c8_i32_160 dim 0 : vector<128x128xf32>, i32 -> vector<128x128xf32>
    %cst_161 = arith.constant 0xFF800000 : f32
    %278 = vector.shape_cast %34 : vector<128x1xi1> to vector<128x1xi1>
    %279 = vector.broadcast %278 : vector<128x1xi1> to vector<128x128xi1>
    %280 = vector.broadcast %cst_161 : f32 to vector<128x128xf32>
    %281 = arith.select %279, %277, %280 : vector<128x128xi1>, vector<128x128xf32>
    %c120_i32_162 = arith.constant 120 : i32
    %282 = tpu.dynamic_rotate %276 by %c120_i32_162 dim 0 : vector<128x128xf32>, i32 -> vector<128x128xf32>
    %cst_163 = arith.constant 0xFF800000 : f32
    %283 = vector.shape_cast %36 : vector<128x1xi1> to vector<128x1xi1>
    %284 = vector.broadcast %283 : vector<128x1xi1> to vector<128x128xi1>
    %285 = vector.broadcast %cst_163 : f32 to vector<128x128xf32>
    %286 = arith.select %284, %282, %285 : vector<128x128xi1>, vector<128x128xf32>
    %287 = arith.maximumf %281, %286 : vector<128x128xf32>
    %288 = arith.maximumf %276, %287 : vector<128x128xf32>
    %289 = arith.truncf %288 : vector<128x128xf32> to vector<128x128xbf16>
    %c0_164 = arith.constant 0 : index
    %c0_165 = arith.constant 0 : index
    %290 = vector.load %arg20[%c0_164, %c0_165] : memref<128x64xbf16, #tpu.memory_space<vmem>>, vector<128x64xbf16>
    %cst_166 = arith.constant dense<0.000000e+00> : vector<128x64xf32>
    %291 = tpu.matmul %289, %290, %cst_166 {dimension_numbers = #tpu.dot_dimension_numbers<[1], [0], [0], [1], [0, 0, 1, 1], [], []>} : vector<128x128xbf16>, vector<128x64xbf16>, vector<128x64xf32> -> vector<128x64xf32>
    %c0_167 = arith.constant 0 : index
    %c0_168 = arith.constant 0 : index
    %292 = vector.load %arg21[%c0_167, %c0_168] : memref<3x64xf32, #tpu.memory_space<vmem>>, vector<1x64xf32>
    %293 = vector.broadcast %292 : vector<1x64xf32> to vector<128x64xf32>
    %294 = arith.addf %291, %293 : vector<128x64xf32>
    %cst_169 = arith.constant 0.000000e+00 : f32
    %295 = vector.broadcast %cst_169 : f32 to vector<128x64xf32>
    %296 = arith.maximumf %294, %295 : vector<128x64xf32>
    %c1_170 = arith.constant 1 : index
    %c0_171 = arith.constant 0 : index
    %297 = vector.load %arg21[%c1_170, %c0_171] : memref<3x64xf32, #tpu.memory_space<vmem>>, vector<1x64xf32>
    %298 = vector.broadcast %297 : vector<1x64xf32> to vector<128x64xf32>
    %299 = arith.mulf %296, %298 : vector<128x64xf32>
    %c2_172 = arith.constant 2 : index
    %c0_173 = arith.constant 0 : index
    %300 = vector.load %arg21[%c2_172, %c0_173] : memref<3x64xf32, #tpu.memory_space<vmem>>, vector<1x64xf32>
    %301 = vector.broadcast %300 : vector<1x64xf32> to vector<128x64xf32>
    %302 = arith.addf %299, %301 : vector<128x64xf32>
    %c0_174 = arith.constant 0 : index
    %c448 = arith.constant 448 : index
    %303 = vector.load %arg22[%c0_174, %c448] : memref<128x512xf32, #tpu.memory_space<vmem>>, vector<128x64xf32>
    tpu.vector_store %arg22[%c0_174, %c448], %302 {strides = array<i32>} : memref<128x512xf32, #tpu.memory_space<vmem>>, vector<128x64xf32>,
    return
  }
  func.func @transform_0(%arg0: i32) -> (i32, i32) {
    %c0_i32 = arith.constant 0 : i32
    %c0_i32_0 = arith.constant 0 : i32
    return %arg0, %c0_i32 : i32, i32
  }
  func.func @transform_1(%arg0: i32) -> (i32, i32) {
    %c0_i32 = arith.constant 0 : i32
    %c0_i32_0 = arith.constant 0 : i32
    %c0_i32_1 = arith.constant 0 : i32
    return %c0_i32, %c0_i32_0 : i32, i32
  }
  func.func @transform_2(%arg0: i32) -> (i32, i32) {
    %c0_i32 = arith.constant 0 : i32
    %c0_i32_0 = arith.constant 0 : i32
    %c0_i32_1 = arith.constant 0 : i32
    return %c0_i32, %c0_i32_0 : i32, i32
  }
  func.func @transform_3(%arg0: i32) -> (i32, i32) {
    %c0_i32 = arith.constant 0 : i32
    %c0_i32_0 = arith.constant 0 : i32
    %c0_i32_1 = arith.constant 0 : i32
    return %c0_i32, %c0_i32_0 : i32, i32
  }
  func.func @transform_4(%arg0: i32) -> (i32, i32) {
    %c0_i32 = arith.constant 0 : i32
    %c0_i32_0 = arith.constant 0 : i32
    %c0_i32_1 = arith.constant 0 : i32
    return %c0_i32, %c0_i32_0 : i32, i32
  }
  func.func @transform_5(%arg0: i32) -> (i32, i32) {
    %c0_i32 = arith.constant 0 : i32
    %c0_i32_0 = arith.constant 0 : i32
    %c0_i32_1 = arith.constant 0 : i32
    return %c0_i32, %c0_i32_0 : i32, i32
  }
  func.func @transform_6(%arg0: i32) -> (i32, i32) {
    %c0_i32 = arith.constant 0 : i32
    %c0_i32_0 = arith.constant 0 : i32
    %c0_i32_1 = arith.constant 0 : i32
    return %c0_i32, %c0_i32_0 : i32, i32
  }
  func.func @transform_7(%arg0: i32) -> (i32, i32) {
    %c0_i32 = arith.constant 0 : i32
    %c0_i32_0 = arith.constant 0 : i32
    %c0_i32_1 = arith.constant 0 : i32
    return %c0_i32, %c0_i32_0 : i32, i32
  }
  func.func @transform_8(%arg0: i32) -> (i32, i32) {
    %c0_i32 = arith.constant 0 : i32
    %c0_i32_0 = arith.constant 0 : i32
    %c0_i32_1 = arith.constant 0 : i32
    return %c0_i32, %c0_i32_0 : i32, i32
  }
  func.func @transform_9(%arg0: i32) -> (i32, i32) {
    %c0_i32 = arith.constant 0 : i32
    %c0_i32_0 = arith.constant 0 : i32
    %c0_i32_1 = arith.constant 0 : i32
    return %c0_i32, %c0_i32_0 : i32, i32
  }
  func.func @transform_10(%arg0: i32) -> (i32, i32) {
    %c0_i32 = arith.constant 0 : i32
    %c0_i32_0 = arith.constant 0 : i32
    %c0_i32_1 = arith.constant 0 : i32
    return %c0_i32, %c0_i32_0 : i32, i32
  }
  func.func @transform_11(%arg0: i32) -> (i32, i32) {
    %c0_i32 = arith.constant 0 : i32
    %c0_i32_0 = arith.constant 0 : i32
    %c0_i32_1 = arith.constant 0 : i32
    return %c0_i32, %c0_i32_0 : i32, i32
  }
  func.func @transform_12(%arg0: i32) -> (i32, i32) {
    %c0_i32 = arith.constant 0 : i32
    %c0_i32_0 = arith.constant 0 : i32
    %c0_i32_1 = arith.constant 0 : i32
    return %c0_i32, %c0_i32_0 : i32, i32
  }
  func.func @transform_13(%arg0: i32) -> (i32, i32) {
    %c0_i32 = arith.constant 0 : i32
    %c0_i32_0 = arith.constant 0 : i32
    %c0_i32_1 = arith.constant 0 : i32
    return %c0_i32, %c0_i32_0 : i32, i32
  }
  func.func @transform_14(%arg0: i32) -> (i32, i32) {
    %c0_i32 = arith.constant 0 : i32
    %c0_i32_0 = arith.constant 0 : i32
    %c0_i32_1 = arith.constant 0 : i32
    return %c0_i32, %c0_i32_0 : i32, i32
  }
  func.func @transform_15(%arg0: i32) -> (i32, i32) {
    %c0_i32 = arith.constant 0 : i32
    %c0_i32_0 = arith.constant 0 : i32
    %c0_i32_1 = arith.constant 0 : i32
    return %c0_i32, %c0_i32_0 : i32, i32
  }
  func.func @transform_16(%arg0: i32) -> (i32, i32) {
    %c0_i32 = arith.constant 0 : i32
    %c0_i32_0 = arith.constant 0 : i32
    %c0_i32_1 = arith.constant 0 : i32
    return %c0_i32, %c0_i32_0 : i32, i32
  }
  func.func @transform_17(%arg0: i32) -> (i32, i32) {
    %c0_i32 = arith.constant 0 : i32
    %c0_i32_0 = arith.constant 0 : i32
    %c0_i32_1 = arith.constant 0 : i32
    return %c0_i32, %c0_i32_0 : i32, i32
  }
  func.func @transform_18(%arg0: i32) -> (i32, i32) {
    %c0_i32 = arith.constant 0 : i32
    %c0_i32_0 = arith.constant 0 : i32
    %c0_i32_1 = arith.constant 0 : i32
    return %c0_i32, %c0_i32_0 : i32, i32
  }
  func.func @transform_19(%arg0: i32) -> (i32, i32) {
    %c0_i32 = arith.constant 0 : i32
    %c0_i32_0 = arith.constant 0 : i32
    %c0_i32_1 = arith.constant 0 : i32
    return %c0_i32, %c0_i32_0 : i32, i32
  }
  func.func @transform_20(%arg0: i32) -> (i32, i32) {
    %c0_i32 = arith.constant 0 : i32
    %c0_i32_0 = arith.constant 0 : i32
    %c0_i32_1 = arith.constant 0 : i32
    return %c0_i32, %c0_i32_0 : i32, i32
  }
  func.func @transform_21(%arg0: i32) -> (i32, i32) {
    %c0_i32 = arith.constant 0 : i32
    %c0_i32_0 = arith.constant 0 : i32
    return %arg0, %c0_i32 : i32, i32
  }
}

</mosaic_0001>

<llo_original>
// kernel: forward.1
$region0: #{forward.1}
  #allocation0 [shape = 'u32[]', space=smem, size = 0x4, offset = 0x4, fixed_abs, tag = 'smem constant byte address 0x4 - core index']
  #allocation1 [shape = 'u32[144,128]{1,0:T(1,128)}', space=vmem, size = 0x12000, scoped, tag = 'internal scratch']
  %s0 = inlined_call_operand.vmem [shape: bf16[128,128], index: 0, kind: input, shape index: {}]
  %s1 = inlined_call_operand.vmem [shape: bf16[128,128], index: 1, kind: input, shape index: {}]
  %s2 = inlined_call_operand.vmem [shape: f32[3,128], index: 2, kind: input, shape index: {}]
  %s3 = inlined_call_operand.vmem [shape: bf16[128,96], index: 3, kind: input, shape index: {}]
  %s4 = inlined_call_operand.vmem [shape: f32[3,96], index: 4, kind: input, shape index: {}]
  %s5 = inlined_call_operand.vmem [shape: bf16[288,128], index: 5, kind: input, shape index: {}]
  %s6 = inlined_call_operand.vmem [shape: f32[3,128], index: 6, kind: input, shape index: {}]
  %s7 = inlined_call_operand.vmem [shape: bf16[384,128], index: 7, kind: input, shape index: {}]
  %s8 = inlined_call_operand.vmem [shape: f32[3,128], index: 8, kind: input, shape index: {}]
  %s9 = inlined_call_operand.vmem [shape: bf16[128,64], index: 9, kind: input, shape index: {}]
  %s10 = inlined_call_operand.vmem [shape: f32[3,64], index: 10, kind: input, shape index: {}]
  %s11 = inlined_call_operand.vmem [shape: bf16[192,96], index: 11, kind: input, shape index: {}]
  %s12 = inlined_call_operand.vmem [shape: f32[3,96], index: 12, kind: input, shape index: {}]
  %s13 = inlined_call_operand.vmem [shape: bf16[288,96], index: 13, kind: input, shape index: {}]
  %s14 = inlined_call_operand.vmem [shape: f32[3,96], index: 14, kind: input, shape index: {}]
  %s15 = inlined_call_operand.vmem [shape: bf16[288,192], index: 15, kind: input, shape index: {}]
  %s16 = inlined_call_operand.vmem [shape: f32[3,192], index: 16, kind: input, shape index: {}]
  %s17 = inlined_call_operand.vmem [shape: bf16[576,192], index: 17, kind: input, shape index: {}]
  %s18 = inlined_call_operand.vmem [shape: f32[3,192], index: 18, kind: input, shape index: {}]
  %s19 = inlined_call_operand.vmem [shape: bf16[128,64], index: 19, kind: input, shape index: {}]
  %s20 = inlined_call_operand.vmem [shape: f32[3,64], index: 20, kind: input, shape index: {}]
  %s21 = inlined_call_operand.hbm [shape: f32[128,512], index: 21, kind: output, shape index: {}]
  %s22 = sld [smem:[#allocation0]]
  $region94: #{forward.1} parent=0
    _
  %s24 = ssub.s32 1, %s22
  %s25 = scalar_select 0, %s24, %s22
  $region1: #{forward.1} parent=0
    #allocation2 [shape = 'u8[262144]{0}', space=vmem, size = 0x40000, scoped, tag = 'output window, operand 0, single buffered']
    #allocation3 [shape = 's32[1]{0}', space=sflag, size = 0x4, scoped, tag = 'scoped memory for forward.1']
    %26 = vsyncpa [#allocation3], 0
    // Predicated region
    $region2: #{forward.1} parent=1 // pred_check
      _
    $region3: #{forward.1} parent=1 // pred_check_branch
      %28 = sbr.rel (0) target = $region5
    $region4: #{forward.1} parent=1 // pred_region
      _
    $region5: #{forward.1} parent=1 // pred_fallthru
      _
    // Predicated region
    $region6: #{forward.1} parent=1 // pred_check
      _
    $region7: #{forward.1} parent=1 // pred_check_branch
      %30 = sbr.rel (0) target = $region9
    $region8: #{forward.1} parent=1 // pred_region
      _
    $region9: #{forward.1} parent=1 // pred_fallthru
      _
    // Predicated region
    $region10: #{forward.1} parent=1 // pred_check
      _
    $region11: #{forward.1} parent=1 // pred_check_branch
      %32 = sbr.rel (0) target = $region13
    $region12: #{forward.1} parent=1 // pred_region
      _
    $region13: #{forward.1} parent=1 // pred_fallthru
      _
    // Predicated region
    $region14: #{forward.1} parent=1 // pred_check
      _
    $region15: #{forward.1} parent=1 // pred_check_branch
      %34 = sbr.rel (0) target = $region17
    $region16: #{forward.1} parent=1 // pred_region
      _
    $region17: #{forward.1} parent=1 // pred_fallthru
      _
    // Predicated region
    $region18: #{forward.1} parent=1 // pred_check
      _
    $region19: #{forward.1} parent=1 // pred_check_branch
      %36 = sbr.rel (0) target = $region21
    $region20: #{forward.1} parent=1 // pred_region
      _
    $region21: #{forward.1} parent=1 // pred_fallthru
      _
    // Predicated region
    $region22: #{forward.1} parent=1 // pred_check
      _
    $region23: #{forward.1} parent=1 // pred_check_branch
      %38 = sbr.rel (0) target = $region25
    $region24: #{forward.1} parent=1 // pred_region
      _
    $region25: #{forward.1} parent=1 // pred_fallthru
      _
    // Predicated region
    $region26: #{forward.1} parent=1 // pred_check
      _
    $region27: #{forward.1} parent=1 // pred_check_branch
      %40 = sbr.rel (0) target = $region29
    $region28: #{forward.1} parent=1 // pred_region
      _
    $region29: #{forward.1} parent=1 // pred_fallthru
      _
    // Predicated region
    $region30: #{forward.1} parent=1 // pred_check
      _
    $region31: #{forward.1} parent=1 // pred_check_branch
      %42 = sbr.rel (0) target = $region33
    $region32: #{forward.1} parent=1 // pred_region
      _
    $region33: #{forward.1} parent=1 // pred_fallthru
      _
    // Predicated region
    $region34: #{forward.1} parent=1 // pred_check
      _
    $region35: #{forward.1} parent=1 // pred_check_branch
      %44 = sbr.rel (0) target = $region37
    $region36: #{forward.1} parent=1 // pred_region
      _
    $region37: #{forward.1} parent=1 // pred_fallthru
      _
    // Predicated region
    $region38: #{forward.1} parent=1 // pred_check
      _
    $region39: #{forward.1} parent=1 // pred_check_branch
      %46 = sbr.rel (0) target = $region41
    $region40: #{forward.1} parent=1 // pred_region
      _
    $region41: #{forward.1} parent=1 // pred_fallthru
      _
    // Predicated region
    $region42: #{forward.1} parent=1 // pred_check
      _
    $region43: #{forward.1} parent=1 // pred_check_branch
      %48 = sbr.rel (0) target = $region45
    $region44: #{forward.1} parent=1 // pred_region
      _
    $region45: #{forward.1} parent=1 // pred_fallthru
      _
    // Predicated region
    $region46: #{forward.1} parent=1 // pred_check
      _
    $region47: #{forward.1} parent=1 // pred_check_branch
      %50 = sbr.rel (0) target = $region49
    $region48: #{forward.1} parent=1 // pred_region
      _
    $region49: #{forward.1} parent=1 // pred_fallthru
      _
    // Predicated region
    $region50: #{forward.1} parent=1 // pred_check
      _
    $region51: #{forward.1} parent=1 // pred_check_branch
      %52 = sbr.rel (0) target = $region53
    $region52: #{forward.1} parent=1 // pred_region
      _
    $region53: #{forward.1} parent=1 // pred_fallthru
      _
    // Predicated region
    $region54: #{forward.1} parent=1 // pred_check
      _
    $region55: #{forward.1} parent=1 // pred_check_branch
      %54 = sbr.rel (0) target = $region57
    $region56: #{forward.1} parent=1 // pred_region
      _
    $region57: #{forward.1} parent=1 // pred_fallthru
      _
    // Predicated region
    $region58: #{forward.1} parent=1 // pred_check
      _
    $region59: #{forward.1} parent=1 // pred_check_branch
      %56 = sbr.rel (0) target = $region61
    $region60: #{forward.1} parent=1 // pred_region
      _
    $region61: #{forward.1} parent=1 // pred_fallthru
      _
    // Predicated region
    $region62: #{forward.1} parent=1 // pred_check
      _
    $region63: #{forward.1} parent=1 // pred_check_branch
      %58 = sbr.rel (0) target = $region65
    $region64: #{forward.1} parent=1 // pred_region
      _
    $region65: #{forward.1} parent=1 // pred_fallthru
      _
    // Predicated region
    $region66: #{forward.1} parent=1 // pred_check
      _
    $region67: #{forward.1} parent=1 // pred_check_branch
      %60 = sbr.rel (0) target = $region69
    $region68: #{forward.1} parent=1 // pred_region
      _
    $region69: #{forward.1} parent=1 // pred_fallthru
      _
    // Predicated region
    $region70: #{forward.1} parent=1 // pred_check
      _
    $region71: #{forward.1} parent=1 // pred_check_branch
      %62 = sbr.rel (0) target = $region73
    $region72: #{forward.1} parent=1 // pred_region
      _
    $region73: #{forward.1} parent=1 // pred_fallthru
      _
    // Predicated region
    $region74: #{forward.1} parent=1 // pred_check
      _
    $region75: #{forward.1} parent=1 // pred_check_branch
      %64 = sbr.rel (0) target = $region77
    $region76: #{forward.1} parent=1 // pred_region
      _
    $region77: #{forward.1} parent=1 // pred_fallthru
      _
    // Predicated region
    $region78: #{forward.1} parent=1 // pred_check
      _
    $region79: #{forward.1} parent=1 // pred_check_branch
      %66 = sbr.rel (0) target = $region81
    $region80: #{forward.1} parent=1 // pred_region
      _
    $region81: #{forward.1} parent=1 // pred_fallthru
      _
    // Predicated region
    $region82: #{forward.1} parent=1 // pred_check
      _
    $region83: #{forward.1} parent=1 // pred_check_branch
      %68 = sbr.rel (0) target = $region85
    $region84: #{forward.1} parent=1 // pred_region
      _
    $region85: #{forward.1} parent=1 // pred_fallthru
      _
    %v70 = vlaneseq
    %v71 = vshrl.u32 %v70, 7
    %v72 = vadd.s32 %v71, 8
    %v73 = vadd.s32 %v71, 16
    %v74 = vadd.s32 %v71, 24
    %v75 = vadd.s32 %v71, 32
    %v76 = vadd.s32 %v71, 40
    %v77 = vadd.s32 %v71, 48
    %v78 = vadd.s32 %v71, 56
    %v79 = vadd.s32 %v71, 64
    %v80 = vadd.s32 %v71, 72
    %v81 = vadd.s32 %v71, 80
    %v82 = vadd.s32 %v71, 88
    %v83 = vadd.s32 %v71, 96
    %v84 = vadd.s32 %v71, 104
    %v85 = vadd.s32 %v71, 112
    %v86 = vadd.s32 %v71, 120
    %vm87 = vcmp.lt.s32.totalorder %v71, 0
    %v88 = vsub.s32 0, %v71
    %v89 = vsel %vm87, %v88, %v71
    %v90 = vshrl.u32 %v89, 6
    %v91 = vand.u32 %v89, 63
    %v92 = vsub.s32 0, %v91
    %v93 = vsel %vm87, %v92, %v91
    %vm94 = vcmp.lt.s32.totalorder %v72, 0
    %v95 = vsub.s32 0, %v72
    %v96 = vsel %vm94, %v95, %v72
    %v97 = vshrl.u32 %v96, 6
    %v98 = vand.u32 %v96, 63
    %v99 = vsub.s32 0, %v98
    %v100 = vsel %vm94, %v99, %v98
    %vm101 = vcmp.lt.s32.totalorder %v73, 0
    %v102 = vsub.s32 0, %v73
    %v103 = vsel %vm101, %v102, %v73
    %v104 = vshrl.u32 %v103, 6
    %v105 = vand.u32 %v103, 63
    %v106 = vsub.s32 0, %v105
    %v107 = vsel %vm101, %v106, %v105
    %vm108 = vcmp.lt.s32.totalorder %v74, 0
    %v109 = vsub.s32 0, %v74
    %v110 = vsel %vm108, %v109, %v74
    %v111 = vshrl.u32 %v110, 6
    %v112 = vand.u32 %v110, 63
    %v113 = vsub.s32 0, %v112
    %v114 = vsel %vm108, %v113, %v112
    %vm115 = vcmp.lt.s32.totalorder %v75, 0
    %v116 = vsub.s32 0, %v75
    %v117 = vsel %vm115, %v116, %v75
    %v118 = vshrl.u32 %v117, 6
    %v119 = vand.u32 %v117, 63
    %v120 = vsub.s32 0, %v119
    %v121 = vsel %vm115, %v120, %v119
    %vm122 = vcmp.lt.s32.totalorder %v76, 0
    %v123 = vsub.s32 0, %v76
    %v124 = vsel %vm122, %v123, %v76
    %v125 = vshrl.u32 %v124, 6
    %v126 = vand.u32 %v124, 63
    %v127 = vsub.s32 0, %v126
    %v128 = vsel %vm122, %v127, %v126
    %vm129 = vcmp.lt.s32.totalorder %v77, 0
    %v130 = vsub.s32 0, %v77
    %v131 = vsel %vm129, %v130, %v77
    %v132 = vshrl.u32 %v131, 6
    %v133 = vand.u32 %v131, 63
    %v134 = vsub.s32 0, %v133
    %v135 = vsel %vm129, %v134, %v133
    %vm136 = vcmp.lt.s32.totalorder %v78, 0
    %v137 = vsub.s32 0, %v78
    %v138 = vsel %vm136, %v137, %v78
    %v139 = vshrl.u32 %v138, 6
    %v140 = vand.u32 %v138, 63
    %v141 = vsub.s32 0, %v140
    %v142 = vsel %vm136, %v141, %v140
    %vm143 = vcmp.lt.s32.totalorder %v79, 0
    %v144 = vsub.s32 0, %v79
    %v145 = vsel %vm143, %v144, %v79
    %v146 = vshrl.u32 %v145, 6
    %v147 = vand.u32 %v145, 63
    %v148 = vsub.s32 0, %v147
    %v149 = vsel %vm143, %v148, %v147
    %vm150 = vcmp.lt.s32.totalorder %v80, 0
    %v151 = vsub.s32 0, %v80
    %v152 = vsel %vm150, %v151, %v80
    %v153 = vshrl.u32 %v152, 6
    %v154 = vand.u32 %v152, 63
    %v155 = vsub.s32 0, %v154
    %v156 = vsel %vm150, %v155, %v154
    %vm157 = vcmp.lt.s32.totalorder %v81, 0
    %v158 = vsub.s32 0, %v81
    %v159 = vsel %vm157, %v158, %v81
    %v160 = vshrl.u32 %v159, 6
    %v161 = vand.u32 %v159, 63
    %v162 = vsub.s32 0, %v161
    %v163 = vsel %vm157, %v162, %v161
    %vm164 = vcmp.lt.s32.totalorder %v82, 0
    %v165 = vsub.s32 0, %v82
    %v166 = vsel %vm164, %v165, %v82
    %v167 = vshrl.u32 %v166, 6
    %v168 = vand.u32 %v166, 63
    %v169 = vsub.s32 0, %v168
    %v170 = vsel %vm164, %v169, %v168
    %vm171 = vcmp.lt.s32.totalorder %v83, 0
    %v172 = vsub.s32 0, %v83
    %v173 = vsel %vm171, %v172, %v83
    %v174 = vshrl.u32 %v173, 6
    %v175 = vand.u32 %v173, 63
    %v176 = vsub.s32 0, %v175
    %v177 = vsel %vm171, %v176, %v175
    %vm178 = vcmp.lt.s32.totalorder %v84, 0
    %v179 = vsub.s32 0, %v84
    %v180 = vsel %vm178, %v179, %v84
    %v181 = vshrl.u32 %v180, 6
    %v182 = vand.u32 %v180, 63
    %v183 = vsub.s32 0, %v182
    %v184 = vsel %vm178, %v183, %v182
    %vm185 = vcmp.lt.s32.totalorder %v85, 0
    %v186 = vsub.s32 0, %v85
    %v187 = vsel %vm185, %v186, %v85
    %v188 = vshrl.u32 %v187, 6
    %v189 = vand.u32 %v187, 63
    %v190 = vsub.s32 0, %v189
    %v191 = vsel %vm185, %v190, %v189
    %vm192 = vcmp.lt.s32.totalorder %v86, 0
    %v193 = vsub.s32 0, %v86
    %v194 = vsel %vm192, %v193, %v86
    %v195 = vshrl.u32 %v194, 6
    %v196 = vand.u32 %v194, 63
    %v197 = vsub.s32 0, %v196
    %v198 = vsel %vm192, %v197, %v196
    %vm199 = vcmp.ne.s32.totalorder %v93, 0
    %vm200 = vcmp.ne.s32.totalorder %v100, 0
    %vm201 = vcmp.ne.s32.totalorder %v107, 0
    %vm202 = vcmp.ne.s32.totalorder %v114, 0
    %vm203 = vcmp.ne.s32.totalorder %v121, 0
    %vm204 = vcmp.ne.s32.totalorder %v128, 0
    %vm205 = vcmp.ne.s32.totalorder %v135, 0
    %vm206 = vcmp.ne.s32.totalorder %v142, 0
    %vm207 = vcmp.ne.s32.totalorder %v149, 0
    %vm208 = vcmp.ne.s32.totalorder %v156, 0
    %vm209 = vcmp.ne.s32.totalorder %v163, 0
    %vm210 = vcmp.ne.s32.totalorder %v170, 0
    %vm211 = vcmp.ne.s32.totalorder %v177, 0
    %vm212 = vcmp.ne.s32.totalorder %v184, 0
    %vm213 = vcmp.ne.s32.totalorder %v191, 0
    %vm214 = vcmp.ne.s32.totalorder %v198, 0
    %vm215 = vcmp.lt.s32.totalorder %v93, 0
    %vm216 = vcmp.lt.s32.totalorder %v100, 0
    %vm217 = vcmp.lt.s32.totalorder %v107, 0
    %vm218 = vcmp.lt.s32.totalorder %v114, 0
    %vm219 = vcmp.lt.s32.totalorder %v121, 0
    %vm220 = vcmp.lt.s32.totalorder %v128, 0
    %vm221 = vcmp.lt.s32.totalorder %v135, 0
    %vm222 = vcmp.lt.s32.totalorder %v142, 0
    %vm223 = vcmp.lt.s32.totalorder %v149, 0
    %vm224 = vcmp.lt.s32.totalorder %v156, 0
    %vm225 = vcmp.lt.s32.totalorder %v163, 0
    %vm226 = vcmp.lt.s32.totalorder %v170, 0
    %vm227 = vcmp.lt.s32.totalorder %v177, 0
    %vm228 = vcmp.lt.s32.totalorder %v184, 0
    %vm229 = vcmp.lt.s32.totalorder %v191, 0
    %vm230 = vcmp.lt.s32.totalorder %v198, 0
    %vm231 = vmand %vm215, %vm199
    %vm232 = vmand %vm216, %vm200
    %vm233 = vmand %vm217, %vm201
    %vm234 = vmand %vm218, %vm202
    %vm235 = vmand %vm219, %vm203
    %vm236 = vmand %vm220, %vm204
    %vm237 = vmand %vm221, %vm205
    %vm238 = vmand %vm222, %vm206
    %vm239 = vmand %vm223, %vm207
    %vm240 = vmand %vm224, %vm208
    %vm241 = vmand %vm225, %vm209
    %vm242 = vmand %vm226, %vm210
    %vm243 = vmand %vm227, %vm211
    %vm244 = vmand %vm228, %vm212
    %vm245 = vmand %vm229, %vm213
    %vm246 = vmand %vm230, %vm214
    %v247 = vadd.s32 %v93, 64
    %v248 = vadd.s32 %v100, 64
    %v249 = vadd.s32 %v107, 64
    %v250 = vadd.s32 %v114, 64
    %v251 = vadd.s32 %v121, 64
    %v252 = vadd.s32 %v128, 64
    %v253 = vadd.s32 %v135, 64
    %v254 = vadd.s32 %v142, 64
    %v255 = vadd.s32 %v149, 64
    %v256 = vadd.s32 %v156, 64
    %v257 = vadd.s32 %v163, 64
    %v258 = vadd.s32 %v170, 64
    %v259 = vadd.s32 %v177, 64
    %v260 = vadd.s32 %v184, 64
    %v261 = vadd.s32 %v191, 64
    %v262 = vadd.s32 %v198, 64
    %v263 = vsel %vm231, %v247, %v93
    %v264 = vsel %vm232, %v248, %v100
    %v265 = vsel %vm233, %v249, %v107
    %v266 = vsel %vm234, %v250, %v114
    %v267 = vsel %vm235, %v251, %v121
    %v268 = vsel %vm236, %v252, %v128
    %v269 = vsel %vm237, %v253, %v135
    %v270 = vsel %vm238, %v254, %v142
    %v271 = vsel %vm239, %v255, %v149
    %v272 = vsel %vm240, %v256, %v156
    %v273 = vsel %vm241, %v257, %v163
    %v274 = vsel %vm242, %v258, %v170
    %v275 = vsel %vm243, %v259, %v177
    %v276 = vsel %vm244, %v260, %v184
    %v277 = vsel %vm245, %v261, %v191
    %v278 = vsel %vm246, %v262, %v198
    %vm279 = vcmp.lt.s32.totalorder %v71, 0
    %v280 = vsub.s32 0, %v71
    %v281 = vsel %vm279, %v280, %v71
    %v282 = vshrl.u32 %v281, 3
    %v283 = vand.u32 %v281, 7
    %v284 = vsub.s32 0, %v283
    %v285 = vsel %vm279, %v284, %v283
    %vm286 = vcmp.lt.s32.totalorder %v72, 0
    %v287 = vsub.s32 0, %v72
    %v288 = vsel %vm286, %v287, %v72
    %v289 = vshrl.u32 %v288, 3
    %v290 = vand.u32 %v288, 7
    %v291 = vsub.s32 0, %v290
    %v292 = vsel %vm286, %v291, %v290
    %vm293 = vcmp.lt.s32.totalorder %v73, 0
    %v294 = vsub.s32 0, %v73
    %v295 = vsel %vm293, %v294, %v73
    %v296 = vshrl.u32 %v295, 3
    %v297 = vand.u32 %v295, 7
    %v298 = vsub.s32 0, %v297
    %v299 = vsel %vm293, %v298, %v297
    %vm300 = vcmp.lt.s32.totalorder %v74, 0
    %v301 = vsub.s32 0, %v74
    %v302 = vsel %vm300, %v301, %v74
    %v303 = vshrl.u32 %v302, 3
    %v304 = vand.u32 %v302, 7
    %v305 = vsub.s32 0, %v304
    %v306 = vsel %vm300, %v305, %v304
    %vm307 = vcmp.lt.s32.totalorder %v75, 0
    %v308 = vsub.s32 0, %v75
    %v309 = vsel %vm307, %v308, %v75
    %v310 = vshrl.u32 %v309, 3
    %v311 = vand.u32 %v309, 7
    %v312 = vsub.s32 0, %v311
    %v313 = vsel %vm307, %v312, %v311
    %vm314 = vcmp.lt.s32.totalorder %v76, 0
    %v315 = vsub.s32 0, %v76
    %v316 = vsel %vm314, %v315, %v76
    %v317 = vshrl.u32 %v316, 3
    %v318 = vand.u32 %v316, 7
    %v319 = vsub.s32 0, %v318
    %v320 = vsel %vm314, %v319, %v318
    %vm321 = vcmp.lt.s32.totalorder %v77, 0
    %v322 = vsub.s32 0, %v77
    %v323 = vsel %vm321, %v322, %v77
    %v324 = vshrl.u32 %v323, 3
    %v325 = vand.u32 %v323, 7
    %v326 = vsub.s32 0, %v325
    %v327 = vsel %vm321, %v326, %v325
    %vm328 = vcmp.lt.s32.totalorder %v78, 0
    %v329 = vsub.s32 0, %v78
    %v330 = vsel %vm328, %v329, %v78
    %v331 = vshrl.u32 %v330, 3
    %v332 = vand.u32 %v330, 7
    %v333 = vsub.s32 0, %v332
    %v334 = vsel %vm328, %v333, %v332
    %vm335 = vcmp.lt.s32.totalorder %v79, 0
    %v336 = vsub.s32 0, %v79
    %v337 = vsel %vm335, %v336, %v79
    %v338 = vshrl.u32 %v337, 3
    %v339 = vand.u32 %v337, 7
    %v340 = vsub.s32 0, %v339
    %v341 = vsel %vm335, %v340, %v339
    %vm342 = vcmp.lt.s32.totalorder %v80, 0
    %v343 = vsub.s32 0, %v80
    %v344 = vsel %vm342, %v343, %v80
    %v345 = vshrl.u32 %v344, 3
    %v346 = vand.u32 %v344, 7
    %v347 = vsub.s32 0, %v346
    %v348 = vsel %vm342, %v347, %v346
    %vm349 = vcmp.lt.s32.totalorder %v81, 0
    %v350 = vsub.s32 0, %v81
    %v351 = vsel %vm349, %v350, %v81
    %v352 = vshrl.u32 %v351, 3
    %v353 = vand.u32 %v351, 7
    %v354 = vsub.s32 0, %v353
    %v355 = vsel %vm349, %v354, %v353
    %vm356 = vcmp.lt.s32.totalorder %v82, 0
    %v357 = vsub.s32 0, %v82
    %v358 = vsel %vm356, %v357, %v82
    %v359 = vshrl.u32 %v358, 3
    %v360 = vand.u32 %v358, 7
    %v361 = vsub.s32 0, %v360
    %v362 = vsel %vm356, %v361, %v360
    %vm363 = vcmp.lt.s32.totalorder %v83, 0
    %v364 = vsub.s32 0, %v83
    %v365 = vsel %vm363, %v364, %v83
    %v366 = vshrl.u32 %v365, 3
    %v367 = vand.u32 %v365, 7
    %v368 = vsub.s32 0, %v367
    %v369 = vsel %vm363, %v368, %v367
    %vm370 = vcmp.lt.s32.totalorder %v84, 0
    %v371 = vsub.s32 0, %v84
    %v372 = vsel %vm370, %v371, %v84
    %v373 = vshrl.u32 %v372, 3
    %v374 = vand.u32 %v372, 7
    %v375 = vsub.s32 0, %v374
    %v376 = vsel %vm370, %v375, %v374
    %vm377 = vcmp.lt.s32.totalorder %v85, 0
    %v378 = vsub.s32 0, %v85
    %v379 = vsel %vm377, %v378, %v85
    %v380 = vshrl.u32 %v379, 3
    %v381 = vand.u32 %v379, 7
    %v382 = vsub.s32 0, %v381
    %v383 = vsel %vm377, %v382, %v381
    %vm384 = vcmp.lt.s32.totalorder %v86, 0
    %v385 = vsub.s32 0, %v86
    %v386 = vsel %vm384, %v385, %v86
    %v387 = vshrl.u32 %v386, 3
    %v388 = vand.u32 %v386, 7
    %v389 = vsub.s32 0, %v388
    %v390 = vsel %vm384, %v389, %v388
    %vm391 = vcmp.ne.s32.totalorder %v285, 0
    %vm392 = vcmp.ne.s32.totalorder %v292, 0
    %vm393 = vcmp.ne.s32.totalorder %v299, 0
    %vm394 = vcmp.ne.s32.totalorder %v306, 0
    %vm395 = vcmp.ne.s32.totalorder %v313, 0
    %vm396 = vcmp.ne.s32.totalorder %v320, 0
    %vm397 = vcmp.ne.s32.totalorder %v327, 0
    %vm398 = vcmp.ne.s32.totalorder %v334, 0
    %vm399 = vcmp.ne.s32.totalorder %v341, 0
    %vm400 = vcmp.ne.s32.totalorder %v348, 0
    %vm401 = vcmp.ne.s32.totalorder %v355, 0
    %vm402 = vcmp.ne.s32.totalorder %v362, 0
    %vm403 = vcmp.ne.s32.totalorder %v369, 0
    %vm404 = vcmp.ne.s32.totalorder %v376, 0
    %vm405 = vcmp.ne.s32.totalorder %v383, 0
    %vm406 = vcmp.ne.s32.totalorder %v390, 0
    %vm407 = vcmp.lt.s32.totalorder %v285, 0
    %vm408 = vcmp.lt.s32.totalorder %v292, 0
    %vm409 = vcmp.lt.s32.totalorder %v299, 0
    %vm410 = vcmp.lt.s32.totalorder %v306, 0
    %vm411 = vcmp.lt.s32.totalorder %v313, 0
    %vm412 = vcmp.lt.s32.totalorder %v320, 0
    %vm413 = vcmp.lt.s32.totalorder %v327, 0
    %vm414 = vcmp.lt.s32.totalorder %v334, 0
    %vm415 = vcmp.lt.s32.totalorder %v341, 0
    %vm416 = vcmp.lt.s32.totalorder %v348, 0
    %vm417 = vcmp.lt.s32.totalorder %v355, 0
    %vm418 = vcmp.lt.s32.totalorder %v362, 0
    %vm419 = vcmp.lt.s32.totalorder %v369, 0
    %vm420 = vcmp.lt.s32.totalorder %v376, 0
    %vm421 = vcmp.lt.s32.totalorder %v383, 0
    %vm422 = vcmp.lt.s32.totalorder %v390, 0
    %vm423 = vmand %vm407, %vm391
    %vm424 = vmand %vm408, %vm392
    %vm425 = vmand %vm409, %vm393
    %vm426 = vmand %vm410, %vm394
    %vm427 = vmand %vm411, %vm395
    %vm428 = vmand %vm412, %vm396
    %vm429 = vmand %vm413, %vm397
    %vm430 = vmand %vm414, %vm398
    %vm431 = vmand %vm415, %vm399
    %vm432 = vmand %vm416, %vm400
    %vm433 = vmand %vm417, %vm401
    %vm434 = vmand %vm418, %vm402
    %vm435 = vmand %vm419, %vm403
    %vm436 = vmand %vm420, %vm404
    %vm437 = vmand %vm421, %vm405
    %vm438 = vmand %vm422, %vm406
    %v439 = vadd.s32 %v285, 8
    %v440 = vadd.s32 %v292, 8
    %v441 = vadd.s32 %v299, 8
    %v442 = vadd.s32 %v306, 8
    %v443 = vadd.s32 %v313, 8
    %v444 = vadd.s32 %v320, 8
    %v445 = vadd.s32 %v327, 8
    %v446 = vadd.s32 %v334, 8
    %v447 = vadd.s32 %v341, 8
    %v448 = vadd.s32 %v348, 8
    %v449 = vadd.s32 %v355, 8
    %v450 = vadd.s32 %v362, 8
    %v451 = vadd.s32 %v369, 8
    %v452 = vadd.s32 %v376, 8
    %v453 = vadd.s32 %v383, 8
    %v454 = vadd.s32 %v390, 8
    %v455 = vsel %vm423, %v439, %v285
    %v456 = vsel %vm424, %v440, %v292
    %v457 = vsel %vm425, %v441, %v299
    %v458 = vsel %vm426, %v442, %v306
    %v459 = vsel %vm427, %v443, %v313
    %v460 = vsel %vm428, %v444, %v320
    %v461 = vsel %vm429, %v445, %v327
    %v462 = vsel %vm430, %v446, %v334
    %v463 = vsel %vm431, %v447, %v341
    %v464 = vsel %vm432, %v448, %v348
    %v465 = vsel %vm433, %v449, %v355
    %v466 = vsel %vm434, %v450, %v362
    %v467 = vsel %vm435, %v451, %v369
    %v468 = vsel %vm436, %v452, %v376
    %v469 = vsel %vm437, %v453, %v383
    %v470 = vsel %vm438, %v454, %v390
    %vm471 = vcmp.ge.s32.totalorder %v263, 8
    %vm472 = vcmp.ge.s32.totalorder %v264, 8
    %vm473 = vcmp.ge.s32.totalorder %v265, 8
    %vm474 = vcmp.ge.s32.totalorder %v266, 8
    %vm475 = vcmp.ge.s32.totalorder %v267, 8
    %vm476 = vcmp.ge.s32.totalorder %v268, 8
    %vm477 = vcmp.ge.s32.totalorder %v269, 8
    %vm478 = vcmp.ge.s32.totalorder %v270, 8
    %vm479 = vcmp.ge.s32.totalorder %v271, 8
    %vm480 = vcmp.ge.s32.totalorder %v272, 8
    %vm481 = vcmp.ge.s32.totalorder %v273, 8
    %vm482 = vcmp.ge.s32.totalorder %v274, 8
    %vm483 = vcmp.ge.s32.totalorder %v275, 8
    %vm484 = vcmp.ge.s32.totalorder %v276, 8
    %vm485 = vcmp.ge.s32.totalorder %v277, 8
    %vm486 = vcmp.ge.s32.totalorder %v278, 8
    %vm487 = vcmp.lt.s32.totalorder %v263, 56
    %vm488 = vcmp.lt.s32.totalorder %v264, 56
    %vm489 = vcmp.lt.s32.totalorder %v265, 56
    %vm490 = vcmp.lt.s32.totalorder %v266, 56
    %vm491 = vcmp.lt.s32.totalorder %v267, 56
    %vm492 = vcmp.lt.s32.totalorder %v268, 56
    %vm493 = vcmp.lt.s32.totalorder %v269, 56
    %vm494 = vcmp.lt.s32.totalorder %v270, 56
    %vm495 = vcmp.lt.s32.totalorder %v271, 56
    %vm496 = vcmp.lt.s32.totalorder %v272, 56
    %vm497 = vcmp.lt.s32.totalorder %v273, 56
    %vm498 = vcmp.lt.s32.totalorder %v274, 56
    %vm499 = vcmp.lt.s32.totalorder %v275, 56
    %vm500 = vcmp.lt.s32.totalorder %v276, 56
    %vm501 = vcmp.lt.s32.totalorder %v277, 56
    %vm502 = vcmp.lt.s32.totalorder %v278, 56
    %vm503 = vcmp.ge.s32.totalorder %v455, 1
    %vm504 = vcmp.ge.s32.totalorder %v456, 1
    %vm505 = vcmp.ge.s32.totalorder %v457, 1
    %vm506 = vcmp.ge.s32.totalorder %v458, 1
    %vm507 = vcmp.ge.s32.totalorder %v459, 1
    %vm508 = vcmp.ge.s32.totalorder %v460, 1
    %vm509 = vcmp.ge.s32.totalorder %v461, 1
    %vm510 = vcmp.ge.s32.totalorder %v462, 1
    %vm511 = vcmp.ge.s32.totalorder %v463, 1
    %vm512 = vcmp.ge.s32.totalorder %v464, 1
    %vm513 = vcmp.ge.s32.totalorder %v465, 1
    %vm514 = vcmp.ge.s32.totalorder %v466, 1
    %vm515 = vcmp.ge.s32.totalorder %v467, 1
    %vm516 = vcmp.ge.s32.totalorder %v468, 1
    %vm517 = vcmp.ge.s32.totalorder %v469, 1
    %vm518 = vcmp.ge.s32.totalorder %v470, 1
    %vm519 = vcmp.lt.s32.totalorder %v455, 7
    %vm520 = vcmp.lt.s32.totalorder %v456, 7
    %vm521 = vcmp.lt.s32.totalorder %v457, 7
    %vm522 = vcmp.lt.s32.totalorder %v458, 7
    %vm523 = vcmp.lt.s32.totalorder %v459, 7
    %vm524 = vcmp.lt.s32.totalorder %v460, 7
    %vm525 = vcmp.lt.s32.totalorder %v461, 7
    %vm526 = vcmp.lt.s32.totalorder %v462, 7
    %vm527 = vcmp.lt.s32.totalorder %v463, 7
    %vm528 = vcmp.lt.s32.totalorder %v464, 7
    %vm529 = vcmp.lt.s32.totalorder %v465, 7
    %vm530 = vcmp.lt.s32.totalorder %v466, 7
    %vm531 = vcmp.lt.s32.totalorder %v467, 7
    %vm532 = vcmp.lt.s32.totalorder %v468, 7
    %vm533 = vcmp.lt.s32.totalorder %v469, 7
    %vm534 = vcmp.lt.s32.totalorder %v470, 7
    %v535 = vld [vmem:[%s0] sm:$0xf]
    %v536 = vld [vmem:[%s0 + $0x4] sm:$0xf]
    %v537 = vld [vmem:[%s0 + $0x8] sm:$0xf]
    %v538 = vld [vmem:[%s0 + $0xc] sm:$0xf]
    %v539 = vld [vmem:[%s0 + $0x10] sm:$0xf]
    %v540 = vld [vmem:[%s0 + $0x14] sm:$0xf]
    %v541 = vld [vmem:[%s0 + $0x18] sm:$0xf]
    %v542 = vld [vmem:[%s0 + $0x1c] sm:$0xf]
    %v543 = vld [vmem:[%s0 + $0x20] sm:$0xf]
    %v544 = vld [vmem:[%s0 + $0x24] sm:$0xf]
    %v545 = vld [vmem:[%s0 + $0x28] sm:$0xf]
    %v546 = vld [vmem:[%s0 + $0x2c] sm:$0xf]
    %v547 = vld [vmem:[%s0 + $0x30] sm:$0xf]
    %v548 = vld [vmem:[%s0 + $0x34] sm:$0xf]
    %v549 = vld [vmem:[%s0 + $0x38] sm:$0xf]
    %v550 = vld [vmem:[%s0 + $0x3c] sm:$0xf]
    %v551 = vld [vmem:[%s1] sm:$0xf]
    %v552 = vld [vmem:[%s1 + $0x4] sm:$0xf]
    %v553 = vld [vmem:[%s1 + $0x8] sm:$0xf]
    %v554 = vld [vmem:[%s1 + $0xc] sm:$0xf]
    %v555 = vld [vmem:[%s1 + $0x10] sm:$0xf]
    %v556 = vld [vmem:[%s1 + $0x14] sm:$0xf]
    %v557 = vld [vmem:[%s1 + $0x18] sm:$0xf]
    %v558 = vld [vmem:[%s1 + $0x1c] sm:$0xf]
    %v559 = vld [vmem:[%s1 + $0x20] sm:$0xf]
    %v560 = vld [vmem:[%s1 + $0x24] sm:$0xf]
    %v561 = vld [vmem:[%s1 + $0x28] sm:$0xf]
    %v562 = vld [vmem:[%s1 + $0x2c] sm:$0xf]
    %v563 = vld [vmem:[%s1 + $0x30] sm:$0xf]
    %v564 = vld [vmem:[%s1 + $0x34] sm:$0xf]
    %v565 = vld [vmem:[%s1 + $0x38] sm:$0xf]
    %v566 = vld [vmem:[%s1 + $0x3c] sm:$0xf]
    %v567 = vld [vmem:[%s2] sm:$0x1]
    %v568 = vlaneseq
    %v569 = vshrl.u32 %v568, 7
    %v570 = vsub.s32 0, %v569
    %v571 = vrot.slane %v567, %v570
    %v588 = vunpack.c.l.b16 %v535
    %v589 = vunpack.c.l.b16 %v536
    %v590 = vunpack.c.l.b16 %v537
    %v591 = vunpack.c.l.b16 %v538
    %v592 = vunpack.c.l.b16 %v539
    %v593 = vunpack.c.l.b16 %v540
    %v594 = vunpack.c.l.b16 %v541
    %v595 = vunpack.c.l.b16 %v542
    %v596 = vunpack.c.l.b16 %v543
    %v597 = vunpack.c.l.b16 %v544
    %v598 = vunpack.c.l.b16 %v545
    %v599 = vunpack.c.l.b16 %v546
    %v600 = vunpack.c.l.b16 %v547
    %v601 = vunpack.c.l.b16 %v548
    %v602 = vunpack.c.l.b16 %v549
    %v603 = vunpack.c.l.b16 %v550
    %v604 = vpack.c.b16 %v589, %v588
    %v605 = vpack.c.b16 %v591, %v590
    %v606 = vpack.c.b16 %v593, %v592
    %v607 = vpack.c.b16 %v595, %v594
    %v608 = vpack.c.b16 %v597, %v596
    %v609 = vpack.c.b16 %v599, %v598
    %v610 = vpack.c.b16 %v601, %v600
    %v611 = vpack.c.b16 %v603, %v602
    %v636 = vunpack.c.l.b16 %v551
    %v637 = vunpack.c.l.b16 %v552
    %v638 = vunpack.c.l.b16 %v553
    %v639 = vunpack.c.l.b16 %v554
    %v640 = vunpack.c.l.b16 %v555
    %v641 = vunpack.c.l.b16 %v556
    %v642 = vunpack.c.l.b16 %v557
    %v643 = vunpack.c.l.b16 %v558
    %v644 = vunpack.c.l.b16 %v559
    %v645 = vunpack.c.l.b16 %v560
    %v646 = vunpack.c.l.b16 %v561
    %v647 = vunpack.c.l.b16 %v562
    %v648 = vunpack.c.l.b16 %v563
    %v649 = vunpack.c.l.b16 %v564
    %v650 = vunpack.c.l.b16 %v565
    %v651 = vunpack.c.l.b16 %v566
    %v652 = vpack.c.b16 %v637, %v636
    %v653 = vpack.c.b16 %v639, %v638
    %v654 = vpack.c.b16 %v641, %v640
    %v655 = vpack.c.b16 %v643, %v642
    %v656 = vpack.c.b16 %v645, %v644
    %v657 = vpack.c.b16 %v647, %v646
    %v658 = vpack.c.b16 %v649, %v648
    %v659 = vpack.c.b16 %v651, %v650
    %668 = vmatprep.subr.bf16.mxu0 0
    %669 = vmatpush1.bf16.msra.mxu0 %v659
    %670 = vmatprep.subr.bf16.mxu0 0
    %671 = vmatpush1.bf16.msra.mxu0 %v658
    %672 = vmatprep.subr.bf16.mxu0 0
    %673 = vmatpush1.bf16.msra.mxu0 %v657
    %674 = vmatprep.subr.bf16.mxu0 0
    %675 = vmatpush1.bf16.msra.mxu0 %v656
    %676 = vmatprep.subr.bf16.mxu0 0
    %677 = vmatpush1.bf16.msra.mxu0 %v655
    %678 = vmatprep.subr.bf16.mxu0 0
    %679 = vmatpush1.bf16.msra.mxu0 %v654
    %680 = vmatprep.subr.bf16.mxu0 0
    %681 = vmatpush1.bf16.msra.mxu0 %v653
    %682 = vmatprep.subr.bf16.mxu0 0
    %683 = vmatpush1.bf16.msra.mxu0 %v652
    %684 = vmatprep.subr.bf16.mxu0 0
    %685 = vmatpush2.bf16.msra.mxu0 0
    %686 = vmatprep.subr.bf16.mxu0 0
    %687 = vmatpush2.bf16.msra.mxu0 0
    %688 = vmatprep.subr.bf16.mxu0 0
    %689 = vmatpush2.bf16.msra.mxu0 0
    %690 = vmatprep.subr.bf16.mxu0 0
    %691 = vmatpush2.bf16.msra.mxu0 0
    %692 = vmatprep.subr.bf16.mxu0 0
    %693 = vmatpush2.bf16.msra.mxu0 0
    %694 = vmatprep.subr.bf16.mxu0 0
    %695 = vmatpush2.bf16.msra.mxu0 0
    %696 = vmatprep.subr.bf16.mxu0 0
    %697 = vmatpush2.bf16.msra.mxu0 0
    %698 = vmatprep.subr.bf16.mxu0 0
    %699 = vmatpush2.bf16.msra.mxu0 0
    %700 = vmatprep.mubr.bf16.mxu0 0
    %701 = vmatmul.mubr.bf16.gmra.mxu0 %v604
    %v702 = vpop.f32.mrf.mxu0
    %v703 = vadd.f32 %v571, %v702
    %v704 = vpop.f32.mrf.mxu0
    %v705 = vpop.f32.mrf.mxu0
    %v706 = vadd.f32 %v571, %v705
    %v707 = vpop.f32.mrf.mxu0
    %708 = vmatprep.mubr.bf16.mxu0 0
    %709 = vmatmul.mubr.bf16.gmra.mxu0 %v605
    %v710 = vpop.f32.mrf.mxu0
    %v711 = vadd.f32 %v571, %v710
    %v712 = vpop.f32.mrf.mxu0
    %v713 = vpop.f32.mrf.mxu0
    %v714 = vadd.f32 %v571, %v713
    %v715 = vpop.f32.mrf.mxu0
    %716 = vmatprep.mubr.bf16.mxu0 0
    %717 = vmatmul.mubr.bf16.gmra.mxu0 %v606
    %v718 = vpop.f32.mrf.mxu0
    %v719 = vadd.f32 %v571, %v718
    %v720 = vpop.f32.mrf.mxu0
    %v721 = vpop.f32.mrf.mxu0
    %v722 = vadd.f32 %v571, %v721
    %v723 = vpop.f32.mrf.mxu0
    %724 = vmatprep.mubr.bf16.mxu0 0
    %725 = vmatmul.mubr.bf16.gmra.mxu0 %v607
    %v726 = vpop.f32.mrf.mxu0
    %v727 = vadd.f32 %v571, %v726
    %v728 = vpop.f32.mrf.mxu0
    %v729 = vpop.f32.mrf.mxu0
    %v730 = vadd.f32 %v571, %v729
    %v731 = vpop.f32.mrf.mxu0
    %732 = vmatprep.mubr.bf16.mxu0 0
    %733 = vmatmul.mubr.bf16.gmra.mxu0 %v608
    %v734 = vpop.f32.mrf.mxu0
    %v735 = vadd.f32 %v571, %v734
    %v736 = vpop.f32.mrf.mxu0
    %v737 = vpop.f32.mrf.mxu0
    %v738 = vadd.f32 %v571, %v737
    %v739 = vpop.f32.mrf.mxu0
    %740 = vmatprep.mubr.bf16.mxu0 0
    %741 = vmatmul.mubr.bf16.gmra.mxu0 %v609
    %v742 = vpop.f32.mrf.mxu0
    %v743 = vadd.f32 %v571, %v742
    %v744 = vpop.f32.mrf.mxu0
    %v745 = vpop.f32.mrf.mxu0
    %v746 = vadd.f32 %v571, %v745
    %v747 = vpop.f32.mrf.mxu0
    %748 = vmatprep.mubr.bf16.mxu0 0
    %749 = vmatmul.mubr.bf16.gmra.mxu0 %v610
    %v750 = vpop.f32.mrf.mxu0
    %v751 = vadd.f32 %v571, %v750
    %v752 = vpop.f32.mrf.mxu0
    %v753 = vpop.f32.mrf.mxu0
    %v754 = vadd.f32 %v571, %v753
    %v755 = vpop.f32.mrf.mxu0
    %756 = vmatprep.mubr.bf16.mxu0 0
    %757 = vmatmul.mubr.bf16.gmra.mxu0 %v611
    %v758 = vpop.f32.mrf.mxu0
    %v759 = vadd.f32 %v571, %v758
    %v760 = vpop.f32.mrf.mxu0
    %v761 = vpop.f32.mrf.mxu0
    %v762 = vadd.f32 %v571, %v761
    %v763 = vpop.f32.mrf.mxu0
    %764 = vdwg.mxu0
    %v765 = vmax.f32 %v703, 0.0
    %v766 = vmax.f32 %v706, 0.0
    %v767 = vmax.f32 %v711, 0.0
    %v768 = vmax.f32 %v714, 0.0
    %v769 = vmax.f32 %v719, 0.0
    %v770 = vmax.f32 %v722, 0.0
    %v771 = vmax.f32 %v727, 0.0
    %v772 = vmax.f32 %v730, 0.0
    %v773 = vmax.f32 %v735, 0.0
    %v774 = vmax.f32 %v738, 0.0
    %v775 = vmax.f32 %v743, 0.0
    %v776 = vmax.f32 %v746, 0.0
    %v777 = vmax.f32 %v751, 0.0
    %v778 = vmax.f32 %v754, 0.0
    %v779 = vmax.f32 %v759, 0.0
    %v780 = vmax.f32 %v762, 0.0
    %v781 = vld [vmem:[%s2 + $0x1] sm:$0x1]
    %v782 = vlaneseq
    %v783 = vshrl.u32 %v782, 7
    %v784 = vsub.s32 0, %v783
    %v785 = vrot.slane %v781, %v784
    %v786 = vmul.f32 %v765, %v785
    %v787 = vmul.f32 %v766, %v785
    %v788 = vmul.f32 %v767, %v785
    %v789 = vmul.f32 %v768, %v785
    %v790 = vmul.f32 %v769, %v785
    %v791 = vmul.f32 %v770, %v785
    %v792 = vmul.f32 %v771, %v785
    %v793 = vmul.f32 %v772, %v785
    %v794 = vmul.f32 %v773, %v785
    %v795 = vmul.f32 %v774, %v785
    %v796 = vmul.f32 %v775, %v785
    %v797 = vmul.f32 %v776, %v785
    %v798 = vmul.f32 %v777, %v785
    %v799 = vmul.f32 %v778, %v785
    %v800 = vmul.f32 %v779, %v785
    %v801 = vmul.f32 %v780, %v785
    %v802 = vld [vmem:[%s2 + $0x2] sm:$0x1]
    %v803 = vlaneseq
    %v804 = vshrl.u32 %v803, 7
    %v805 = vsub.s32 0, %v804
    %v806 = vrot.slane %v802, %v805
    %v807 = vadd.f32 %v786, %v806
    %v808 = vadd.f32 %v787, %v806
    %v809 = vadd.f32 %v788, %v806
    %v810 = vadd.f32 %v789, %v806
    %v811 = vadd.f32 %v790, %v806
    %v812 = vadd.f32 %v791, %v806
    %v813 = vadd.f32 %v792, %v806
    %v814 = vadd.f32 %v793, %v806
    %v815 = vadd.f32 %v794, %v806
    %v816 = vadd.f32 %v795, %v806
    %v817 = vadd.f32 %v796, %v806
    %v818 = vadd.f32 %v797, %v806
    %v819 = vadd.f32 %v798, %v806
    %v820 = vadd.f32 %v799, %v806
    %v821 = vadd.f32 %v800, %v806
    %v822 = vadd.f32 %v801, %v806
    %823 = vst [vmem:[#allocation2] sm:$0xff] %v807
    %824 = vst [vmem:[#allocation2 + $0x20] sm:$0xff] %v808
    %825 = vst [vmem:[#allocation2 + $0x40] sm:$0xff] %v809
    %826 = vst [vmem:[#allocation2 + $0x60] sm:$0xff] %v810
    %827 = vst [vmem:[#allocation2 + $0x80] sm:$0xff] %v811
    %828 = vst [vmem:[#allocation2 + $0xa0] sm:$0xff] %v812
    %829 = vst [vmem:[#allocation2 + $0xc0] sm:$0xff] %v813
    %830 = vst [vmem:[#allocation2 + $0xe0] sm:$0xff] %v814
    %831 = vst [vmem:[#allocation2 + $0x100] sm:$0xff] %v815
    %832 = vst [vmem:[#allocation2 + $0x120] sm:$0xff] %v816
    %833 = vst [vmem:[#allocation2 + $0x140] sm:$0xff] %v817
    %834 = vst [vmem:[#allocation2 + $0x160] sm:$0xff] %v818
    %835 = vst [vmem:[#allocation2 + $0x180] sm:$0xff] %v819
    %836 = vst [vmem:[#allocation2 + $0x1a0] sm:$0xff] %v820
    %837 = vst [vmem:[#allocation2 + $0x1c0] sm:$0xff] %v821
    %838 = vst [vmem:[#allocation2 + $0x1e0] sm:$0xff] %v822
    %v839 = vld [vmem:[%s3] sm:$0xf]
    %v840 = vld [vmem:[%s3 + $0x4] sm:$0xf]
    %v841 = vld [vmem:[%s3 + $0x8] sm:$0xf]
    %v842 = vld [vmem:[%s3 + $0xc] sm:$0xf]
    %v843 = vld [vmem:[%s3 + $0x10] sm:$0xf]
    %v844 = vld [vmem:[%s3 + $0x14] sm:$0xf]
    %v845 = vld [vmem:[%s3 + $0x18] sm:$0xf]
    %v846 = vld [vmem:[%s3 + $0x1c] sm:$0xf]
    %v847 = vld [vmem:[%s3 + $0x20] sm:$0xf]
    %v848 = vld [vmem:[%s3 + $0x24] sm:$0xf]
    %v849 = vld [vmem:[%s3 + $0x28] sm:$0xf]
    %v850 = vld [vmem:[%s3 + $0x2c] sm:$0xf]
    %v851 = vld [vmem:[%s3 + $0x30] sm:$0xf]
    %v852 = vld [vmem:[%s3 + $0x34] sm:$0xf]
    %v853 = vld [vmem:[%s3 + $0x38] sm:$0xf]
    %v854 = vld [vmem:[%s3 + $0x3c] sm:$0xf]
    %v855 = vld [vmem:[%s4] sm:$0x1]
    %v856 = vlaneseq
    %v857 = vshrl.u32 %v856, 7
    %v858 = vsub.s32 0, %v857
    %v859 = vrot.slane %v855, %v858
    %v876 = vunpack.c.l.b16 %v839
    %v877 = vunpack.c.l.b16 %v840
    %v878 = vunpack.c.l.b16 %v841
    %v879 = vunpack.c.l.b16 %v842
    %v880 = vunpack.c.l.b16 %v843
    %v881 = vunpack.c.l.b16 %v844
    %v882 = vunpack.c.l.b16 %v845
    %v883 = vunpack.c.l.b16 %v846
    %v884 = vunpack.c.l.b16 %v847
    %v885 = vunpack.c.l.b16 %v848
    %v886 = vunpack.c.l.b16 %v849
    %v887 = vunpack.c.l.b16 %v850
    %v888 = vunpack.c.l.b16 %v851
    %v889 = vunpack.c.l.b16 %v852
    %v890 = vunpack.c.l.b16 %v853
    %v891 = vunpack.c.l.b16 %v854
    %v892 = vpack.c.b16 %v877, %v876
    %v893 = vpack.c.b16 %v879, %v878
    %v894 = vpack.c.b16 %v881, %v880
    %v895 = vpack.c.b16 %v883, %v882
    %v896 = vpack.c.b16 %v885, %v884
    %v897 = vpack.c.b16 %v887, %v886
    %v898 = vpack.c.b16 %v889, %v888
    %v899 = vpack.c.b16 %v891, %v890
    %908 = vmatprep.subr.bf16.mxu0 0
    %909 = vmatpush1.bf16.msra.mxu0 %v899
    %910 = vmatprep.subr.bf16.mxu0 0
    %911 = vmatpush1.bf16.msra.mxu0 %v898
    %912 = vmatprep.subr.bf16.mxu0 0
    %913 = vmatpush1.bf16.msra.mxu0 %v897
    %914 = vmatprep.subr.bf16.mxu0 0
    %915 = vmatpush1.bf16.msra.mxu0 %v896
    %916 = vmatprep.subr.bf16.mxu0 0
    %917 = vmatpush1.bf16.msra.mxu0 %v895
    %918 = vmatprep.subr.bf16.mxu0 0
    %919 = vmatpush1.bf16.msra.mxu0 %v894
    %920 = vmatprep.subr.bf16.mxu0 0
    %921 = vmatpush1.bf16.msra.mxu0 %v893
    %922 = vmatprep.subr.bf16.mxu0 0
    %923 = vmatpush1.bf16.msra.mxu0 %v892
    %924 = vmatprep.subr.bf16.mxu0 0
    %925 = vmatpush2.bf16.msra.mxu0 0
    %926 = vmatprep.subr.bf16.mxu0 0
    %927 = vmatpush2.bf16.msra.mxu0 0
    %928 = vmatprep.subr.bf16.mxu0 0
    %929 = vmatpush2.bf16.msra.mxu0 0
    %930 = vmatprep.subr.bf16.mxu0 0
    %931 = vmatpush2.bf16.msra.mxu0 0
    %932 = vmatprep.subr.bf16.mxu0 0
    %933 = vmatpush2.bf16.msra.mxu0 0
    %934 = vmatprep.subr.bf16.mxu0 0
    %935 = vmatpush2.bf16.msra.mxu0 0
    %936 = vmatprep.subr.bf16.mxu0 0
    %937 = vmatpush2.bf16.msra.mxu0 0
    %938 = vmatprep.subr.bf16.mxu0 0
    %939 = vmatpush2.bf16.msra.mxu0 0
    %940 = vmatprep.mubr.bf16.mxu0 0
    %941 = vmatmul.mubr.bf16.gmra.mxu0 %v604
    %v942 = vpop.f32.mrf.mxu0
    %v943 = vadd.f32 %v859, %v942
    %v944 = vpop.f32.mrf.mxu0
    %v945 = vpop.f32.mrf.mxu0
    %v946 = vadd.f32 %v859, %v945
    %v947 = vpop.f32.mrf.mxu0
    %948 = vmatprep.mubr.bf16.mxu0 0
    %949 = vmatmul.mubr.bf16.gmra.mxu0 %v605
    %v950 = vpop.f32.mrf.mxu0
    %v951 = vadd.f32 %v859, %v950
    %v952 = vpop.f32.mrf.mxu0
    %v953 = vpop.f32.mrf.mxu0
    %v954 = vadd.f32 %v859, %v953
    %v955 = vpop.f32.mrf.mxu0
    %956 = vmatprep.mubr.bf16.mxu0 0
    %957 = vmatmul.mubr.bf16.gmra.mxu0 %v606
    %v958 = vpop.f32.mrf.mxu0
    %v959 = vadd.f32 %v859, %v958
    %v960 = vpop.f32.mrf.mxu0
    %v961 = vpop.f32.mrf.mxu0
    %v962 = vadd.f32 %v859, %v961
    %v963 = vpop.f32.mrf.mxu0
    %964 = vmatprep.mubr.bf16.mxu0 0
    %965 = vmatmul.mubr.bf16.gmra.mxu0 %v607
    %v966 = vpop.f32.mrf.mxu0
    %v967 = vadd.f32 %v859, %v966
    %v968 = vpop.f32.mrf.mxu0
    %v969 = vpop.f32.mrf.mxu0
    %v970 = vadd.f32 %v859, %v969
    %v971 = vpop.f32.mrf.mxu0
    %972 = vmatprep.mubr.bf16.mxu0 0
    %973 = vmatmul.mubr.bf16.gmra.mxu0 %v608
    %v974 = vpop.f32.mrf.mxu0
    %v975 = vadd.f32 %v859, %v974
    %v976 = vpop.f32.mrf.mxu0
    %v977 = vpop.f32.mrf.mxu0
    %v978 = vadd.f32 %v859, %v977
    %v979 = vpop.f32.mrf.mxu0
    %980 = vmatprep.mubr.bf16.mxu0 0
    %981 = vmatmul.mubr.bf16.gmra.mxu0 %v609
    %v982 = vpop.f32.mrf.mxu0
    %v983 = vadd.f32 %v859, %v982
    %v984 = vpop.f32.mrf.mxu0
    %v985 = vpop.f32.mrf.mxu0
    %v986 = vadd.f32 %v859, %v985
    %v987 = vpop.f32.mrf.mxu0
    %988 = vmatprep.mubr.bf16.mxu0 0
    %989 = vmatmul.mubr.bf16.gmra.mxu0 %v610
    %v990 = vpop.f32.mrf.mxu0
    %v991 = vadd.f32 %v859, %v990
    %v992 = vpop.f32.mrf.mxu0
    %v993 = vpop.f32.mrf.mxu0
    %v994 = vadd.f32 %v859, %v993
    %v995 = vpop.f32.mrf.mxu0
    %996 = vmatprep.mubr.bf16.mxu0 0
    %997 = vmatmul.mubr.bf16.gmra.mxu0 %v611
    %v998 = vpop.f32.mrf.mxu0
    %v999 = vadd.f32 %v859, %v998
    %v1000 = vpop.f32.mrf.mxu0
    %v1001 = vpop.f32.mrf.mxu0
    %v1002 = vadd.f32 %v859, %v1001
    %v1003 = vpop.f32.mrf.mxu0
    %1004 = vdwg.mxu0
    %v1005 = vmax.f32 %v943, 0.0
    %v1006 = vmax.f32 %v946, 0.0
    %v1007 = vmax.f32 %v951, 0.0
    %v1008 = vmax.f32 %v954, 0.0
    %v1009 = vmax.f32 %v959, 0.0
    %v1010 = vmax.f32 %v962, 0.0
    %v1011 = vmax.f32 %v967, 0.0
    %v1012 = vmax.f32 %v970, 0.0
    %v1013 = vmax.f32 %v975, 0.0
    %v1014 = vmax.f32 %v978, 0.0
    %v1015 = vmax.f32 %v983, 0.0
    %v1016 = vmax.f32 %v986, 0.0
    %v1017 = vmax.f32 %v991, 0.0
    %v1018 = vmax.f32 %v994, 0.0
    %v1019 = vmax.f32 %v999, 0.0
    %v1020 = vmax.f32 %v1002, 0.0
    %v1021 = vld [vmem:[%s4 + $0x1] sm:$0x1]
    %v1022 = vlaneseq
    %v1023 = vshrl.u32 %v1022, 7
    %v1024 = vsub.s32 0, %v1023
    %v1025 = vrot.slane %v1021, %v1024
    %v1026 = vmul.f32 %v1005, %v1025
    %v1027 = vmul.f32 %v1006, %v1025
    %v1028 = vmul.f32 %v1007, %v1025
    %v1029 = vmul.f32 %v1008, %v1025
    %v1030 = vmul.f32 %v1009, %v1025
    %v1031 = vmul.f32 %v1010, %v1025
    %v1032 = vmul.f32 %v1011, %v1025
    %v1033 = vmul.f32 %v1012, %v1025
    %v1034 = vmul.f32 %v1013, %v1025
    %v1035 = vmul.f32 %v1014, %v1025
    %v1036 = vmul.f32 %v1015, %v1025
    %v1037 = vmul.f32 %v1016, %v1025
    %v1038 = vmul.f32 %v1017, %v1025
    %v1039 = vmul.f32 %v1018, %v1025
    %v1040 = vmul.f32 %v1019, %v1025
    %v1041 = vmul.f32 %v1020, %v1025
    %v1042 = vld [vmem:[%s4 + $0x2] sm:$0x1]
    %v1043 = vlaneseq
    %v1044 = vshrl.u32 %v1043, 7
    %v1045 = vsub.s32 0, %v1044
    %v1046 = vrot.slane %v1042, %v1045
    %v1047 = vadd.f32 %v1026, %v1046
    %v1048 = vadd.f32 %v1027, %v1046
    %v1049 = vadd.f32 %v1028, %v1046
    %v1050 = vadd.f32 %v1029, %v1046
    %v1051 = vadd.f32 %v1030, %v1046
    %v1052 = vadd.f32 %v1031, %v1046
    %v1053 = vadd.f32 %v1032, %v1046
    %v1054 = vadd.f32 %v1033, %v1046
    %v1055 = vadd.f32 %v1034, %v1046
    %v1056 = vadd.f32 %v1035, %v1046
    %v1057 = vadd.f32 %v1036, %v1046
    %v1058 = vadd.f32 %v1037, %v1046
    %v1059 = vadd.f32 %v1038, %v1046
    %v1060 = vadd.f32 %v1039, %v1046
    %v1061 = vadd.f32 %v1040, %v1046
    %v1062 = vadd.f32 %v1041, %v1046
    %v1063 = vpack.c.bf16 %v1048, %v1047
    %v1064 = vpack.c.bf16 %v1050, %v1049
    %v1065 = vpack.c.bf16 %v1052, %v1051
    %v1066 = vpack.c.bf16 %v1054, %v1053
    %v1067 = vpack.c.bf16 %v1056, %v1055
    %v1068 = vpack.c.bf16 %v1058, %v1057
    %v1069 = vpack.c.bf16 %v1060, %v1059
    %v1070 = vpack.c.bf16 %v1062, %v1061
    %v1071 = vld [vmem:[%s5] sm:$0xf]
    %v1072 = vld [vmem:[%s5 + $0x4] sm:$0xf]
    %v1073 = vld [vmem:[%s5 + $0x8] sm:$0xf]
    %v1074 = vld [vmem:[%s5 + $0xc] sm:$0xf]
    %v1075 = vld [vmem:[%s5 + $0x10] sm:$0xf]
    %v1076 = vld [vmem:[%s5 + $0x14] sm:$0xf]
    %v1077 = vld [vmem:[%s5 + $0x18] sm:$0xf]
    %v1078 = vld [vmem:[%s5 + $0x1c] sm:$0xf]
    %v1079 = vld [vmem:[%s5 + $0x20] sm:$0xf]
    %v1080 = vld [vmem:[%s5 + $0x24] sm:$0xf]
    %v1081 = vld [vmem:[%s5 + $0x28] sm:$0xf]
    %v1082 = vld [vmem:[%s5 + $0x2c] sm:$0xf]
    %v1095 = vunpack.c.l.b16 %v1071
    %v1096 = vunpack.c.l.b16 %v1072
    %v1097 = vunpack.c.l.b16 %v1073
    %v1098 = vunpack.c.l.b16 %v1074
    %v1099 = vunpack.c.l.b16 %v1075
    %v1100 = vunpack.c.l.b16 %v1076
    %v1101 = vunpack.c.l.b16 %v1077
    %v1102 = vunpack.c.l.b16 %v1078
    %v1103 = vunpack.c.l.b16 %v1079
    %v1104 = vunpack.c.l.b16 %v1080
    %v1105 = vunpack.c.l.b16 %v1081
    %v1106 = vunpack.c.l.b16 %v1082
    %v1107 = vpack.c.b16 %v1096, %v1095
    %v1108 = vpack.c.b16 %v1098, %v1097
    %v1109 = vpack.c.b16 %v1100, %v1099
    %v1110 = vpack.c.b16 %v1102, %v1101
    %v1111 = vpack.c.b16 %v1104, %v1103
    %v1112 = vpack.c.b16 %v1106, %v1105
    %vm1119 = vcmask 785408
    %v1121 = vsel %vm1119, %v1063, 0
    %v1124 = vsel %vm1119, %v1064, 0
    %v1127 = vsel %vm1119, %v1065, 0
    %v1130 = vsel %vm1119, %v1066, 0
    %v1133 = vsel %vm1119, %v1067, 0
    %v1136 = vsel %vm1119, %v1068, 0
    %v1139 = vsel %vm1119, %v1069, 0
    %v1142 = vsel %vm1119, %v1070, 0
    %1144 = vmatprep.subr.bf16.mxu0 0
    %1145 = vmatpush1.bf16.msra.mxu0 0
    %1146 = vmatprep.subr.bf16.mxu0 0
    %1147 = vmatpush1.bf16.msra.mxu0 0
    %1148 = vmatprep.subr.bf16.mxu0 0
    %1149 = vmatpush1.bf16.msra.mxu0 %v1112
    %1150 = vmatprep.subr.bf16.mxu0 0
    %1151 = vmatpush1.bf16.msra.mxu0 %v1111
    %1152 = vmatprep.subr.bf16.mxu0 0
    %1153 = vmatpush1.bf16.msra.mxu0 %v1110
    %1154 = vmatprep.subr.bf16.mxu0 0
    %1155 = vmatpush1.bf16.msra.mxu0 %v1109
    %1156 = vmatprep.subr.bf16.mxu0 0
    %1157 = vmatpush1.bf16.msra.mxu0 %v1108
    %1158 = vmatprep.subr.bf16.mxu0 0
    %1159 = vmatpush1.bf16.msra.mxu0 %v1107
    %1160 = vmatprep.subr.bf16.mxu0 0
    %1161 = vmatpush2.bf16.msra.mxu0 0
    %1162 = vmatprep.subr.bf16.mxu0 0
    %1163 = vmatpush2.bf16.msra.mxu0 0
    %1164 = vmatprep.subr.bf16.mxu0 0
    %1165 = vmatpush2.bf16.msra.mxu0 0
    %1166 = vmatprep.subr.bf16.mxu0 0
    %1167 = vmatpush2.bf16.msra.mxu0 0
    %1168 = vmatprep.subr.bf16.mxu0 0
    %1169 = vmatpush2.bf16.msra.mxu0 0
    %1170 = vmatprep.subr.bf16.mxu0 0
    %1171 = vmatpush2.bf16.msra.mxu0 0
    %1172 = vmatprep.subr.bf16.mxu0 0
    %1173 = vmatpush2.bf16.msra.mxu0 0
    %1174 = vmatprep.subr.bf16.mxu0 0
    %1175 = vmatpush2.bf16.msra.mxu0 0
    %1176 = vmatprep.mubr.bf16.mxu0 0
    %1177 = vmatmul.mubr.bf16.gmra.mxu0 %v1121
    %v1178 = vpop.f32.mrf.mxu0
    %v1179 = vadd.f32 0.0, %v1178
    %v1180 = vpop.f32.mrf.mxu0
    %v1181 = vpop.f32.mrf.mxu0
    %v1182 = vadd.f32 0.0, %v1181
    %v1183 = vpop.f32.mrf.mxu0
    %1184 = vmatprep.mubr.bf16.mxu0 0
    %1185 = vmatmul.mubr.bf16.gmra.mxu0 %v1124
    %v1186 = vpop.f32.mrf.mxu0
    %v1187 = vadd.f32 0.0, %v1186
    %v1188 = vpop.f32.mrf.mxu0
    %v1189 = vpop.f32.mrf.mxu0
    %v1190 = vadd.f32 0.0, %v1189
    %v1191 = vpop.f32.mrf.mxu0
    %1192 = vmatprep.mubr.bf16.mxu0 0
    %1193 = vmatmul.mubr.bf16.gmra.mxu0 %v1127
    %v1194 = vpop.f32.mrf.mxu0
    %v1195 = vadd.f32 0.0, %v1194
    %v1196 = vpop.f32.mrf.mxu0
    %v1197 = vpop.f32.mrf.mxu0
    %v1198 = vadd.f32 0.0, %v1197
    %v1199 = vpop.f32.mrf.mxu0
    %1200 = vmatprep.mubr.bf16.mxu0 0
    %1201 = vmatmul.mubr.bf16.gmra.mxu0 %v1130
    %v1202 = vpop.f32.mrf.mxu0
    %v1203 = vadd.f32 0.0, %v1202
    %v1204 = vpop.f32.mrf.mxu0
    %v1205 = vpop.f32.mrf.mxu0
    %v1206 = vadd.f32 0.0, %v1205
    %v1207 = vpop.f32.mrf.mxu0
    %1208 = vmatprep.mubr.bf16.mxu0 0
    %1209 = vmatmul.mubr.bf16.gmra.mxu0 %v1133
    %v1210 = vpop.f32.mrf.mxu0
    %v1211 = vadd.f32 0.0, %v1210
    %v1212 = vpop.f32.mrf.mxu0
    %v1213 = vpop.f32.mrf.mxu0
    %v1214 = vadd.f32 0.0, %v1213
    %v1215 = vpop.f32.mrf.mxu0
    %1216 = vmatprep.mubr.bf16.mxu0 0
    %1217 = vmatmul.mubr.bf16.gmra.mxu0 %v1136
    %v1218 = vpop.f32.mrf.mxu0
    %v1219 = vadd.f32 0.0, %v1218
    %v1220 = vpop.f32.mrf.mxu0
    %v1221 = vpop.f32.mrf.mxu0
    %v1222 = vadd.f32 0.0, %v1221
    %v1223 = vpop.f32.mrf.mxu0
    %1224 = vmatprep.mubr.bf16.mxu0 0
    %1225 = vmatmul.mubr.bf16.gmra.mxu0 %v1139
    %v1226 = vpop.f32.mrf.mxu0
    %v1227 = vadd.f32 0.0, %v1226
    %v1228 = vpop.f32.mrf.mxu0
    %v1229 = vpop.f32.mrf.mxu0
    %v1230 = vadd.f32 0.0, %v1229
    %v1231 = vpop.f32.mrf.mxu0
    %1232 = vmatprep.mubr.bf16.mxu0 0
    %1233 = vmatmul.mubr.bf16.gmra.mxu0 %v1142
    %v1234 = vpop.f32.mrf.mxu0
    %v1235 = vadd.f32 0.0, %v1234
    %v1236 = vpop.f32.mrf.mxu0
    %v1237 = vpop.f32.mrf.mxu0
    %v1238 = vadd.f32 0.0, %v1237
    %v1239 = vpop.f32.mrf.mxu0
    %1240 = vdwg.mxu0
    %v1241 = vld [vmem:[%s5 + $0x30] sm:$0xf]
    %v1242 = vld [vmem:[%s5 + $0x34] sm:$0xf]
    %v1243 = vld [vmem:[%s5 + $0x38] sm:$0xf]
    %v1244 = vld [vmem:[%s5 + $0x3c] sm:$0xf]
    %v1245 = vld [vmem:[%s5 + $0x40] sm:$0xf]
    %v1246 = vld [vmem:[%s5 + $0x44] sm:$0xf]
    %v1247 = vld [vmem:[%s5 + $0x48] sm:$0xf]
    %v1248 = vld [vmem:[%s5 + $0x4c] sm:$0xf]
    %v1249 = vld [vmem:[%s5 + $0x50] sm:$0xf]
    %v1250 = vld [vmem:[%s5 + $0x54] sm:$0xf]
    %v1251 = vld [vmem:[%s5 + $0x58] sm:$0xf]
    %v1252 = vld [vmem:[%s5 + $0x5c] sm:$0xf]
    %v1253 = vld [vmem:[%s5 + $0x60] sm:$0xf]
    %v1254 = vld [vmem:[%s5 + $0x64] sm:$0xf]
    %v1255 = vld [vmem:[%s5 + $0x68] sm:$0xf]
    %v1256 = vld [vmem:[%s5 + $0x6c] sm:$0xf]
    %v1257 = vld [vmem:[%s5 + $0x70] sm:$0xf]
    %v1258 = vld [vmem:[%s5 + $0x74] sm:$0xf]
    %v1259 = vld [vmem:[%s5 + $0x78] sm:$0xf]
    %v1260 = vld [vmem:[%s5 + $0x7c] sm:$0xf]
    %v1261 = vld [vmem:[%s5 + $0x80] sm:$0xf]
    %v1262 = vld [vmem:[%s5 + $0x84] sm:$0xf]
    %v1263 = vld [vmem:[%s5 + $0x88] sm:$0xf]
    %v1264 = vld [vmem:[%s5 + $0x8c] sm:$0xf]
    %v1277 = vunpack.c.l.b16 %v1253
    %v1278 = vunpack.c.l.b16 %v1254
    %v1279 = vunpack.c.l.b16 %v1255
    %v1280 = vunpack.c.l.b16 %v1256
    %v1281 = vunpack.c.l.b16 %v1257
    %v1282 = vunpack.c.l.b16 %v1258
    %v1283 = vunpack.c.l.b16 %v1259
    %v1284 = vunpack.c.l.b16 %v1260
    %v1285 = vunpack.c.l.b16 %v1261
    %v1286 = vunpack.c.l.b16 %v1262
    %v1287 = vunpack.c.l.b16 %v1263
    %v1288 = vunpack.c.l.b16 %v1264
    %v1289 = vpack.c.b16 %v1278, %v1277
    %v1290 = vpack.c.b16 %v1280, %v1279
    %v1291 = vpack.c.b16 %v1282, %v1281
    %v1292 = vpack.c.b16 %v1284, %v1283
    %v1293 = vpack.c.b16 %v1286, %v1285
    %v1294 = vpack.c.b16 %v1288, %v1287
    %1301 = vmatprep.subr.bf16.mxu0 0
    %1302 = vmatpush1.bf16.msra.mxu0 0
    %1303 = vmatprep.subr.bf16.mxu0 0
    %1304 = vmatpush1.bf16.msra.mxu0 0
    %1305 = vmatprep.subr.bf16.mxu0 0
    %1306 = vmatpush1.bf16.msra.mxu0 %v1294
    %1307 = vmatprep.subr.bf16.mxu0 0
    %1308 = vmatpush1.bf16.msra.mxu0 %v1293
    %1309 = vmatprep.subr.bf16.mxu0 0
    %1310 = vmatpush1.bf16.msra.mxu0 %v1292
    %1311 = vmatprep.subr.bf16.mxu0 0
    %1312 = vmatpush1.bf16.msra.mxu0 %v1291
    %1313 = vmatprep.subr.bf16.mxu0 0
    %1314 = vmatpush1.bf16.msra.mxu0 %v1290
    %1315 = vmatprep.subr.bf16.mxu0 0
    %1316 = vmatpush1.bf16.msra.mxu0 %v1289
    %1317 = vmatprep.subr.bf16.mxu0 0
    %1318 = vmatpush2.bf16.msra.mxu0 0
    %1319 = vmatprep.subr.bf16.mxu0 0
    %1320 = vmatpush2.bf16.msra.mxu0 0
    %1321 = vmatprep.subr.bf16.mxu0 0
    %1322 = vmatpush2.bf16.msra.mxu0 0
    %1323 = vmatprep.subr.bf16.mxu0 0
    %1324 = vmatpush2.bf16.msra.mxu0 0
    %1325 = vmatprep.subr.bf16.mxu0 0
    %1326 = vmatpush2.bf16.msra.mxu0 0
    %1327 = vmatprep.subr.bf16.mxu0 0
    %1328 = vmatpush2.bf16.msra.mxu0 0
    %1329 = vmatprep.subr.bf16.mxu0 0
    %1330 = vmatpush2.bf16.msra.mxu0 0
    %1331 = vmatprep.subr.bf16.mxu0 0
    %1332 = vmatpush2.bf16.msra.mxu0 0
    %1333 = vmatprep.mubr.bf16.mxu0 0
    %1334 = vmatmul.mubr.bf16.gmra.mxu0 %v1121
    %v1335 = vpop.f32.mrf.mxu0
    %v1336 = vadd.f32 0.0, %v1335
    %v1337 = vpop.f32.mrf.mxu0
    %v1338 = vpop.f32.mrf.mxu0
    %v1339 = vadd.f32 0.0, %v1338
    %v1340 = vpop.f32.mrf.mxu0
    %1341 = vmatprep.mubr.bf16.mxu0 0
    %1342 = vmatmul.mubr.bf16.gmra.mxu0 %v1124
    %v1343 = vpop.f32.mrf.mxu0
    %v1344 = vadd.f32 0.0, %v1343
    %v1345 = vpop.f32.mrf.mxu0
    %v1346 = vpop.f32.mrf.mxu0
    %v1347 = vadd.f32 0.0, %v1346
    %v1348 = vpop.f32.mrf.mxu0
    %1349 = vmatprep.mubr.bf16.mxu0 0
    %1350 = vmatmul.mubr.bf16.gmra.mxu0 %v1127
    %v1351 = vpop.f32.mrf.mxu0
    %v1352 = vadd.f32 0.0, %v1351
    %v1353 = vpop.f32.mrf.mxu0
    %v1354 = vpop.f32.mrf.mxu0
    %v1355 = vadd.f32 0.0, %v1354
    %v1356 = vpop.f32.mrf.mxu0
    %1357 = vmatprep.mubr.bf16.mxu0 0
    %1358 = vmatmul.mubr.bf16.gmra.mxu0 %v1130
    %v1359 = vpop.f32.mrf.mxu0
    %v1360 = vadd.f32 0.0, %v1359
    %v1361 = vpop.f32.mrf.mxu0
    %v1362 = vpop.f32.mrf.mxu0
    %v1363 = vadd.f32 0.0, %v1362
    %v1364 = vpop.f32.mrf.mxu0
    %1365 = vmatprep.mubr.bf16.mxu0 0
    %1366 = vmatmul.mubr.bf16.gmra.mxu0 %v1133
    %v1367 = vpop.f32.mrf.mxu0
    %v1368 = vadd.f32 0.0, %v1367
    %v1369 = vpop.f32.mrf.mxu0
    %v1370 = vpop.f32.mrf.mxu0
    %v1371 = vadd.f32 0.0, %v1370
    %v1372 = vpop.f32.mrf.mxu0
    %1373 = vmatprep.mubr.bf16.mxu0 0
    %1374 = vmatmul.mubr.bf16.gmra.mxu0 %v1136
    %v1375 = vpop.f32.mrf.mxu0
    %v1376 = vadd.f32 0.0, %v1375
    %v1377 = vpop.f32.mrf.mxu0
    %v1378 = vpop.f32.mrf.mxu0
    %v1379 = vadd.f32 0.0, %v1378
    %v1380 = vpop.f32.mrf.mxu0
    %1381 = vmatprep.mubr.bf16.mxu0 0
    %1382 = vmatmul.mubr.bf16.gmra.mxu0 %v1139
    %v1383 = vpop.f32.mrf.mxu0
    %v1384 = vadd.f32 0.0, %v1383
    %v1385 = vpop.f32.mrf.mxu0
    %v1386 = vpop.f32.mrf.mxu0
    %v1387 = vadd.f32 0.0, %v1386
    %v1388 = vpop.f32.mrf.mxu0
    %1389 = vmatprep.mubr.bf16.mxu0 0
    %1390 = vmatmul.mubr.bf16.gmra.mxu0 %v1142
    %v1391 = vpop.f32.mrf.mxu0
    %v1392 = vadd.f32 0.0, %v1391
    %v1393 = vpop.f32.mrf.mxu0
    %v1394 = vpop.f32.mrf.mxu0
    %v1395 = vadd.f32 0.0, %v1394
    %v1396 = vpop.f32.mrf.mxu0
    %1397 = vdwg.mxu0
    %v1398 = vsel %vm471, 1, 0
    %v1399 = vsel %vm472, 1, 0
    %v1400 = vsel %vm473, 1, 0
    %v1401 = vsel %vm474, 1, 0
    %v1402 = vsel %vm475, 1, 0
    %v1403 = vsel %vm476, 1, 0
    %v1404 = vsel %vm477, 1, 0
    %v1405 = vsel %vm478, 1, 0
    %v1406 = vsel %vm479, 1, 0
    %v1407 = vsel %vm480, 1, 0
    %v1408 = vsel %vm481, 1, 0
    %v1409 = vsel %vm482, 1, 0
    %v1410 = vsel %vm483, 1, 0
    %v1411 = vsel %vm484, 1, 0
    %v1412 = vsel %vm485, 1, 0
    %v1413 = vsel %vm486, 1, 0
    %vm1414 = vcmp.eq.s32.totalorder %v1398, 1
    %vm1415 = vcmp.eq.s32.totalorder %v1399, 1
    %vm1416 = vcmp.eq.s32.totalorder %v1400, 1
    %vm1417 = vcmp.eq.s32.totalorder %v1401, 1
    %vm1418 = vcmp.eq.s32.totalorder %v1402, 1
    %vm1419 = vcmp.eq.s32.totalorder %v1403, 1
    %vm1420 = vcmp.eq.s32.totalorder %v1404, 1
    %vm1421 = vcmp.eq.s32.totalorder %v1405, 1
    %vm1422 = vcmp.eq.s32.totalorder %v1406, 1
    %vm1423 = vcmp.eq.s32.totalorder %v1407, 1
    %vm1424 = vcmp.eq.s32.totalorder %v1408, 1
    %vm1425 = vcmp.eq.s32.totalorder %v1409, 1
    %vm1426 = vcmp.eq.s32.totalorder %v1410, 1
    %vm1427 = vcmp.eq.s32.totalorder %v1411, 1
    %vm1428 = vcmp.eq.s32.totalorder %v1412, 1
    %vm1429 = vcmp.eq.s32.totalorder %v1413, 1
    %v1430 = vsel %vm1414, %v1238, 0.0
    %v1431 = vsel %vm1415, %v1179, 0.0
    %v1432 = vsel %vm1416, %v1182, 0.0
    %v1433 = vsel %vm1417, %v1187, 0.0
    %v1434 = vsel %vm1418, %v1190, 0.0
    %v1435 = vsel %vm1419, %v1195, 0.0
    %v1436 = vsel %vm1420, %v1198, 0.0
    %v1437 = vsel %vm1421, %v1203, 0.0
    %v1438 = vsel %vm1422, %v1206, 0.0
    %v1439 = vsel %vm1423, %v1211, 0.0
    %v1440 = vsel %vm1424, %v1214, 0.0
    %v1441 = vsel %vm1425, %v1219, 0.0
    %v1442 = vsel %vm1426, %v1222, 0.0
    %v1443 = vsel %vm1427, %v1227, 0.0
    %v1444 = vsel %vm1428, %v1230, 0.0
    %v1445 = vsel %vm1429, %v1235, 0.0
    %v1458 = vunpack.c.l.b16 %v1241
    %v1459 = vunpack.c.l.b16 %v1242
    %v1460 = vunpack.c.l.b16 %v1243
    %v1461 = vunpack.c.l.b16 %v1244
    %v1462 = vunpack.c.l.b16 %v1245
    %v1463 = vunpack.c.l.b16 %v1246
    %v1464 = vunpack.c.l.b16 %v1247
    %v1465 = vunpack.c.l.b16 %v1248
    %v1466 = vunpack.c.l.b16 %v1249
    %v1467 = vunpack.c.l.b16 %v1250
    %v1468 = vunpack.c.l.b16 %v1251
    %v1469 = vunpack.c.l.b16 %v1252
    %v1470 = vpack.c.b16 %v1459, %v1458
    %v1471 = vpack.c.b16 %v1461, %v1460
    %v1472 = vpack.c.b16 %v1463, %v1462
    %v1473 = vpack.c.b16 %v1465, %v1464
    %v1474 = vpack.c.b16 %v1467, %v1466
    %v1475 = vpack.c.b16 %v1469, %v1468
    %1482 = vmatprep.subr.bf16.mxu0 0
    %1483 = vmatpush1.bf16.msra.mxu0 0
    %1484 = vmatprep.subr.bf16.mxu0 0
    %1485 = vmatpush1.bf16.msra.mxu0 0
    %1486 = vmatprep.subr.bf16.mxu0 0
    %1487 = vmatpush1.bf16.msra.mxu0 %v1475
    %1488 = vmatprep.subr.bf16.mxu0 0
    %1489 = vmatpush1.bf16.msra.mxu0 %v1474
    %1490 = vmatprep.subr.bf16.mxu0 0
    %1491 = vmatpush1.bf16.msra.mxu0 %v1473
    %1492 = vmatprep.subr.bf16.mxu0 0
    %1493 = vmatpush1.bf16.msra.mxu0 %v1472
    %1494 = vmatprep.subr.bf16.mxu0 0
    %1495 = vmatpush1.bf16.msra.mxu0 %v1471
    %1496 = vmatprep.subr.bf16.mxu0 0
    %1497 = vmatpush1.bf16.msra.mxu0 %v1470
    %1498 = vmatprep.subr.bf16.mxu0 0
    %1499 = vmatpush2.bf16.msra.mxu0 0
    %1500 = vmatprep.subr.bf16.mxu0 0
    %1501 = vmatpush2.bf16.msra.mxu0 0
    %1502 = vmatprep.subr.bf16.mxu0 0
    %1503 = vmatpush2.bf16.msra.mxu0 0
    %1504 = vmatprep.subr.bf16.mxu0 0
    %1505 = vmatpush2.bf16.msra.mxu0 0
    %1506 = vmatprep.subr.bf16.mxu0 0
    %1507 = vmatpush2.bf16.msra.mxu0 0
    %1508 = vmatprep.subr.bf16.mxu0 0
    %1509 = vmatpush2.bf16.msra.mxu0 0
    %1510 = vmatprep.subr.bf16.mxu0 0
    %1511 = vmatpush2.bf16.msra.mxu0 0
    %1512 = vmatprep.subr.bf16.mxu0 0
    %1513 = vmatpush2.bf16.msra.mxu0 0
    %1514 = vmatprep.mubr.bf16.mxu0 0
    %1515 = vmatmul.mubr.bf16.gmra.mxu0 %v1121
    %v1516 = vpop.f32.mrf.mxu0
    %v1517 = vadd.f32 %v1430, %v1516
    %v1518 = vpop.f32.mrf.mxu0
    %v1519 = vpop.f32.mrf.mxu0
    %v1520 = vadd.f32 %v1431, %v1519
    %v1521 = vpop.f32.mrf.mxu0
    %1522 = vmatprep.mubr.bf16.mxu0 0
    %1523 = vmatmul.mubr.bf16.gmra.mxu0 %v1124
    %v1524 = vpop.f32.mrf.mxu0
    %v1525 = vadd.f32 %v1432, %v1524
    %v1526 = vpop.f32.mrf.mxu0
    %v1527 = vpop.f32.mrf.mxu0
    %v1528 = vadd.f32 %v1433, %v1527
    %v1529 = vpop.f32.mrf.mxu0
    %1530 = vmatprep.mubr.bf16.mxu0 0
    %1531 = vmatmul.mubr.bf16.gmra.mxu0 %v1127
    %v1532 = vpop.f32.mrf.mxu0
    %v1533 = vadd.f32 %v1434, %v1532
    %v1534 = vpop.f32.mrf.mxu0
    %v1535 = vpop.f32.mrf.mxu0
    %v1536 = vadd.f32 %v1435, %v1535
    %v1537 = vpop.f32.mrf.mxu0
    %1538 = vmatprep.mubr.bf16.mxu0 0
    %1539 = vmatmul.mubr.bf16.gmra.mxu0 %v1130
    %v1540 = vpop.f32.mrf.mxu0
    %v1541 = vadd.f32 %v1436, %v1540
    %v1542 = vpop.f32.mrf.mxu0
    %v1543 = vpop.f32.mrf.mxu0
    %v1544 = vadd.f32 %v1437, %v1543
    %v1545 = vpop.f32.mrf.mxu0
    %1546 = vmatprep.mubr.bf16.mxu0 0
    %1547 = vmatmul.mubr.bf16.gmra.mxu0 %v1133
    %v1548 = vpop.f32.mrf.mxu0
    %v1549 = vadd.f32 %v1438, %v1548
    %v1550 = vpop.f32.mrf.mxu0
    %v1551 = vpop.f32.mrf.mxu0
    %v1552 = vadd.f32 %v1439, %v1551
    %v1553 = vpop.f32.mrf.mxu0
    %1554 = vmatprep.mubr.bf16.mxu0 0
    %1555 = vmatmul.mubr.bf16.gmra.mxu0 %v1136
    %v1556 = vpop.f32.mrf.mxu0
    %v1557 = vadd.f32 %v1440, %v1556
    %v1558 = vpop.f32.mrf.mxu0
    %v1559 = vpop.f32.mrf.mxu0
    %v1560 = vadd.f32 %v1441, %v1559
    %v1561 = vpop.f32.mrf.mxu0
    %1562 = vmatprep.mubr.bf16.mxu0 0
    %1563 = vmatmul.mubr.bf16.gmra.mxu0 %v1139
    %v1564 = vpop.f32.mrf.mxu0
    %v1565 = vadd.f32 %v1442, %v1564
    %v1566 = vpop.f32.mrf.mxu0
    %v1567 = vpop.f32.mrf.mxu0
    %v1568 = vadd.f32 %v1443, %v1567
    %v1569 = vpop.f32.mrf.mxu0
    %1570 = vmatprep.mubr.bf16.mxu0 0
    %1571 = vmatmul.mubr.bf16.gmra.mxu0 %v1142
    %v1572 = vpop.f32.mrf.mxu0
    %v1573 = vadd.f32 %v1444, %v1572
    %v1574 = vpop.f32.mrf.mxu0
    %v1575 = vpop.f32.mrf.mxu0
    %v1576 = vadd.f32 %v1445, %v1575
    %v1577 = vpop.f32.mrf.mxu0
    %1578 = vdwg.mxu0
    %v1579 = vsel %vm487, 1, 0
    %v1580 = vsel %vm488, 1, 0
    %v1581 = vsel %vm489, 1, 0
    %v1582 = vsel %vm490, 1, 0
    %v1583 = vsel %vm491, 1, 0
    %v1584 = vsel %vm492, 1, 0
    %v1585 = vsel %vm493, 1, 0
    %v1586 = vsel %vm494, 1, 0
    %v1587 = vsel %vm495, 1, 0
    %v1588 = vsel %vm496, 1, 0
    %v1589 = vsel %vm497, 1, 0
    %v1590 = vsel %vm498, 1, 0
    %v1591 = vsel %vm499, 1, 0
    %v1592 = vsel %vm500, 1, 0
    %v1593 = vsel %vm501, 1, 0
    %v1594 = vsel %vm502, 1, 0
    %vm1595 = vcmp.eq.s32.totalorder %v1579, 1
    %vm1596 = vcmp.eq.s32.totalorder %v1580, 1
    %vm1597 = vcmp.eq.s32.totalorder %v1581, 1
    %vm1598 = vcmp.eq.s32.totalorder %v1582, 1
    %vm1599 = vcmp.eq.s32.totalorder %v1583, 1
    %vm1600 = vcmp.eq.s32.totalorder %v1584, 1
    %vm1601 = vcmp.eq.s32.totalorder %v1585, 1
    %vm1602 = vcmp.eq.s32.totalorder %v1586, 1
    %vm1603 = vcmp.eq.s32.totalorder %v1587, 1
    %vm1604 = vcmp.eq.s32.totalorder %v1588, 1
    %vm1605 = vcmp.eq.s32.totalorder %v1589, 1
    %vm1606 = vcmp.eq.s32.totalorder %v1590, 1
    %vm1607 = vcmp.eq.s32.totalorder %v1591, 1
    %vm1608 = vcmp.eq.s32.totalorder %v1592, 1
    %vm1609 = vcmp.eq.s32.totalorder %v1593, 1
    %vm1610 = vcmp.eq.s32.totalorder %v1594, 1
    %v1611 = vsel %vm1595, %v1339, 0.0
    %v1612 = vsel %vm1596, %v1344, 0.0
    %v1613 = vsel %vm1597, %v1347, 0.0
    %v1614 = vsel %vm1598, %v1352, 0.0
    %v1615 = vsel %vm1599, %v1355, 0.0
    %v1616 = vsel %vm1600, %v1360, 0.0
    %v1617 = vsel %vm1601, %v1363, 0.0
    %v1618 = vsel %vm1602, %v1368, 0.0
    %v1619 = vsel %vm1603, %v1371, 0.0
    %v1620 = vsel %vm1604, %v1376, 0.0
    %v1621 = vsel %vm1605, %v1379, 0.0
    %v1622 = vsel %vm1606, %v1384, 0.0
    %v1623 = vsel %vm1607, %v1387, 0.0
    %v1624 = vsel %vm1608, %v1392, 0.0
    %v1625 = vsel %vm1609, %v1395, 0.0
    %v1626 = vsel %vm1610, %v1336, 0.0
    %v1627 = vadd.f32 %v1517, %v1611
    %v1628 = vadd.f32 %v1520, %v1612
    %v1629 = vadd.f32 %v1525, %v1613
    %v1630 = vadd.f32 %v1528, %v1614
    %v1631 = vadd.f32 %v1533, %v1615
    %v1632 = vadd.f32 %v1536, %v1616
    %v1633 = vadd.f32 %v1541, %v1617
    %v1634 = vadd.f32 %v1544, %v1618
    %v1635 = vadd.f32 %v1549, %v1619
    %v1636 = vadd.f32 %v1552, %v1620
    %v1637 = vadd.f32 %v1557, %v1621
    %v1638 = vadd.f32 %v1560, %v1622
    %v1639 = vadd.f32 %v1565, %v1623
    %v1640 = vadd.f32 %v1568, %v1624
    %v1641 = vadd.f32 %v1573, %v1625
    %v1642 = vadd.f32 %v1576, %v1626
    %v1643 = vld [vmem:[%s6] sm:$0x1]
    %v1644 = vlaneseq
    %v1645 = vshrl.u32 %v1644, 7
    %v1646 = vsub.s32 0, %v1645
    %v1647 = vrot.slane %v1643, %v1646
    %v1648 = vadd.f32 %v1627, %v1647
    %v1649 = vadd.f32 %v1628, %v1647
    %v1650 = vadd.f32 %v1629, %v1647
    %v1651 = vadd.f32 %v1630, %v1647
    %v1652 = vadd.f32 %v1631, %v1647
    %v1653 = vadd.f32 %v1632, %v1647
    %v1654 = vadd.f32 %v1633, %v1647
    %v1655 = vadd.f32 %v1634, %v1647
    %v1656 = vadd.f32 %v1635, %v1647
    %v1657 = vadd.f32 %v1636, %v1647
    %v1658 = vadd.f32 %v1637, %v1647
    %v1659 = vadd.f32 %v1638, %v1647
    %v1660 = vadd.f32 %v1639, %v1647
    %v1661 = vadd.f32 %v1640, %v1647
    %v1662 = vadd.f32 %v1641, %v1647
    %v1663 = vadd.f32 %v1642, %v1647
    %v1664 = vmax.f32 %v1648, 0.0
    %v1665 = vmax.f32 %v1649, 0.0
    %v1666 = vmax.f32 %v1650, 0.0
    %v1667 = vmax.f32 %v1651, 0.0
    %v1668 = vmax.f32 %v1652, 0.0
    %v1669 = vmax.f32 %v1653, 0.0
    %v1670 = vmax.f32 %v1654, 0.0
    %v1671 = vmax.f32 %v1655, 0.0
    %v1672 = vmax.f32 %v1656, 0.0
    %v1673 = vmax.f32 %v1657, 0.0
    %v1674 = vmax.f32 %v1658, 0.0
    %v1675 = vmax.f32 %v1659, 0.0
    %v1676 = vmax.f32 %v1660, 0.0
    %v1677 = vmax.f32 %v1661, 0.0
    %v1678 = vmax.f32 %v1662, 0.0
    %v1679 = vmax.f32 %v1663, 0.0
    %v1680 = vld [vmem:[%s6 + $0x1] sm:$0x1]
    %v1681 = vlaneseq
    %v1682 = vshrl.u32 %v1681, 7
    %v1683 = vsub.s32 0, %v1682
    %v1684 = vrot.slane %v1680, %v1683
    %v1685 = vmul.f32 %v1664, %v1684
    %v1686 = vmul.f32 %v1665, %v1684
    %v1687 = vmul.f32 %v1666, %v1684
    %v1688 = vmul.f32 %v1667, %v1684
    %v1689 = vmul.f32 %v1668, %v1684
    %v1690 = vmul.f32 %v1669, %v1684
    %v1691 = vmul.f32 %v1670, %v1684
    %v1692 = vmul.f32 %v1671, %v1684
    %v1693 = vmul.f32 %v1672, %v1684
    %v1694 = vmul.f32 %v1673, %v1684
    %v1695 = vmul.f32 %v1674, %v1684
    %v1696 = vmul.f32 %v1675, %v1684
    %v1697 = vmul.f32 %v1676, %v1684
    %v1698 = vmul.f32 %v1677, %v1684
    %v1699 = vmul.f32 %v1678, %v1684
    %v1700 = vmul.f32 %v1679, %v1684
    %v1701 = vld [vmem:[%s6 + $0x2] sm:$0x1]
    %v1702 = vlaneseq
    %v1703 = vshrl.u32 %v1702, 7
    %v1704 = vsub.s32 0, %v1703
    %v1705 = vrot.slane %v1701, %v1704
    %v1706 = vadd.f32 %v1685, %v1705
    %v1707 = vadd.f32 %v1686, %v1705
    %v1708 = vadd.f32 %v1687, %v1705
    %v1709 = vadd.f32 %v1688, %v1705
    %v1710 = vadd.f32 %v1689, %v1705
    %v1711 = vadd.f32 %v1690, %v1705
    %v1712 = vadd.f32 %v1691, %v1705
    %v1713 = vadd.f32 %v1692, %v1705
    %v1714 = vadd.f32 %v1693, %v1705
    %v1715 = vadd.f32 %v1694, %v1705
    %v1716 = vadd.f32 %v1695, %v1705
    %v1717 = vadd.f32 %v1696, %v1705
    %v1718 = vadd.f32 %v1697, %v1705
    %v1719 = vadd.f32 %v1698, %v1705
    %v1720 = vadd.f32 %v1699, %v1705
    %v1721 = vadd.f32 %v1700, %v1705
    %v1722 = vpack.c.bf16 %v1707, %v1706
    %v1723 = vpack.c.bf16 %v1709, %v1708
    %v1724 = vpack.c.bf16 %v1711, %v1710
    %v1725 = vpack.c.bf16 %v1713, %v1712
    %v1726 = vpack.c.bf16 %v1715, %v1714
    %v1727 = vpack.c.bf16 %v1717, %v1716
    %v1728 = vpack.c.bf16 %v1719, %v1718
    %v1729 = vpack.c.bf16 %v1721, %v1720
    %v1730 = vld [vmem:[%s7] sm:$0xf]
    %v1731 = vld [vmem:[%s7 + $0x4] sm:$0xf]
    %v1732 = vld [vmem:[%s7 + $0x8] sm:$0xf]
    %v1733 = vld [vmem:[%s7 + $0xc] sm:$0xf]
    %v1734 = vld [vmem:[%s7 + $0x10] sm:$0xf]
    %v1735 = vld [vmem:[%s7 + $0x14] sm:$0xf]
    %v1736 = vld [vmem:[%s7 + $0x18] sm:$0xf]
    %v1737 = vld [vmem:[%s7 + $0x1c] sm:$0xf]
    %v1738 = vld [vmem:[%s7 + $0x20] sm:$0xf]
    %v1739 = vld [vmem:[%s7 + $0x24] sm:$0xf]
    %v1740 = vld [vmem:[%s7 + $0x28] sm:$0xf]
    %v1741 = vld [vmem:[%s7 + $0x2c] sm:$0xf]
    %v1742 = vld [vmem:[%s7 + $0x30] sm:$0xf]
    %v1743 = vld [vmem:[%s7 + $0x34] sm:$0xf]
    %v1744 = vld [vmem:[%s7 + $0x38] sm:$0xf]
    %v1745 = vld [vmem:[%s7 + $0x3c] sm:$0xf]
    %v1762 = vunpack.c.l.b16 %v1730
    %v1763 = vunpack.c.l.b16 %v1731
    %v1764 = vunpack.c.l.b16 %v1732
    %v1765 = vunpack.c.l.b16 %v1733
    %v1766 = vunpack.c.l.b16 %v1734
    %v1767 = vunpack.c.l.b16 %v1735
    %v1768 = vunpack.c.l.b16 %v1736
    %v1769 = vunpack.c.l.b16 %v1737
    %v1770 = vunpack.c.l.b16 %v1738
    %v1771 = vunpack.c.l.b16 %v1739
    %v1772 = vunpack.c.l.b16 %v1740
    %v1773 = vunpack.c.l.b16 %v1741
    %v1774 = vunpack.c.l.b16 %v1742
    %v1775 = vunpack.c.l.b16 %v1743
    %v1776 = vunpack.c.l.b16 %v1744
    %v1777 = vunpack.c.l.b16 %v1745
    %v1778 = vpack.c.b16 %v1763, %v1762
    %v1779 = vpack.c.b16 %v1765, %v1764
    %v1780 = vpack.c.b16 %v1767, %v1766
    %v1781 = vpack.c.b16 %v1769, %v1768
    %v1782 = vpack.c.b16 %v1771, %v1770
    %v1783 = vpack.c.b16 %v1773, %v1772
    %v1784 = vpack.c.b16 %v1775, %v1774
    %v1785 = vpack.c.b16 %v1777, %v1776
    %1794 = vmatprep.subr.bf16.mxu0 0
    %1795 = vmatpush1.bf16.msra.mxu0 %v1785
    %1796 = vmatprep.subr.bf16.mxu0 0
    %1797 = vmatpush1.bf16.msra.mxu0 %v1784
    %1798 = vmatprep.subr.bf16.mxu0 0
    %1799 = vmatpush1.bf16.msra.mxu0 %v1783
    %1800 = vmatprep.subr.bf16.mxu0 0
    %1801 = vmatpush1.bf16.msra.mxu0 %v1782
    %1802 = vmatprep.subr.bf16.mxu0 0
    %1803 = vmatpush1.bf16.msra.mxu0 %v1781
    %1804 = vmatprep.subr.bf16.mxu0 0
    %1805 = vmatpush1.bf16.msra.mxu0 %v1780
    %1806 = vmatprep.subr.bf16.mxu0 0
    %1807 = vmatpush1.bf16.msra.mxu0 %v1779
    %1808 = vmatprep.subr.bf16.mxu0 0
    %1809 = vmatpush1.bf16.msra.mxu0 %v1778
    %1810 = vmatprep.subr.bf16.mxu0 0
    %1811 = vmatpush2.bf16.msra.mxu0 0
    %1812 = vmatprep.subr.bf16.mxu0 0
    %1813 = vmatpush2.bf16.msra.mxu0 0
    %1814 = vmatprep.subr.bf16.mxu0 0
    %1815 = vmatpush2.bf16.msra.mxu0 0
    %1816 = vmatprep.subr.bf16.mxu0 0
    %1817 = vmatpush2.bf16.msra.mxu0 0
    %1818 = vmatprep.subr.bf16.mxu0 0
    %1819 = vmatpush2.bf16.msra.mxu0 0
    %1820 = vmatprep.subr.bf16.mxu0 0
    %1821 = vmatpush2.bf16.msra.mxu0 0
    %1822 = vmatprep.subr.bf16.mxu0 0
    %1823 = vmatpush2.bf16.msra.mxu0 0
    %1824 = vmatprep.subr.bf16.mxu0 0
    %1825 = vmatpush2.bf16.msra.mxu0 0
    %1826 = vmatprep.mubr.bf16.mxu0 0
    %1827 = vmatmul.mubr.bf16.gmra.mxu0 %v1722
    %v1828 = vpop.f32.mrf.mxu0
    %v1829 = vadd.f32 0.0, %v1828
    %v1830 = vpop.f32.mrf.mxu0
    %v1831 = vpop.f32.mrf.mxu0
    %v1832 = vadd.f32 0.0, %v1831
    %v1833 = vpop.f32.mrf.mxu0
    %1834 = vmatprep.mubr.bf16.mxu0 0
    %1835 = vmatmul.mubr.bf16.gmra.mxu0 %v1723
    %v1836 = vpop.f32.mrf.mxu0
    %v1837 = vadd.f32 0.0, %v1836
    %v1838 = vpop.f32.mrf.mxu0
    %v1839 = vpop.f32.mrf.mxu0
    %v1840 = vadd.f32 0.0, %v1839
    %v1841 = vpop.f32.mrf.mxu0
    %1842 = vmatprep.mubr.bf16.mxu0 0
    %1843 = vmatmul.mubr.bf16.gmra.mxu0 %v1724
    %v1844 = vpop.f32.mrf.mxu0
    %v1845 = vadd.f32 0.0, %v1844
    %v1846 = vpop.f32.mrf.mxu0
    %v1847 = vpop.f32.mrf.mxu0
    %v1848 = vadd.f32 0.0, %v1847
    %v1849 = vpop.f32.mrf.mxu0
    %1850 = vmatprep.mubr.bf16.mxu0 0
    %1851 = vmatmul.mubr.bf16.gmra.mxu0 %v1725
    %v1852 = vpop.f32.mrf.mxu0
    %v1853 = vadd.f32 0.0, %v1852
    %v1854 = vpop.f32.mrf.mxu0
    %v1855 = vpop.f32.mrf.mxu0
    %v1856 = vadd.f32 0.0, %v1855
    %v1857 = vpop.f32.mrf.mxu0
    %1858 = vmatprep.mubr.bf16.mxu0 0
    %1859 = vmatmul.mubr.bf16.gmra.mxu0 %v1726
    %v1860 = vpop.f32.mrf.mxu0
    %v1861 = vadd.f32 0.0, %v1860
    %v1862 = vpop.f32.mrf.mxu0
    %v1863 = vpop.f32.mrf.mxu0
    %v1864 = vadd.f32 0.0, %v1863
    %v1865 = vpop.f32.mrf.mxu0
    %1866 = vmatprep.mubr.bf16.mxu0 0
    %1867 = vmatmul.mubr.bf16.gmra.mxu0 %v1727
    %v1868 = vpop.f32.mrf.mxu0
    %v1869 = vadd.f32 0.0, %v1868
    %v1870 = vpop.f32.mrf.mxu0
    %v1871 = vpop.f32.mrf.mxu0
    %v1872 = vadd.f32 0.0, %v1871
    %v1873 = vpop.f32.mrf.mxu0
    %1874 = vmatprep.mubr.bf16.mxu0 0
    %1875 = vmatmul.mubr.bf16.gmra.mxu0 %v1728
    %v1876 = vpop.f32.mrf.mxu0
    %v1877 = vadd.f32 0.0, %v1876
    %v1878 = vpop.f32.mrf.mxu0
    %v1879 = vpop.f32.mrf.mxu0
    %v1880 = vadd.f32 0.0, %v1879
    %v1881 = vpop.f32.mrf.mxu0
    %1882 = vmatprep.mubr.bf16.mxu0 0
    %1883 = vmatmul.mubr.bf16.gmra.mxu0 %v1729
    %v1884 = vpop.f32.mrf.mxu0
    %v1885 = vadd.f32 0.0, %v1884
    %v1886 = vpop.f32.mrf.mxu0
    %v1887 = vpop.f32.mrf.mxu0
    %v1888 = vadd.f32 0.0, %v1887
    %v1889 = vpop.f32.mrf.mxu0
    %1890 = vdwg.mxu0
    %v1891 = vld [vmem:[%s7 + $0x40] sm:$0xf]
    %v1892 = vld [vmem:[%s7 + $0x44] sm:$0xf]
    %v1893 = vld [vmem:[%s7 + $0x48] sm:$0xf]
    %v1894 = vld [vmem:[%s7 + $0x4c] sm:$0xf]
    %v1895 = vld [vmem:[%s7 + $0x50] sm:$0xf]
    %v1896 = vld [vmem:[%s7 + $0x54] sm:$0xf]
    %v1897 = vld [vmem:[%s7 + $0x58] sm:$0xf]
    %v1898 = vld [vmem:[%s7 + $0x5c] sm:$0xf]
    %v1899 = vld [vmem:[%s7 + $0x60] sm:$0xf]
    %v1900 = vld [vmem:[%s7 + $0x64] sm:$0xf]
    %v1901 = vld [vmem:[%s7 + $0x68] sm:$0xf]
    %v1902 = vld [vmem:[%s7 + $0x6c] sm:$0xf]
    %v1903 = vld [vmem:[%s7 + $0x70] sm:$0xf]
    %v1904 = vld [vmem:[%s7 + $0x74] sm:$0xf]
    %v1905 = vld [vmem:[%s7 + $0x78] sm:$0xf]
    %v1906 = vld [vmem:[%s7 + $0x7c] sm:$0xf]
    %v1907 = vld [vmem:[%s7 + $0x80] sm:$0xf]
    %v1908 = vld [vmem:[%s7 + $0x84] sm:$0xf]
    %v1909 = vld [vmem:[%s7 + $0x88] sm:$0xf]
    %v1910 = vld [vmem:[%s7 + $0x8c] sm:$0xf]
    %v1911 = vld [vmem:[%s7 + $0x90] sm:$0xf]
    %v1912 = vld [vmem:[%s7 + $0x94] sm:$0xf]
    %v1913 = vld [vmem:[%s7 + $0x98] sm:$0xf]
    %v1914 = vld [vmem:[%s7 + $0x9c] sm:$0xf]
    %v1915 = vld [vmem:[%s7 + $0xa0] sm:$0xf]
    %v1916 = vld [vmem:[%s7 + $0xa4] sm:$0xf]
    %v1917 = vld [vmem:[%s7 + $0xa8] sm:$0xf]
    %v1918 = vld [vmem:[%s7 + $0xac] sm:$0xf]
    %v1919 = vld [vmem:[%s7 + $0xb0] sm:$0xf]
    %v1920 = vld [vmem:[%s7 + $0xb4] sm:$0xf]
    %v1921 = vld [vmem:[%s7 + $0xb8] sm:$0xf]
    %v1922 = vld [vmem:[%s7 + $0xbc] sm:$0xf]
    %v1939 = vunpack.c.l.b16 %v1907
    %v1940 = vunpack.c.l.b16 %v1908
    %v1941 = vunpack.c.l.b16 %v1909
    %v1942 = vunpack.c.l.b16 %v1910
    %v1943 = vunpack.c.l.b16 %v1911
    %v1944 = vunpack.c.l.b16 %v1912
    %v1945 = vunpack.c.l.b16 %v1913
    %v1946 = vunpack.c.l.b16 %v1914
    %v1947 = vunpack.c.l.b16 %v1915
    %v1948 = vunpack.c.l.b16 %v1916
    %v1949 = vunpack.c.l.b16 %v1917
    %v1950 = vunpack.c.l.b16 %v1918
    %v1951 = vunpack.c.l.b16 %v1919
    %v1952 = vunpack.c.l.b16 %v1920
    %v1953 = vunpack.c.l.b16 %v1921
    %v1954 = vunpack.c.l.b16 %v1922
    %v1955 = vpack.c.b16 %v1940, %v1939
    %v1956 = vpack.c.b16 %v1942, %v1941
    %v1957 = vpack.c.b16 %v1944, %v1943
    %v1958 = vpack.c.b16 %v1946, %v1945
    %v1959 = vpack.c.b16 %v1948, %v1947
    %v1960 = vpack.c.b16 %v1950, %v1949
    %v1961 = vpack.c.b16 %v1952, %v1951
    %v1962 = vpack.c.b16 %v1954, %v1953
    %1971 = vmatprep.subr.bf16.mxu0 0
    %1972 = vmatpush1.bf16.msra.mxu0 %v1962
    %1973 = vmatprep.subr.bf16.mxu0 0
    %1974 = vmatpush1.bf16.msra.mxu0 %v1961
    %1975 = vmatprep.subr.bf16.mxu0 0
    %1976 = vmatpush1.bf16.msra.mxu0 %v1960
    %1977 = vmatprep.subr.bf16.mxu0 0
    %1978 = vmatpush1.bf16.msra.mxu0 %v1959
    %1979 = vmatprep.subr.bf16.mxu0 0
    %1980 = vmatpush1.bf16.msra.mxu0 %v1958
    %1981 = vmatprep.subr.bf16.mxu0 0
    %1982 = vmatpush1.bf16.msra.mxu0 %v1957
    %1983 = vmatprep.subr.bf16.mxu0 0
    %1984 = vmatpush1.bf16.msra.mxu0 %v1956
    %1985 = vmatprep.subr.bf16.mxu0 0
    %1986 = vmatpush1.bf16.msra.mxu0 %v1955
    %1987 = vmatprep.subr.bf16.mxu0 0
    %1988 = vmatpush2.bf16.msra.mxu0 0
    %1989 = vmatprep.subr.bf16.mxu0 0
    %1990 = vmatpush2.bf16.msra.mxu0 0
    %1991 = vmatprep.subr.bf16.mxu0 0
    %1992 = vmatpush2.bf16.msra.mxu0 0
    %1993 = vmatprep.subr.bf16.mxu0 0
    %1994 = vmatpush2.bf16.msra.mxu0 0
    %1995 = vmatprep.subr.bf16.mxu0 0
    %1996 = vmatpush2.bf16.msra.mxu0 0
    %1997 = vmatprep.subr.bf16.mxu0 0
    %1998 = vmatpush2.bf16.msra.mxu0 0
    %1999 = vmatprep.subr.bf16.mxu0 0
    %2000 = vmatpush2.bf16.msra.mxu0 0
    %2001 = vmatprep.subr.bf16.mxu0 0
    %2002 = vmatpush2.bf16.msra.mxu0 0
    %2003 = vmatprep.mubr.bf16.mxu0 0
    %2004 = vmatmul.mubr.bf16.gmra.mxu0 %v1722
    %v2005 = vpop.f32.mrf.mxu0
    %v2006 = vadd.f32 0.0, %v2005
    %v2007 = vpop.f32.mrf.mxu0
    %v2008 = vpop.f32.mrf.mxu0
    %v2009 = vadd.f32 0.0, %v2008
    %v2010 = vpop.f32.mrf.mxu0
    %2011 = vmatprep.mubr.bf16.mxu0 0
    %2012 = vmatmul.mubr.bf16.gmra.mxu0 %v1723
    %v2013 = vpop.f32.mrf.mxu0
    %v2014 = vadd.f32 0.0, %v2013
    %v2015 = vpop.f32.mrf.mxu0
    %v2016 = vpop.f32.mrf.mxu0
    %v2017 = vadd.f32 0.0, %v2016
    %v2018 = vpop.f32.mrf.mxu0
    %2019 = vmatprep.mubr.bf16.mxu0 0
    %2020 = vmatmul.mubr.bf16.gmra.mxu0 %v1724
    %v2021 = vpop.f32.mrf.mxu0
    %v2022 = vadd.f32 0.0, %v2021
    %v2023 = vpop.f32.mrf.mxu0
    %v2024 = vpop.f32.mrf.mxu0
    %v2025 = vadd.f32 0.0, %v2024
    %v2026 = vpop.f32.mrf.mxu0
    %2027 = vmatprep.mubr.bf16.mxu0 0
    %2028 = vmatmul.mubr.bf16.gmra.mxu0 %v1725
    %v2029 = vpop.f32.mrf.mxu0
    %v2030 = vadd.f32 0.0, %v2029
    %v2031 = vpop.f32.mrf.mxu0
    %v2032 = vpop.f32.mrf.mxu0
    %v2033 = vadd.f32 0.0, %v2032
    %v2034 = vpop.f32.mrf.mxu0
    %2035 = vmatprep.mubr.bf16.mxu0 0
    %2036 = vmatmul.mubr.bf16.gmra.mxu0 %v1726
    %v2037 = vpop.f32.mrf.mxu0
    %v2038 = vadd.f32 0.0, %v2037
    %v2039 = vpop.f32.mrf.mxu0
    %v2040 = vpop.f32.mrf.mxu0
    %v2041 = vadd.f32 0.0, %v2040
    %v2042 = vpop.f32.mrf.mxu0
    %2043 = vmatprep.mubr.bf16.mxu0 0
    %2044 = vmatmul.mubr.bf16.gmra.mxu0 %v1727
    %v2045 = vpop.f32.mrf.mxu0
    %v2046 = vadd.f32 0.0, %v2045
    %v2047 = vpop.f32.mrf.mxu0
    %v2048 = vpop.f32.mrf.mxu0
    %v2049 = vadd.f32 0.0, %v2048
    %v2050 = vpop.f32.mrf.mxu0
    %2051 = vmatprep.mubr.bf16.mxu0 0
    %2052 = vmatmul.mubr.bf16.gmra.mxu0 %v1728
    %v2053 = vpop.f32.mrf.mxu0
    %v2054 = vadd.f32 0.0, %v2053
    %v2055 = vpop.f32.mrf.mxu0
    %v2056 = vpop.f32.mrf.mxu0
    %v2057 = vadd.f32 0.0, %v2056
    %v2058 = vpop.f32.mrf.mxu0
    %2059 = vmatprep.mubr.bf16.mxu0 0
    %2060 = vmatmul.mubr.bf16.gmra.mxu0 %v1729
    %v2061 = vpop.f32.mrf.mxu0
    %v2062 = vadd.f32 0.0, %v2061
    %v2063 = vpop.f32.mrf.mxu0
    %v2064 = vpop.f32.mrf.mxu0
    %v2065 = vadd.f32 0.0, %v2064
    %v2066 = vpop.f32.mrf.mxu0
    %2067 = vdwg.mxu0
    %v2068 = vrot.slane %v1829, 7
    %v2069 = vrot.slane %v1832, 7
    %v2070 = vrot.slane %v1837, 7
    %v2071 = vrot.slane %v1840, 7
    %v2072 = vrot.slane %v1845, 7
    %v2073 = vrot.slane %v1848, 7
    %v2074 = vrot.slane %v1853, 7
    %v2075 = vrot.slane %v1856, 7
    %v2076 = vrot.slane %v1861, 7
    %v2077 = vrot.slane %v1864, 7
    %v2078 = vrot.slane %v1869, 7
    %v2079 = vrot.slane %v1872, 7
    %v2080 = vrot.slane %v1877, 7
    %v2081 = vrot.slane %v1880, 7
    %v2082 = vrot.slane %v1885, 7
    %v2083 = vrot.slane %v1888, 7
    %vm2084 = vcmp.lt.s32.totalorder %v71, 1
    %v2085 = vsel %vm2084, %v2082, %v2083
    %v2086 = vsel %vm2084, %v2081, %v2082
    %v2087 = vsel %vm2084, %v2080, %v2081
    %v2088 = vsel %vm2084, %v2079, %v2080
    %v2089 = vsel %vm2084, %v2078, %v2079
    %v2090 = vsel %vm2084, %v2077, %v2078
    %v2091 = vsel %vm2084, %v2076, %v2077
    %v2092 = vsel %vm2084, %v2075, %v2076
    %v2093 = vsel %vm2084, %v2074, %v2075
    %v2094 = vsel %vm2084, %v2073, %v2074
    %v2095 = vsel %vm2084, %v2072, %v2073
    %v2096 = vsel %vm2084, %v2071, %v2072
    %v2097 = vsel %vm2084, %v2070, %v2071
    %v2098 = vsel %vm2084, %v2069, %v2070
    %v2099 = vsel %vm2084, %v2068, %v2069
    %v2100 = vsel %vm2084, %v2083, %v2068
    %v2101 = vsel %vm503, 1, 0
    %v2102 = vsel %vm504, 1, 0
    %v2103 = vsel %vm505, 1, 0
    %v2104 = vsel %vm506, 1, 0
    %v2105 = vsel %vm507, 1, 0
    %v2106 = vsel %vm508, 1, 0
    %v2107 = vsel %vm509, 1, 0
    %v2108 = vsel %vm510, 1, 0
    %v2109 = vsel %vm511, 1, 0
    %v2110 = vsel %vm512, 1, 0
    %v2111 = vsel %vm513, 1, 0
    %v2112 = vsel %vm514, 1, 0
    %v2113 = vsel %vm515, 1, 0
    %v2114 = vsel %vm516, 1, 0
    %v2115 = vsel %vm517, 1, 0
    %v2116 = vsel %vm518, 1, 0
    %vm2117 = vcmp.eq.s32.totalorder %v2101, 1
    %vm2118 = vcmp.eq.s32.totalorder %v2102, 1
    %vm2119 = vcmp.eq.s32.totalorder %v2103, 1
    %vm2120 = vcmp.eq.s32.totalorder %v2104, 1
    %vm2121 = vcmp.eq.s32.totalorder %v2105, 1
    %vm2122 = vcmp.eq.s32.totalorder %v2106, 1
    %vm2123 = vcmp.eq.s32.totalorder %v2107, 1
    %vm2124 = vcmp.eq.s32.totalorder %v2108, 1
    %vm2125 = vcmp.eq.s32.totalorder %v2109, 1
    %vm2126 = vcmp.eq.s32.totalorder %v2110, 1
    %vm2127 = vcmp.eq.s32.totalorder %v2111, 1
    %vm2128 = vcmp.eq.s32.totalorder %v2112, 1
    %vm2129 = vcmp.eq.s32.totalorder %v2113, 1
    %vm2130 = vcmp.eq.s32.totalorder %v2114, 1
    %vm2131 = vcmp.eq.s32.totalorder %v2115, 1
    %vm2132 = vcmp.eq.s32.totalorder %v2116, 1
    %v2133 = vsel %vm2117, %v2100, 0.0
    %v2134 = vsel %vm2118, %v2099, 0.0
    %v2135 = vsel %vm2119, %v2098, 0.0
    %v2136 = vsel %vm2120, %v2097, 0.0
    %v2137 = vsel %vm2121, %v2096, 0.0
    %v2138 = vsel %vm2122, %v2095, 0.0
    %v2139 = vsel %vm2123, %v2094, 0.0
    %v2140 = vsel %vm2124, %v2093, 0.0
    %v2141 = vsel %vm2125, %v2092, 0.0
    %v2142 = vsel %vm2126, %v2091, 0.0
    %v2143 = vsel %vm2127, %v2090, 0.0
    %v2144 = vsel %vm2128, %v2089, 0.0
    %v2145 = vsel %vm2129, %v2088, 0.0
    %v2146 = vsel %vm2130, %v2087, 0.0
    %v2147 = vsel %vm2131, %v2086, 0.0
    %v2148 = vsel %vm2132, %v2085, 0.0
    %v2165 = vunpack.c.l.b16 %v1891
    %v2166 = vunpack.c.l.b16 %v1892
    %v2167 = vunpack.c.l.b16 %v1893
    %v2168 = vunpack.c.l.b16 %v1894
    %v2169 = vunpack.c.l.b16 %v1895
    %v2170 = vunpack.c.l.b16 %v1896
    %v2171 = vunpack.c.l.b16 %v1897
    %v2172 = vunpack.c.l.b16 %v1898
    %v2173 = vunpack.c.l.b16 %v1899
    %v2174 = vunpack.c.l.b16 %v1900
    %v2175 = vunpack.c.l.b16 %v1901
    %v2176 = vunpack.c.l.b16 %v1902
    %v2177 = vunpack.c.l.b16 %v1903
    %v2178 = vunpack.c.l.b16 %v1904
    %v2179 = vunpack.c.l.b16 %v1905
    %v2180 = vunpack.c.l.b16 %v1906
    %v2181 = vpack.c.b16 %v2166, %v2165
    %v2182 = vpack.c.b16 %v2168, %v2167
    %v2183 = vpack.c.b16 %v2170, %v2169
    %v2184 = vpack.c.b16 %v2172, %v2171
    %v2185 = vpack.c.b16 %v2174, %v2173
    %v2186 = vpack.c.b16 %v2176, %v2175
    %v2187 = vpack.c.b16 %v2178, %v2177
    %v2188 = vpack.c.b16 %v2180, %v2179
    %2197 = vmatprep.subr.bf16.mxu0 0
    %2198 = vmatpush1.bf16.msra.mxu0 %v2188
    %2199 = vmatprep.subr.bf16.mxu0 0
    %2200 = vmatpush1.bf16.msra.mxu0 %v2187
    %2201 = vmatprep.subr.bf16.mxu0 0
    %2202 = vmatpush1.bf16.msra.mxu0 %v2186
    %2203 = vmatprep.subr.bf16.mxu0 0
    %2204 = vmatpush1.bf16.msra.mxu0 %v2185
    %2205 = vmatprep.subr.bf16.mxu0 0
    %2206 = vmatpush1.bf16.msra.mxu0 %v2184
    %2207 = vmatprep.subr.bf16.mxu0 0
    %2208 = vmatpush1.bf16.msra.mxu0 %v2183
    %2209 = vmatprep.subr.bf16.mxu0 0
    %2210 = vmatpush1.bf16.msra.mxu0 %v2182
    %2211 = vmatprep.subr.bf16.mxu0 0
    %2212 = vmatpush1.bf16.msra.mxu0 %v2181
    %2213 = vmatprep.subr.bf16.mxu0 0
    %2214 = vmatpush2.bf16.msra.mxu0 0
    %2215 = vmatprep.subr.bf16.mxu0 0
    %2216 = vmatpush2.bf16.msra.mxu0 0
    %2217 = vmatprep.subr.bf16.mxu0 0
    %2218 = vmatpush2.bf16.msra.mxu0 0
    %2219 = vmatprep.subr.bf16.mxu0 0
    %2220 = vmatpush2.bf16.msra.mxu0 0
    %2221 = vmatprep.subr.bf16.mxu0 0
    %2222 = vmatpush2.bf16.msra.mxu0 0
    %2223 = vmatprep.subr.bf16.mxu0 0
    %2224 = vmatpush2.bf16.msra.mxu0 0
    %2225 = vmatprep.subr.bf16.mxu0 0
    %2226 = vmatpush2.bf16.msra.mxu0 0
    %2227 = vmatprep.subr.bf16.mxu0 0
    %2228 = vmatpush2.bf16.msra.mxu0 0
    %2229 = vmatprep.mubr.bf16.mxu0 0
    %2230 = vmatmul.mubr.bf16.gmra.mxu0 %v1722
    %v2231 = vpop.f32.mrf.mxu0
    %v2232 = vadd.f32 %v2133, %v2231
    %v2233 = vpop.f32.mrf.mxu0
    %v2234 = vpop.f32.mrf.mxu0
    %v2235 = vadd.f32 %v2134, %v2234
    %v2236 = vpop.f32.mrf.mxu0
    %2237 = vmatprep.mubr.bf16.mxu0 0
    %2238 = vmatmul.mubr.bf16.gmra.mxu0 %v1723
    %v2239 = vpop.f32.mrf.mxu0
    %v2240 = vadd.f32 %v2135, %v2239
    %v2241 = vpop.f32.mrf.mxu0
    %v2242 = vpop.f32.mrf.mxu0
    %v2243 = vadd.f32 %v2136, %v2242
    %v2244 = vpop.f32.mrf.mxu0
    %2245 = vmatprep.mubr.bf16.mxu0 0
    %2246 = vmatmul.mubr.bf16.gmra.mxu0 %v1724
    %v2247 = vpop.f32.mrf.mxu0
    %v2248 = vadd.f32 %v2137, %v2247
    %v2249 = vpop.f32.mrf.mxu0
    %v2250 = vpop.f32.mrf.mxu0
    %v2251 = vadd.f32 %v2138, %v2250
    %v2252 = vpop.f32.mrf.mxu0
    %2253 = vmatprep.mubr.bf16.mxu0 0
    %2254 = vmatmul.mubr.bf16.gmra.mxu0 %v1725
    %v2255 = vpop.f32.mrf.mxu0
    %v2256 = vadd.f32 %v2139, %v2255
    %v2257 = vpop.f32.mrf.mxu0
    %v2258 = vpop.f32.mrf.mxu0
    %v2259 = vadd.f32 %v2140, %v2258
    %v2260 = vpop.f32.mrf.mxu0
    %2261 = vmatprep.mubr.bf16.mxu0 0
    %2262 = vmatmul.mubr.bf16.gmra.mxu0 %v1726
    %v2263 = vpop.f32.mrf.mxu0
    %v2264 = vadd.f32 %v2141, %v2263
    %v2265 = vpop.f32.mrf.mxu0
    %v2266 = vpop.f32.mrf.mxu0
    %v2267 = vadd.f32 %v2142, %v2266
    %v2268 = vpop.f32.mrf.mxu0
    %2269 = vmatprep.mubr.bf16.mxu0 0
    %2270 = vmatmul.mubr.bf16.gmra.mxu0 %v1727
    %v2271 = vpop.f32.mrf.mxu0
    %v2272 = vadd.f32 %v2143, %v2271
    %v2273 = vpop.f32.mrf.mxu0
    %v2274 = vpop.f32.mrf.mxu0
    %v2275 = vadd.f32 %v2144, %v2274
    %v2276 = vpop.f32.mrf.mxu0
    %2277 = vmatprep.mubr.bf16.mxu0 0
    %2278 = vmatmul.mubr.bf16.gmra.mxu0 %v1728
    %v2279 = vpop.f32.mrf.mxu0
    %v2280 = vadd.f32 %v2145, %v2279
    %v2281 = vpop.f32.mrf.mxu0
    %v2282 = vpop.f32.mrf.mxu0
    %v2283 = vadd.f32 %v2146, %v2282
    %v2284 = vpop.f32.mrf.mxu0
    %2285 = vmatprep.mubr.bf16.mxu0 0
    %2286 = vmatmul.mubr.bf16.gmra.mxu0 %v1729
    %v2287 = vpop.f32.mrf.mxu0
    %v2288 = vadd.f32 %v2147, %v2287
    %v2289 = vpop.f32.mrf.mxu0
    %v2290 = vpop.f32.mrf.mxu0
    %v2291 = vadd.f32 %v2148, %v2290
    %v2292 = vpop.f32.mrf.mxu0
    %2293 = vdwg.mxu0
    %v2294 = vrot.slane %v2006, 1
    %v2295 = vrot.slane %v2009, 1
    %v2296 = vrot.slane %v2014, 1
    %v2297 = vrot.slane %v2017, 1
    %v2298 = vrot.slane %v2022, 1
    %v2299 = vrot.slane %v2025, 1
    %v2300 = vrot.slane %v2030, 1
    %v2301 = vrot.slane %v2033, 1
    %v2302 = vrot.slane %v2038, 1
    %v2303 = vrot.slane %v2041, 1
    %v2304 = vrot.slane %v2046, 1
    %v2305 = vrot.slane %v2049, 1
    %v2306 = vrot.slane %v2054, 1
    %v2307 = vrot.slane %v2057, 1
    %v2308 = vrot.slane %v2062, 1
    %v2309 = vrot.slane %v2065, 1
    %vm2310 = vcmp.lt.s32.totalorder %v71, 7
    %v2311 = vsel %vm2310, %v2308, %v2309
    %v2312 = vsel %vm2310, %v2307, %v2308
    %v2313 = vsel %vm2310, %v2306, %v2307
    %v2314 = vsel %vm2310, %v2305, %v2306
    %v2315 = vsel %vm2310, %v2304, %v2305
    %v2316 = vsel %vm2310, %v2303, %v2304
    %v2317 = vsel %vm2310, %v2302, %v2303
    %v2318 = vsel %vm2310, %v2301, %v2302
    %v2319 = vsel %vm2310, %v2300, %v2301
    %v2320 = vsel %vm2310, %v2299, %v2300
    %v2321 = vsel %vm2310, %v2298, %v2299
    %v2322 = vsel %vm2310, %v2297, %v2298
    %v2323 = vsel %vm2310, %v2296, %v2297
    %v2324 = vsel %vm2310, %v2295, %v2296
    %v2325 = vsel %vm2310, %v2294, %v2295
    %v2326 = vsel %vm2310, %v2309, %v2294
    %v2327 = vsel %vm519, 1, 0
    %v2328 = vsel %vm520, 1, 0
    %v2329 = vsel %vm521, 1, 0
    %v2330 = vsel %vm522, 1, 0
    %v2331 = vsel %vm523, 1, 0
    %v2332 = vsel %vm524, 1, 0
    %v2333 = vsel %vm525, 1, 0
    %v2334 = vsel %vm526, 1, 0
    %v2335 = vsel %vm527, 1, 0
    %v2336 = vsel %vm528, 1, 0
    %v2337 = vsel %vm529, 1, 0
    %v2338 = vsel %vm530, 1, 0
    %v2339 = vsel %vm531, 1, 0
    %v2340 = vsel %vm532, 1, 0
    %v2341 = vsel %vm533, 1, 0
    %v2342 = vsel %vm534, 1, 0
    %vm2343 = vcmp.eq.s32.totalorder %v2327, 1
    %vm2344 = vcmp.eq.s32.totalorder %v2328, 1
    %vm2345 = vcmp.eq.s32.totalorder %v2329, 1
    %vm2346 = vcmp.eq.s32.totalorder %v2330, 1
    %vm2347 = vcmp.eq.s32.totalorder %v2331, 1
    %vm2348 = vcmp.eq.s32.totalorder %v2332, 1
    %vm2349 = vcmp.eq.s32.totalorder %v2333, 1
    %vm2350 = vcmp.eq.s32.totalorder %v2334, 1
    %vm2351 = vcmp.eq.s32.totalorder %v2335, 1
    %vm2352 = vcmp.eq.s32.totalorder %v2336, 1
    %vm2353 = vcmp.eq.s32.totalorder %v2337, 1
    %vm2354 = vcmp.eq.s32.totalorder %v2338, 1
    %vm2355 = vcmp.eq.s32.totalorder %v2339, 1
    %vm2356 = vcmp.eq.s32.totalorder %v2340, 1
    %vm2357 = vcmp.eq.s32.totalorder %v2341, 1
    %vm2358 = vcmp.eq.s32.totalorder %v2342, 1
    %v2359 = vsel %vm2343, %v2325, 0.0
    %v2360 = vsel %vm2344, %v2324, 0.0
    %v2361 = vsel %vm2345, %v2323, 0.0
    %v2362 = vsel %vm2346, %v2322, 0.0
    %v2363 = vsel %vm2347, %v2321, 0.0
    %v2364 = vsel %vm2348, %v2320, 0.0
    %v2365 = vsel %vm2349, %v2319, 0.0
    %v2366 = vsel %vm2350, %v2318, 0.0
    %v2367 = vsel %vm2351, %v2317, 0.0
    %v2368 = vsel %vm2352, %v2316, 0.0
    %v2369 = vsel %vm2353, %v2315, 0.0
    %v2370 = vsel %vm2354, %v2314, 0.0
    %v2371 = vsel %vm2355, %v2313, 0.0
    %v2372 = vsel %vm2356, %v2312, 0.0
    %v2373 = vsel %vm2357, %v2311, 0.0
    %v2374 = vsel %vm2358, %v2326, 0.0
    %v2375 = vadd.f32 %v2232, %v2359
    %v2376 = vadd.f32 %v2235, %v2360
    %v2377 = vadd.f32 %v2240, %v2361
    %v2378 = vadd.f32 %v2243, %v2362
    %v2379 = vadd.f32 %v2248, %v2363
    %v2380 = vadd.f32 %v2251, %v2364
    %v2381 = vadd.f32 %v2256, %v2365
    %v2382 = vadd.f32 %v2259, %v2366
    %v2383 = vadd.f32 %v2264, %v2367
    %v2384 = vadd.f32 %v2267, %v2368
    %v2385 = vadd.f32 %v2272, %v2369
    %v2386 = vadd.f32 %v2275, %v2370
    %v2387 = vadd.f32 %v2280, %v2371
    %v2388 = vadd.f32 %v2283, %v2372
    %v2389 = vadd.f32 %v2288, %v2373
    %v2390 = vadd.f32 %v2291, %v2374
    %v2391 = vld [vmem:[%s8] sm:$0x1]
    %v2392 = vlaneseq
    %v2393 = vshrl.u32 %v2392, 7
    %v2394 = vsub.s32 0, %v2393
    %v2395 = vrot.slane %v2391, %v2394
    %v2396 = vadd.f32 %v2375, %v2395
    %v2397 = vadd.f32 %v2376, %v2395
    %v2398 = vadd.f32 %v2377, %v2395
    %v2399 = vadd.f32 %v2378, %v2395
    %v2400 = vadd.f32 %v2379, %v2395
    %v2401 = vadd.f32 %v2380, %v2395
    %v2402 = vadd.f32 %v2381, %v2395
    %v2403 = vadd.f32 %v2382, %v2395
    %v2404 = vadd.f32 %v2383, %v2395
    %v2405 = vadd.f32 %v2384, %v2395
    %v2406 = vadd.f32 %v2385, %v2395
    %v2407 = vadd.f32 %v2386, %v2395
    %v2408 = vadd.f32 %v2387, %v2395
    %v2409 = vadd.f32 %v2388, %v2395
    %v2410 = vadd.f32 %v2389, %v2395
    %v2411 = vadd.f32 %v2390, %v2395
    %v2412 = vmax.f32 %v2396, 0.0
    %v2413 = vmax.f32 %v2397, 0.0
    %v2414 = vmax.f32 %v2398, 0.0
    %v2415 = vmax.f32 %v2399, 0.0
    %v2416 = vmax.f32 %v2400, 0.0
    %v2417 = vmax.f32 %v2401, 0.0
    %v2418 = vmax.f32 %v2402, 0.0
    %v2419 = vmax.f32 %v2403, 0.0
    %v2420 = vmax.f32 %v2404, 0.0
    %v2421 = vmax.f32 %v2405, 0.0
    %v2422 = vmax.f32 %v2406, 0.0
    %v2423 = vmax.f32 %v2407, 0.0
    %v2424 = vmax.f32 %v2408, 0.0
    %v2425 = vmax.f32 %v2409, 0.0
    %v2426 = vmax.f32 %v2410, 0.0
    %v2427 = vmax.f32 %v2411, 0.0
    %v2428 = vld [vmem:[%s8 + $0x1] sm:$0x1]
    %v2429 = vlaneseq
    %v2430 = vshrl.u32 %v2429, 7
    %v2431 = vsub.s32 0, %v2430
    %v2432 = vrot.slane %v2428, %v2431
    %v2433 = vmul.f32 %v2412, %v2432
    %v2434 = vmul.f32 %v2413, %v2432
    %v2435 = vmul.f32 %v2414, %v2432
    %v2436 = vmul.f32 %v2415, %v2432
    %v2437 = vmul.f32 %v2416, %v2432
    %v2438 = vmul.f32 %v2417, %v2432
    %v2439 = vmul.f32 %v2418, %v2432
    %v2440 = vmul.f32 %v2419, %v2432
    %v2441 = vmul.f32 %v2420, %v2432
    %v2442 = vmul.f32 %v2421, %v2432
    %v2443 = vmul.f32 %v2422, %v2432
    %v2444 = vmul.f32 %v2423, %v2432
    %v2445 = vmul.f32 %v2424, %v2432
    %v2446 = vmul.f32 %v2425, %v2432
    %v2447 = vmul.f32 %v2426, %v2432
    %v2448 = vmul.f32 %v2427, %v2432
    %v2449 = vld [vmem:[%s8 + $0x2] sm:$0x1]
    %v2450 = vlaneseq
    %v2451 = vshrl.u32 %v2450, 7
    %v2452 = vsub.s32 0, %v2451
    %v2453 = vrot.slane %v2449, %v2452
    %v2454 = vadd.f32 %v2433, %v2453
    %v2455 = vadd.f32 %v2434, %v2453
    %v2456 = vadd.f32 %v2435, %v2453
    %v2457 = vadd.f32 %v2436, %v2453
    %v2458 = vadd.f32 %v2437, %v2453
    %v2459 = vadd.f32 %v2438, %v2453
    %v2460 = vadd.f32 %v2439, %v2453
    %v2461 = vadd.f32 %v2440, %v2453
    %v2462 = vadd.f32 %v2441, %v2453
    %v2463 = vadd.f32 %v2442, %v2453
    %v2464 = vadd.f32 %v2443, %v2453
    %v2465 = vadd.f32 %v2444, %v2453
    %v2466 = vadd.f32 %v2445, %v2453
    %v2467 = vadd.f32 %v2446, %v2453
    %v2468 = vadd.f32 %v2447, %v2453
    %v2469 = vadd.f32 %v2448, %v2453
    %2470 = vst [vmem:[#allocation2 + $0x8] sm:$0xff] %v2454
    %2471 = vst [vmem:[#allocation2 + $0x28] sm:$0xff] %v2455
    %2472 = vst [vmem:[#allocation2 + $0x48] sm:$0xff] %v2456
    %2473 = vst [vmem:[#allocation2 + $0x68] sm:$0xff] %v2457
    %2474 = vst [vmem:[#allocation2 + $0x88] sm:$0xff] %v2458
    %2475 = vst [vmem:[#allocation2 + $0xa8] sm:$0xff] %v2459
    %2476 = vst [vmem:[#allocation2 + $0xc8] sm:$0xff] %v2460
    %2477 = vst [vmem:[#allocation2 + $0xe8] sm:$0xff] %v2461
    %2478 = vst [vmem:[#allocation2 + $0x108] sm:$0xff] %v2462
    %2479 = vst [vmem:[#allocation2 + $0x128] sm:$0xff] %v2463
    %2480 = vst [vmem:[#allocation2 + $0x148] sm:$0xff] %v2464
    %2481 = vst [vmem:[#allocation2 + $0x168] sm:$0xff] %v2465
    %2482 = vst [vmem:[#allocation2 + $0x188] sm:$0xff] %v2466
    %2483 = vst [vmem:[#allocation2 + $0x1a8] sm:$0xff] %v2467
    %2484 = vst [vmem:[#allocation2 + $0x1c8] sm:$0xff] %v2468
    %2485 = vst [vmem:[#allocation2 + $0x1e8] sm:$0xff] %v2469
    %v2486 = vld [vmem:[%s9] sm:$0xf]
    %v2487 = vld [vmem:[%s9 + $0x4] sm:$0xf]
    %v2488 = vld [vmem:[%s9 + $0x8] sm:$0xf]
    %v2489 = vld [vmem:[%s9 + $0xc] sm:$0xf]
    %v2490 = vld [vmem:[%s9 + $0x10] sm:$0xf]
    %v2491 = vld [vmem:[%s9 + $0x14] sm:$0xf]
    %v2492 = vld [vmem:[%s9 + $0x18] sm:$0xf]
    %v2493 = vld [vmem:[%s9 + $0x1c] sm:$0xf]
    %v2494 = vld [vmem:[%s9 + $0x20] sm:$0xf]
    %v2495 = vld [vmem:[%s9 + $0x24] sm:$0xf]
    %v2496 = vld [vmem:[%s9 + $0x28] sm:$0xf]
    %v2497 = vld [vmem:[%s9 + $0x2c] sm:$0xf]
    %v2498 = vld [vmem:[%s9 + $0x30] sm:$0xf]
    %v2499 = vld [vmem:[%s9 + $0x34] sm:$0xf]
    %v2500 = vld [vmem:[%s9 + $0x38] sm:$0xf]
    %v2501 = vld [vmem:[%s9 + $0x3c] sm:$0xf]
    %v2502 = vld [vmem:[%s10] sm:$0x1]
    %v2503 = vlaneseq
    %v2504 = vshrl.u32 %v2503, 7
    %v2505 = vsub.s32 0, %v2504
    %v2506 = vrot.slane %v2502, %v2505
    %v2523 = vunpack.c.l.b16 %v2486
    %v2524 = vunpack.c.l.b16 %v2487
    %v2525 = vunpack.c.l.b16 %v2488
    %v2526 = vunpack.c.l.b16 %v2489
    %v2527 = vunpack.c.l.b16 %v2490
    %v2528 = vunpack.c.l.b16 %v2491
    %v2529 = vunpack.c.l.b16 %v2492
    %v2530 = vunpack.c.l.b16 %v2493
    %v2531 = vunpack.c.l.b16 %v2494
    %v2532 = vunpack.c.l.b16 %v2495
    %v2533 = vunpack.c.l.b16 %v2496
    %v2534 = vunpack.c.l.b16 %v2497
    %v2535 = vunpack.c.l.b16 %v2498
    %v2536 = vunpack.c.l.b16 %v2499
    %v2537 = vunpack.c.l.b16 %v2500
    %v2538 = vunpack.c.l.b16 %v2501
    %v2539 = vpack.c.b16 %v2524, %v2523
    %v2540 = vpack.c.b16 %v2526, %v2525
    %v2541 = vpack.c.b16 %v2528, %v2527
    %v2542 = vpack.c.b16 %v2530, %v2529
    %v2543 = vpack.c.b16 %v2532, %v2531
    %v2544 = vpack.c.b16 %v2534, %v2533
    %v2545 = vpack.c.b16 %v2536, %v2535
    %v2546 = vpack.c.b16 %v2538, %v2537
    %2555 = vmatprep.subr.bf16.mxu0 0
    %2556 = vmatpush1.bf16.msra.mxu0 %v2546
    %2557 = vmatprep.subr.bf16.mxu0 0
    %2558 = vmatpush1.bf16.msra.mxu0 %v2545
    %2559 = vmatprep.subr.bf16.mxu0 0
    %2560 = vmatpush1.bf16.msra.mxu0 %v2544
    %2561 = vmatprep.subr.bf16.mxu0 0
    %2562 = vmatpush1.bf16.msra.mxu0 %v2543
    %2563 = vmatprep.subr.bf16.mxu0 0
    %2564 = vmatpush1.bf16.msra.mxu0 %v2542
    %2565 = vmatprep.subr.bf16.mxu0 0
    %2566 = vmatpush1.bf16.msra.mxu0 %v2541
    %2567 = vmatprep.subr.bf16.mxu0 0
    %2568 = vmatpush1.bf16.msra.mxu0 %v2540
    %2569 = vmatprep.subr.bf16.mxu0 0
    %2570 = vmatpush1.bf16.msra.mxu0 %v2539
    %2571 = vmatprep.subr.bf16.mxu0 0
    %2572 = vmatpush2.bf16.msra.mxu0 0
    %2573 = vmatprep.subr.bf16.mxu0 0
    %2574 = vmatpush2.bf16.msra.mxu0 0
    %2575 = vmatprep.subr.bf16.mxu0 0
    %2576 = vmatpush2.bf16.msra.mxu0 0
    %2577 = vmatprep.subr.bf16.mxu0 0
    %2578 = vmatpush2.bf16.msra.mxu0 0
    %2579 = vmatprep.subr.bf16.mxu0 0
    %2580 = vmatpush2.bf16.msra.mxu0 0
    %2581 = vmatprep.subr.bf16.mxu0 0
    %2582 = vmatpush2.bf16.msra.mxu0 0
    %2583 = vmatprep.subr.bf16.mxu0 0
    %2584 = vmatpush2.bf16.msra.mxu0 0
    %2585 = vmatprep.subr.bf16.mxu0 0
    %2586 = vmatpush2.bf16.msra.mxu0 0
    %2587 = vmatprep.mubr.bf16.mxu0 0
    %2588 = vmatmul.mubr.bf16.gmra.mxu0 %v604
    %v2589 = vpop.f32.mrf.mxu0
    %v2590 = vadd.f32 %v2506, %v2589
    %v2591 = vpop.f32.mrf.mxu0
    %v2592 = vpop.f32.mrf.mxu0
    %v2593 = vadd.f32 %v2506, %v2592
    %v2594 = vpop.f32.mrf.mxu0
    %2595 = vmatprep.mubr.bf16.mxu0 0
    %2596 = vmatmul.mubr.bf16.gmra.mxu0 %v605
    %v2597 = vpop.f32.mrf.mxu0
    %v2598 = vadd.f32 %v2506, %v2597
    %v2599 = vpop.f32.mrf.mxu0
    %v2600 = vpop.f32.mrf.mxu0
    %v2601 = vadd.f32 %v2506, %v2600
    %v2602 = vpop.f32.mrf.mxu0
    %2603 = vmatprep.mubr.bf16.mxu0 0
    %2604 = vmatmul.mubr.bf16.gmra.mxu0 %v606
    %v2605 = vpop.f32.mrf.mxu0
    %v2606 = vadd.f32 %v2506, %v2605
    %v2607 = vpop.f32.mrf.mxu0
    %v2608 = vpop.f32.mrf.mxu0
    %v2609 = vadd.f32 %v2506, %v2608
    %v2610 = vpop.f32.mrf.mxu0
    %2611 = vmatprep.mubr.bf16.mxu0 0
    %2612 = vmatmul.mubr.bf16.gmra.mxu0 %v607
    %v2613 = vpop.f32.mrf.mxu0
    %v2614 = vadd.f32 %v2506, %v2613
    %v2615 = vpop.f32.mrf.mxu0
    %v2616 = vpop.f32.mrf.mxu0
    %v2617 = vadd.f32 %v2506, %v2616
    %v2618 = vpop.f32.mrf.mxu0
    %2619 = vmatprep.mubr.bf16.mxu0 0
    %2620 = vmatmul.mubr.bf16.gmra.mxu0 %v608
    %v2621 = vpop.f32.mrf.mxu0
    %v2622 = vadd.f32 %v2506, %v2621
    %v2623 = vpop.f32.mrf.mxu0
    %v2624 = vpop.f32.mrf.mxu0
    %v2625 = vadd.f32 %v2506, %v2624
    %v2626 = vpop.f32.mrf.mxu0
    %2627 = vmatprep.mubr.bf16.mxu0 0
    %2628 = vmatmul.mubr.bf16.gmra.mxu0 %v609
    %v2629 = vpop.f32.mrf.mxu0
    %v2630 = vadd.f32 %v2506, %v2629
    %v2631 = vpop.f32.mrf.mxu0
    %v2632 = vpop.f32.mrf.mxu0
    %v2633 = vadd.f32 %v2506, %v2632
    %v2634 = vpop.f32.mrf.mxu0
    %2635 = vmatprep.mubr.bf16.mxu0 0
    %2636 = vmatmul.mubr.bf16.gmra.mxu0 %v610
    %v2637 = vpop.f32.mrf.mxu0
    %v2638 = vadd.f32 %v2506, %v2637
    %v2639 = vpop.f32.mrf.mxu0
    %v2640 = vpop.f32.mrf.mxu0
    %v2641 = vadd.f32 %v2506, %v2640
    %v2642 = vpop.f32.mrf.mxu0
    %2643 = vmatprep.mubr.bf16.mxu0 0
    %2644 = vmatmul.mubr.bf16.gmra.mxu0 %v611
    %v2645 = vpop.f32.mrf.mxu0
    %v2646 = vadd.f32 %v2506, %v2645
    %v2647 = vpop.f32.mrf.mxu0
    %v2648 = vpop.f32.mrf.mxu0
    %v2649 = vadd.f32 %v2506, %v2648
    %v2650 = vpop.f32.mrf.mxu0
    %2651 = vdwg.mxu0
    %v2652 = vmax.f32 %v2590, 0.0
    %v2653 = vmax.f32 %v2593, 0.0
    %v2654 = vmax.f32 %v2598, 0.0
    %v2655 = vmax.f32 %v2601, 0.0
    %v2656 = vmax.f32 %v2606, 0.0
    %v2657 = vmax.f32 %v2609, 0.0
    %v2658 = vmax.f32 %v2614, 0.0
    %v2659 = vmax.f32 %v2617, 0.0
    %v2660 = vmax.f32 %v2622, 0.0
    %v2661 = vmax.f32 %v2625, 0.0
    %v2662 = vmax.f32 %v2630, 0.0
    %v2663 = vmax.f32 %v2633, 0.0
    %v2664 = vmax.f32 %v2638, 0.0
    %v2665 = vmax.f32 %v2641, 0.0
    %v2666 = vmax.f32 %v2646, 0.0
    %v2667 = vmax.f32 %v2649, 0.0
    %v2668 = vld [vmem:[%s10 + $0x1] sm:$0x1]
    %v2669 = vlaneseq
    %v2670 = vshrl.u32 %v2669, 7
    %v2671 = vsub.s32 0, %v2670
    %v2672 = vrot.slane %v2668, %v2671
    %v2673 = vmul.f32 %v2652, %v2672
    %v2674 = vmul.f32 %v2653, %v2672
    %v2675 = vmul.f32 %v2654, %v2672
    %v2676 = vmul.f32 %v2655, %v2672
    %v2677 = vmul.f32 %v2656, %v2672
    %v2678 = vmul.f32 %v2657, %v2672
    %v2679 = vmul.f32 %v2658, %v2672
    %v2680 = vmul.f32 %v2659, %v2672
    %v2681 = vmul.f32 %v2660, %v2672
    %v2682 = vmul.f32 %v2661, %v2672
    %v2683 = vmul.f32 %v2662, %v2672
    %v2684 = vmul.f32 %v2663, %v2672
    %v2685 = vmul.f32 %v2664, %v2672
    %v2686 = vmul.f32 %v2665, %v2672
    %v2687 = vmul.f32 %v2666, %v2672
    %v2688 = vmul.f32 %v2667, %v2672
    %v2689 = vld [vmem:[%s10 + $0x2] sm:$0x1]
    %v2690 = vlaneseq
    %v2691 = vshrl.u32 %v2690, 7
    %v2692 = vsub.s32 0, %v2691
    %v2693 = vrot.slane %v2689, %v2692
    %v2694 = vadd.f32 %v2673, %v2693
    %v2695 = vadd.f32 %v2674, %v2693
    %v2696 = vadd.f32 %v2675, %v2693
    %v2697 = vadd.f32 %v2676, %v2693
    %v2698 = vadd.f32 %v2677, %v2693
    %v2699 = vadd.f32 %v2678, %v2693
    %v2700 = vadd.f32 %v2679, %v2693
    %v2701 = vadd.f32 %v2680, %v2693
    %v2702 = vadd.f32 %v2681, %v2693
    %v2703 = vadd.f32 %v2682, %v2693
    %v2704 = vadd.f32 %v2683, %v2693
    %v2705 = vadd.f32 %v2684, %v2693
    %v2706 = vadd.f32 %v2685, %v2693
    %v2707 = vadd.f32 %v2686, %v2693
    %v2708 = vadd.f32 %v2687, %v2693
    %v2709 = vadd.f32 %v2688, %v2693
    %v2710 = vpack.c.bf16 %v2695, %v2694
    %v2711 = vpack.c.bf16 %v2697, %v2696
    %v2712 = vpack.c.bf16 %v2699, %v2698
    %v2713 = vpack.c.bf16 %v2701, %v2700
    %v2714 = vpack.c.bf16 %v2703, %v2702
    %v2715 = vpack.c.bf16 %v2705, %v2704
    %v2716 = vpack.c.bf16 %v2707, %v2706
    %v2717 = vpack.c.bf16 %v2709, %v2708
    %v2718 = vld [vmem:[%s11] sm:$0xf]
    %v2719 = vld [vmem:[%s11 + $0x4] sm:$0xf]
    %v2720 = vld [vmem:[%s11 + $0x8] sm:$0xf]
    %v2721 = vld [vmem:[%s11 + $0xc] sm:$0xf]
    %v2722 = vld [vmem:[%s11 + $0x10] sm:$0xf]
    %v2723 = vld [vmem:[%s11 + $0x14] sm:$0xf]
    %v2724 = vld [vmem:[%s11 + $0x18] sm:$0xf]
    %v2725 = vld [vmem:[%s11 + $0x1c] sm:$0xf]
    %v2734 = vunpack.c.l.b16 %v2718
    %v2735 = vunpack.c.l.b16 %v2719
    %v2736 = vunpack.c.l.b16 %v2720
    %v2737 = vunpack.c.l.b16 %v2721
    %v2738 = vunpack.c.l.b16 %v2722
    %v2739 = vunpack.c.l.b16 %v2723
    %v2740 = vunpack.c.l.b16 %v2724
    %v2741 = vunpack.c.l.b16 %v2725
    %v2742 = vpack.c.b16 %v2735, %v2734
    %v2743 = vpack.c.b16 %v2737, %v2736
    %v2744 = vpack.c.b16 %v2739, %v2738
    %v2745 = vpack.c.b16 %v2741, %v2740
    %vm2750 = vcmask 523264
    %v2752 = vsel %vm2750, %v2710, 0
    %v2755 = vsel %vm2750, %v2711, 0
    %v2758 = vsel %vm2750, %v2712, 0
    %v2761 = vsel %vm2750, %v2713, 0
    %v2764 = vsel %vm2750, %v2714, 0
    %v2767 = vsel %vm2750, %v2715, 0
    %v2770 = vsel %vm2750, %v2716, 0
    %v2773 = vsel %vm2750, %v2717, 0
    %2775 = vmatprep.subr.bf16.mxu0 0
    %2776 = vmatpush1.bf16.msra.mxu0 0
    %2777 = vmatprep.subr.bf16.mxu0 0
    %2778 = vmatpush1.bf16.msra.mxu0 0
    %2779 = vmatprep.subr.bf16.mxu0 0
    %2780 = vmatpush1.bf16.msra.mxu0 0
    %2781 = vmatprep.subr.bf16.mxu0 0
    %2782 = vmatpush1.bf16.msra.mxu0 0
    %2783 = vmatprep.subr.bf16.mxu0 0
    %2784 = vmatpush1.bf16.msra.mxu0 %v2745
    %2785 = vmatprep.subr.bf16.mxu0 0
    %2786 = vmatpush1.bf16.msra.mxu0 %v2744
    %2787 = vmatprep.subr.bf16.mxu0 0
    %2788 = vmatpush1.bf16.msra.mxu0 %v2743
    %2789 = vmatprep.subr.bf16.mxu0 0
    %2790 = vmatpush1.bf16.msra.mxu0 %v2742
    %2791 = vmatprep.subr.bf16.mxu0 0
    %2792 = vmatpush2.bf16.msra.mxu0 0
    %2793 = vmatprep.subr.bf16.mxu0 0
    %2794 = vmatpush2.bf16.msra.mxu0 0
    %2795 = vmatprep.subr.bf16.mxu0 0
    %2796 = vmatpush2.bf16.msra.mxu0 0
    %2797 = vmatprep.subr.bf16.mxu0 0
    %2798 = vmatpush2.bf16.msra.mxu0 0
    %2799 = vmatprep.subr.bf16.mxu0 0
    %2800 = vmatpush2.bf16.msra.mxu0 0
    %2801 = vmatprep.subr.bf16.mxu0 0
    %2802 = vmatpush2.bf16.msra.mxu0 0
    %2803 = vmatprep.subr.bf16.mxu0 0
    %2804 = vmatpush2.bf16.msra.mxu0 0
    %2805 = vmatprep.subr.bf16.mxu0 0
    %2806 = vmatpush2.bf16.msra.mxu0 0
    %2807 = vmatprep.mubr.bf16.mxu0 0
    %2808 = vmatmul.mubr.bf16.gmra.mxu0 %v2752
    %v2809 = vpop.f32.mrf.mxu0
    %v2810 = vadd.f32 0.0, %v2809
    %v2811 = vpop.f32.mrf.mxu0
    %v2812 = vpop.f32.mrf.mxu0
    %v2813 = vadd.f32 0.0, %v2812
    %v2814 = vpop.f32.mrf.mxu0
    %2815 = vmatprep.mubr.bf16.mxu0 0
    %2816 = vmatmul.mubr.bf16.gmra.mxu0 %v2755
    %v2817 = vpop.f32.mrf.mxu0
    %v2818 = vadd.f32 0.0, %v2817
    %v2819 = vpop.f32.mrf.mxu0
    %v2820 = vpop.f32.mrf.mxu0
    %v2821 = vadd.f32 0.0, %v2820
    %v2822 = vpop.f32.mrf.mxu0
    %2823 = vmatprep.mubr.bf16.mxu0 0
    %2824 = vmatmul.mubr.bf16.gmra.mxu0 %v2758
    %v2825 = vpop.f32.mrf.mxu0
    %v2826 = vadd.f32 0.0, %v2825
    %v2827 = vpop.f32.mrf.mxu0
    %v2828 = vpop.f32.mrf.mxu0
    %v2829 = vadd.f32 0.0, %v2828
    %v2830 = vpop.f32.mrf.mxu0
    %2831 = vmatprep.mubr.bf16.mxu0 0
    %2832 = vmatmul.mubr.bf16.gmra.mxu0 %v2761
    %v2833 = vpop.f32.mrf.mxu0
    %v2834 = vadd.f32 0.0, %v2833
    %v2835 = vpop.f32.mrf.mxu0
    %v2836 = vpop.f32.mrf.mxu0
    %v2837 = vadd.f32 0.0, %v2836
    %v2838 = vpop.f32.mrf.mxu0
    %2839 = vmatprep.mubr.bf16.mxu0 0
    %2840 = vmatmul.mubr.bf16.gmra.mxu0 %v2764
    %v2841 = vpop.f32.mrf.mxu0
    %v2842 = vadd.f32 0.0, %v2841
    %v2843 = vpop.f32.mrf.mxu0
    %v2844 = vpop.f32.mrf.mxu0
    %v2845 = vadd.f32 0.0, %v2844
    %v2846 = vpop.f32.mrf.mxu0
    %2847 = vmatprep.mubr.bf16.mxu0 0
    %2848 = vmatmul.mubr.bf16.gmra.mxu0 %v2767
    %v2849 = vpop.f32.mrf.mxu0
    %v2850 = vadd.f32 0.0, %v2849
    %v2851 = vpop.f32.mrf.mxu0
    %v2852 = vpop.f32.mrf.mxu0
    %v2853 = vadd.f32 0.0, %v2852
    %v2854 = vpop.f32.mrf.mxu0
    %2855 = vmatprep.mubr.bf16.mxu0 0
    %2856 = vmatmul.mubr.bf16.gmra.mxu0 %v2770
    %v2857 = vpop.f32.mrf.mxu0
    %v2858 = vadd.f32 0.0, %v2857
    %v2859 = vpop.f32.mrf.mxu0
    %v2860 = vpop.f32.mrf.mxu0
    %v2861 = vadd.f32 0.0, %v2860
    %v2862 = vpop.f32.mrf.mxu0
    %2863 = vmatprep.mubr.bf16.mxu0 0
    %2864 = vmatmul.mubr.bf16.gmra.mxu0 %v2773
    %v2865 = vpop.f32.mrf.mxu0
    %v2866 = vadd.f32 0.0, %v2865
    %v2867 = vpop.f32.mrf.mxu0
    %v2868 = vpop.f32.mrf.mxu0
    %v2869 = vadd.f32 0.0, %v2868
    %v2870 = vpop.f32.mrf.mxu0
    %2871 = vdwg.mxu0
    %v2872 = vld [vmem:[%s11 + $0x20] sm:$0xf]
    %v2873 = vld [vmem:[%s11 + $0x24] sm:$0xf]
    %v2874 = vld [vmem:[%s11 + $0x28] sm:$0xf]
    %v2875 = vld [vmem:[%s11 + $0x2c] sm:$0xf]
    %v2876 = vld [vmem:[%s11 + $0x30] sm:$0xf]
    %v2877 = vld [vmem:[%s11 + $0x34] sm:$0xf]
    %v2878 = vld [vmem:[%s11 + $0x38] sm:$0xf]
    %v2879 = vld [vmem:[%s11 + $0x3c] sm:$0xf]
    %v2880 = vld [vmem:[%s11 + $0x40] sm:$0xf]
    %v2881 = vld [vmem:[%s11 + $0x44] sm:$0xf]
    %v2882 = vld [vmem:[%s11 + $0x48] sm:$0xf]
    %v2883 = vld [vmem:[%s11 + $0x4c] sm:$0xf]
    %v2884 = vld [vmem:[%s11 + $0x50] sm:$0xf]
    %v2885 = vld [vmem:[%s11 + $0x54] sm:$0xf]
    %v2886 = vld [vmem:[%s11 + $0x58] sm:$0xf]
    %v2887 = vld [vmem:[%s11 + $0x5c] sm:$0xf]
    %v2896 = vunpack.c.l.b16 %v2880
    %v2897 = vunpack.c.l.b16 %v2881
    %v2898 = vunpack.c.l.b16 %v2882
    %v2899 = vunpack.c.l.b16 %v2883
    %v2900 = vunpack.c.l.b16 %v2884
    %v2901 = vunpack.c.l.b16 %v2885
    %v2902 = vunpack.c.l.b16 %v2886
    %v2903 = vunpack.c.l.b16 %v2887
    %v2904 = vpack.c.b16 %v2897, %v2896
    %v2905 = vpack.c.b16 %v2899, %v2898
    %v2906 = vpack.c.b16 %v2901, %v2900
    %v2907 = vpack.c.b16 %v2903, %v2902
    %2912 = vmatprep.subr.bf16.mxu0 0
    %2913 = vmatpush1.bf16.msra.mxu0 0
    %2914 = vmatprep.subr.bf16.mxu0 0
    %2915 = vmatpush1.bf16.msra.mxu0 0
    %2916 = vmatprep.subr.bf16.mxu0 0
    %2917 = vmatpush1.bf16.msra.mxu0 0
    %2918 = vmatprep.subr.bf16.mxu0 0
    %2919 = vmatpush1.bf16.msra.mxu0 0
    %2920 = vmatprep.subr.bf16.mxu0 0
    %2921 = vmatpush1.bf16.msra.mxu0 %v2907
    %2922 = vmatprep.subr.bf16.mxu0 0
    %2923 = vmatpush1.bf16.msra.mxu0 %v2906
    %2924 = vmatprep.subr.bf16.mxu0 0
    %2925 = vmatpush1.bf16.msra.mxu0 %v2905
    %2926 = vmatprep.subr.bf16.mxu0 0
    %2927 = vmatpush1.bf16.msra.mxu0 %v2904
    %2928 = vmatprep.subr.bf16.mxu0 0
    %2929 = vmatpush2.bf16.msra.mxu0 0
    %2930 = vmatprep.subr.bf16.mxu0 0
    %2931 = vmatpush2.bf16.msra.mxu0 0
    %2932 = vmatprep.subr.bf16.mxu0 0
    %2933 = vmatpush2.bf16.msra.mxu0 0
    %2934 = vmatprep.subr.bf16.mxu0 0
    %2935 = vmatpush2.bf16.msra.mxu0 0
    %2936 = vmatprep.subr.bf16.mxu0 0
    %2937 = vmatpush2.bf16.msra.mxu0 0
    %2938 = vmatprep.subr.bf16.mxu0 0
    %2939 = vmatpush2.bf16.msra.mxu0 0
    %2940 = vmatprep.subr.bf16.mxu0 0
    %2941 = vmatpush2.bf16.msra.mxu0 0
    %2942 = vmatprep.subr.bf16.mxu0 0
    %2943 = vmatpush2.bf16.msra.mxu0 0
    %2944 = vmatprep.mubr.bf16.mxu0 0
    %2945 = vmatmul.mubr.bf16.gmra.mxu0 %v2752
    %v2946 = vpop.f32.mrf.mxu0
    %v2947 = vadd.f32 0.0, %v2946
    %v2948 = vpop.f32.mrf.mxu0
    %v2949 = vpop.f32.mrf.mxu0
    %v2950 = vadd.f32 0.0, %v2949
    %v2951 = vpop.f32.mrf.mxu0
    %2952 = vmatprep.mubr.bf16.mxu0 0
    %2953 = vmatmul.mubr.bf16.gmra.mxu0 %v2755
    %v2954 = vpop.f32.mrf.mxu0
    %v2955 = vadd.f32 0.0, %v2954
    %v2956 = vpop.f32.mrf.mxu0
    %v2957 = vpop.f32.mrf.mxu0
    %v2958 = vadd.f32 0.0, %v2957
    %v2959 = vpop.f32.mrf.mxu0
    %2960 = vmatprep.mubr.bf16.mxu0 0
    %2961 = vmatmul.mubr.bf16.gmra.mxu0 %v2758
    %v2962 = vpop.f32.mrf.mxu0
    %v2963 = vadd.f32 0.0, %v2962
    %v2964 = vpop.f32.mrf.mxu0
    %v2965 = vpop.f32.mrf.mxu0
    %v2966 = vadd.f32 0.0, %v2965
    %v2967 = vpop.f32.mrf.mxu0
    %2968 = vmatprep.mubr.bf16.mxu0 0
    %2969 = vmatmul.mubr.bf16.gmra.mxu0 %v2761
    %v2970 = vpop.f32.mrf.mxu0
    %v2971 = vadd.f32 0.0, %v2970
    %v2972 = vpop.f32.mrf.mxu0
    %v2973 = vpop.f32.mrf.mxu0
    %v2974 = vadd.f32 0.0, %v2973
    %v2975 = vpop.f32.mrf.mxu0
    %2976 = vmatprep.mubr.bf16.mxu0 0
    %2977 = vmatmul.mubr.bf16.gmra.mxu0 %v2764
    %v2978 = vpop.f32.mrf.mxu0
    %v2979 = vadd.f32 0.0, %v2978
    %v2980 = vpop.f32.mrf.mxu0
    %v2981 = vpop.f32.mrf.mxu0
    %v2982 = vadd.f32 0.0, %v2981
    %v2983 = vpop.f32.mrf.mxu0
    %2984 = vmatprep.mubr.bf16.mxu0 0
    %2985 = vmatmul.mubr.bf16.gmra.mxu0 %v2767
    %v2986 = vpop.f32.mrf.mxu0
    %v2987 = vadd.f32 0.0, %v2986
    %v2988 = vpop.f32.mrf.mxu0
    %v2989 = vpop.f32.mrf.mxu0
    %v2990 = vadd.f32 0.0, %v2989
    %v2991 = vpop.f32.mrf.mxu0
    %2992 = vmatprep.mubr.bf16.mxu0 0
    %2993 = vmatmul.mubr.bf16.gmra.mxu0 %v2770
    %v2994 = vpop.f32.mrf.mxu0
    %v2995 = vadd.f32 0.0, %v2994
    %v2996 = vpop.f32.mrf.mxu0
    %v2997 = vpop.f32.mrf.mxu0
    %v2998 = vadd.f32 0.0, %v2997
    %v2999 = vpop.f32.mrf.mxu0
    %3000 = vmatprep.mubr.bf16.mxu0 0
    %3001 = vmatmul.mubr.bf16.gmra.mxu0 %v2773
    %v3002 = vpop.f32.mrf.mxu0
    %v3003 = vadd.f32 0.0, %v3002
    %v3004 = vpop.f32.mrf.mxu0
    %v3005 = vpop.f32.mrf.mxu0
    %v3006 = vadd.f32 0.0, %v3005
    %v3007 = vpop.f32.mrf.mxu0
    %3008 = vdwg.mxu0
    %v3009 = vsel %vm1414, %v2869, 0.0
    %v3010 = vsel %vm1415, %v2810, 0.0
    %v3011 = vsel %vm1416, %v2813, 0.0
    %v3012 = vsel %vm1417, %v2818, 0.0
    %v3013 = vsel %vm1418, %v2821, 0.0
    %v3014 = vsel %vm1419, %v2826, 0.0
    %v3015 = vsel %vm1420, %v2829, 0.0
    %v3016 = vsel %vm1421, %v2834, 0.0
    %v3017 = vsel %vm1422, %v2837, 0.0
    %v3018 = vsel %vm1423, %v2842, 0.0
    %v3019 = vsel %vm1424, %v2845, 0.0
    %v3020 = vsel %vm1425, %v2850, 0.0
    %v3021 = vsel %vm1426, %v2853, 0.0
    %v3022 = vsel %vm1427, %v2858, 0.0
    %v3023 = vsel %vm1428, %v2861, 0.0
    %v3024 = vsel %vm1429, %v2866, 0.0
    %v3033 = vunpack.c.l.b16 %v2872
    %v3034 = vunpack.c.l.b16 %v2873
    %v3035 = vunpack.c.l.b16 %v2874
    %v3036 = vunpack.c.l.b16 %v2875
    %v3037 = vunpack.c.l.b16 %v2876
    %v3038 = vunpack.c.l.b16 %v2877
    %v3039 = vunpack.c.l.b16 %v2878
    %v3040 = vunpack.c.l.b16 %v2879
    %v3041 = vpack.c.b16 %v3034, %v3033
    %v3042 = vpack.c.b16 %v3036, %v3035
    %v3043 = vpack.c.b16 %v3038, %v3037
    %v3044 = vpack.c.b16 %v3040, %v3039
    %3049 = vmatprep.subr.bf16.mxu0 0
    %3050 = vmatpush1.bf16.msra.mxu0 0
    %3051 = vmatprep.subr.bf16.mxu0 0
    %3052 = vmatpush1.bf16.msra.mxu0 0
    %3053 = vmatprep.subr.bf16.mxu0 0
    %3054 = vmatpush1.bf16.msra.mxu0 0
    %3055 = vmatprep.subr.bf16.mxu0 0
    %3056 = vmatpush1.bf16.msra.mxu0 0
    %3057 = vmatprep.subr.bf16.mxu0 0
    %3058 = vmatpush1.bf16.msra.mxu0 %v3044
    %3059 = vmatprep.subr.bf16.mxu0 0
    %3060 = vmatpush1.bf16.msra.mxu0 %v3043
    %3061 = vmatprep.subr.bf16.mxu0 0
    %3062 = vmatpush1.bf16.msra.mxu0 %v3042
    %3063 = vmatprep.subr.bf16.mxu0 0
    %3064 = vmatpush1.bf16.msra.mxu0 %v3041
    %3065 = vmatprep.subr.bf16.mxu0 0
    %3066 = vmatpush2.bf16.msra.mxu0 0
    %3067 = vmatprep.subr.bf16.mxu0 0
    %3068 = vmatpush2.bf16.msra.mxu0 0
    %3069 = vmatprep.subr.bf16.mxu0 0
    %3070 = vmatpush2.bf16.msra.mxu0 0
    %3071 = vmatprep.subr.bf16.mxu0 0
    %3072 = vmatpush2.bf16.msra.mxu0 0
    %3073 = vmatprep.subr.bf16.mxu0 0
    %3074 = vmatpush2.bf16.msra.mxu0 0
    %3075 = vmatprep.subr.bf16.mxu0 0
    %3076 = vmatpush2.bf16.msra.mxu0 0
    %3077 = vmatprep.subr.bf16.mxu0 0
    %3078 = vmatpush2.bf16.msra.mxu0 0
    %3079 = vmatprep.subr.bf16.mxu0 0
    %3080 = vmatpush2.bf16.msra.mxu0 0
    %3081 = vmatprep.mubr.bf16.mxu0 0
    %3082 = vmatmul.mubr.bf16.gmra.mxu0 %v2752
    %v3083 = vpop.f32.mrf.mxu0
    %v3084 = vadd.f32 %v3009, %v3083
    %v3085 = vpop.f32.mrf.mxu0
    %v3086 = vpop.f32.mrf.mxu0
    %v3087 = vadd.f32 %v3010, %v3086
    %v3088 = vpop.f32.mrf.mxu0
    %3089 = vmatprep.mubr.bf16.mxu0 0
    %3090 = vmatmul.mubr.bf16.gmra.mxu0 %v2755
    %v3091 = vpop.f32.mrf.mxu0
    %v3092 = vadd.f32 %v3011, %v3091
    %v3093 = vpop.f32.mrf.mxu0
    %v3094 = vpop.f32.mrf.mxu0
    %v3095 = vadd.f32 %v3012, %v3094
    %v3096 = vpop.f32.mrf.mxu0
    %3097 = vmatprep.mubr.bf16.mxu0 0
    %3098 = vmatmul.mubr.bf16.gmra.mxu0 %v2758
    %v3099 = vpop.f32.mrf.mxu0
    %v3100 = vadd.f32 %v3013, %v3099
    %v3101 = vpop.f32.mrf.mxu0
    %v3102 = vpop.f32.mrf.mxu0
    %v3103 = vadd.f32 %v3014, %v3102
    %v3104 = vpop.f32.mrf.mxu0
    %3105 = vmatprep.mubr.bf16.mxu0 0
    %3106 = vmatmul.mubr.bf16.gmra.mxu0 %v2761
    %v3107 = vpop.f32.mrf.mxu0
    %v3108 = vadd.f32 %v3015, %v3107
    %v3109 = vpop.f32.mrf.mxu0
    %v3110 = vpop.f32.mrf.mxu0
    %v3111 = vadd.f32 %v3016, %v3110
    %v3112 = vpop.f32.mrf.mxu0
    %3113 = vmatprep.mubr.bf16.mxu0 0
    %3114 = vmatmul.mubr.bf16.gmra.mxu0 %v2764
    %v3115 = vpop.f32.mrf.mxu0
    %v3116 = vadd.f32 %v3017, %v3115
    %v3117 = vpop.f32.mrf.mxu0
    %v3118 = vpop.f32.mrf.mxu0
    %v3119 = vadd.f32 %v3018, %v3118
    %v3120 = vpop.f32.mrf.mxu0
    %3121 = vmatprep.mubr.bf16.mxu0 0
    %3122 = vmatmul.mubr.bf16.gmra.mxu0 %v2767
    %v3123 = vpop.f32.mrf.mxu0
    %v3124 = vadd.f32 %v3019, %v3123
    %v3125 = vpop.f32.mrf.mxu0
    %v3126 = vpop.f32.mrf.mxu0
    %v3127 = vadd.f32 %v3020, %v3126
    %v3128 = vpop.f32.mrf.mxu0
    %3129 = vmatprep.mubr.bf16.mxu0 0
    %3130 = vmatmul.mubr.bf16.gmra.mxu0 %v2770
    %v3131 = vpop.f32.mrf.mxu0
    %v3132 = vadd.f32 %v3021, %v3131
    %v3133 = vpop.f32.mrf.mxu0
    %v3134 = vpop.f32.mrf.mxu0
    %v3135 = vadd.f32 %v3022, %v3134
    %v3136 = vpop.f32.mrf.mxu0
    %3137 = vmatprep.mubr.bf16.mxu0 0
    %3138 = vmatmul.mubr.bf16.gmra.mxu0 %v2773
    %v3139 = vpop.f32.mrf.mxu0
    %v3140 = vadd.f32 %v3023, %v3139
    %v3141 = vpop.f32.mrf.mxu0
    %v3142 = vpop.f32.mrf.mxu0
    %v3143 = vadd.f32 %v3024, %v3142
    %v3144 = vpop.f32.mrf.mxu0
    %3145 = vdwg.mxu0
    %v3146 = vsel %vm1595, %v2950, 0.0
    %v3147 = vsel %vm1596, %v2955, 0.0
    %v3148 = vsel %vm1597, %v2958, 0.0
    %v3149 = vsel %vm1598, %v2963, 0.0
    %v3150 = vsel %vm1599, %v2966, 0.0
    %v3151 = vsel %vm1600, %v2971, 0.0
    %v3152 = vsel %vm1601, %v2974, 0.0
    %v3153 = vsel %vm1602, %v2979, 0.0
    %v3154 = vsel %vm1603, %v2982, 0.0
    %v3155 = vsel %vm1604, %v2987, 0.0
    %v3156 = vsel %vm1605, %v2990, 0.0
    %v3157 = vsel %vm1606, %v2995, 0.0
    %v3158 = vsel %vm1607, %v2998, 0.0
    %v3159 = vsel %vm1608, %v3003, 0.0
    %v3160 = vsel %vm1609, %v3006, 0.0
    %v3161 = vsel %vm1610, %v2947, 0.0
    %v3162 = vadd.f32 %v3084, %v3146
    %v3163 = vadd.f32 %v3087, %v3147
    %v3164 = vadd.f32 %v3092, %v3148
    %v3165 = vadd.f32 %v3095, %v3149
    %v3166 = vadd.f32 %v3100, %v3150
    %v3167 = vadd.f32 %v3103, %v3151
    %v3168 = vadd.f32 %v3108, %v3152
    %v3169 = vadd.f32 %v3111, %v3153
    %v3170 = vadd.f32 %v3116, %v3154
    %v3171 = vadd.f32 %v3119, %v3155
    %v3172 = vadd.f32 %v3124, %v3156
    %v3173 = vadd.f32 %v3127, %v3157
    %v3174 = vadd.f32 %v3132, %v3158
    %v3175 = vadd.f32 %v3135, %v3159
    %v3176 = vadd.f32 %v3140, %v3160
    %v3177 = vadd.f32 %v3143, %v3161
    %v3178 = vld [vmem:[%s12] sm:$0x1]
    %v3179 = vlaneseq
    %v3180 = vshrl.u32 %v3179, 7
    %v3181 = vsub.s32 0, %v3180
    %v3182 = vrot.slane %v3178, %v3181
    %v3183 = vadd.f32 %v3162, %v3182
    %v3184 = vadd.f32 %v3163, %v3182
    %v3185 = vadd.f32 %v3164, %v3182
    %v3186 = vadd.f32 %v3165, %v3182
    %v3187 = vadd.f32 %v3166, %v3182
    %v3188 = vadd.f32 %v3167, %v3182
    %v3189 = vadd.f32 %v3168, %v3182
    %v3190 = vadd.f32 %v3169, %v3182
    %v3191 = vadd.f32 %v3170, %v3182
    %v3192 = vadd.f32 %v3171, %v3182
    %v3193 = vadd.f32 %v3172, %v3182
    %v3194 = vadd.f32 %v3173, %v3182
    %v3195 = vadd.f32 %v3174, %v3182
    %v3196 = vadd.f32 %v3175, %v3182
    %v3197 = vadd.f32 %v3176, %v3182
    %v3198 = vadd.f32 %v3177, %v3182
    %v3199 = vmax.f32 %v3183, 0.0
    %v3200 = vmax.f32 %v3184, 0.0
    %v3201 = vmax.f32 %v3185, 0.0
    %v3202 = vmax.f32 %v3186, 0.0
    %v3203 = vmax.f32 %v3187, 0.0
    %v3204 = vmax.f32 %v3188, 0.0
    %v3205 = vmax.f32 %v3189, 0.0
    %v3206 = vmax.f32 %v3190, 0.0
    %v3207 = vmax.f32 %v3191, 0.0
    %v3208 = vmax.f32 %v3192, 0.0
    %v3209 = vmax.f32 %v3193, 0.0
    %v3210 = vmax.f32 %v3194, 0.0
    %v3211 = vmax.f32 %v3195, 0.0
    %v3212 = vmax.f32 %v3196, 0.0
    %v3213 = vmax.f32 %v3197, 0.0
    %v3214 = vmax.f32 %v3198, 0.0
    %v3215 = vld [vmem:[%s12 + $0x1] sm:$0x1]
    %v3216 = vlaneseq
    %v3217 = vshrl.u32 %v3216, 7
    %v3218 = vsub.s32 0, %v3217
    %v3219 = vrot.slane %v3215, %v3218
    %v3220 = vmul.f32 %v3199, %v3219
    %v3221 = vmul.f32 %v3200, %v3219
    %v3222 = vmul.f32 %v3201, %v3219
    %v3223 = vmul.f32 %v3202, %v3219
    %v3224 = vmul.f32 %v3203, %v3219
    %v3225 = vmul.f32 %v3204, %v3219
    %v3226 = vmul.f32 %v3205, %v3219
    %v3227 = vmul.f32 %v3206, %v3219
    %v3228 = vmul.f32 %v3207, %v3219
    %v3229 = vmul.f32 %v3208, %v3219
    %v3230 = vmul.f32 %v3209, %v3219
    %v3231 = vmul.f32 %v3210, %v3219
    %v3232 = vmul.f32 %v3211, %v3219
    %v3233 = vmul.f32 %v3212, %v3219
    %v3234 = vmul.f32 %v3213, %v3219
    %v3235 = vmul.f32 %v3214, %v3219
    %v3236 = vld [vmem:[%s12 + $0x2] sm:$0x1]
    %v3237 = vlaneseq
    %v3238 = vshrl.u32 %v3237, 7
    %v3239 = vsub.s32 0, %v3238
    %v3240 = vrot.slane %v3236, %v3239
    %v3241 = vadd.f32 %v3220, %v3240
    %v3242 = vadd.f32 %v3221, %v3240
    %v3243 = vadd.f32 %v3222, %v3240
    %v3244 = vadd.f32 %v3223, %v3240
    %v3245 = vadd.f32 %v3224, %v3240
    %v3246 = vadd.f32 %v3225, %v3240
    %v3247 = vadd.f32 %v3226, %v3240
    %v3248 = vadd.f32 %v3227, %v3240
    %v3249 = vadd.f32 %v3228, %v3240
    %v3250 = vadd.f32 %v3229, %v3240
    %v3251 = vadd.f32 %v3230, %v3240
    %v3252 = vadd.f32 %v3231, %v3240
    %v3253 = vadd.f32 %v3232, %v3240
    %v3254 = vadd.f32 %v3233, %v3240
    %v3255 = vadd.f32 %v3234, %v3240
    %v3256 = vadd.f32 %v3235, %v3240
    %v3257 = vpack.c.bf16 %v3242, %v3241
    %v3258 = vpack.c.bf16 %v3244, %v3243
    %v3259 = vpack.c.bf16 %v3246, %v3245
    %v3260 = vpack.c.bf16 %v3248, %v3247
    %v3261 = vpack.c.bf16 %v3250, %v3249
    %v3262 = vpack.c.bf16 %v3252, %v3251
    %v3263 = vpack.c.bf16 %v3254, %v3253
    %v3264 = vpack.c.bf16 %v3256, %v3255
    %v3265 = vld [vmem:[%s13] sm:$0xf]
    %v3266 = vld [vmem:[%s13 + $0x4] sm:$0xf]
    %v3267 = vld [vmem:[%s13 + $0x8] sm:$0xf]
    %v3268 = vld [vmem:[%s13 + $0xc] sm:$0xf]
    %v3269 = vld [vmem:[%s13 + $0x10] sm:$0xf]
    %v3270 = vld [vmem:[%s13 + $0x14] sm:$0xf]
    %v3271 = vld [vmem:[%s13 + $0x18] sm:$0xf]
    %v3272 = vld [vmem:[%s13 + $0x1c] sm:$0xf]
    %v3273 = vld [vmem:[%s13 + $0x20] sm:$0xf]
    %v3274 = vld [vmem:[%s13 + $0x24] sm:$0xf]
    %v3275 = vld [vmem:[%s13 + $0x28] sm:$0xf]
    %v3276 = vld [vmem:[%s13 + $0x2c] sm:$0xf]
    %v3289 = vunpack.c.l.b16 %v3265
    %v3290 = vunpack.c.l.b16 %v3266
    %v3291 = vunpack.c.l.b16 %v3267
    %v3292 = vunpack.c.l.b16 %v3268
    %v3293 = vunpack.c.l.b16 %v3269
    %v3294 = vunpack.c.l.b16 %v3270
    %v3295 = vunpack.c.l.b16 %v3271
    %v3296 = vunpack.c.l.b16 %v3272
    %v3297 = vunpack.c.l.b16 %v3273
    %v3298 = vunpack.c.l.b16 %v3274
    %v3299 = vunpack.c.l.b16 %v3275
    %v3300 = vunpack.c.l.b16 %v3276
    %v3301 = vpack.c.b16 %v3290, %v3289
    %v3302 = vpack.c.b16 %v3292, %v3291
    %v3303 = vpack.c.b16 %v3294, %v3293
    %v3304 = vpack.c.b16 %v3296, %v3295
    %v3305 = vpack.c.b16 %v3298, %v3297
    %v3306 = vpack.c.b16 %v3300, %v3299
    %v3314 = vsel %vm1119, %v3257, 0
    %v3317 = vsel %vm1119, %v3258, 0
    %v3320 = vsel %vm1119, %v3259, 0
    %v3323 = vsel %vm1119, %v3260, 0
    %v3326 = vsel %vm1119, %v3261, 0
    %v3329 = vsel %vm1119, %v3262, 0
    %v3332 = vsel %vm1119, %v3263, 0
    %v3335 = vsel %vm1119, %v3264, 0
    %3337 = vmatprep.subr.bf16.mxu0 0
    %3338 = vmatpush1.bf16.msra.mxu0 0
    %3339 = vmatprep.subr.bf16.mxu0 0
    %3340 = vmatpush1.bf16.msra.mxu0 0
    %3341 = vmatprep.subr.bf16.mxu0 0
    %3342 = vmatpush1.bf16.msra.mxu0 %v3306
    %3343 = vmatprep.subr.bf16.mxu0 0
    %3344 = vmatpush1.bf16.msra.mxu0 %v3305
    %3345 = vmatprep.subr.bf16.mxu0 0
    %3346 = vmatpush1.bf16.msra.mxu0 %v3304
    %3347 = vmatprep.subr.bf16.mxu0 0
    %3348 = vmatpush1.bf16.msra.mxu0 %v3303
    %3349 = vmatprep.subr.bf16.mxu0 0
    %3350 = vmatpush1.bf16.msra.mxu0 %v3302
    %3351 = vmatprep.subr.bf16.mxu0 0
    %3352 = vmatpush1.bf16.msra.mxu0 %v3301
    %3353 = vmatprep.subr.bf16.mxu0 0
    %3354 = vmatpush2.bf16.msra.mxu0 0
    %3355 = vmatprep.subr.bf16.mxu0 0
    %3356 = vmatpush2.bf16.msra.mxu0 0
    %3357 = vmatprep.subr.bf16.mxu0 0
    %3358 = vmatpush2.bf16.msra.mxu0 0
    %3359 = vmatprep.subr.bf16.mxu0 0
    %3360 = vmatpush2.bf16.msra.mxu0 0
    %3361 = vmatprep.subr.bf16.mxu0 0
    %3362 = vmatpush2.bf16.msra.mxu0 0
    %3363 = vmatprep.subr.bf16.mxu0 0
    %3364 = vmatpush2.bf16.msra.mxu0 0
    %3365 = vmatprep.subr.bf16.mxu0 0
    %3366 = vmatpush2.bf16.msra.mxu0 0
    %3367 = vmatprep.subr.bf16.mxu0 0
    %3368 = vmatpush2.bf16.msra.mxu0 0
    %3369 = vmatprep.mubr.bf16.mxu0 0
    %3370 = vmatmul.mubr.bf16.gmra.mxu0 %v3314
    %v3371 = vpop.f32.mrf.mxu0
    %v3372 = vadd.f32 0.0, %v3371
    %v3373 = vpop.f32.mrf.mxu0
    %v3374 = vpop.f32.mrf.mxu0
    %v3375 = vadd.f32 0.0, %v3374
    %v3376 = vpop.f32.mrf.mxu0
    %3377 = vmatprep.mubr.bf16.mxu0 0
    %3378 = vmatmul.mubr.bf16.gmra.mxu0 %v3317
    %v3379 = vpop.f32.mrf.mxu0
    %v3380 = vadd.f32 0.0, %v3379
    %v3381 = vpop.f32.mrf.mxu0
    %v3382 = vpop.f32.mrf.mxu0
    %v3383 = vadd.f32 0.0, %v3382
    %v3384 = vpop.f32.mrf.mxu0
    %3385 = vmatprep.mubr.bf16.mxu0 0
    %3386 = vmatmul.mubr.bf16.gmra.mxu0 %v3320
    %v3387 = vpop.f32.mrf.mxu0
    %v3388 = vadd.f32 0.0, %v3387
    %v3389 = vpop.f32.mrf.mxu0
    %v3390 = vpop.f32.mrf.mxu0
    %v3391 = vadd.f32 0.0, %v3390
    %v3392 = vpop.f32.mrf.mxu0
    %3393 = vmatprep.mubr.bf16.mxu0 0
    %3394 = vmatmul.mubr.bf16.gmra.mxu0 %v3323
    %v3395 = vpop.f32.mrf.mxu0
    %v3396 = vadd.f32 0.0, %v3395
    %v3397 = vpop.f32.mrf.mxu0
    %v3398 = vpop.f32.mrf.mxu0
    %v3399 = vadd.f32 0.0, %v3398
    %v3400 = vpop.f32.mrf.mxu0
    %3401 = vmatprep.mubr.bf16.mxu0 0
    %3402 = vmatmul.mubr.bf16.gmra.mxu0 %v3326
    %v3403 = vpop.f32.mrf.mxu0
    %v3404 = vadd.f32 0.0, %v3403
    %v3405 = vpop.f32.mrf.mxu0
    %v3406 = vpop.f32.mrf.mxu0
    %v3407 = vadd.f32 0.0, %v3406
    %v3408 = vpop.f32.mrf.mxu0
    %3409 = vmatprep.mubr.bf16.mxu0 0
    %3410 = vmatmul.mubr.bf16.gmra.mxu0 %v3329
    %v3411 = vpop.f32.mrf.mxu0
    %v3412 = vadd.f32 0.0, %v3411
    %v3413 = vpop.f32.mrf.mxu0
    %v3414 = vpop.f32.mrf.mxu0
    %v3415 = vadd.f32 0.0, %v3414
    %v3416 = vpop.f32.mrf.mxu0
    %3417 = vmatprep.mubr.bf16.mxu0 0
    %3418 = vmatmul.mubr.bf16.gmra.mxu0 %v3332
    %v3419 = vpop.f32.mrf.mxu0
    %v3420 = vadd.f32 0.0, %v3419
    %v3421 = vpop.f32.mrf.mxu0
    %v3422 = vpop.f32.mrf.mxu0
    %v3423 = vadd.f32 0.0, %v3422
    %v3424 = vpop.f32.mrf.mxu0
    %3425 = vmatprep.mubr.bf16.mxu0 0
    %3426 = vmatmul.mubr.bf16.gmra.mxu0 %v3335
    %v3427 = vpop.f32.mrf.mxu0
    %v3428 = vadd.f32 0.0, %v3427
    %v3429 = vpop.f32.mrf.mxu0
    %v3430 = vpop.f32.mrf.mxu0
    %v3431 = vadd.f32 0.0, %v3430
    %v3432 = vpop.f32.mrf.mxu0
    %3433 = vdwg.mxu0
    %v3434 = vld [vmem:[%s13 + $0x30] sm:$0xf]
    %v3435 = vld [vmem:[%s13 + $0x34] sm:$0xf]
    %v3436 = vld [vmem:[%s13 + $0x38] sm:$0xf]
    %v3437 = vld [vmem:[%s13 + $0x3c] sm:$0xf]
    %v3438 = vld [vmem:[%s13 + $0x40] sm:$0xf]
    %v3439 = vld [vmem:[%s13 + $0x44] sm:$0xf]
    %v3440 = vld [vmem:[%s13 + $0x48] sm:$0xf]
    %v3441 = vld [vmem:[%s13 + $0x4c] sm:$0xf]
    %v3442 = vld [vmem:[%s13 + $0x50] sm:$0xf]
    %v3443 = vld [vmem:[%s13 + $0x54] sm:$0xf]
    %v3444 = vld [vmem:[%s13 + $0x58] sm:$0xf]
    %v3445 = vld [vmem:[%s13 + $0x5c] sm:$0xf]
    %v3446 = vld [vmem:[%s13 + $0x60] sm:$0xf]
    %v3447 = vld [vmem:[%s13 + $0x64] sm:$0xf]
    %v3448 = vld [vmem:[%s13 + $0x68] sm:$0xf]
    %v3449 = vld [vmem:[%s13 + $0x6c] sm:$0xf]
    %v3450 = vld [vmem:[%s13 + $0x70] sm:$0xf]
    %v3451 = vld [vmem:[%s13 + $0x74] sm:$0xf]
    %v3452 = vld [vmem:[%s13 + $0x78] sm:$0xf]
    %v3453 = vld [vmem:[%s13 + $0x7c] sm:$0xf]
    %v3454 = vld [vmem:[%s13 + $0x80] sm:$0xf]
    %v3455 = vld [vmem:[%s13 + $0x84] sm:$0xf]
    %v3456 = vld [vmem:[%s13 + $0x88] sm:$0xf]
    %v3457 = vld [vmem:[%s13 + $0x8c] sm:$0xf]
    %v3470 = vunpack.c.l.b16 %v3446
    %v3471 = vunpack.c.l.b16 %v3447
    %v3472 = vunpack.c.l.b16 %v3448
    %v3473 = vunpack.c.l.b16 %v3449
    %v3474 = vunpack.c.l.b16 %v3450
    %v3475 = vunpack.c.l.b16 %v3451
    %v3476 = vunpack.c.l.b16 %v3452
    %v3477 = vunpack.c.l.b16 %v3453
    %v3478 = vunpack.c.l.b16 %v3454
    %v3479 = vunpack.c.l.b16 %v3455
    %v3480 = vunpack.c.l.b16 %v3456
    %v3481 = vunpack.c.l.b16 %v3457
    %v3482 = vpack.c.b16 %v3471, %v3470
    %v3483 = vpack.c.b16 %v3473, %v3472
    %v3484 = vpack.c.b16 %v3475, %v3474
    %v3485 = vpack.c.b16 %v3477, %v3476
    %v3486 = vpack.c.b16 %v3479, %v3478
    %v3487 = vpack.c.b16 %v3481, %v3480
    %3494 = vmatprep.subr.bf16.mxu0 0
    %3495 = vmatpush1.bf16.msra.mxu0 0
    %3496 = vmatprep.subr.bf16.mxu0 0
    %3497 = vmatpush1.bf16.msra.mxu0 0
    %3498 = vmatprep.subr.bf16.mxu0 0
    %3499 = vmatpush1.bf16.msra.mxu0 %v3487
    %3500 = vmatprep.subr.bf16.mxu0 0
    %3501 = vmatpush1.bf16.msra.mxu0 %v3486
    %3502 = vmatprep.subr.bf16.mxu0 0
    %3503 = vmatpush1.bf16.msra.mxu0 %v3485
    %3504 = vmatprep.subr.bf16.mxu0 0
    %3505 = vmatpush1.bf16.msra.mxu0 %v3484
    %3506 = vmatprep.subr.bf16.mxu0 0
    %3507 = vmatpush1.bf16.msra.mxu0 %v3483
    %3508 = vmatprep.subr.bf16.mxu0 0
    %3509 = vmatpush1.bf16.msra.mxu0 %v3482
    %3510 = vmatprep.subr.bf16.mxu0 0
    %3511 = vmatpush2.bf16.msra.mxu0 0
    %3512 = vmatprep.subr.bf16.mxu0 0
    %3513 = vmatpush2.bf16.msra.mxu0 0
    %3514 = vmatprep.subr.bf16.mxu0 0
    %3515 = vmatpush2.bf16.msra.mxu0 0
    %3516 = vmatprep.subr.bf16.mxu0 0
    %3517 = vmatpush2.bf16.msra.mxu0 0
    %3518 = vmatprep.subr.bf16.mxu0 0
    %3519 = vmatpush2.bf16.msra.mxu0 0
    %3520 = vmatprep.subr.bf16.mxu0 0
    %3521 = vmatpush2.bf16.msra.mxu0 0
    %3522 = vmatprep.subr.bf16.mxu0 0
    %3523 = vmatpush2.bf16.msra.mxu0 0
    %3524 = vmatprep.subr.bf16.mxu0 0
    %3525 = vmatpush2.bf16.msra.mxu0 0
    %3526 = vmatprep.mubr.bf16.mxu0 0
    %3527 = vmatmul.mubr.bf16.gmra.mxu0 %v3314
    %v3528 = vpop.f32.mrf.mxu0
    %v3529 = vadd.f32 0.0, %v3528
    %v3530 = vpop.f32.mrf.mxu0
    %v3531 = vpop.f32.mrf.mxu0
    %v3532 = vadd.f32 0.0, %v3531
    %v3533 = vpop.f32.mrf.mxu0
    %3534 = vmatprep.mubr.bf16.mxu0 0
    %3535 = vmatmul.mubr.bf16.gmra.mxu0 %v3317
    %v3536 = vpop.f32.mrf.mxu0
    %v3537 = vadd.f32 0.0, %v3536
    %v3538 = vpop.f32.mrf.mxu0
    %v3539 = vpop.f32.mrf.mxu0
    %v3540 = vadd.f32 0.0, %v3539
    %v3541 = vpop.f32.mrf.mxu0
    %3542 = vmatprep.mubr.bf16.mxu0 0
    %3543 = vmatmul.mubr.bf16.gmra.mxu0 %v3320
    %v3544 = vpop.f32.mrf.mxu0
    %v3545 = vadd.f32 0.0, %v3544
    %v3546 = vpop.f32.mrf.mxu0
    %v3547 = vpop.f32.mrf.mxu0
    %v3548 = vadd.f32 0.0, %v3547
    %v3549 = vpop.f32.mrf.mxu0
    %3550 = vmatprep.mubr.bf16.mxu0 0
    %3551 = vmatmul.mubr.bf16.gmra.mxu0 %v3323
    %v3552 = vpop.f32.mrf.mxu0
    %v3553 = vadd.f32 0.0, %v3552
    %v3554 = vpop.f32.mrf.mxu0
    %v3555 = vpop.f32.mrf.mxu0
    %v3556 = vadd.f32 0.0, %v3555
    %v3557 = vpop.f32.mrf.mxu0
    %3558 = vmatprep.mubr.bf16.mxu0 0
    %3559 = vmatmul.mubr.bf16.gmra.mxu0 %v3326
    %v3560 = vpop.f32.mrf.mxu0
    %v3561 = vadd.f32 0.0, %v3560
    %v3562 = vpop.f32.mrf.mxu0
    %v3563 = vpop.f32.mrf.mxu0
    %v3564 = vadd.f32 0.0, %v3563
    %v3565 = vpop.f32.mrf.mxu0
    %3566 = vmatprep.mubr.bf16.mxu0 0
    %3567 = vmatmul.mubr.bf16.gmra.mxu0 %v3329
    %v3568 = vpop.f32.mrf.mxu0
    %v3569 = vadd.f32 0.0, %v3568
    %v3570 = vpop.f32.mrf.mxu0
    %v3571 = vpop.f32.mrf.mxu0
    %v3572 = vadd.f32 0.0, %v3571
    %v3573 = vpop.f32.mrf.mxu0
    %3574 = vmatprep.mubr.bf16.mxu0 0
    %3575 = vmatmul.mubr.bf16.gmra.mxu0 %v3332
    %v3576 = vpop.f32.mrf.mxu0
    %v3577 = vadd.f32 0.0, %v3576
    %v3578 = vpop.f32.mrf.mxu0
    %v3579 = vpop.f32.mrf.mxu0
    %v3580 = vadd.f32 0.0, %v3579
    %v3581 = vpop.f32.mrf.mxu0
    %3582 = vmatprep.mubr.bf16.mxu0 0
    %3583 = vmatmul.mubr.bf16.gmra.mxu0 %v3335
    %v3584 = vpop.f32.mrf.mxu0
    %v3585 = vadd.f32 0.0, %v3584
    %v3586 = vpop.f32.mrf.mxu0
    %v3587 = vpop.f32.mrf.mxu0
    %v3588 = vadd.f32 0.0, %v3587
    %v3589 = vpop.f32.mrf.mxu0
    %3590 = vdwg.mxu0
    %v3591 = vrot.slane %v3372, 7
    %v3592 = vrot.slane %v3375, 7
    %v3593 = vrot.slane %v3380, 7
    %v3594 = vrot.slane %v3383, 7
    %v3595 = vrot.slane %v3388, 7
    %v3596 = vrot.slane %v3391, 7
    %v3597 = vrot.slane %v3396, 7
    %v3598 = vrot.slane %v3399, 7
    %v3599 = vrot.slane %v3404, 7
    %v3600 = vrot.slane %v3407, 7
    %v3601 = vrot.slane %v3412, 7
    %v3602 = vrot.slane %v3415, 7
    %v3603 = vrot.slane %v3420, 7
    %v3604 = vrot.slane %v3423, 7
    %v3605 = vrot.slane %v3428, 7
    %v3606 = vrot.slane %v3431, 7
    %v3607 = vsel %vm2084, %v3605, %v3606
    %v3608 = vsel %vm2084, %v3604, %v3605
    %v3609 = vsel %vm2084, %v3603, %v3604
    %v3610 = vsel %vm2084, %v3602, %v3603
    %v3611 = vsel %vm2084, %v3601, %v3602
    %v3612 = vsel %vm2084, %v3600, %v3601
    %v3613 = vsel %vm2084, %v3599, %v3600
    %v3614 = vsel %vm2084, %v3598, %v3599
    %v3615 = vsel %vm2084, %v3597, %v3598
    %v3616 = vsel %vm2084, %v3596, %v3597
    %v3617 = vsel %vm2084, %v3595, %v3596
    %v3618 = vsel %vm2084, %v3594, %v3595
    %v3619 = vsel %vm2084, %v3593, %v3594
    %v3620 = vsel %vm2084, %v3592, %v3593
    %v3621 = vsel %vm2084, %v3591, %v3592
    %v3622 = vsel %vm2084, %v3606, %v3591
    %v3623 = vsel %vm2117, %v3622, 0.0
    %v3624 = vsel %vm2118, %v3621, 0.0
    %v3625 = vsel %vm2119, %v3620, 0.0
    %v3626 = vsel %vm2120, %v3619, 0.0
    %v3627 = vsel %vm2121, %v3618, 0.0
    %v3628 = vsel %vm2122, %v3617, 0.0
    %v3629 = vsel %vm2123, %v3616, 0.0
    %v3630 = vsel %vm2124, %v3615, 0.0
    %v3631 = vsel %vm2125, %v3614, 0.0
    %v3632 = vsel %vm2126, %v3613, 0.0
    %v3633 = vsel %vm2127, %v3612, 0.0
    %v3634 = vsel %vm2128, %v3611, 0.0
    %v3635 = vsel %vm2129, %v3610, 0.0
    %v3636 = vsel %vm2130, %v3609, 0.0
    %v3637 = vsel %vm2131, %v3608, 0.0
    %v3638 = vsel %vm2132, %v3607, 0.0
    %v3651 = vunpack.c.l.b16 %v3434
    %v3652 = vunpack.c.l.b16 %v3435
    %v3653 = vunpack.c.l.b16 %v3436
    %v3654 = vunpack.c.l.b16 %v3437
    %v3655 = vunpack.c.l.b16 %v3438
    %v3656 = vunpack.c.l.b16 %v3439
    %v3657 = vunpack.c.l.b16 %v3440
    %v3658 = vunpack.c.l.b16 %v3441
    %v3659 = vunpack.c.l.b16 %v3442
    %v3660 = vunpack.c.l.b16 %v3443
    %v3661 = vunpack.c.l.b16 %v3444
    %v3662 = vunpack.c.l.b16 %v3445
    %v3663 = vpack.c.b16 %v3652, %v3651
    %v3664 = vpack.c.b16 %v3654, %v3653
    %v3665 = vpack.c.b16 %v3656, %v3655
    %v3666 = vpack.c.b16 %v3658, %v3657
    %v3667 = vpack.c.b16 %v3660, %v3659
    %v3668 = vpack.c.b16 %v3662, %v3661
    %3675 = vmatprep.subr.bf16.mxu0 0
    %3676 = vmatpush1.bf16.msra.mxu0 0
    %3677 = vmatprep.subr.bf16.mxu0 0
    %3678 = vmatpush1.bf16.msra.mxu0 0
    %3679 = vmatprep.subr.bf16.mxu0 0
    %3680 = vmatpush1.bf16.msra.mxu0 %v3668
    %3681 = vmatprep.subr.bf16.mxu0 0
    %3682 = vmatpush1.bf16.msra.mxu0 %v3667
    %3683 = vmatprep.subr.bf16.mxu0 0
    %3684 = vmatpush1.bf16.msra.mxu0 %v3666
    %3685 = vmatprep.subr.bf16.mxu0 0
    %3686 = vmatpush1.bf16.msra.mxu0 %v3665
    %3687 = vmatprep.subr.bf16.mxu0 0
    %3688 = vmatpush1.bf16.msra.mxu0 %v3664
    %3689 = vmatprep.subr.bf16.mxu0 0
    %3690 = vmatpush1.bf16.msra.mxu0 %v3663
    %3691 = vmatprep.subr.bf16.mxu0 0
    %3692 = vmatpush2.bf16.msra.mxu0 0
    %3693 = vmatprep.subr.bf16.mxu0 0
    %3694 = vmatpush2.bf16.msra.mxu0 0
    %3695 = vmatprep.subr.bf16.mxu0 0
    %3696 = vmatpush2.bf16.msra.mxu0 0
    %3697 = vmatprep.subr.bf16.mxu0 0
    %3698 = vmatpush2.bf16.msra.mxu0 0
    %3699 = vmatprep.subr.bf16.mxu0 0
    %3700 = vmatpush2.bf16.msra.mxu0 0
    %3701 = vmatprep.subr.bf16.mxu0 0
    %3702 = vmatpush2.bf16.msra.mxu0 0
    %3703 = vmatprep.subr.bf16.mxu0 0
    %3704 = vmatpush2.bf16.msra.mxu0 0
    %3705 = vmatprep.subr.bf16.mxu0 0
    %3706 = vmatpush2.bf16.msra.mxu0 0
    %3707 = vmatprep.mubr.bf16.mxu0 0
    %3708 = vmatmul.mubr.bf16.gmra.mxu0 %v3314
    %v3709 = vpop.f32.mrf.mxu0
    %v3710 = vadd.f32 %v3623, %v3709
    %v3711 = vpop.f32.mrf.mxu0
    %v3712 = vpop.f32.mrf.mxu0
    %v3713 = vadd.f32 %v3624, %v3712
    %v3714 = vpop.f32.mrf.mxu0
    %3715 = vmatprep.mubr.bf16.mxu0 0
    %3716 = vmatmul.mubr.bf16.gmra.mxu0 %v3317
    %v3717 = vpop.f32.mrf.mxu0
    %v3718 = vadd.f32 %v3625, %v3717
    %v3719 = vpop.f32.mrf.mxu0
    %v3720 = vpop.f32.mrf.mxu0
    %v3721 = vadd.f32 %v3626, %v3720
    %v3722 = vpop.f32.mrf.mxu0
    %3723 = vmatprep.mubr.bf16.mxu0 0
    %3724 = vmatmul.mubr.bf16.gmra.mxu0 %v3320
    %v3725 = vpop.f32.mrf.mxu0
    %v3726 = vadd.f32 %v3627, %v3725
    %v3727 = vpop.f32.mrf.mxu0
    %v3728 = vpop.f32.mrf.mxu0
    %v3729 = vadd.f32 %v3628, %v3728
    %v3730 = vpop.f32.mrf.mxu0
    %3731 = vmatprep.mubr.bf16.mxu0 0
    %3732 = vmatmul.mubr.bf16.gmra.mxu0 %v3323
    %v3733 = vpop.f32.mrf.mxu0
    %v3734 = vadd.f32 %v3629, %v3733
    %v3735 = vpop.f32.mrf.mxu0
    %v3736 = vpop.f32.mrf.mxu0
    %v3737 = vadd.f32 %v3630, %v3736
    %v3738 = vpop.f32.mrf.mxu0
    %3739 = vmatprep.mubr.bf16.mxu0 0
    %3740 = vmatmul.mubr.bf16.gmra.mxu0 %v3326
    %v3741 = vpop.f32.mrf.mxu0
    %v3742 = vadd.f32 %v3631, %v3741
    %v3743 = vpop.f32.mrf.mxu0
    %v3744 = vpop.f32.mrf.mxu0
    %v3745 = vadd.f32 %v3632, %v3744
    %v3746 = vpop.f32.mrf.mxu0
    %3747 = vmatprep.mubr.bf16.mxu0 0
    %3748 = vmatmul.mubr.bf16.gmra.mxu0 %v3329
    %v3749 = vpop.f32.mrf.mxu0
    %v3750 = vadd.f32 %v3633, %v3749
    %v3751 = vpop.f32.mrf.mxu0
    %v3752 = vpop.f32.mrf.mxu0
    %v3753 = vadd.f32 %v3634, %v3752
    %v3754 = vpop.f32.mrf.mxu0
    %3755 = vmatprep.mubr.bf16.mxu0 0
    %3756 = vmatmul.mubr.bf16.gmra.mxu0 %v3332
    %v3757 = vpop.f32.mrf.mxu0
    %v3758 = vadd.f32 %v3635, %v3757
    %v3759 = vpop.f32.mrf.mxu0
    %v3760 = vpop.f32.mrf.mxu0
    %v3761 = vadd.f32 %v3636, %v3760
    %v3762 = vpop.f32.mrf.mxu0
    %3763 = vmatprep.mubr.bf16.mxu0 0
    %3764 = vmatmul.mubr.bf16.gmra.mxu0 %v3335
    %v3765 = vpop.f32.mrf.mxu0
    %v3766 = vadd.f32 %v3637, %v3765
    %v3767 = vpop.f32.mrf.mxu0
    %v3768 = vpop.f32.mrf.mxu0
    %v3769 = vadd.f32 %v3638, %v3768
    %v3770 = vpop.f32.mrf.mxu0
    %3771 = vdwg.mxu0
    %v3772 = vrot.slane %v3529, 1
    %v3773 = vrot.slane %v3532, 1
    %v3774 = vrot.slane %v3537, 1
    %v3775 = vrot.slane %v3540, 1
    %v3776 = vrot.slane %v3545, 1
    %v3777 = vrot.slane %v3548, 1
    %v3778 = vrot.slane %v3553, 1
    %v3779 = vrot.slane %v3556, 1
    %v3780 = vrot.slane %v3561, 1
    %v3781 = vrot.slane %v3564, 1
    %v3782 = vrot.slane %v3569, 1
    %v3783 = vrot.slane %v3572, 1
    %v3784 = vrot.slane %v3577, 1
    %v3785 = vrot.slane %v3580, 1
    %v3786 = vrot.slane %v3585, 1
    %v3787 = vrot.slane %v3588, 1
    %v3788 = vsel %vm2310, %v3786, %v3787
    %v3789 = vsel %vm2310, %v3785, %v3786
    %v3790 = vsel %vm2310, %v3784, %v3785
    %v3791 = vsel %vm2310, %v3783, %v3784
    %v3792 = vsel %vm2310, %v3782, %v3783
    %v3793 = vsel %vm2310, %v3781, %v3782
    %v3794 = vsel %vm2310, %v3780, %v3781
    %v3795 = vsel %vm2310, %v3779, %v3780
    %v3796 = vsel %vm2310, %v3778, %v3779
    %v3797 = vsel %vm2310, %v3777, %v3778
    %v3798 = vsel %vm2310, %v3776, %v3777
    %v3799 = vsel %vm2310, %v3775, %v3776
    %v3800 = vsel %vm2310, %v3774, %v3775
    %v3801 = vsel %vm2310, %v3773, %v3774
    %v3802 = vsel %vm2310, %v3772, %v3773
    %v3803 = vsel %vm2310, %v3787, %v3772
    %v3804 = vsel %vm2343, %v3802, 0.0
    %v3805 = vsel %vm2344, %v3801, 0.0
    %v3806 = vsel %vm2345, %v3800, 0.0
    %v3807 = vsel %vm2346, %v3799, 0.0
    %v3808 = vsel %vm2347, %v3798, 0.0
    %v3809 = vsel %vm2348, %v3797, 0.0
    %v3810 = vsel %vm2349, %v3796, 0.0
    %v3811 = vsel %vm2350, %v3795, 0.0
    %v3812 = vsel %vm2351, %v3794, 0.0
    %v3813 = vsel %vm2352, %v3793, 0.0
    %v3814 = vsel %vm2353, %v3792, 0.0
    %v3815 = vsel %vm2354, %v3791, 0.0
    %v3816 = vsel %vm2355, %v3790, 0.0
    %v3817 = vsel %vm2356, %v3789, 0.0
    %v3818 = vsel %vm2357, %v3788, 0.0
    %v3819 = vsel %vm2358, %v3803, 0.0
    %v3820 = vadd.f32 %v3710, %v3804
    %v3821 = vadd.f32 %v3713, %v3805
    %v3822 = vadd.f32 %v3718, %v3806
    %v3823 = vadd.f32 %v3721, %v3807
    %v3824 = vadd.f32 %v3726, %v3808
    %v3825 = vadd.f32 %v3729, %v3809
    %v3826 = vadd.f32 %v3734, %v3810
    %v3827 = vadd.f32 %v3737, %v3811
    %v3828 = vadd.f32 %v3742, %v3812
    %v3829 = vadd.f32 %v3745, %v3813
    %v3830 = vadd.f32 %v3750, %v3814
    %v3831 = vadd.f32 %v3753, %v3815
    %v3832 = vadd.f32 %v3758, %v3816
    %v3833 = vadd.f32 %v3761, %v3817
    %v3834 = vadd.f32 %v3766, %v3818
    %v3835 = vadd.f32 %v3769, %v3819
    %v3836 = vld [vmem:[%s14] sm:$0x1]
    %v3837 = vlaneseq
    %v3838 = vshrl.u32 %v3837, 7
    %v3839 = vsub.s32 0, %v3838
    %v3840 = vrot.slane %v3836, %v3839
    %v3841 = vadd.f32 %v3820, %v3840
    %v3842 = vadd.f32 %v3821, %v3840
    %v3843 = vadd.f32 %v3822, %v3840
    %v3844 = vadd.f32 %v3823, %v3840
    %v3845 = vadd.f32 %v3824, %v3840
    %v3846 = vadd.f32 %v3825, %v3840
    %v3847 = vadd.f32 %v3826, %v3840
    %v3848 = vadd.f32 %v3827, %v3840
    %v3849 = vadd.f32 %v3828, %v3840
    %v3850 = vadd.f32 %v3829, %v3840
    %v3851 = vadd.f32 %v3830, %v3840
    %v3852 = vadd.f32 %v3831, %v3840
    %v3853 = vadd.f32 %v3832, %v3840
    %v3854 = vadd.f32 %v3833, %v3840
    %v3855 = vadd.f32 %v3834, %v3840
    %v3856 = vadd.f32 %v3835, %v3840
    %v3857 = vmax.f32 %v3841, 0.0
    %v3858 = vmax.f32 %v3842, 0.0
    %v3859 = vmax.f32 %v3843, 0.0
    %v3860 = vmax.f32 %v3844, 0.0
    %v3861 = vmax.f32 %v3845, 0.0
    %v3862 = vmax.f32 %v3846, 0.0
    %v3863 = vmax.f32 %v3847, 0.0
    %v3864 = vmax.f32 %v3848, 0.0
    %v3865 = vmax.f32 %v3849, 0.0
    %v3866 = vmax.f32 %v3850, 0.0
    %v3867 = vmax.f32 %v3851, 0.0
    %v3868 = vmax.f32 %v3852, 0.0
    %v3869 = vmax.f32 %v3853, 0.0
    %v3870 = vmax.f32 %v3854, 0.0
    %v3871 = vmax.f32 %v3855, 0.0
    %v3872 = vmax.f32 %v3856, 0.0
    %v3873 = vld [vmem:[%s14 + $0x1] sm:$0x1]
    %v3874 = vlaneseq
    %v3875 = vshrl.u32 %v3874, 7
    %v3876 = vsub.s32 0, %v3875
    %v3877 = vrot.slane %v3873, %v3876
    %v3878 = vmul.f32 %v3857, %v3877
    %v3879 = vmul.f32 %v3858, %v3877
    %v3880 = vmul.f32 %v3859, %v3877
    %v3881 = vmul.f32 %v3860, %v3877
    %v3882 = vmul.f32 %v3861, %v3877
    %v3883 = vmul.f32 %v3862, %v3877
    %v3884 = vmul.f32 %v3863, %v3877
    %v3885 = vmul.f32 %v3864, %v3877
    %v3886 = vmul.f32 %v3865, %v3877
    %v3887 = vmul.f32 %v3866, %v3877
    %v3888 = vmul.f32 %v3867, %v3877
    %v3889 = vmul.f32 %v3868, %v3877
    %v3890 = vmul.f32 %v3869, %v3877
    %v3891 = vmul.f32 %v3870, %v3877
    %v3892 = vmul.f32 %v3871, %v3877
    %v3893 = vmul.f32 %v3872, %v3877
    %v3894 = vld [vmem:[%s14 + $0x2] sm:$0x1]
    %v3895 = vlaneseq
    %v3896 = vshrl.u32 %v3895, 7
    %v3897 = vsub.s32 0, %v3896
    %v3898 = vrot.slane %v3894, %v3897
    %v3899 = vadd.f32 %v3878, %v3898
    %v3900 = vadd.f32 %v3879, %v3898
    %v3901 = vadd.f32 %v3880, %v3898
    %v3902 = vadd.f32 %v3881, %v3898
    %v3903 = vadd.f32 %v3882, %v3898
    %v3904 = vadd.f32 %v3883, %v3898
    %v3905 = vadd.f32 %v3884, %v3898
    %v3906 = vadd.f32 %v3885, %v3898
    %v3907 = vadd.f32 %v3886, %v3898
    %v3908 = vadd.f32 %v3887, %v3898
    %v3909 = vadd.f32 %v3888, %v3898
    %v3910 = vadd.f32 %v3889, %v3898
    %v3911 = vadd.f32 %v3890, %v3898
    %v3912 = vadd.f32 %v3891, %v3898
    %v3913 = vadd.f32 %v3892, %v3898
    %v3914 = vadd.f32 %v3893, %v3898
    %v3915 = vpack.c.bf16 %v3900, %v3899
    %v3916 = vpack.c.bf16 %v3902, %v3901
    %v3917 = vpack.c.bf16 %v3904, %v3903
    %v3918 = vpack.c.bf16 %v3906, %v3905
    %v3919 = vpack.c.bf16 %v3908, %v3907
    %v3920 = vpack.c.bf16 %v3910, %v3909
    %v3921 = vpack.c.bf16 %v3912, %v3911
    %v3922 = vpack.c.bf16 %v3914, %v3913
    %v3923 = vld [vmem:[%s15] sm:$0xff]
    %v3924 = vld [vmem:[%s15 + $0x8] sm:$0xff]
    %v3925 = vld [vmem:[%s15 + $0x10] sm:$0xff]
    %v3926 = vld [vmem:[%s15 + $0x18] sm:$0xff]
    %v3927 = vld [vmem:[%s15 + $0x20] sm:$0xff]
    %v3928 = vld [vmem:[%s15 + $0x28] sm:$0xff]
    %v3929 = vld [vmem:[%s15 + $0x30] sm:$0xff]
    %v3930 = vld [vmem:[%s15 + $0x38] sm:$0xff]
    %v3931 = vld [vmem:[%s15 + $0x40] sm:$0xff]
    %v3932 = vld [vmem:[%s15 + $0x48] sm:$0xff]
    %v3933 = vld [vmem:[%s15 + $0x50] sm:$0xff]
    %v3934 = vld [vmem:[%s15 + $0x58] sm:$0xff]
    %v3947 = vunpack.c.l.b16 %v3923
    %v3948 = vunpack.c.h.b16 %v3923
    %v3949 = vunpack.c.l.b16 %v3924
    %v3950 = vunpack.c.h.b16 %v3924
    %v3951 = vunpack.c.l.b16 %v3925
    %v3952 = vunpack.c.h.b16 %v3925
    %v3953 = vunpack.c.l.b16 %v3926
    %v3954 = vunpack.c.h.b16 %v3926
    %v3955 = vunpack.c.l.b16 %v3927
    %v3956 = vunpack.c.h.b16 %v3927
    %v3957 = vunpack.c.l.b16 %v3928
    %v3958 = vunpack.c.h.b16 %v3928
    %v3959 = vunpack.c.l.b16 %v3929
    %v3960 = vunpack.c.h.b16 %v3929
    %v3961 = vunpack.c.l.b16 %v3930
    %v3962 = vunpack.c.h.b16 %v3930
    %v3963 = vunpack.c.l.b16 %v3931
    %v3964 = vunpack.c.h.b16 %v3931
    %v3965 = vunpack.c.l.b16 %v3932
    %v3966 = vunpack.c.h.b16 %v3932
    %v3967 = vunpack.c.l.b16 %v3933
    %v3968 = vunpack.c.h.b16 %v3933
    %v3969 = vunpack.c.l.b16 %v3934
    %v3970 = vunpack.c.h.b16 %v3934
    %v3971 = vpack.c.b16 %v3949, %v3947
    %v3972 = vpack.c.b16 %v3950, %v3948
    %v3973 = vpack.c.b16 %v3953, %v3951
    %v3974 = vpack.c.b16 %v3954, %v3952
    %v3975 = vpack.c.b16 %v3957, %v3955
    %v3976 = vpack.c.b16 %v3958, %v3956
    %v3977 = vpack.c.b16 %v3961, %v3959
    %v3978 = vpack.c.b16 %v3962, %v3960
    %v3979 = vpack.c.b16 %v3965, %v3963
    %v3980 = vpack.c.b16 %v3966, %v3964
    %v3981 = vpack.c.b16 %v3969, %v3967
    %v3982 = vpack.c.b16 %v3970, %v3968
    %v3996 = vsel %vm1119, %v3915, 0
    %v3999 = vsel %vm1119, %v3916, 0
    %v4002 = vsel %vm1119, %v3917, 0
    %v4005 = vsel %vm1119, %v3918, 0
    %v4008 = vsel %vm1119, %v3919, 0
    %v4011 = vsel %vm1119, %v3920, 0
    %v4014 = vsel %vm1119, %v3921, 0
    %v4017 = vsel %vm1119, %v3922, 0
    %4019 = vmatprep.subr.bf16.mxu0 0
    %4020 = vmatpush1.bf16.msra.mxu0 0
    %4021 = vmatprep.subr.bf16.mxu0 0
    %4022 = vmatpush1.bf16.msra.mxu0 0
    %4023 = vmatprep.subr.bf16.mxu0 %v3982
    %4024 = vmatpush1.bf16.msra.mxu0 %v3981
    %4025 = vmatprep.subr.bf16.mxu0 %v3980
    %4026 = vmatpush1.bf16.msra.mxu0 %v3979
    %4027 = vmatprep.subr.bf16.mxu0 %v3978
    %4028 = vmatpush1.bf16.msra.mxu0 %v3977
    %4029 = vmatprep.subr.bf16.mxu0 %v3976
    %4030 = vmatpush1.bf16.msra.mxu0 %v3975
    %4031 = vmatprep.subr.bf16.mxu0 %v3974
    %4032 = vmatpush1.bf16.msra.mxu0 %v3973
    %4033 = vmatprep.subr.bf16.mxu0 %v3972
    %4034 = vmatpush1.bf16.msra.mxu0 %v3971
    %4035 = vmatprep.subr.bf16.mxu0 0
    %4036 = vmatpush2.bf16.msra.mxu0 0
    %4037 = vmatprep.subr.bf16.mxu0 0
    %4038 = vmatpush2.bf16.msra.mxu0 0
    %4039 = vmatprep.subr.bf16.mxu0 0
    %4040 = vmatpush2.bf16.msra.mxu0 0
    %4041 = vmatprep.subr.bf16.mxu0 0
    %4042 = vmatpush2.bf16.msra.mxu0 0
    %4043 = vmatprep.subr.bf16.mxu0 0
    %4044 = vmatpush2.bf16.msra.mxu0 0
    %4045 = vmatprep.subr.bf16.mxu0 0
    %4046 = vmatpush2.bf16.msra.mxu0 0
    %4047 = vmatprep.subr.bf16.mxu0 0
    %4048 = vmatpush2.bf16.msra.mxu0 0
    %4049 = vmatprep.subr.bf16.mxu0 0
    %4050 = vmatpush2.bf16.msra.mxu0 0
    %4051 = vmatprep.mubr.bf16.mxu0 0
    %4052 = vmatmul.mubr.bf16.gmra.mxu0 %v3996
    %v4053 = vpop.f32.mrf.mxu0
    %v4054 = vadd.f32 0.0, %v4053
    %v4055 = vpop.f32.mrf.mxu0
    %v4056 = vadd.f32 0.0, %v4055
    %v4057 = vpop.f32.mrf.mxu0
    %v4058 = vadd.f32 0.0, %v4057
    %v4059 = vpop.f32.mrf.mxu0
    %v4060 = vadd.f32 0.0, %v4059
    %4061 = vmatprep.mubr.bf16.mxu0 0
    %4062 = vmatmul.mubr.bf16.gmra.mxu0 %v3999
    %v4063 = vpop.f32.mrf.mxu0
    %v4064 = vadd.f32 0.0, %v4063
    %v4065 = vpop.f32.mrf.mxu0
    %v4066 = vadd.f32 0.0, %v4065
    %v4067 = vpop.f32.mrf.mxu0
    %v4068 = vadd.f32 0.0, %v4067
    %v4069 = vpop.f32.mrf.mxu0
    %v4070 = vadd.f32 0.0, %v4069
    %4071 = vmatprep.mubr.bf16.mxu0 0
    %4072 = vmatmul.mubr.bf16.gmra.mxu0 %v4002
    %v4073 = vpop.f32.mrf.mxu0
    %v4074 = vadd.f32 0.0, %v4073
    %v4075 = vpop.f32.mrf.mxu0
    %v4076 = vadd.f32 0.0, %v4075
    %v4077 = vpop.f32.mrf.mxu0
    %v4078 = vadd.f32 0.0, %v4077
    %v4079 = vpop.f32.mrf.mxu0
    %v4080 = vadd.f32 0.0, %v4079
    %4081 = vmatprep.mubr.bf16.mxu0 0
    %4082 = vmatmul.mubr.bf16.gmra.mxu0 %v4005
    %v4083 = vpop.f32.mrf.mxu0
    %v4084 = vadd.f32 0.0, %v4083
    %v4085 = vpop.f32.mrf.mxu0
    %v4086 = vadd.f32 0.0, %v4085
    %v4087 = vpop.f32.mrf.mxu0
    %v4088 = vadd.f32 0.0, %v4087
    %v4089 = vpop.f32.mrf.mxu0
    %v4090 = vadd.f32 0.0, %v4089
    %4091 = vmatprep.mubr.bf16.mxu0 0
    %4092 = vmatmul.mubr.bf16.gmra.mxu0 %v4008
    %v4093 = vpop.f32.mrf.mxu0
    %v4094 = vadd.f32 0.0, %v4093
    %v4095 = vpop.f32.mrf.mxu0
    %v4096 = vadd.f32 0.0, %v4095
    %v4097 = vpop.f32.mrf.mxu0
    %v4098 = vadd.f32 0.0, %v4097
    %v4099 = vpop.f32.mrf.mxu0
    %v4100 = vadd.f32 0.0, %v4099
    %4101 = vmatprep.mubr.bf16.mxu0 0
    %4102 = vmatmul.mubr.bf16.gmra.mxu0 %v4011
    %v4103 = vpop.f32.mrf.mxu0
    %v4104 = vadd.f32 0.0, %v4103
    %v4105 = vpop.f32.mrf.mxu0
    %v4106 = vadd.f32 0.0, %v4105
    %v4107 = vpop.f32.mrf.mxu0
    %v4108 = vadd.f32 0.0, %v4107
    %v4109 = vpop.f32.mrf.mxu0
    %v4110 = vadd.f32 0.0, %v4109
    %4111 = vmatprep.mubr.bf16.mxu0 0
    %4112 = vmatmul.mubr.bf16.gmra.mxu0 %v4014
    %v4113 = vpop.f32.mrf.mxu0
    %v4114 = vadd.f32 0.0, %v4113
    %v4115 = vpop.f32.mrf.mxu0
    %v4116 = vadd.f32 0.0, %v4115
    %v4117 = vpop.f32.mrf.mxu0
    %v4118 = vadd.f32 0.0, %v4117
    %v4119 = vpop.f32.mrf.mxu0
    %v4120 = vadd.f32 0.0, %v4119
    %4121 = vmatprep.mubr.bf16.mxu0 0
    %4122 = vmatmul.mubr.bf16.gmra.mxu0 %v4017
    %v4123 = vpop.f32.mrf.mxu0
    %v4124 = vadd.f32 0.0, %v4123
    %v4125 = vpop.f32.mrf.mxu0
    %v4126 = vadd.f32 0.0, %v4125
    %v4127 = vpop.f32.mrf.mxu0
    %v4128 = vadd.f32 0.0, %v4127
    %v4129 = vpop.f32.mrf.mxu0
    %v4130 = vadd.f32 0.0, %v4129
    %4131 = vdwg.mxu0
    %v4132 = vld [vmem:[%s15 + $0x60] sm:$0xff]
    %v4133 = vld [vmem:[%s15 + $0x68] sm:$0xff]
    %v4134 = vld [vmem:[%s15 + $0x70] sm:$0xff]
    %v4135 = vld [vmem:[%s15 + $0x78] sm:$0xff]
    %v4136 = vld [vmem:[%s15 + $0x80] sm:$0xff]
    %v4137 = vld [vmem:[%s15 + $0x88] sm:$0xff]
    %v4138 = vld [vmem:[%s15 + $0x90] sm:$0xff]
    %v4139 = vld [vmem:[%s15 + $0x98] sm:$0xff]
    %v4140 = vld [vmem:[%s15 + $0xa0] sm:$0xff]
    %v4141 = vld [vmem:[%s15 + $0xa8] sm:$0xff]
    %v4142 = vld [vmem:[%s15 + $0xb0] sm:$0xff]
    %v4143 = vld [vmem:[%s15 + $0xb8] sm:$0xff]
    %v4144 = vld [vmem:[%s15 + $0xc0] sm:$0xff]
    %v4145 = vld [vmem:[%s15 + $0xc8] sm:$0xff]
    %v4146 = vld [vmem:[%s15 + $0xd0] sm:$0xff]
    %v4147 = vld [vmem:[%s15 + $0xd8] sm:$0xff]
    %v4148 = vld [vmem:[%s15 + $0xe0] sm:$0xff]
    %v4149 = vld [vmem:[%s15 + $0xe8] sm:$0xff]
    %v4150 = vld [vmem:[%s15 + $0xf0] sm:$0xff]
    %v4151 = vld [vmem:[%s15 + $0xf8] sm:$0xff]
    %v4152 = vld [vmem:[%s15 + $0x100] sm:$0xff]
    %v4153 = vld [vmem:[%s15 + $0x108] sm:$0xff]
    %v4154 = vld [vmem:[%s15 + $0x110] sm:$0xff]
    %v4155 = vld [vmem:[%s15 + $0x118] sm:$0xff]
    %v4168 = vunpack.c.l.b16 %v4144
    %v4169 = vunpack.c.h.b16 %v4144
    %v4170 = vunpack.c.l.b16 %v4145
    %v4171 = vunpack.c.h.b16 %v4145
    %v4172 = vunpack.c.l.b16 %v4146
    %v4173 = vunpack.c.h.b16 %v4146
    %v4174 = vunpack.c.l.b16 %v4147
    %v4175 = vunpack.c.h.b16 %v4147
    %v4176 = vunpack.c.l.b16 %v4148
    %v4177 = vunpack.c.h.b16 %v4148
    %v4178 = vunpack.c.l.b16 %v4149
    %v4179 = vunpack.c.h.b16 %v4149
    %v4180 = vunpack.c.l.b16 %v4150
    %v4181 = vunpack.c.h.b16 %v4150
    %v4182 = vunpack.c.l.b16 %v4151
    %v4183 = vunpack.c.h.b16 %v4151
    %v4184 = vunpack.c.l.b16 %v4152
    %v4185 = vunpack.c.h.b16 %v4152
    %v4186 = vunpack.c.l.b16 %v4153
    %v4187 = vunpack.c.h.b16 %v4153
    %v4188 = vunpack.c.l.b16 %v4154
    %v4189 = vunpack.c.h.b16 %v4154
    %v4190 = vunpack.c.l.b16 %v4155
    %v4191 = vunpack.c.h.b16 %v4155
    %v4192 = vpack.c.b16 %v4170, %v4168
    %v4193 = vpack.c.b16 %v4171, %v4169
    %v4194 = vpack.c.b16 %v4174, %v4172
    %v4195 = vpack.c.b16 %v4175, %v4173
    %v4196 = vpack.c.b16 %v4178, %v4176
    %v4197 = vpack.c.b16 %v4179, %v4177
    %v4198 = vpack.c.b16 %v4182, %v4180
    %v4199 = vpack.c.b16 %v4183, %v4181
    %v4200 = vpack.c.b16 %v4186, %v4184
    %v4201 = vpack.c.b16 %v4187, %v4185
    %v4202 = vpack.c.b16 %v4190, %v4188
    %v4203 = vpack.c.b16 %v4191, %v4189
    %4216 = vmatprep.subr.bf16.mxu0 0
    %4217 = vmatpush1.bf16.msra.mxu0 0
    %4218 = vmatprep.subr.bf16.mxu0 0
    %4219 = vmatpush1.bf16.msra.mxu0 0
    %4220 = vmatprep.subr.bf16.mxu0 %v4203
    %4221 = vmatpush1.bf16.msra.mxu0 %v4202
    %4222 = vmatprep.subr.bf16.mxu0 %v4201
    %4223 = vmatpush1.bf16.msra.mxu0 %v4200
    %4224 = vmatprep.subr.bf16.mxu0 %v4199
    %4225 = vmatpush1.bf16.msra.mxu0 %v4198
    %4226 = vmatprep.subr.bf16.mxu0 %v4197
    %4227 = vmatpush1.bf16.msra.mxu0 %v4196
    %4228 = vmatprep.subr.bf16.mxu0 %v4195
    %4229 = vmatpush1.bf16.msra.mxu0 %v4194
    %4230 = vmatprep.subr.bf16.mxu0 %v4193
    %4231 = vmatpush1.bf16.msra.mxu0 %v4192
    %4232 = vmatprep.subr.bf16.mxu0 0
    %4233 = vmatpush2.bf16.msra.mxu0 0
    %4234 = vmatprep.subr.bf16.mxu0 0
    %4235 = vmatpush2.bf16.msra.mxu0 0
    %4236 = vmatprep.subr.bf16.mxu0 0
    %4237 = vmatpush2.bf16.msra.mxu0 0
    %4238 = vmatprep.subr.bf16.mxu0 0
    %4239 = vmatpush2.bf16.msra.mxu0 0
    %4240 = vmatprep.subr.bf16.mxu0 0
    %4241 = vmatpush2.bf16.msra.mxu0 0
    %4242 = vmatprep.subr.bf16.mxu0 0
    %4243 = vmatpush2.bf16.msra.mxu0 0
    %4244 = vmatprep.subr.bf16.mxu0 0
    %4245 = vmatpush2.bf16.msra.mxu0 0
    %4246 = vmatprep.subr.bf16.mxu0 0
    %4247 = vmatpush2.bf16.msra.mxu0 0
    %4248 = vmatprep.mubr.bf16.mxu0 0
    %4249 = vmatmul.mubr.bf16.gmra.mxu0 %v3996
    %v4250 = vpop.f32.mrf.mxu0
    %v4251 = vadd.f32 0.0, %v4250
    %v4252 = vpop.f32.mrf.mxu0
    %v4253 = vadd.f32 0.0, %v4252
    %v4254 = vpop.f32.mrf.mxu0
    %v4255 = vadd.f32 0.0, %v4254
    %v4256 = vpop.f32.mrf.mxu0
    %v4257 = vadd.f32 0.0, %v4256
    %4258 = vmatprep.mubr.bf16.mxu0 0
    %4259 = vmatmul.mubr.bf16.gmra.mxu0 %v3999
    %v4260 = vpop.f32.mrf.mxu0
    %v4261 = vadd.f32 0.0, %v4260
    %v4262 = vpop.f32.mrf.mxu0
    %v4263 = vadd.f32 0.0, %v4262
    %v4264 = vpop.f32.mrf.mxu0
    %v4265 = vadd.f32 0.0, %v4264
    %v4266 = vpop.f32.mrf.mxu0
    %v4267 = vadd.f32 0.0, %v4266
    %4268 = vmatprep.mubr.bf16.mxu0 0
    %4269 = vmatmul.mubr.bf16.gmra.mxu0 %v4002
    %v4270 = vpop.f32.mrf.mxu0
    %v4271 = vadd.f32 0.0, %v4270
    %v4272 = vpop.f32.mrf.mxu0
    %v4273 = vadd.f32 0.0, %v4272
    %v4274 = vpop.f32.mrf.mxu0
    %v4275 = vadd.f32 0.0, %v4274
    %v4276 = vpop.f32.mrf.mxu0
    %v4277 = vadd.f32 0.0, %v4276
    %4278 = vmatprep.mubr.bf16.mxu0 0
    %4279 = vmatmul.mubr.bf16.gmra.mxu0 %v4005
    %v4280 = vpop.f32.mrf.mxu0
    %v4281 = vadd.f32 0.0, %v4280
    %v4282 = vpop.f32.mrf.mxu0
    %v4283 = vadd.f32 0.0, %v4282
    %v4284 = vpop.f32.mrf.mxu0
    %v4285 = vadd.f32 0.0, %v4284
    %v4286 = vpop.f32.mrf.mxu0
    %v4287 = vadd.f32 0.0, %v4286
    %4288 = vmatprep.mubr.bf16.mxu0 0
    %4289 = vmatmul.mubr.bf16.gmra.mxu0 %v4008
    %v4290 = vpop.f32.mrf.mxu0
    %v4291 = vadd.f32 0.0, %v4290
    %v4292 = vpop.f32.mrf.mxu0
    %v4293 = vadd.f32 0.0, %v4292
    %v4294 = vpop.f32.mrf.mxu0
    %v4295 = vadd.f32 0.0, %v4294
    %v4296 = vpop.f32.mrf.mxu0
    %v4297 = vadd.f32 0.0, %v4296
    %4298 = vmatprep.mubr.bf16.mxu0 0
    %4299 = vmatmul.mubr.bf16.gmra.mxu0 %v4011
    %v4300 = vpop.f32.mrf.mxu0
    %v4301 = vadd.f32 0.0, %v4300
    %v4302 = vpop.f32.mrf.mxu0
    %v4303 = vadd.f32 0.0, %v4302
    %v4304 = vpop.f32.mrf.mxu0
    %v4305 = vadd.f32 0.0, %v4304
    %v4306 = vpop.f32.mrf.mxu0
    %v4307 = vadd.f32 0.0, %v4306
    %4308 = vmatprep.mubr.bf16.mxu0 0
    %4309 = vmatmul.mubr.bf16.gmra.mxu0 %v4014
    %v4310 = vpop.f32.mrf.mxu0
    %v4311 = vadd.f32 0.0, %v4310
    %v4312 = vpop.f32.mrf.mxu0
    %v4313 = vadd.f32 0.0, %v4312
    %v4314 = vpop.f32.mrf.mxu0
    %v4315 = vadd.f32 0.0, %v4314
    %v4316 = vpop.f32.mrf.mxu0
    %v4317 = vadd.f32 0.0, %v4316
    %4318 = vmatprep.mubr.bf16.mxu0 0
    %4319 = vmatmul.mubr.bf16.gmra.mxu0 %v4017
    %v4320 = vpop.f32.mrf.mxu0
    %v4321 = vadd.f32 0.0, %v4320
    %v4322 = vpop.f32.mrf.mxu0
    %v4323 = vadd.f32 0.0, %v4322
    %v4324 = vpop.f32.mrf.mxu0
    %v4325 = vadd.f32 0.0, %v4324
    %v4326 = vpop.f32.mrf.mxu0
    %v4327 = vadd.f32 0.0, %v4326
    %4328 = vdwg.mxu0
    %v4329 = vsel %vm1414, %v4128, 0.0
    %v4330 = vsel %vm1414, %v4130, 0.0
    %v4331 = vsel %vm1415, %v4054, 0.0
    %v4332 = vsel %vm1415, %v4056, 0.0
    %v4333 = vsel %vm1416, %v4058, 0.0
    %v4334 = vsel %vm1416, %v4060, 0.0
    %v4335 = vsel %vm1417, %v4064, 0.0
    %v4336 = vsel %vm1417, %v4066, 0.0
    %v4337 = vsel %vm1418, %v4068, 0.0
    %v4338 = vsel %vm1418, %v4070, 0.0
    %v4339 = vsel %vm1419, %v4074, 0.0
    %v4340 = vsel %vm1419, %v4076, 0.0
    %v4341 = vsel %vm1420, %v4078, 0.0
    %v4342 = vsel %vm1420, %v4080, 0.0
    %v4343 = vsel %vm1421, %v4084, 0.0
    %v4344 = vsel %vm1421, %v4086, 0.0
    %v4345 = vsel %vm1422, %v4088, 0.0
    %v4346 = vsel %vm1422, %v4090, 0.0
    %v4347 = vsel %vm1423, %v4094, 0.0
    %v4348 = vsel %vm1423, %v4096, 0.0
    %v4349 = vsel %vm1424, %v4098, 0.0
    %v4350 = vsel %vm1424, %v4100, 0.0
    %v4351 = vsel %vm1425, %v4104, 0.0
    %v4352 = vsel %vm1425, %v4106, 0.0
    %v4353 = vsel %vm1426, %v4108, 0.0
    %v4354 = vsel %vm1426, %v4110, 0.0
    %v4355 = vsel %vm1427, %v4114, 0.0
    %v4356 = vsel %vm1427, %v4116, 0.0
    %v4357 = vsel %vm1428, %v4118, 0.0
    %v4358 = vsel %vm1428, %v4120, 0.0
    %v4359 = vsel %vm1429, %v4124, 0.0
    %v4360 = vsel %vm1429, %v4126, 0.0
    %v4373 = vunpack.c.l.b16 %v4132
    %v4374 = vunpack.c.h.b16 %v4132
    %v4375 = vunpack.c.l.b16 %v4133
    %v4376 = vunpack.c.h.b16 %v4133
    %v4377 = vunpack.c.l.b16 %v4134
    %v4378 = vunpack.c.h.b16 %v4134
    %v4379 = vunpack.c.l.b16 %v4135
    %v4380 = vunpack.c.h.b16 %v4135
    %v4381 = vunpack.c.l.b16 %v4136
    %v4382 = vunpack.c.h.b16 %v4136
    %v4383 = vunpack.c.l.b16 %v4137
    %v4384 = vunpack.c.h.b16 %v4137
    %v4385 = vunpack.c.l.b16 %v4138
    %v4386 = vunpack.c.h.b16 %v4138
    %v4387 = vunpack.c.l.b16 %v4139
    %v4388 = vunpack.c.h.b16 %v4139
    %v4389 = vunpack.c.l.b16 %v4140
    %v4390 = vunpack.c.h.b16 %v4140
    %v4391 = vunpack.c.l.b16 %v4141
    %v4392 = vunpack.c.h.b16 %v4141
    %v4393 = vunpack.c.l.b16 %v4142
    %v4394 = vunpack.c.h.b16 %v4142
    %v4395 = vunpack.c.l.b16 %v4143
    %v4396 = vunpack.c.h.b16 %v4143
    %v4397 = vpack.c.b16 %v4375, %v4373
    %v4398 = vpack.c.b16 %v4376, %v4374
    %v4399 = vpack.c.b16 %v4379, %v4377
    %v4400 = vpack.c.b16 %v4380, %v4378
    %v4401 = vpack.c.b16 %v4383, %v4381
    %v4402 = vpack.c.b16 %v4384, %v4382
    %v4403 = vpack.c.b16 %v4387, %v4385
    %v4404 = vpack.c.b16 %v4388, %v4386
    %v4405 = vpack.c.b16 %v4391, %v4389
    %v4406 = vpack.c.b16 %v4392, %v4390
    %v4407 = vpack.c.b16 %v4395, %v4393
    %v4408 = vpack.c.b16 %v4396, %v4394
    %4421 = vmatprep.subr.bf16.mxu0 0
    %4422 = vmatpush1.bf16.msra.mxu0 0
    %4423 = vmatprep.subr.bf16.mxu0 0
    %4424 = vmatpush1.bf16.msra.mxu0 0
    %4425 = vmatprep.subr.bf16.mxu0 %v4408
    %4426 = vmatpush1.bf16.msra.mxu0 %v4407
    %4427 = vmatprep.subr.bf16.mxu0 %v4406
    %4428 = vmatpush1.bf16.msra.mxu0 %v4405
    %4429 = vmatprep.subr.bf16.mxu0 %v4404
    %4430 = vmatpush1.bf16.msra.mxu0 %v4403
    %4431 = vmatprep.subr.bf16.mxu0 %v4402
    %4432 = vmatpush1.bf16.msra.mxu0 %v4401
    %4433 = vmatprep.subr.bf16.mxu0 %v4400
    %4434 = vmatpush1.bf16.msra.mxu0 %v4399
    %4435 = vmatprep.subr.bf16.mxu0 %v4398
    %4436 = vmatpush1.bf16.msra.mxu0 %v4397
    %4437 = vmatprep.subr.bf16.mxu0 0
    %4438 = vmatpush2.bf16.msra.mxu0 0
    %4439 = vmatprep.subr.bf16.mxu0 0
    %4440 = vmatpush2.bf16.msra.mxu0 0
    %4441 = vmatprep.subr.bf16.mxu0 0
    %4442 = vmatpush2.bf16.msra.mxu0 0
    %4443 = vmatprep.subr.bf16.mxu0 0
    %4444 = vmatpush2.bf16.msra.mxu0 0
    %4445 = vmatprep.subr.bf16.mxu0 0
    %4446 = vmatpush2.bf16.msra.mxu0 0
    %4447 = vmatprep.subr.bf16.mxu0 0
    %4448 = vmatpush2.bf16.msra.mxu0 0
    %4449 = vmatprep.subr.bf16.mxu0 0
    %4450 = vmatpush2.bf16.msra.mxu0 0
    %4451 = vmatprep.subr.bf16.mxu0 0
    %4452 = vmatpush2.bf16.msra.mxu0 0
    %4453 = vmatprep.mubr.bf16.mxu0 0
    %4454 = vmatmul.mubr.bf16.gmra.mxu0 %v3996
    %v4455 = vpop.f32.mrf.mxu0
    %v4456 = vadd.f32 %v4329, %v4455
    %v4457 = vpop.f32.mrf.mxu0
    %v4458 = vadd.f32 %v4330, %v4457
    %v4459 = vpop.f32.mrf.mxu0
    %v4460 = vadd.f32 %v4331, %v4459
    %v4461 = vpop.f32.mrf.mxu0
    %v4462 = vadd.f32 %v4332, %v4461
    %4463 = vmatprep.mubr.bf16.mxu0 0
    %4464 = vmatmul.mubr.bf16.gmra.mxu0 %v3999
    %v4465 = vpop.f32.mrf.mxu0
    %v4466 = vadd.f32 %v4333, %v4465
    %v4467 = vpop.f32.mrf.mxu0
    %v4468 = vadd.f32 %v4334, %v4467
    %v4469 = vpop.f32.mrf.mxu0
    %v4470 = vadd.f32 %v4335, %v4469
    %v4471 = vpop.f32.mrf.mxu0
    %v4472 = vadd.f32 %v4336, %v4471
    %4473 = vmatprep.mubr.bf16.mxu0 0
    %4474 = vmatmul.mubr.bf16.gmra.mxu0 %v4002
    %v4475 = vpop.f32.mrf.mxu0
    %v4476 = vadd.f32 %v4337, %v4475
    %v4477 = vpop.f32.mrf.mxu0
    %v4478 = vadd.f32 %v4338, %v4477
    %v4479 = vpop.f32.mrf.mxu0
    %v4480 = vadd.f32 %v4339, %v4479
    %v4481 = vpop.f32.mrf.mxu0
    %v4482 = vadd.f32 %v4340, %v4481
    %4483 = vmatprep.mubr.bf16.mxu0 0
    %4484 = vmatmul.mubr.bf16.gmra.mxu0 %v4005
    %v4485 = vpop.f32.mrf.mxu0
    %v4486 = vadd.f32 %v4341, %v4485
    %v4487 = vpop.f32.mrf.mxu0
    %v4488 = vadd.f32 %v4342, %v4487
    %v4489 = vpop.f32.mrf.mxu0
    %v4490 = vadd.f32 %v4343, %v4489
    %v4491 = vpop.f32.mrf.mxu0
    %v4492 = vadd.f32 %v4344, %v4491
    %4493 = vmatprep.mubr.bf16.mxu0 0
    %4494 = vmatmul.mubr.bf16.gmra.mxu0 %v4008
    %v4495 = vpop.f32.mrf.mxu0
    %v4496 = vadd.f32 %v4345, %v4495
    %v4497 = vpop.f32.mrf.mxu0
    %v4498 = vadd.f32 %v4346, %v4497
    %v4499 = vpop.f32.mrf.mxu0
    %v4500 = vadd.f32 %v4347, %v4499
    %v4501 = vpop.f32.mrf.mxu0
    %v4502 = vadd.f32 %v4348, %v4501
    %4503 = vmatprep.mubr.bf16.mxu0 0
    %4504 = vmatmul.mubr.bf16.gmra.mxu0 %v4011
    %v4505 = vpop.f32.mrf.mxu0
    %v4506 = vadd.f32 %v4349, %v4505
    %v4507 = vpop.f32.mrf.mxu0
    %v4508 = vadd.f32 %v4350, %v4507
    %v4509 = vpop.f32.mrf.mxu0
    %v4510 = vadd.f32 %v4351, %v4509
    %v4511 = vpop.f32.mrf.mxu0
    %v4512 = vadd.f32 %v4352, %v4511
    %4513 = vmatprep.mubr.bf16.mxu0 0
    %4514 = vmatmul.mubr.bf16.gmra.mxu0 %v4014
    %v4515 = vpop.f32.mrf.mxu0
    %v4516 = vadd.f32 %v4353, %v4515
    %v4517 = vpop.f32.mrf.mxu0
    %v4518 = vadd.f32 %v4354, %v4517
    %v4519 = vpop.f32.mrf.mxu0
    %v4520 = vadd.f32 %v4355, %v4519
    %v4521 = vpop.f32.mrf.mxu0
    %v4522 = vadd.f32 %v4356, %v4521
    %4523 = vmatprep.mubr.bf16.mxu0 0
    %4524 = vmatmul.mubr.bf16.gmra.mxu0 %v4017
    %v4525 = vpop.f32.mrf.mxu0
    %v4526 = vadd.f32 %v4357, %v4525
    %v4527 = vpop.f32.mrf.mxu0
    %v4528 = vadd.f32 %v4358, %v4527
    %v4529 = vpop.f32.mrf.mxu0
    %v4530 = vadd.f32 %v4359, %v4529
    %v4531 = vpop.f32.mrf.mxu0
    %v4532 = vadd.f32 %v4360, %v4531
    %4533 = vdwg.mxu0
    %v4534 = vsel %vm1595, %v4255, 0.0
    %v4535 = vsel %vm1595, %v4257, 0.0
    %v4536 = vsel %vm1596, %v4261, 0.0
    %v4537 = vsel %vm1596, %v4263, 0.0
    %v4538 = vsel %vm1597, %v4265, 0.0
    %v4539 = vsel %vm1597, %v4267, 0.0
    %v4540 = vsel %vm1598, %v4271, 0.0
    %v4541 = vsel %vm1598, %v4273, 0.0
    %v4542 = vsel %vm1599, %v4275, 0.0
    %v4543 = vsel %vm1599, %v4277, 0.0
    %v4544 = vsel %vm1600, %v4281, 0.0
    %v4545 = vsel %vm1600, %v4283, 0.0
    %v4546 = vsel %vm1601, %v4285, 0.0
    %v4547 = vsel %vm1601, %v4287, 0.0
    %v4548 = vsel %vm1602, %v4291, 0.0
    %v4549 = vsel %vm1602, %v4293, 0.0
    %v4550 = vsel %vm1603, %v4295, 0.0
    %v4551 = vsel %vm1603, %v4297, 0.0
    %v4552 = vsel %vm1604, %v4301, 0.0
    %v4553 = vsel %vm1604, %v4303, 0.0
    %v4554 = vsel %vm1605, %v4305, 0.0
    %v4555 = vsel %vm1605, %v4307, 0.0
    %v4556 = vsel %vm1606, %v4311, 0.0
    %v4557 = vsel %vm1606, %v4313, 0.0
    %v4558 = vsel %vm1607, %v4315, 0.0
    %v4559 = vsel %vm1607, %v4317, 0.0
    %v4560 = vsel %vm1608, %v4321, 0.0
    %v4561 = vsel %vm1608, %v4323, 0.0
    %v4562 = vsel %vm1609, %v4325, 0.0
    %v4563 = vsel %vm1609, %v4327, 0.0
    %v4564 = vsel %vm1610, %v4251, 0.0
    %v4565 = vsel %vm1610, %v4253, 0.0
    %v4566 = vadd.f32 %v4456, %v4534
    %v4567 = vadd.f32 %v4458, %v4535
    %v4568 = vadd.f32 %v4460, %v4536
    %v4569 = vadd.f32 %v4462, %v4537
    %v4570 = vadd.f32 %v4466, %v4538
    %v4571 = vadd.f32 %v4468, %v4539
    %v4572 = vadd.f32 %v4470, %v4540
    %v4573 = vadd.f32 %v4472, %v4541
    %v4574 = vadd.f32 %v4476, %v4542
    %v4575 = vadd.f32 %v4478, %v4543
    %v4576 = vadd.f32 %v4480, %v4544
    %v4577 = vadd.f32 %v4482, %v4545
    %v4578 = vadd.f32 %v4486, %v4546
    %v4579 = vadd.f32 %v4488, %v4547
    %v4580 = vadd.f32 %v4490, %v4548
    %v4581 = vadd.f32 %v4492, %v4549
    %v4582 = vadd.f32 %v4496, %v4550
    %v4583 = vadd.f32 %v4498, %v4551
    %v4584 = vadd.f32 %v4500, %v4552
    %v4585 = vadd.f32 %v4502, %v4553
    %v4586 = vadd.f32 %v4506, %v4554
    %v4587 = vadd.f32 %v4508, %v4555
    %v4588 = vadd.f32 %v4510, %v4556
    %v4589 = vadd.f32 %v4512, %v4557
    %v4590 = vadd.f32 %v4516, %v4558
    %v4591 = vadd.f32 %v4518, %v4559
    %v4592 = vadd.f32 %v4520, %v4560
    %v4593 = vadd.f32 %v4522, %v4561
    %v4594 = vadd.f32 %v4526, %v4562
    %v4595 = vadd.f32 %v4528, %v4563
    %v4596 = vadd.f32 %v4530, %v4564
    %v4597 = vadd.f32 %v4532, %v4565
    %v4598 = vld [vmem:[%s16] ss:$4 sm:$0x3]
    %v4600 = vlaneseq
    %v4601 = vshrl.u32 %v4600, 7
    %v4602 = vsub.s32 0, %v4601
    %v4603 = vrot.slane %v4598, %v4602
    %v4604 = vlaneseq
    %v4605 = vshrl.u32 %v4604, 7
    %v4606 = vsub.s32 1, %v4605
    %v4607 = vrot.slane %v4598, %v4606
    %v4610 = vadd.f32 %v4566, %v4603
    %v4611 = vadd.f32 %v4567, %v4607
    %v4612 = vadd.f32 %v4568, %v4603
    %v4613 = vadd.f32 %v4569, %v4607
    %v4614 = vadd.f32 %v4570, %v4603
    %v4615 = vadd.f32 %v4571, %v4607
    %v4616 = vadd.f32 %v4572, %v4603
    %v4617 = vadd.f32 %v4573, %v4607
    %v4618 = vadd.f32 %v4574, %v4603
    %v4619 = vadd.f32 %v4575, %v4607
    %v4620 = vadd.f32 %v4576, %v4603
    %v4621 = vadd.f32 %v4577, %v4607
    %v4622 = vadd.f32 %v4578, %v4603
    %v4623 = vadd.f32 %v4579, %v4607
    %v4624 = vadd.f32 %v4580, %v4603
    %v4625 = vadd.f32 %v4581, %v4607
    %v4626 = vadd.f32 %v4582, %v4603
    %v4627 = vadd.f32 %v4583, %v4607
    %v4628 = vadd.f32 %v4584, %v4603
    %v4629 = vadd.f32 %v4585, %v4607
    %v4630 = vadd.f32 %v4586, %v4603
    %v4631 = vadd.f32 %v4587, %v4607
    %v4632 = vadd.f32 %v4588, %v4603
    %v4633 = vadd.f32 %v4589, %v4607
    %v4634 = vadd.f32 %v4590, %v4603
    %v4635 = vadd.f32 %v4591, %v4607
    %v4636 = vadd.f32 %v4592, %v4603
    %v4637 = vadd.f32 %v4593, %v4607
    %v4638 = vadd.f32 %v4594, %v4603
    %v4639 = vadd.f32 %v4595, %v4607
    %v4640 = vadd.f32 %v4596, %v4603
    %v4641 = vadd.f32 %v4597, %v4607
    %v4642 = vmax.f32 %v4610, 0.0
    %v4643 = vmax.f32 %v4611, 0.0
    %v4644 = vmax.f32 %v4612, 0.0
    %v4645 = vmax.f32 %v4613, 0.0
    %v4646 = vmax.f32 %v4614, 0.0
    %v4647 = vmax.f32 %v4615, 0.0
    %v4648 = vmax.f32 %v4616, 0.0
    %v4649 = vmax.f32 %v4617, 0.0
    %v4650 = vmax.f32 %v4618, 0.0
    %v4651 = vmax.f32 %v4619, 0.0
    %v4652 = vmax.f32 %v4620, 0.0
    %v4653 = vmax.f32 %v4621, 0.0
    %v4654 = vmax.f32 %v4622, 0.0
    %v4655 = vmax.f32 %v4623, 0.0
    %v4656 = vmax.f32 %v4624, 0.0
    %v4657 = vmax.f32 %v4625, 0.0
    %v4658 = vmax.f32 %v4626, 0.0
    %v4659 = vmax.f32 %v4627, 0.0
    %v4660 = vmax.f32 %v4628, 0.0
    %v4661 = vmax.f32 %v4629, 0.0
    %v4662 = vmax.f32 %v4630, 0.0
    %v4663 = vmax.f32 %v4631, 0.0
    %v4664 = vmax.f32 %v4632, 0.0
    %v4665 = vmax.f32 %v4633, 0.0
    %v4666 = vmax.f32 %v4634, 0.0
    %v4667 = vmax.f32 %v4635, 0.0
    %v4668 = vmax.f32 %v4636, 0.0
    %v4669 = vmax.f32 %v4637, 0.0
    %v4670 = vmax.f32 %v4638, 0.0
    %v4671 = vmax.f32 %v4639, 0.0
    %v4672 = vmax.f32 %v4640, 0.0
    %v4673 = vmax.f32 %v4641, 0.0
    %s4674 = scalar_lea.vmem %s16, 1
    %v4675 = vld [vmem:[%s4674] ss:$4 sm:$0x3]
    %v4677 = vlaneseq
    %v4678 = vshrl.u32 %v4677, 7
    %v4679 = vsub.s32 0, %v4678
    %v4680 = vrot.slane %v4675, %v4679
    %v4681 = vlaneseq
    %v4682 = vshrl.u32 %v4681, 7
    %v4683 = vsub.s32 1, %v4682
    %v4684 = vrot.slane %v4675, %v4683
    %v4687 = vmul.f32 %v4642, %v4680
    %v4688 = vmul.f32 %v4643, %v4684
    %v4689 = vmul.f32 %v4644, %v4680
    %v4690 = vmul.f32 %v4645, %v4684
    %v4691 = vmul.f32 %v4646, %v4680
    %v4692 = vmul.f32 %v4647, %v4684
    %v4693 = vmul.f32 %v4648, %v4680
    %v4694 = vmul.f32 %v4649, %v4684
    %v4695 = vmul.f32 %v4650, %v4680
    %v4696 = vmul.f32 %v4651, %v4684
    %v4697 = vmul.f32 %v4652, %v4680
    %v4698 = vmul.f32 %v4653, %v4684
    %v4699 = vmul.f32 %v4654, %v4680
    %v4700 = vmul.f32 %v4655, %v4684
    %v4701 = vmul.f32 %v4656, %v4680
    %v4702 = vmul.f32 %v4657, %v4684
    %v4703 = vmul.f32 %v4658, %v4680
    %v4704 = vmul.f32 %v4659, %v4684
    %v4705 = vmul.f32 %v4660, %v4680
    %v4706 = vmul.f32 %v4661, %v4684
    %v4707 = vmul.f32 %v4662, %v4680
    %v4708 = vmul.f32 %v4663, %v4684
    %v4709 = vmul.f32 %v4664, %v4680
    %v4710 = vmul.f32 %v4665, %v4684
    %v4711 = vmul.f32 %v4666, %v4680
    %v4712 = vmul.f32 %v4667, %v4684
    %v4713 = vmul.f32 %v4668, %v4680
    %v4714 = vmul.f32 %v4669, %v4684
    %v4715 = vmul.f32 %v4670, %v4680
    %v4716 = vmul.f32 %v4671, %v4684
    %v4717 = vmul.f32 %v4672, %v4680
    %v4718 = vmul.f32 %v4673, %v4684
    %s4719 = scalar_lea.vmem %s16, 2
    %v4720 = vld [vmem:[%s4719] ss:$4 sm:$0x3]
    %v4722 = vlaneseq
    %v4723 = vshrl.u32 %v4722, 7
    %v4724 = vsub.s32 0, %v4723
    %v4725 = vrot.slane %v4720, %v4724
    %v4726 = vlaneseq
    %v4727 = vshrl.u32 %v4726, 7
    %v4728 = vsub.s32 1, %v4727
    %v4729 = vrot.slane %v4720, %v4728
    %v4732 = vadd.f32 %v4687, %v4725
    %v4733 = vadd.f32 %v4688, %v4729
    %v4734 = vadd.f32 %v4689, %v4725
    %v4735 = vadd.f32 %v4690, %v4729
    %v4736 = vadd.f32 %v4691, %v4725
    %v4737 = vadd.f32 %v4692, %v4729
    %v4738 = vadd.f32 %v4693, %v4725
    %v4739 = vadd.f32 %v4694, %v4729
    %v4740 = vadd.f32 %v4695, %v4725
    %v4741 = vadd.f32 %v4696, %v4729
    %v4742 = vadd.f32 %v4697, %v4725
    %v4743 = vadd.f32 %v4698, %v4729
    %v4744 = vadd.f32 %v4699, %v4725
    %v4745 = vadd.f32 %v4700, %v4729
    %v4746 = vadd.f32 %v4701, %v4725
    %v4747 = vadd.f32 %v4702, %v4729
    %v4748 = vadd.f32 %v4703, %v4725
    %v4749 = vadd.f32 %v4704, %v4729
    %v4750 = vadd.f32 %v4705, %v4725
    %v4751 = vadd.f32 %v4706, %v4729
    %v4752 = vadd.f32 %v4707, %v4725
    %v4753 = vadd.f32 %v4708, %v4729
    %v4754 = vadd.f32 %v4709, %v4725
    %v4755 = vadd.f32 %v4710, %v4729
    %v4756 = vadd.f32 %v4711, %v4725
    %v4757 = vadd.f32 %v4712, %v4729
    %v4758 = vadd.f32 %v4713, %v4725
    %v4759 = vadd.f32 %v4714, %v4729
    %v4760 = vadd.f32 %v4715, %v4725
    %v4761 = vadd.f32 %v4716, %v4729
    %v4762 = vadd.f32 %v4717, %v4725
    %v4763 = vadd.f32 %v4718, %v4729
    %v4764 = vpack.c.bf16 %v4734, %v4732
    %v4765 = vpack.c.bf16 %v4735, %v4733
    %v4766 = vpack.c.bf16 %v4738, %v4736
    %v4767 = vpack.c.bf16 %v4739, %v4737
    %v4768 = vpack.c.bf16 %v4742, %v4740
    %v4769 = vpack.c.bf16 %v4743, %v4741
    %v4770 = vpack.c.bf16 %v4746, %v4744
    %v4771 = vpack.c.bf16 %v4747, %v4745
    %v4772 = vpack.c.bf16 %v4750, %v4748
    %v4773 = vpack.c.bf16 %v4751, %v4749
    %v4774 = vpack.c.bf16 %v4754, %v4752
    %v4775 = vpack.c.bf16 %v4755, %v4753
    %v4776 = vpack.c.bf16 %v4758, %v4756
    %v4777 = vpack.c.bf16 %v4759, %v4757
    %v4778 = vpack.c.bf16 %v4762, %v4760
    %v4779 = vpack.c.bf16 %v4763, %v4761
    %v4780 = vld [vmem:[%s17] sm:$0xff]
    %v4781 = vld [vmem:[%s17 + $0x8] sm:$0xff]
    %v4782 = vld [vmem:[%s17 + $0x10] sm:$0xff]
    %v4783 = vld [vmem:[%s17 + $0x18] sm:$0xff]
    %v4784 = vld [vmem:[%s17 + $0x20] sm:$0xff]
    %v4785 = vld [vmem:[%s17 + $0x28] sm:$0xff]
    %v4786 = vld [vmem:[%s17 + $0x30] sm:$0xff]
    %v4787 = vld [vmem:[%s17 + $0x38] sm:$0xff]
    %v4788 = vld [vmem:[%s17 + $0x40] sm:$0xff]
    %v4789 = vld [vmem:[%s17 + $0x48] sm:$0xff]
    %v4790 = vld [vmem:[%s17 + $0x50] sm:$0xff]
    %v4791 = vld [vmem:[%s17 + $0x58] sm:$0xff]
    %v4792 = vld [vmem:[%s17 + $0x60] sm:$0xff]
    %v4793 = vld [vmem:[%s17 + $0x68] sm:$0xff]
    %v4794 = vld [vmem:[%s17 + $0x70] sm:$0xff]
    %v4795 = vld [vmem:[%s17 + $0x78] sm:$0xff]
    %v4796 = vld [vmem:[%s17 + $0x80] sm:$0xff]
    %v4797 = vld [vmem:[%s17 + $0x88] sm:$0xff]
    %v4798 = vld [vmem:[%s17 + $0x90] sm:$0xff]
    %v4799 = vld [vmem:[%s17 + $0x98] sm:$0xff]
    %v4800 = vld [vmem:[%s17 + $0xa0] sm:$0xff]
    %v4801 = vld [vmem:[%s17 + $0xa8] sm:$0xff]
    %v4802 = vld [vmem:[%s17 + $0xb0] sm:$0xff]
    %v4803 = vld [vmem:[%s17 + $0xb8] sm:$0xff]
    %v4828 = vunpack.c.l.b16 %v4780
    %v4829 = vunpack.c.h.b16 %v4780
    %v4830 = vunpack.c.l.b16 %v4781
    %v4831 = vunpack.c.h.b16 %v4781
    %v4832 = vunpack.c.l.b16 %v4782
    %v4833 = vunpack.c.h.b16 %v4782
    %v4834 = vunpack.c.l.b16 %v4783
    %v4835 = vunpack.c.h.b16 %v4783
    %v4836 = vunpack.c.l.b16 %v4784
    %v4837 = vunpack.c.h.b16 %v4784
    %v4838 = vunpack.c.l.b16 %v4785
    %v4839 = vunpack.c.h.b16 %v4785
    %v4840 = vunpack.c.l.b16 %v4786
    %v4841 = vunpack.c.h.b16 %v4786
    %v4842 = vunpack.c.l.b16 %v4787
    %v4843 = vunpack.c.h.b16 %v4787
    %v4844 = vunpack.c.l.b16 %v4788
    %v4845 = vunpack.c.h.b16 %v4788
    %v4846 = vunpack.c.l.b16 %v4789
    %v4847 = vunpack.c.h.b16 %v4789
    %v4848 = vunpack.c.l.b16 %v4790
    %v4849 = vunpack.c.h.b16 %v4790
    %v4850 = vunpack.c.l.b16 %v4791
    %v4851 = vunpack.c.h.b16 %v4791
    %v4852 = vunpack.c.l.b16 %v4792
    %v4853 = vunpack.c.h.b16 %v4792
    %v4854 = vunpack.c.l.b16 %v4793
    %v4855 = vunpack.c.h.b16 %v4793
    %v4856 = vunpack.c.l.b16 %v4794
    %v4857 = vunpack.c.h.b16 %v4794
    %v4858 = vunpack.c.l.b16 %v4795
    %v4859 = vunpack.c.h.b16 %v4795
    %v4860 = vunpack.c.l.b16 %v4796
    %v4861 = vunpack.c.h.b16 %v4796
    %v4862 = vunpack.c.l.b16 %v4797
    %v4863 = vunpack.c.h.b16 %v4797
    %v4864 = vunpack.c.l.b16 %v4798
    %v4865 = vunpack.c.h.b16 %v4798
    %v4866 = vunpack.c.l.b16 %v4799
    %v4867 = vunpack.c.h.b16 %v4799
    %v4868 = vunpack.c.l.b16 %v4800
    %v4869 = vunpack.c.h.b16 %v4800
    %v4870 = vunpack.c.l.b16 %v4801
    %v4871 = vunpack.c.h.b16 %v4801
    %v4872 = vunpack.c.l.b16 %v4802
    %v4873 = vunpack.c.h.b16 %v4802
    %v4874 = vunpack.c.l.b16 %v4803
    %v4875 = vunpack.c.h.b16 %v4803
    %v4876 = vpack.c.b16 %v4830, %v4828
    %v4877 = vpack.c.b16 %v4831, %v4829
    %v4878 = vpack.c.b16 %v4834, %v4832
    %v4879 = vpack.c.b16 %v4835, %v4833
    %v4880 = vpack.c.b16 %v4838, %v4836
    %v4881 = vpack.c.b16 %v4839, %v4837
    %v4882 = vpack.c.b16 %v4842, %v4840
    %v4883 = vpack.c.b16 %v4843, %v4841
    %v4884 = vpack.c.b16 %v4846, %v4844
    %v4885 = vpack.c.b16 %v4847, %v4845
    %v4886 = vpack.c.b16 %v4850, %v4848
    %v4887 = vpack.c.b16 %v4851, %v4849
    %v4888 = vpack.c.b16 %v4854, %v4852
    %v4889 = vpack.c.b16 %v4855, %v4853
    %v4890 = vpack.c.b16 %v4858, %v4856
    %v4891 = vpack.c.b16 %v4859, %v4857
    %v4892 = vpack.c.b16 %v4862, %v4860
    %v4893 = vpack.c.b16 %v4863, %v4861
    %v4894 = vpack.c.b16 %v4866, %v4864
    %v4895 = vpack.c.b16 %v4867, %v4865
    %v4896 = vpack.c.b16 %v4870, %v4868
    %v4897 = vpack.c.b16 %v4871, %v4869
    %v4898 = vpack.c.b16 %v4874, %v4872
    %v4899 = vpack.c.b16 %v4875, %v4873
    %v4925 = vsel %vm2750, %v4765, 0
    %v4928 = vsel %vm2750, %v4767, 0
    %v4931 = vsel %vm2750, %v4769, 0
    %v4934 = vsel %vm2750, %v4771, 0
    %v4937 = vsel %vm2750, %v4773, 0
    %v4940 = vsel %vm2750, %v4775, 0
    %v4943 = vsel %vm2750, %v4777, 0
    %v4946 = vsel %vm2750, %v4779, 0
    %4948 = vmatprep.subr.bf16.mxu0 %v4891
    %4949 = vmatpush1.bf16.msra.mxu0 %v4890
    %4950 = vmatprep.subr.bf16.mxu0 %v4889
    %4951 = vmatpush1.bf16.msra.mxu0 %v4888
    %4952 = vmatprep.subr.bf16.mxu0 %v4887
    %4953 = vmatpush1.bf16.msra.mxu0 %v4886
    %4954 = vmatprep.subr.bf16.mxu0 %v4885
    %4955 = vmatpush1.bf16.msra.mxu0 %v4884
    %4956 = vmatprep.subr.bf16.mxu0 %v4883
    %4957 = vmatpush1.bf16.msra.mxu0 %v4882
    %4958 = vmatprep.subr.bf16.mxu0 %v4881
    %4959 = vmatpush1.bf16.msra.mxu0 %v4880
    %4960 = vmatprep.subr.bf16.mxu0 %v4879
    %4961 = vmatpush1.bf16.msra.mxu0 %v4878
    %4962 = vmatprep.subr.bf16.mxu0 %v4877
    %4963 = vmatpush1.bf16.msra.mxu0 %v4876
    %4964 = vmatprep.subr.bf16.mxu0 0
    %4965 = vmatpush2.bf16.msra.mxu0 0
    %4966 = vmatprep.subr.bf16.mxu0 0
    %4967 = vmatpush2.bf16.msra.mxu0 0
    %4968 = vmatprep.subr.bf16.mxu0 0
    %4969 = vmatpush2.bf16.msra.mxu0 0
    %4970 = vmatprep.subr.bf16.mxu0 0
    %4971 = vmatpush2.bf16.msra.mxu0 0
    %4972 = vmatprep.subr.bf16.mxu0 %v4899
    %4973 = vmatpush2.bf16.msra.mxu0 %v4898
    %4974 = vmatprep.subr.bf16.mxu0 %v4897
    %4975 = vmatpush2.bf16.msra.mxu0 %v4896
    %4976 = vmatprep.subr.bf16.mxu0 %v4895
    %4977 = vmatpush2.bf16.msra.mxu0 %v4894
    %4978 = vmatprep.subr.bf16.mxu0 %v4893
    %4979 = vmatpush2.bf16.msra.mxu0 %v4892
    %4980 = vmatprep.mubr.bf16.mxu0 %v4925
    %4981 = vmatmul.mubr.bf16.gmra.mxu0 %v4764
    %v4982 = vpop.f32.mrf.mxu0
    %v4983 = vadd.f32 0.0, %v4982
    %v4984 = vpop.f32.mrf.mxu0
    %v4985 = vadd.f32 0.0, %v4984
    %v4986 = vpop.f32.mrf.mxu0
    %v4987 = vadd.f32 0.0, %v4986
    %v4988 = vpop.f32.mrf.mxu0
    %v4989 = vadd.f32 0.0, %v4988
    %4990 = vmatprep.mubr.bf16.mxu0 %v4928
    %4991 = vmatmul.mubr.bf16.gmra.mxu0 %v4766
    %v4992 = vpop.f32.mrf.mxu0
    %v4993 = vadd.f32 0.0, %v4992
    %v4994 = vpop.f32.mrf.mxu0
    %v4995 = vadd.f32 0.0, %v4994
    %v4996 = vpop.f32.mrf.mxu0
    %v4997 = vadd.f32 0.0, %v4996
    %v4998 = vpop.f32.mrf.mxu0
    %v4999 = vadd.f32 0.0, %v4998
    %5000 = vmatprep.mubr.bf16.mxu0 %v4931
    %5001 = vmatmul.mubr.bf16.gmra.mxu0 %v4768
    %v5002 = vpop.f32.mrf.mxu0
    %v5003 = vadd.f32 0.0, %v5002
    %v5004 = vpop.f32.mrf.mxu0
    %v5005 = vadd.f32 0.0, %v5004
    %v5006 = vpop.f32.mrf.mxu0
    %v5007 = vadd.f32 0.0, %v5006
    %v5008 = vpop.f32.mrf.mxu0
    %v5009 = vadd.f32 0.0, %v5008
    %5010 = vmatprep.mubr.bf16.mxu0 %v4934
    %5011 = vmatmul.mubr.bf16.gmra.mxu0 %v4770
    %v5012 = vpop.f32.mrf.mxu0
    %v5013 = vadd.f32 0.0, %v5012
    %v5014 = vpop.f32.mrf.mxu0
    %v5015 = vadd.f32 0.0, %v5014
    %v5016 = vpop.f32.mrf.mxu0
    %v5017 = vadd.f32 0.0, %v5016
    %v5018 = vpop.f32.mrf.mxu0
    %v5019 = vadd.f32 0.0, %v5018
    %5020 = vmatprep.mubr.bf16.mxu0 %v4937
    %5021 = vmatmul.mubr.bf16.gmra.mxu0 %v4772
    %v5022 = vpop.f32.mrf.mxu0
    %v5023 = vadd.f32 0.0, %v5022
    %v5024 = vpop.f32.mrf.mxu0
    %v5025 = vadd.f32 0.0, %v5024
    %v5026 = vpop.f32.mrf.mxu0
    %v5027 = vadd.f32 0.0, %v5026
    %v5028 = vpop.f32.mrf.mxu0
    %v5029 = vadd.f32 0.0, %v5028
    %5030 = vmatprep.mubr.bf16.mxu0 %v4940
    %5031 = vmatmul.mubr.bf16.gmra.mxu0 %v4774
    %v5032 = vpop.f32.mrf.mxu0
    %v5033 = vadd.f32 0.0, %v5032
    %v5034 = vpop.f32.mrf.mxu0
    %v5035 = vadd.f32 0.0, %v5034
    %v5036 = vpop.f32.mrf.mxu0
    %v5037 = vadd.f32 0.0, %v5036
    %v5038 = vpop.f32.mrf.mxu0
    %v5039 = vadd.f32 0.0, %v5038
    %5040 = vmatprep.mubr.bf16.mxu0 %v4943
    %5041 = vmatmul.mubr.bf16.gmra.mxu0 %v4776
    %v5042 = vpop.f32.mrf.mxu0
    %v5043 = vadd.f32 0.0, %v5042
    %v5044 = vpop.f32.mrf.mxu0
    %v5045 = vadd.f32 0.0, %v5044
    %v5046 = vpop.f32.mrf.mxu0
    %v5047 = vadd.f32 0.0, %v5046
    %v5048 = vpop.f32.mrf.mxu0
    %v5049 = vadd.f32 0.0, %v5048
    %5050 = vmatprep.mubr.bf16.mxu0 %v4946
    %5051 = vmatmul.mubr.bf16.gmra.mxu0 %v4778
    %v5052 = vpop.f32.mrf.mxu0
    %v5053 = vadd.f32 0.0, %v5052
    %v5054 = vpop.f32.mrf.mxu0
    %v5055 = vadd.f32 0.0, %v5054
    %v5056 = vpop.f32.mrf.mxu0
    %v5057 = vadd.f32 0.0, %v5056
    %v5058 = vpop.f32.mrf.mxu0
    %v5059 = vadd.f32 0.0, %v5058
    %5060 = vdwg.mxu0
    %v5061 = vld [vmem:[%s17 + $0xc0] sm:$0xff]
    %v5062 = vld [vmem:[%s17 + $0xc8] sm:$0xff]
    %v5063 = vld [vmem:[%s17 + $0xd0] sm:$0xff]
    %v5064 = vld [vmem:[%s17 + $0xd8] sm:$0xff]
    %v5065 = vld [vmem:[%s17 + $0xe0] sm:$0xff]
    %v5066 = vld [vmem:[%s17 + $0xe8] sm:$0xff]
    %v5067 = vld [vmem:[%s17 + $0xf0] sm:$0xff]
    %v5068 = vld [vmem:[%s17 + $0xf8] sm:$0xff]
    %v5069 = vld [vmem:[%s17 + $0x100] sm:$0xff]
    %v5070 = vld [vmem:[%s17 + $0x108] sm:$0xff]
    %v5071 = vld [vmem:[%s17 + $0x110] sm:$0xff]
    %v5072 = vld [vmem:[%s17 + $0x118] sm:$0xff]
    %v5073 = vld [vmem:[%s17 + $0x120] sm:$0xff]
    %v5074 = vld [vmem:[%s17 + $0x128] sm:$0xff]
    %v5075 = vld [vmem:[%s17 + $0x130] sm:$0xff]
    %v5076 = vld [vmem:[%s17 + $0x138] sm:$0xff]
    %v5077 = vld [vmem:[%s17 + $0x140] sm:$0xff]
    %v5078 = vld [vmem:[%s17 + $0x148] sm:$0xff]
    %v5079 = vld [vmem:[%s17 + $0x150] sm:$0xff]
    %v5080 = vld [vmem:[%s17 + $0x158] sm:$0xff]
    %v5081 = vld [vmem:[%s17 + $0x160] sm:$0xff]
    %v5082 = vld [vmem:[%s17 + $0x168] sm:$0xff]
    %v5083 = vld [vmem:[%s17 + $0x170] sm:$0xff]
    %v5084 = vld [vmem:[%s17 + $0x178] sm:$0xff]
    %v5085 = vld [vmem:[%s17 + $0x180] sm:$0xff]
    %v5086 = vld [vmem:[%s17 + $0x188] sm:$0xff]
    %v5087 = vld [vmem:[%s17 + $0x190] sm:$0xff]
    %v5088 = vld [vmem:[%s17 + $0x198] sm:$0xff]
    %v5089 = vld [vmem:[%s17 + $0x1a0] sm:$0xff]
    %v5090 = vld [vmem:[%s17 + $0x1a8] sm:$0xff]
    %v5091 = vld [vmem:[%s17 + $0x1b0] sm:$0xff]
    %v5092 = vld [vmem:[%s17 + $0x1b8] sm:$0xff]
    %v5093 = vld [vmem:[%s17 + $0x1c0] sm:$0xff]
    %v5094 = vld [vmem:[%s17 + $0x1c8] sm:$0xff]
    %v5095 = vld [vmem:[%s17 + $0x1d0] sm:$0xff]
    %v5096 = vld [vmem:[%s17 + $0x1d8] sm:$0xff]
    %v5097 = vld [vmem:[%s17 + $0x1e0] sm:$0xff]
    %v5098 = vld [vmem:[%s17 + $0x1e8] sm:$0xff]
    %v5099 = vld [vmem:[%s17 + $0x1f0] sm:$0xff]
    %v5100 = vld [vmem:[%s17 + $0x1f8] sm:$0xff]
    %v5101 = vld [vmem:[%s17 + $0x200] sm:$0xff]
    %v5102 = vld [vmem:[%s17 + $0x208] sm:$0xff]
    %v5103 = vld [vmem:[%s17 + $0x210] sm:$0xff]
    %v5104 = vld [vmem:[%s17 + $0x218] sm:$0xff]
    %v5105 = vld [vmem:[%s17 + $0x220] sm:$0xff]
    %v5106 = vld [vmem:[%s17 + $0x228] sm:$0xff]
    %v5107 = vld [vmem:[%s17 + $0x230] sm:$0xff]
    %v5108 = vld [vmem:[%s17 + $0x238] sm:$0xff]
    %v5133 = vunpack.c.l.b16 %v5085
    %v5134 = vunpack.c.h.b16 %v5085
    %v5135 = vunpack.c.l.b16 %v5086
    %v5136 = vunpack.c.h.b16 %v5086
    %v5137 = vunpack.c.l.b16 %v5087
    %v5138 = vunpack.c.h.b16 %v5087
    %v5139 = vunpack.c.l.b16 %v5088
    %v5140 = vunpack.c.h.b16 %v5088
    %v5141 = vunpack.c.l.b16 %v5089
    %v5142 = vunpack.c.h.b16 %v5089
    %v5143 = vunpack.c.l.b16 %v5090
    %v5144 = vunpack.c.h.b16 %v5090
    %v5145 = vunpack.c.l.b16 %v5091
    %v5146 = vunpack.c.h.b16 %v5091
    %v5147 = vunpack.c.l.b16 %v5092
    %v5148 = vunpack.c.h.b16 %v5092
    %v5149 = vunpack.c.l.b16 %v5093
    %v5150 = vunpack.c.h.b16 %v5093
    %v5151 = vunpack.c.l.b16 %v5094
    %v5152 = vunpack.c.h.b16 %v5094
    %v5153 = vunpack.c.l.b16 %v5095
    %v5154 = vunpack.c.h.b16 %v5095
    %v5155 = vunpack.c.l.b16 %v5096
    %v5156 = vunpack.c.h.b16 %v5096
    %v5157 = vunpack.c.l.b16 %v5097
    %v5158 = vunpack.c.h.b16 %v5097
    %v5159 = vunpack.c.l.b16 %v5098
    %v5160 = vunpack.c.h.b16 %v5098
    %v5161 = vunpack.c.l.b16 %v5099
    %v5162 = vunpack.c.h.b16 %v5099
    %v5163 = vunpack.c.l.b16 %v5100
    %v5164 = vunpack.c.h.b16 %v5100
    %v5165 = vunpack.c.l.b16 %v5101
    %v5166 = vunpack.c.h.b16 %v5101
    %v5167 = vunpack.c.l.b16 %v5102
    %v5168 = vunpack.c.h.b16 %v5102
    %v5169 = vunpack.c.l.b16 %v5103
    %v5170 = vunpack.c.h.b16 %v5103
    %v5171 = vunpack.c.l.b16 %v5104
    %v5172 = vunpack.c.h.b16 %v5104
    %v5173 = vunpack.c.l.b16 %v5105
    %v5174 = vunpack.c.h.b16 %v5105
    %v5175 = vunpack.c.l.b16 %v5106
    %v5176 = vunpack.c.h.b16 %v5106
    %v5177 = vunpack.c.l.b16 %v5107
    %v5178 = vunpack.c.h.b16 %v5107
    %v5179 = vunpack.c.l.b16 %v5108
    %v5180 = vunpack.c.h.b16 %v5108
    %v5181 = vpack.c.b16 %v5135, %v5133
    %v5182 = vpack.c.b16 %v5136, %v5134
    %v5183 = vpack.c.b16 %v5139, %v5137
    %v5184 = vpack.c.b16 %v5140, %v5138
    %v5185 = vpack.c.b16 %v5143, %v5141
    %v5186 = vpack.c.b16 %v5144, %v5142
    %v5187 = vpack.c.b16 %v5147, %v5145
    %v5188 = vpack.c.b16 %v5148, %v5146
    %v5189 = vpack.c.b16 %v5151, %v5149
    %v5190 = vpack.c.b16 %v5152, %v5150
    %v5191 = vpack.c.b16 %v5155, %v5153
    %v5192 = vpack.c.b16 %v5156, %v5154
    %v5193 = vpack.c.b16 %v5159, %v5157
    %v5194 = vpack.c.b16 %v5160, %v5158
    %v5195 = vpack.c.b16 %v5163, %v5161
    %v5196 = vpack.c.b16 %v5164, %v5162
    %v5197 = vpack.c.b16 %v5167, %v5165
    %v5198 = vpack.c.b16 %v5168, %v5166
    %v5199 = vpack.c.b16 %v5171, %v5169
    %v5200 = vpack.c.b16 %v5172, %v5170
    %v5201 = vpack.c.b16 %v5175, %v5173
    %v5202 = vpack.c.b16 %v5176, %v5174
    %v5203 = vpack.c.b16 %v5179, %v5177
    %v5204 = vpack.c.b16 %v5180, %v5178
    %5229 = vmatprep.subr.bf16.mxu0 %v5196
    %5230 = vmatpush1.bf16.msra.mxu0 %v5195
    %5231 = vmatprep.subr.bf16.mxu0 %v5194
    %5232 = vmatpush1.bf16.msra.mxu0 %v5193
    %5233 = vmatprep.subr.bf16.mxu0 %v5192
    %5234 = vmatpush1.bf16.msra.mxu0 %v5191
    %5235 = vmatprep.subr.bf16.mxu0 %v5190
    %5236 = vmatpush1.bf16.msra.mxu0 %v5189
    %5237 = vmatprep.subr.bf16.mxu0 %v5188
    %5238 = vmatpush1.bf16.msra.mxu0 %v5187
    %5239 = vmatprep.subr.bf16.mxu0 %v5186
    %5240 = vmatpush1.bf16.msra.mxu0 %v5185
    %5241 = vmatprep.subr.bf16.mxu0 %v5184
    %5242 = vmatpush1.bf16.msra.mxu0 %v5183
    %5243 = vmatprep.subr.bf16.mxu0 %v5182
    %5244 = vmatpush1.bf16.msra.mxu0 %v5181
    %5245 = vmatprep.subr.bf16.mxu0 0
    %5246 = vmatpush2.bf16.msra.mxu0 0
    %5247 = vmatprep.subr.bf16.mxu0 0
    %5248 = vmatpush2.bf16.msra.mxu0 0
    %5249 = vmatprep.subr.bf16.mxu0 0
    %5250 = vmatpush2.bf16.msra.mxu0 0
    %5251 = vmatprep.subr.bf16.mxu0 0
    %5252 = vmatpush2.bf16.msra.mxu0 0
    %5253 = vmatprep.subr.bf16.mxu0 %v5204
    %5254 = vmatpush2.bf16.msra.mxu0 %v5203
    %5255 = vmatprep.subr.bf16.mxu0 %v5202
    %5256 = vmatpush2.bf16.msra.mxu0 %v5201
    %5257 = vmatprep.subr.bf16.mxu0 %v5200
    %5258 = vmatpush2.bf16.msra.mxu0 %v5199
    %5259 = vmatprep.subr.bf16.mxu0 %v5198
    %5260 = vmatpush2.bf16.msra.mxu0 %v5197
    %5261 = vmatprep.mubr.bf16.mxu0 %v4925
    %5262 = vmatmul.mubr.bf16.gmra.mxu0 %v4764
    %v5263 = vpop.f32.mrf.mxu0
    %v5264 = vadd.f32 0.0, %v5263
    %v5265 = vpop.f32.mrf.mxu0
    %v5266 = vadd.f32 0.0, %v5265
    %v5267 = vpop.f32.mrf.mxu0
    %v5268 = vadd.f32 0.0, %v5267
    %v5269 = vpop.f32.mrf.mxu0
    %v5270 = vadd.f32 0.0, %v5269
    %5271 = vmatprep.mubr.bf16.mxu0 %v4928
    %5272 = vmatmul.mubr.bf16.gmra.mxu0 %v4766
    %v5273 = vpop.f32.mrf.mxu0
    %v5274 = vadd.f32 0.0, %v5273
    %v5275 = vpop.f32.mrf.mxu0
    %v5276 = vadd.f32 0.0, %v5275
    %v5277 = vpop.f32.mrf.mxu0
    %v5278 = vadd.f32 0.0, %v5277
    %v5279 = vpop.f32.mrf.mxu0
    %v5280 = vadd.f32 0.0, %v5279
    %5281 = vmatprep.mubr.bf16.mxu0 %v4931
    %5282 = vmatmul.mubr.bf16.gmra.mxu0 %v4768
    %v5283 = vpop.f32.mrf.mxu0
    %v5284 = vadd.f32 0.0, %v5283
    %v5285 = vpop.f32.mrf.mxu0
    %v5286 = vadd.f32 0.0, %v5285
    %v5287 = vpop.f32.mrf.mxu0
    %v5288 = vadd.f32 0.0, %v5287
    %v5289 = vpop.f32.mrf.mxu0
    %v5290 = vadd.f32 0.0, %v5289
    %5291 = vmatprep.mubr.bf16.mxu0 %v4934
    %5292 = vmatmul.mubr.bf16.gmra.mxu0 %v4770
    %v5293 = vpop.f32.mrf.mxu0
    %v5294 = vadd.f32 0.0, %v5293
    %v5295 = vpop.f32.mrf.mxu0
    %v5296 = vadd.f32 0.0, %v5295
    %v5297 = vpop.f32.mrf.mxu0
    %v5298 = vadd.f32 0.0, %v5297
    %v5299 = vpop.f32.mrf.mxu0
    %v5300 = vadd.f32 0.0, %v5299
    %5301 = vmatprep.mubr.bf16.mxu0 %v4937
    %5302 = vmatmul.mubr.bf16.gmra.mxu0 %v4772
    %v5303 = vpop.f32.mrf.mxu0
    %v5304 = vadd.f32 0.0, %v5303
    %v5305 = vpop.f32.mrf.mxu0
    %v5306 = vadd.f32 0.0, %v5305
    %v5307 = vpop.f32.mrf.mxu0
    %v5308 = vadd.f32 0.0, %v5307
    %v5309 = vpop.f32.mrf.mxu0
    %v5310 = vadd.f32 0.0, %v5309
    %5311 = vmatprep.mubr.bf16.mxu0 %v4940
    %5312 = vmatmul.mubr.bf16.gmra.mxu0 %v4774
    %v5313 = vpop.f32.mrf.mxu0
    %v5314 = vadd.f32 0.0, %v5313
    %v5315 = vpop.f32.mrf.mxu0
    %v5316 = vadd.f32 0.0, %v5315
    %v5317 = vpop.f32.mrf.mxu0
    %v5318 = vadd.f32 0.0, %v5317
    %v5319 = vpop.f32.mrf.mxu0
    %v5320 = vadd.f32 0.0, %v5319
    %5321 = vmatprep.mubr.bf16.mxu0 %v4943
    %5322 = vmatmul.mubr.bf16.gmra.mxu0 %v4776
    %v5323 = vpop.f32.mrf.mxu0
    %v5324 = vadd.f32 0.0, %v5323
    %v5325 = vpop.f32.mrf.mxu0
    %v5326 = vadd.f32 0.0, %v5325
    %v5327 = vpop.f32.mrf.mxu0
    %v5328 = vadd.f32 0.0, %v5327
    %v5329 = vpop.f32.mrf.mxu0
    %v5330 = vadd.f32 0.0, %v5329
    %5331 = vmatprep.mubr.bf16.mxu0 %v4946
    %5332 = vmatmul.mubr.bf16.gmra.mxu0 %v4778
    %v5333 = vpop.f32.mrf.mxu0
    %v5334 = vadd.f32 0.0, %v5333
    %v5335 = vpop.f32.mrf.mxu0
    %v5336 = vadd.f32 0.0, %v5335
    %v5337 = vpop.f32.mrf.mxu0
    %v5338 = vadd.f32 0.0, %v5337
    %v5339 = vpop.f32.mrf.mxu0
    %v5340 = vadd.f32 0.0, %v5339
    %5341 = vdwg.mxu0
    %v5342 = vrot.slane %v4983, 7
    %v5343 = vrot.slane %v4985, 7
    %v5344 = vrot.slane %v4987, 7
    %v5345 = vrot.slane %v4989, 7
    %v5346 = vrot.slane %v4993, 7
    %v5347 = vrot.slane %v4995, 7
    %v5348 = vrot.slane %v4997, 7
    %v5349 = vrot.slane %v4999, 7
    %v5350 = vrot.slane %v5003, 7
    %v5351 = vrot.slane %v5005, 7
    %v5352 = vrot.slane %v5007, 7
    %v5353 = vrot.slane %v5009, 7
    %v5354 = vrot.slane %v5013, 7
    %v5355 = vrot.slane %v5015, 7
    %v5356 = vrot.slane %v5017, 7
    %v5357 = vrot.slane %v5019, 7
    %v5358 = vrot.slane %v5023, 7
    %v5359 = vrot.slane %v5025, 7
    %v5360 = vrot.slane %v5027, 7
    %v5361 = vrot.slane %v5029, 7
    %v5362 = vrot.slane %v5033, 7
    %v5363 = vrot.slane %v5035, 7
    %v5364 = vrot.slane %v5037, 7
    %v5365 = vrot.slane %v5039, 7
    %v5366 = vrot.slane %v5043, 7
    %v5367 = vrot.slane %v5045, 7
    %v5368 = vrot.slane %v5047, 7
    %v5369 = vrot.slane %v5049, 7
    %v5370 = vrot.slane %v5053, 7
    %v5371 = vrot.slane %v5055, 7
    %v5372 = vrot.slane %v5057, 7
    %v5373 = vrot.slane %v5059, 7
    %v5374 = vsel %vm2084, %v5370, %v5372
    %v5375 = vsel %vm2084, %v5371, %v5373
    %v5376 = vsel %vm2084, %v5368, %v5370
    %v5377 = vsel %vm2084, %v5369, %v5371
    %v5378 = vsel %vm2084, %v5366, %v5368
    %v5379 = vsel %vm2084, %v5367, %v5369
    %v5380 = vsel %vm2084, %v5364, %v5366
    %v5381 = vsel %vm2084, %v5365, %v5367
    %v5382 = vsel %vm2084, %v5362, %v5364
    %v5383 = vsel %vm2084, %v5363, %v5365
    %v5384 = vsel %vm2084, %v5360, %v5362
    %v5385 = vsel %vm2084, %v5361, %v5363
    %v5386 = vsel %vm2084, %v5358, %v5360
    %v5387 = vsel %vm2084, %v5359, %v5361
    %v5388 = vsel %vm2084, %v5356, %v5358
    %v5389 = vsel %vm2084, %v5357, %v5359
    %v5390 = vsel %vm2084, %v5354, %v5356
    %v5391 = vsel %vm2084, %v5355, %v5357
    %v5392 = vsel %vm2084, %v5352, %v5354
    %v5393 = vsel %vm2084, %v5353, %v5355
    %v5394 = vsel %vm2084, %v5350, %v5352
    %v5395 = vsel %vm2084, %v5351, %v5353
    %v5396 = vsel %vm2084, %v5348, %v5350
    %v5397 = vsel %vm2084, %v5349, %v5351
    %v5398 = vsel %vm2084, %v5346, %v5348
    %v5399 = vsel %vm2084, %v5347, %v5349
    %v5400 = vsel %vm2084, %v5344, %v5346
    %v5401 = vsel %vm2084, %v5345, %v5347
    %v5402 = vsel %vm2084, %v5342, %v5344
    %v5403 = vsel %vm2084, %v5343, %v5345
    %v5404 = vsel %vm2084, %v5372, %v5342
    %v5405 = vsel %vm2084, %v5373, %v5343
    %v5406 = vsel %vm2117, %v5404, 0.0
    %v5407 = vsel %vm2117, %v5405, 0.0
    %v5408 = vsel %vm2118, %v5402, 0.0
    %v5409 = vsel %vm2118, %v5403, 0.0
    %v5410 = vsel %vm2119, %v5400, 0.0
    %v5411 = vsel %vm2119, %v5401, 0.0
    %v5412 = vsel %vm2120, %v5398, 0.0
    %v5413 = vsel %vm2120, %v5399, 0.0
    %v5414 = vsel %vm2121, %v5396, 0.0
    %v5415 = vsel %vm2121, %v5397, 0.0
    %v5416 = vsel %vm2122, %v5394, 0.0
    %v5417 = vsel %vm2122, %v5395, 0.0
    %v5418 = vsel %vm2123, %v5392, 0.0
    %v5419 = vsel %vm2123, %v5393, 0.0
    %v5420 = vsel %vm2124, %v5390, 0.0
    %v5421 = vsel %vm2124, %v5391, 0.0
    %v5422 = vsel %vm2125, %v5388, 0.0
    %v5423 = vsel %vm2125, %v5389, 0.0
    %v5424 = vsel %vm2126, %v5386, 0.0
    %v5425 = vsel %vm2126, %v5387, 0.0
    %v5426 = vsel %vm2127, %v5384, 0.0
    %v5427 = vsel %vm2127, %v5385, 0.0
    %v5428 = vsel %vm2128, %v5382, 0.0
    %v5429 = vsel %vm2128, %v5383, 0.0
    %v5430 = vsel %vm2129, %v5380, 0.0
    %v5431 = vsel %vm2129, %v5381, 0.0
    %v5432 = vsel %vm2130, %v5378, 0.0
    %v5433 = vsel %vm2130, %v5379, 0.0
    %v5434 = vsel %vm2131, %v5376, 0.0
    %v5435 = vsel %vm2131, %v5377, 0.0
    %v5436 = vsel %vm2132, %v5374, 0.0
    %v5437 = vsel %vm2132, %v5375, 0.0
    %v5462 = vunpack.c.l.b16 %v5061
    %v5463 = vunpack.c.h.b16 %v5061
    %v5464 = vunpack.c.l.b16 %v5062
    %v5465 = vunpack.c.h.b16 %v5062
    %v5466 = vunpack.c.l.b16 %v5063
    %v5467 = vunpack.c.h.b16 %v5063
    %v5468 = vunpack.c.l.b16 %v5064
    %v5469 = vunpack.c.h.b16 %v5064
    %v5470 = vunpack.c.l.b16 %v5065
    %v5471 = vunpack.c.h.b16 %v5065
    %v5472 = vunpack.c.l.b16 %v5066
    %v5473 = vunpack.c.h.b16 %v5066
    %v5474 = vunpack.c.l.b16 %v5067
    %v5475 = vunpack.c.h.b16 %v5067
    %v5476 = vunpack.c.l.b16 %v5068
    %v5477 = vunpack.c.h.b16 %v5068
    %v5478 = vunpack.c.l.b16 %v5069
    %v5479 = vunpack.c.h.b16 %v5069
    %v5480 = vunpack.c.l.b16 %v5070
    %v5481 = vunpack.c.h.b16 %v5070
    %v5482 = vunpack.c.l.b16 %v5071
    %v5483 = vunpack.c.h.b16 %v5071
    %v5484 = vunpack.c.l.b16 %v5072
    %v5485 = vunpack.c.h.b16 %v5072
    %v5486 = vunpack.c.l.b16 %v5073
    %v5487 = vunpack.c.h.b16 %v5073
    %v5488 = vunpack.c.l.b16 %v5074
    %v5489 = vunpack.c.h.b16 %v5074
    %v5490 = vunpack.c.l.b16 %v5075
    %v5491 = vunpack.c.h.b16 %v5075
    %v5492 = vunpack.c.l.b16 %v5076
    %v5493 = vunpack.c.h.b16 %v5076
    %v5494 = vunpack.c.l.b16 %v5077
    %v5495 = vunpack.c.h.b16 %v5077
    %v5496 = vunpack.c.l.b16 %v5078
    %v5497 = vunpack.c.h.b16 %v5078
    %v5498 = vunpack.c.l.b16 %v5079
    %v5499 = vunpack.c.h.b16 %v5079
    %v5500 = vunpack.c.l.b16 %v5080
    %v5501 = vunpack.c.h.b16 %v5080
    %v5502 = vunpack.c.l.b16 %v5081
    %v5503 = vunpack.c.h.b16 %v5081
    %v5504 = vunpack.c.l.b16 %v5082
    %v5505 = vunpack.c.h.b16 %v5082
    %v5506 = vunpack.c.l.b16 %v5083
    %v5507 = vunpack.c.h.b16 %v5083
    %v5508 = vunpack.c.l.b16 %v5084
    %v5509 = vunpack.c.h.b16 %v5084
    %v5510 = vpack.c.b16 %v5464, %v5462
    %v5511 = vpack.c.b16 %v5465, %v5463
    %v5512 = vpack.c.b16 %v5468, %v5466
    %v5513 = vpack.c.b16 %v5469, %v5467
    %v5514 = vpack.c.b16 %v5472, %v5470
    %v5515 = vpack.c.b16 %v5473, %v5471
    %v5516 = vpack.c.b16 %v5476, %v5474
    %v5517 = vpack.c.b16 %v5477, %v5475
    %v5518 = vpack.c.b16 %v5480, %v5478
    %v5519 = vpack.c.b16 %v5481, %v5479
    %v5520 = vpack.c.b16 %v5484, %v5482
    %v5521 = vpack.c.b16 %v5485, %v5483
    %v5522 = vpack.c.b16 %v5488, %v5486
    %v5523 = vpack.c.b16 %v5489, %v5487
    %v5524 = vpack.c.b16 %v5492, %v5490
    %v5525 = vpack.c.b16 %v5493, %v5491
    %v5526 = vpack.c.b16 %v5496, %v5494
    %v5527 = vpack.c.b16 %v5497, %v5495
    %v5528 = vpack.c.b16 %v5500, %v5498
    %v5529 = vpack.c.b16 %v5501, %v5499
    %v5530 = vpack.c.b16 %v5504, %v5502
    %v5531 = vpack.c.b16 %v5505, %v5503
    %v5532 = vpack.c.b16 %v5508, %v5506
    %v5533 = vpack.c.b16 %v5509, %v5507
    %5558 = vmatprep.subr.bf16.mxu0 %v5525
    %5559 = vmatpush1.bf16.msra.mxu0 %v5524
    %5560 = vmatprep.subr.bf16.mxu0 %v5523
    %5561 = vmatpush1.bf16.msra.mxu0 %v5522
    %5562 = vmatprep.subr.bf16.mxu0 %v5521
    %5563 = vmatpush1.bf16.msra.mxu0 %v5520
    %5564 = vmatprep.subr.bf16.mxu0 %v5519
    %5565 = vmatpush1.bf16.msra.mxu0 %v5518
    %5566 = vmatprep.subr.bf16.mxu0 %v5517
    %5567 = vmatpush1.bf16.msra.mxu0 %v5516
    %5568 = vmatprep.subr.bf16.mxu0 %v5515
    %5569 = vmatpush1.bf16.msra.mxu0 %v5514
    %5570 = vmatprep.subr.bf16.mxu0 %v5513
    %5571 = vmatpush1.bf16.msra.mxu0 %v5512
    %5572 = vmatprep.subr.bf16.mxu0 %v5511
    %5573 = vmatpush1.bf16.msra.mxu0 %v5510
    %5574 = vmatprep.subr.bf16.mxu0 0
    %5575 = vmatpush2.bf16.msra.mxu0 0
    %5576 = vmatprep.subr.bf16.mxu0 0
    %5577 = vmatpush2.bf16.msra.mxu0 0
    %5578 = vmatprep.subr.bf16.mxu0 0
    %5579 = vmatpush2.bf16.msra.mxu0 0
    %5580 = vmatprep.subr.bf16.mxu0 0
    %5581 = vmatpush2.bf16.msra.mxu0 0
    %5582 = vmatprep.subr.bf16.mxu0 %v5533
    %5583 = vmatpush2.bf16.msra.mxu0 %v5532
    %5584 = vmatprep.subr.bf16.mxu0 %v5531
    %5585 = vmatpush2.bf16.msra.mxu0 %v5530
    %5586 = vmatprep.subr.bf16.mxu0 %v5529
    %5587 = vmatpush2.bf16.msra.mxu0 %v5528
    %5588 = vmatprep.subr.bf16.mxu0 %v5527
    %5589 = vmatpush2.bf16.msra.mxu0 %v5526
    %5590 = vmatprep.mubr.bf16.mxu0 %v4925
    %5591 = vmatmul.mubr.bf16.gmra.mxu0 %v4764
    %v5592 = vpop.f32.mrf.mxu0
    %v5593 = vadd.f32 %v5406, %v5592
    %v5594 = vpop.f32.mrf.mxu0
    %v5595 = vadd.f32 %v5407, %v5594
    %v5596 = vpop.f32.mrf.mxu0
    %v5597 = vadd.f32 %v5408, %v5596
    %v5598 = vpop.f32.mrf.mxu0
    %v5599 = vadd.f32 %v5409, %v5598
    %5600 = vmatprep.mubr.bf16.mxu0 %v4928
    %5601 = vmatmul.mubr.bf16.gmra.mxu0 %v4766
    %v5602 = vpop.f32.mrf.mxu0
    %v5603 = vadd.f32 %v5410, %v5602
    %v5604 = vpop.f32.mrf.mxu0
    %v5605 = vadd.f32 %v5411, %v5604
    %v5606 = vpop.f32.mrf.mxu0
    %v5607 = vadd.f32 %v5412, %v5606
    %v5608 = vpop.f32.mrf.mxu0
    %v5609 = vadd.f32 %v5413, %v5608
    %5610 = vmatprep.mubr.bf16.mxu0 %v4931
    %5611 = vmatmul.mubr.bf16.gmra.mxu0 %v4768
    %v5612 = vpop.f32.mrf.mxu0
    %v5613 = vadd.f32 %v5414, %v5612
    %v5614 = vpop.f32.mrf.mxu0
    %v5615 = vadd.f32 %v5415, %v5614
    %v5616 = vpop.f32.mrf.mxu0
    %v5617 = vadd.f32 %v5416, %v5616
    %v5618 = vpop.f32.mrf.mxu0
    %v5619 = vadd.f32 %v5417, %v5618
    %5620 = vmatprep.mubr.bf16.mxu0 %v4934
    %5621 = vmatmul.mubr.bf16.gmra.mxu0 %v4770
    %v5622 = vpop.f32.mrf.mxu0
    %v5623 = vadd.f32 %v5418, %v5622
    %v5624 = vpop.f32.mrf.mxu0
    %v5625 = vadd.f32 %v5419, %v5624
    %v5626 = vpop.f32.mrf.mxu0
    %v5627 = vadd.f32 %v5420, %v5626
    %v5628 = vpop.f32.mrf.mxu0
    %v5629 = vadd.f32 %v5421, %v5628
    %5630 = vmatprep.mubr.bf16.mxu0 %v4937
    %5631 = vmatmul.mubr.bf16.gmra.mxu0 %v4772
    %v5632 = vpop.f32.mrf.mxu0
    %v5633 = vadd.f32 %v5422, %v5632
    %v5634 = vpop.f32.mrf.mxu0
    %v5635 = vadd.f32 %v5423, %v5634
    %v5636 = vpop.f32.mrf.mxu0
    %v5637 = vadd.f32 %v5424, %v5636
    %v5638 = vpop.f32.mrf.mxu0
    %v5639 = vadd.f32 %v5425, %v5638
    %5640 = vmatprep.mubr.bf16.mxu0 %v4940
    %5641 = vmatmul.mubr.bf16.gmra.mxu0 %v4774
    %v5642 = vpop.f32.mrf.mxu0
    %v5643 = vadd.f32 %v5426, %v5642
    %v5644 = vpop.f32.mrf.mxu0
    %v5645 = vadd.f32 %v5427, %v5644
    %v5646 = vpop.f32.mrf.mxu0
    %v5647 = vadd.f32 %v5428, %v5646
    %v5648 = vpop.f32.mrf.mxu0
    %v5649 = vadd.f32 %v5429, %v5648
    %5650 = vmatprep.mubr.bf16.mxu0 %v4943
    %5651 = vmatmul.mubr.bf16.gmra.mxu0 %v4776
    %v5652 = vpop.f32.mrf.mxu0
    %v5653 = vadd.f32 %v5430, %v5652
    %v5654 = vpop.f32.mrf.mxu0
    %v5655 = vadd.f32 %v5431, %v5654
    %v5656 = vpop.f32.mrf.mxu0
    %v5657 = vadd.f32 %v5432, %v5656
    %v5658 = vpop.f32.mrf.mxu0
    %v5659 = vadd.f32 %v5433, %v5658
    %5660 = vmatprep.mubr.bf16.mxu0 %v4946
    %5661 = vmatmul.mubr.bf16.gmra.mxu0 %v4778
    %v5662 = vpop.f32.mrf.mxu0
    %v5663 = vadd.f32 %v5434, %v5662
    %v5664 = vpop.f32.mrf.mxu0
    %v5665 = vadd.f32 %v5435, %v5664
    %v5666 = vpop.f32.mrf.mxu0
    %v5667 = vadd.f32 %v5436, %v5666
    %v5668 = vpop.f32.mrf.mxu0
    %v5669 = vadd.f32 %v5437, %v5668
    %5670 = vdwg.mxu0
    %v5671 = vrot.slane %v5264, 1
    %v5672 = vrot.slane %v5266, 1
    %v5673 = vrot.slane %v5268, 1
    %v5674 = vrot.slane %v5270, 1
    %v5675 = vrot.slane %v5274, 1
    %v5676 = vrot.slane %v5276, 1
    %v5677 = vrot.slane %v5278, 1
    %v5678 = vrot.slane %v5280, 1
    %v5679 = vrot.slane %v5284, 1
    %v5680 = vrot.slane %v5286, 1
    %v5681 = vrot.slane %v5288, 1
    %v5682 = vrot.slane %v5290, 1
    %v5683 = vrot.slane %v5294, 1
    %v5684 = vrot.slane %v5296, 1
    %v5685 = vrot.slane %v5298, 1
    %v5686 = vrot.slane %v5300, 1
    %v5687 = vrot.slane %v5304, 1
    %v5688 = vrot.slane %v5306, 1
    %v5689 = vrot.slane %v5308, 1
    %v5690 = vrot.slane %v5310, 1
    %v5691 = vrot.slane %v5314, 1
    %v5692 = vrot.slane %v5316, 1
    %v5693 = vrot.slane %v5318, 1
    %v5694 = vrot.slane %v5320, 1
    %v5695 = vrot.slane %v5324, 1
    %v5696 = vrot.slane %v5326, 1
    %v5697 = vrot.slane %v5328, 1
    %v5698 = vrot.slane %v5330, 1
    %v5699 = vrot.slane %v5334, 1
    %v5700 = vrot.slane %v5336, 1
    %v5701 = vrot.slane %v5338, 1
    %v5702 = vrot.slane %v5340, 1
    %v5703 = vsel %vm2310, %v5699, %v5701
    %v5704 = vsel %vm2310, %v5700, %v5702
    %v5705 = vsel %vm2310, %v5697, %v5699
    %v5706 = vsel %vm2310, %v5698, %v5700
    %v5707 = vsel %vm2310, %v5695, %v5697
    %v5708 = vsel %vm2310, %v5696, %v5698
    %v5709 = vsel %vm2310, %v5693, %v5695
    %v5710 = vsel %vm2310, %v5694, %v5696
    %v5711 = vsel %vm2310, %v5691, %v5693
    %v5712 = vsel %vm2310, %v5692, %v5694
    %v5713 = vsel %vm2310, %v5689, %v5691
    %v5714 = vsel %vm2310, %v5690, %v5692
    %v5715 = vsel %vm2310, %v5687, %v5689
    %v5716 = vsel %vm2310, %v5688, %v5690
    %v5717 = vsel %vm2310, %v5685, %v5687
    %v5718 = vsel %vm2310, %v5686, %v5688
    %v5719 = vsel %vm2310, %v5683, %v5685
    %v5720 = vsel %vm2310, %v5684, %v5686
    %v5721 = vsel %vm2310, %v5681, %v5683
    %v5722 = vsel %vm2310, %v5682, %v5684
    %v5723 = vsel %vm2310, %v5679, %v5681
    %v5724 = vsel %vm2310, %v5680, %v5682
    %v5725 = vsel %vm2310, %v5677, %v5679
    %v5726 = vsel %vm2310, %v5678, %v5680
    %v5727 = vsel %vm2310, %v5675, %v5677
    %v5728 = vsel %vm2310, %v5676, %v5678
    %v5729 = vsel %vm2310, %v5673, %v5675
    %v5730 = vsel %vm2310, %v5674, %v5676
    %v5731 = vsel %vm2310, %v5671, %v5673
    %v5732 = vsel %vm2310, %v5672, %v5674
    %v5733 = vsel %vm2310, %v5701, %v5671
    %v5734 = vsel %vm2310, %v5702, %v5672
    %v5735 = vsel %vm2343, %v5731, 0.0
    %v5736 = vsel %vm2343, %v5732, 0.0
    %v5737 = vsel %vm2344, %v5729, 0.0
    %v5738 = vsel %vm2344, %v5730, 0.0
    %v5739 = vsel %vm2345, %v5727, 0.0
    %v5740 = vsel %vm2345, %v5728, 0.0
    %v5741 = vsel %vm2346, %v5725, 0.0
    %v5742 = vsel %vm2346, %v5726, 0.0
    %v5743 = vsel %vm2347, %v5723, 0.0
    %v5744 = vsel %vm2347, %v5724, 0.0
    %v5745 = vsel %vm2348, %v5721, 0.0
    %v5746 = vsel %vm2348, %v5722, 0.0
    %v5747 = vsel %vm2349, %v5719, 0.0
    %v5748 = vsel %vm2349, %v5720, 0.0
    %v5749 = vsel %vm2350, %v5717, 0.0
    %v5750 = vsel %vm2350, %v5718, 0.0
    %v5751 = vsel %vm2351, %v5715, 0.0
    %v5752 = vsel %vm2351, %v5716, 0.0
    %v5753 = vsel %vm2352, %v5713, 0.0
    %v5754 = vsel %vm2352, %v5714, 0.0
    %v5755 = vsel %vm2353, %v5711, 0.0
    %v5756 = vsel %vm2353, %v5712, 0.0
    %v5757 = vsel %vm2354, %v5709, 0.0
    %v5758 = vsel %vm2354, %v5710, 0.0
    %v5759 = vsel %vm2355, %v5707, 0.0
    %v5760 = vsel %vm2355, %v5708, 0.0
    %v5761 = vsel %vm2356, %v5705, 0.0
    %v5762 = vsel %vm2356, %v5706, 0.0
    %v5763 = vsel %vm2357, %v5703, 0.0
    %v5764 = vsel %vm2357, %v5704, 0.0
    %v5765 = vsel %vm2358, %v5733, 0.0
    %v5766 = vsel %vm2358, %v5734, 0.0
    %v5767 = vadd.f32 %v5593, %v5735
    %v5768 = vadd.f32 %v5595, %v5736
    %v5769 = vadd.f32 %v5597, %v5737
    %v5770 = vadd.f32 %v5599, %v5738
    %v5771 = vadd.f32 %v5603, %v5739
    %v5772 = vadd.f32 %v5605, %v5740
    %v5773 = vadd.f32 %v5607, %v5741
    %v5774 = vadd.f32 %v5609, %v5742
    %v5775 = vadd.f32 %v5613, %v5743
    %v5776 = vadd.f32 %v5615, %v5744
    %v5777 = vadd.f32 %v5617, %v5745
    %v5778 = vadd.f32 %v5619, %v5746
    %v5779 = vadd.f32 %v5623, %v5747
    %v5780 = vadd.f32 %v5625, %v5748
    %v5781 = vadd.f32 %v5627, %v5749
    %v5782 = vadd.f32 %v5629, %v5750
    %v5783 = vadd.f32 %v5633, %v5751
    %v5784 = vadd.f32 %v5635, %v5752
    %v5785 = vadd.f32 %v5637, %v5753
    %v5786 = vadd.f32 %v5639, %v5754
    %v5787 = vadd.f32 %v5643, %v5755
    %v5788 = vadd.f32 %v5645, %v5756
    %v5789 = vadd.f32 %v5647, %v5757
    %v5790 = vadd.f32 %v5649, %v5758
    %v5791 = vadd.f32 %v5653, %v5759
    %v5792 = vadd.f32 %v5655, %v5760
    %v5793 = vadd.f32 %v5657, %v5761
    %v5794 = vadd.f32 %v5659, %v5762
    %v5795 = vadd.f32 %v5663, %v5763
    %v5796 = vadd.f32 %v5665, %v5764
    %v5797 = vadd.f32 %v5667, %v5765
    %v5798 = vadd.f32 %v5669, %v5766
    %v5799 = vld [vmem:[%s18] ss:$4 sm:$0x3]
    %v5801 = vlaneseq
    %v5802 = vshrl.u32 %v5801, 7
    %v5803 = vsub.s32 0, %v5802
    %v5804 = vrot.slane %v5799, %v5803
    %v5805 = vlaneseq
    %v5806 = vshrl.u32 %v5805, 7
    %v5807 = vsub.s32 1, %v5806
    %v5808 = vrot.slane %v5799, %v5807
    %v5811 = vadd.f32 %v5767, %v5804
    %v5812 = vadd.f32 %v5768, %v5808
    %v5813 = vadd.f32 %v5769, %v5804
    %v5814 = vadd.f32 %v5770, %v5808
    %v5815 = vadd.f32 %v5771, %v5804
    %v5816 = vadd.f32 %v5772, %v5808
    %v5817 = vadd.f32 %v5773, %v5804
    %v5818 = vadd.f32 %v5774, %v5808
    %v5819 = vadd.f32 %v5775, %v5804
    %v5820 = vadd.f32 %v5776, %v5808
    %v5821 = vadd.f32 %v5777, %v5804
    %v5822 = vadd.f32 %v5778, %v5808
    %v5823 = vadd.f32 %v5779, %v5804
    %v5824 = vadd.f32 %v5780, %v5808
    %v5825 = vadd.f32 %v5781, %v5804
    %v5826 = vadd.f32 %v5782, %v5808
    %v5827 = vadd.f32 %v5783, %v5804
    %v5828 = vadd.f32 %v5784, %v5808
    %v5829 = vadd.f32 %v5785, %v5804
    %v5830 = vadd.f32 %v5786, %v5808
    %v5831 = vadd.f32 %v5787, %v5804
    %v5832 = vadd.f32 %v5788, %v5808
    %v5833 = vadd.f32 %v5789, %v5804
    %v5834 = vadd.f32 %v5790, %v5808
    %v5835 = vadd.f32 %v5791, %v5804
    %v5836 = vadd.f32 %v5792, %v5808
    %v5837 = vadd.f32 %v5793, %v5804
    %v5838 = vadd.f32 %v5794, %v5808
    %v5839 = vadd.f32 %v5795, %v5804
    %v5840 = vadd.f32 %v5796, %v5808
    %v5841 = vadd.f32 %v5797, %v5804
    %v5842 = vadd.f32 %v5798, %v5808
    %v5843 = vmax.f32 %v5811, 0.0
    %v5844 = vmax.f32 %v5812, 0.0
    %v5845 = vmax.f32 %v5813, 0.0
    %v5846 = vmax.f32 %v5814, 0.0
    %v5847 = vmax.f32 %v5815, 0.0
    %v5848 = vmax.f32 %v5816, 0.0
    %v5849 = vmax.f32 %v5817, 0.0
    %v5850 = vmax.f32 %v5818, 0.0
    %v5851 = vmax.f32 %v5819, 0.0
    %v5852 = vmax.f32 %v5820, 0.0
    %v5853 = vmax.f32 %v5821, 0.0
    %v5854 = vmax.f32 %v5822, 0.0
    %v5855 = vmax.f32 %v5823, 0.0
    %v5856 = vmax.f32 %v5824, 0.0
    %v5857 = vmax.f32 %v5825, 0.0
    %v5858 = vmax.f32 %v5826, 0.0
    %v5859 = vmax.f32 %v5827, 0.0
    %v5860 = vmax.f32 %v5828, 0.0
    %v5861 = vmax.f32 %v5829, 0.0
    %v5862 = vmax.f32 %v5830, 0.0
    %v5863 = vmax.f32 %v5831, 0.0
    %v5864 = vmax.f32 %v5832, 0.0
    %v5865 = vmax.f32 %v5833, 0.0
    %v5866 = vmax.f32 %v5834, 0.0
    %v5867 = vmax.f32 %v5835, 0.0
    %v5868 = vmax.f32 %v5836, 0.0
    %v5869 = vmax.f32 %v5837, 0.0
    %v5870 = vmax.f32 %v5838, 0.0
    %v5871 = vmax.f32 %v5839, 0.0
    %v5872 = vmax.f32 %v5840, 0.0
    %v5873 = vmax.f32 %v5841, 0.0
    %v5874 = vmax.f32 %v5842, 0.0
    %s5875 = scalar_lea.vmem %s18, 1
    %v5876 = vld [vmem:[%s5875] ss:$4 sm:$0x3]
    %v5878 = vlaneseq
    %v5879 = vshrl.u32 %v5878, 7
    %v5880 = vsub.s32 0, %v5879
    %v5881 = vrot.slane %v5876, %v5880
    %v5882 = vlaneseq
    %v5883 = vshrl.u32 %v5882, 7
    %v5884 = vsub.s32 1, %v5883
    %v5885 = vrot.slane %v5876, %v5884
    %v5888 = vmul.f32 %v5843, %v5881
    %v5889 = vmul.f32 %v5844, %v5885
    %v5890 = vmul.f32 %v5845, %v5881
    %v5891 = vmul.f32 %v5846, %v5885
    %v5892 = vmul.f32 %v5847, %v5881
    %v5893 = vmul.f32 %v5848, %v5885
    %v5894 = vmul.f32 %v5849, %v5881
    %v5895 = vmul.f32 %v5850, %v5885
    %v5896 = vmul.f32 %v5851, %v5881
    %v5897 = vmul.f32 %v5852, %v5885
    %v5898 = vmul.f32 %v5853, %v5881
    %v5899 = vmul.f32 %v5854, %v5885
    %v5900 = vmul.f32 %v5855, %v5881
    %v5901 = vmul.f32 %v5856, %v5885
    %v5902 = vmul.f32 %v5857, %v5881
    %v5903 = vmul.f32 %v5858, %v5885
    %v5904 = vmul.f32 %v5859, %v5881
    %v5905 = vmul.f32 %v5860, %v5885
    %v5906 = vmul.f32 %v5861, %v5881
    %v5907 = vmul.f32 %v5862, %v5885
    %v5908 = vmul.f32 %v5863, %v5881
    %v5909 = vmul.f32 %v5864, %v5885
    %v5910 = vmul.f32 %v5865, %v5881
    %v5911 = vmul.f32 %v5866, %v5885
    %v5912 = vmul.f32 %v5867, %v5881
    %v5913 = vmul.f32 %v5868, %v5885
    %v5914 = vmul.f32 %v5869, %v5881
    %v5915 = vmul.f32 %v5870, %v5885
    %v5916 = vmul.f32 %v5871, %v5881
    %v5917 = vmul.f32 %v5872, %v5885
    %v5918 = vmul.f32 %v5873, %v5881
    %v5919 = vmul.f32 %v5874, %v5885
    %s5920 = scalar_lea.vmem %s18, 2
    %v5921 = vld [vmem:[%s5920] ss:$4 sm:$0x3]
    %v5923 = vlaneseq
    %v5924 = vshrl.u32 %v5923, 7
    %v5925 = vsub.s32 0, %v5924
    %v5926 = vrot.slane %v5921, %v5925
    %v5927 = vlaneseq
    %v5928 = vshrl.u32 %v5927, 7
    %v5929 = vsub.s32 1, %v5928
    %v5930 = vrot.slane %v5921, %v5929
    %v5933 = vadd.f32 %v5888, %v5926
    %v5934 = vadd.f32 %v5889, %v5930
    %v5935 = vadd.f32 %v5890, %v5926
    %v5936 = vadd.f32 %v5891, %v5930
    %v5937 = vadd.f32 %v5892, %v5926
    %v5938 = vadd.f32 %v5893, %v5930
    %v5939 = vadd.f32 %v5894, %v5926
    %v5940 = vadd.f32 %v5895, %v5930
    %v5941 = vadd.f32 %v5896, %v5926
    %v5942 = vadd.f32 %v5897, %v5930
    %v5943 = vadd.f32 %v5898, %v5926
    %v5944 = vadd.f32 %v5899, %v5930
    %v5945 = vadd.f32 %v5900, %v5926
    %v5946 = vadd.f32 %v5901, %v5930
    %v5947 = vadd.f32 %v5902, %v5926
    %v5948 = vadd.f32 %v5903, %v5930
    %v5949 = vadd.f32 %v5904, %v5926
    %v5950 = vadd.f32 %v5905, %v5930
    %v5951 = vadd.f32 %v5906, %v5926
    %v5952 = vadd.f32 %v5907, %v5930
    %v5953 = vadd.f32 %v5908, %v5926
    %v5954 = vadd.f32 %v5909, %v5930
    %v5955 = vadd.f32 %v5910, %v5926
    %v5956 = vadd.f32 %v5911, %v5930
    %v5957 = vadd.f32 %v5912, %v5926
    %v5958 = vadd.f32 %v5913, %v5930
    %v5959 = vadd.f32 %v5914, %v5926
    %v5960 = vadd.f32 %v5915, %v5930
    %v5961 = vadd.f32 %v5916, %v5926
    %v5962 = vadd.f32 %v5917, %v5930
    %v5963 = vadd.f32 %v5918, %v5926
    %v5964 = vadd.f32 %v5919, %v5930
    %5965 = vst [vmem:[#allocation2 + $0x10] sm:$0xff] %v5933
    %5966 = vst.msk [vmem:[#allocation2 + $0x18] sm:$0xff] %vm2750, %v5934
    %5967 = vst [vmem:[#allocation2 + $0x30] sm:$0xff] %v5935
    %5968 = vst.msk [vmem:[#allocation2 + $0x38] sm:$0xff] %vm2750, %v5936
    %5969 = vst [vmem:[#allocation2 + $0x50] sm:$0xff] %v5937
    %5970 = vst.msk [vmem:[#allocation2 + $0x58] sm:$0xff] %vm2750, %v5938
    %5971 = vst [vmem:[#allocation2 + $0x70] sm:$0xff] %v5939
    %5972 = vst.msk [vmem:[#allocation2 + $0x78] sm:$0xff] %vm2750, %v5940
    %5973 = vst [vmem:[#allocation2 + $0x90] sm:$0xff] %v5941
    %5974 = vst.msk [vmem:[#allocation2 + $0x98] sm:$0xff] %vm2750, %v5942
    %5975 = vst [vmem:[#allocation2 + $0xb0] sm:$0xff] %v5943
    %5976 = vst.msk [vmem:[#allocation2 + $0xb8] sm:$0xff] %vm2750, %v5944
    %5977 = vst [vmem:[#allocation2 + $0xd0] sm:$0xff] %v5945
    %5978 = vst.msk [vmem:[#allocation2 + $0xd8] sm:$0xff] %vm2750, %v5946
    %5979 = vst [vmem:[#allocation2 + $0xf0] sm:$0xff] %v5947
    %5980 = vst.msk [vmem:[#allocation2 + $0xf8] sm:$0xff] %vm2750, %v5948
    %5981 = vst [vmem:[#allocation2 + $0x110] sm:$0xff] %v5949
    %5982 = vst.msk [vmem:[#allocation2 + $0x118] sm:$0xff] %vm2750, %v5950
    %5983 = vst [vmem:[#allocation2 + $0x130] sm:$0xff] %v5951
    %5984 = vst.msk [vmem:[#allocation2 + $0x138] sm:$0xff] %vm2750, %v5952
    %5985 = vst [vmem:[#allocation2 + $0x150] sm:$0xff] %v5953
    %5986 = vst.msk [vmem:[#allocation2 + $0x158] sm:$0xff] %vm2750, %v5954
    %5987 = vst [vmem:[#allocation2 + $0x170] sm:$0xff] %v5955
    %5988 = vst.msk [vmem:[#allocation2 + $0x178] sm:$0xff] %vm2750, %v5956
    %5989 = vst [vmem:[#allocation2 + $0x190] sm:$0xff] %v5957
    %5990 = vst.msk [vmem:[#allocation2 + $0x198] sm:$0xff] %vm2750, %v5958
    %5991 = vst [vmem:[#allocation2 + $0x1b0] sm:$0xff] %v5959
    %5992 = vst.msk [vmem:[#allocation2 + $0x1b8] sm:$0xff] %vm2750, %v5960
    %5993 = vst [vmem:[#allocation2 + $0x1d0] sm:$0xff] %v5961
    %5994 = vst.msk [vmem:[#allocation2 + $0x1d8] sm:$0xff] %vm2750, %v5962
    %5995 = vst [vmem:[#allocation2 + $0x1f0] sm:$0xff] %v5963
    %5996 = vst.msk [vmem:[#allocation2 + $0x1f8] sm:$0xff] %vm2750, %v5964
    %v5997 = vunpack.c.l.bf16 %v535
    %v5998 = vunpack.c.l.bf16 %v536
    %v5999 = vunpack.c.l.bf16 %v537
    %v6000 = vunpack.c.l.bf16 %v538
    %v6001 = vunpack.c.l.bf16 %v539
    %v6002 = vunpack.c.l.bf16 %v540
    %v6003 = vunpack.c.l.bf16 %v541
    %v6004 = vunpack.c.l.bf16 %v542
    %v6005 = vunpack.c.l.bf16 %v543
    %v6006 = vunpack.c.l.bf16 %v544
    %v6007 = vunpack.c.l.bf16 %v545
    %v6008 = vunpack.c.l.bf16 %v546
    %v6009 = vunpack.c.l.bf16 %v547
    %v6010 = vunpack.c.l.bf16 %v548
    %v6011 = vunpack.c.l.bf16 %v549
    %v6012 = vunpack.c.l.bf16 %v550
    %v6013 = vrot.slane %v5997, 7
    %v6014 = vrot.slane %v5998, 7
    %v6015 = vrot.slane %v5999, 7
    %v6016 = vrot.slane %v6000, 7
    %v6017 = vrot.slane %v6001, 7
    %v6018 = vrot.slane %v6002, 7
    %v6019 = vrot.slane %v6003, 7
    %v6020 = vrot.slane %v6004, 7
    %v6021 = vrot.slane %v6005, 7
    %v6022 = vrot.slane %v6006, 7
    %v6023 = vrot.slane %v6007, 7
    %v6024 = vrot.slane %v6008, 7
    %v6025 = vrot.slane %v6009, 7
    %v6026 = vrot.slane %v6010, 7
    %v6027 = vrot.slane %v6011, 7
    %v6028 = vrot.slane %v6012, 7
    %v6029 = vsel %vm2084, %v6027, %v6028
    %v6030 = vsel %vm2084, %v6026, %v6027
    %v6031 = vsel %vm2084, %v6025, %v6026
    %v6032 = vsel %vm2084, %v6024, %v6025
    %v6033 = vsel %vm2084, %v6023, %v6024
    %v6034 = vsel %vm2084, %v6022, %v6023
    %v6035 = vsel %vm2084, %v6021, %v6022
    %v6036 = vsel %vm2084, %v6020, %v6021
    %v6037 = vsel %vm2084, %v6019, %v6020
    %v6038 = vsel %vm2084, %v6018, %v6019
    %v6039 = vsel %vm2084, %v6017, %v6018
    %v6040 = vsel %vm2084, %v6016, %v6017
    %v6041 = vsel %vm2084, %v6015, %v6016
    %v6042 = vsel %vm2084, %v6014, %v6015
    %v6043 = vsel %vm2084, %v6013, %v6014
    %v6044 = vsel %vm2084, %v6028, %v6013
    %v6045 = vsel %vm2117, %v6044, -inf
    %v6046 = vsel %vm2118, %v6043, -inf
    %v6047 = vsel %vm2119, %v6042, -inf
    %v6048 = vsel %vm2120, %v6041, -inf
    %v6049 = vsel %vm2121, %v6040, -inf
    %v6050 = vsel %vm2122, %v6039, -inf
    %v6051 = vsel %vm2123, %v6038, -inf
    %v6052 = vsel %vm2124, %v6037, -inf
    %v6053 = vsel %vm2125, %v6036, -inf
    %v6054 = vsel %vm2126, %v6035, -inf
    %v6055 = vsel %vm2127, %v6034, -inf
    %v6056 = vsel %vm2128, %v6033, -inf
    %v6057 = vsel %vm2129, %v6032, -inf
    %v6058 = vsel %vm2130, %v6031, -inf
    %v6059 = vsel %vm2131, %v6030, -inf
    %v6060 = vsel %vm2132, %v6029, -inf
    %v6061 = vrot.slane %v5997, 1
    %v6062 = vrot.slane %v5998, 1
    %v6063 = vrot.slane %v5999, 1
    %v6064 = vrot.slane %v6000, 1
    %v6065 = vrot.slane %v6001, 1
    %v6066 = vrot.slane %v6002, 1
    %v6067 = vrot.slane %v6003, 1
    %v6068 = vrot.slane %v6004, 1
    %v6069 = vrot.slane %v6005, 1
    %v6070 = vrot.slane %v6006, 1
    %v6071 = vrot.slane %v6007, 1
    %v6072 = vrot.slane %v6008, 1
    %v6073 = vrot.slane %v6009, 1
    %v6074 = vrot.slane %v6010, 1
    %v6075 = vrot.slane %v6011, 1
    %v6076 = vrot.slane %v6012, 1
    %v6077 = vsel %vm2310, %v6075, %v6076
    %v6078 = vsel %vm2310, %v6074, %v6075
    %v6079 = vsel %vm2310, %v6073, %v6074
    %v6080 = vsel %vm2310, %v6072, %v6073
    %v6081 = vsel %vm2310, %v6071, %v6072
    %v6082 = vsel %vm2310, %v6070, %v6071
    %v6083 = vsel %vm2310, %v6069, %v6070
    %v6084 = vsel %vm2310, %v6068, %v6069
    %v6085 = vsel %vm2310, %v6067, %v6068
    %v6086 = vsel %vm2310, %v6066, %v6067
    %v6087 = vsel %vm2310, %v6065, %v6066
    %v6088 = vsel %vm2310, %v6064, %v6065
    %v6089 = vsel %vm2310, %v6063, %v6064
    %v6090 = vsel %vm2310, %v6062, %v6063
    %v6091 = vsel %vm2310, %v6061, %v6062
    %v6092 = vsel %vm2310, %v6076, %v6061
    %v6093 = vsel %vm2343, %v6091, -inf
    %v6094 = vsel %vm2344, %v6090, -inf
    %v6095 = vsel %vm2345, %v6089, -inf
    %v6096 = vsel %vm2346, %v6088, -inf
    %v6097 = vsel %vm2347, %v6087, -inf
    %v6098 = vsel %vm2348, %v6086, -inf
    %v6099 = vsel %vm2349, %v6085, -inf
    %v6100 = vsel %vm2350, %v6084, -inf
    %v6101 = vsel %vm2351, %v6083, -inf
    %v6102 = vsel %vm2352, %v6082, -inf
    %v6103 = vsel %vm2353, %v6081, -inf
    %v6104 = vsel %vm2354, %v6080, -inf
    %v6105 = vsel %vm2355, %v6079, -inf
    %v6106 = vsel %vm2356, %v6078, -inf
    %v6107 = vsel %vm2357, %v6077, -inf
    %v6108 = vsel %vm2358, %v6092, -inf
    %v6109 = vmax.f32 %v6045, %v6093
    %v6110 = vmax.f32 %v6046, %v6094
    %v6111 = vmax.f32 %v6047, %v6095
    %v6112 = vmax.f32 %v6048, %v6096
    %v6113 = vmax.f32 %v6049, %v6097
    %v6114 = vmax.f32 %v6050, %v6098
    %v6115 = vmax.f32 %v6051, %v6099
    %v6116 = vmax.f32 %v6052, %v6100
    %v6117 = vmax.f32 %v6053, %v6101
    %v6118 = vmax.f32 %v6054, %v6102
    %v6119 = vmax.f32 %v6055, %v6103
    %v6120 = vmax.f32 %v6056, %v6104
    %v6121 = vmax.f32 %v6057, %v6105
    %v6122 = vmax.f32 %v6058, %v6106
    %v6123 = vmax.f32 %v6059, %v6107
    %v6124 = vmax.f32 %v6060, %v6108
    %v6125 = vmax.f32 %v5997, %v6109
    %v6126 = vmax.f32 %v5998, %v6110
    %v6127 = vmax.f32 %v5999, %v6111
    %v6128 = vmax.f32 %v6000, %v6112
    %v6129 = vmax.f32 %v6001, %v6113
    %v6130 = vmax.f32 %v6002, %v6114
    %v6131 = vmax.f32 %v6003, %v6115
    %v6132 = vmax.f32 %v6004, %v6116
    %v6133 = vmax.f32 %v6005, %v6117
    %v6134 = vmax.f32 %v6006, %v6118
    %v6135 = vmax.f32 %v6007, %v6119
    %v6136 = vmax.f32 %v6008, %v6120
    %v6137 = vmax.f32 %v6009, %v6121
    %v6138 = vmax.f32 %v6010, %v6122
    %v6139 = vmax.f32 %v6011, %v6123
    %v6140 = vmax.f32 %v6012, %v6124
    %v6141 = vsel %vm1414, %v6140, -inf
    %v6142 = vsel %vm1415, %v6125, -inf
    %v6143 = vsel %vm1416, %v6126, -inf
    %v6144 = vsel %vm1417, %v6127, -inf
    %v6145 = vsel %vm1418, %v6128, -inf
    %v6146 = vsel %vm1419, %v6129, -inf
    %v6147 = vsel %vm1420, %v6130, -inf
    %v6148 = vsel %vm1421, %v6131, -inf
    %v6149 = vsel %vm1422, %v6132, -inf
    %v6150 = vsel %vm1423, %v6133, -inf
    %v6151 = vsel %vm1424, %v6134, -inf
    %v6152 = vsel %vm1425, %v6135, -inf
    %v6153 = vsel %vm1426, %v6136, -inf
    %v6154 = vsel %vm1427, %v6137, -inf
    %v6155 = vsel %vm1428, %v6138, -inf
    %v6156 = vsel %vm1429, %v6139, -inf
    %v6157 = vsel %vm1595, %v6126, -inf
    %v6158 = vsel %vm1596, %v6127, -inf
    %v6159 = vsel %vm1597, %v6128, -inf
    %v6160 = vsel %vm1598, %v6129, -inf
    %v6161 = vsel %vm1599, %v6130, -inf
    %v6162 = vsel %vm1600, %v6131, -inf
    %v6163 = vsel %vm1601, %v6132, -inf
    %v6164 = vsel %vm1602, %v6133, -inf
    %v6165 = vsel %vm1603, %v6134, -inf
    %v6166 = vsel %vm1604, %v6135, -inf
    %v6167 = vsel %vm1605, %v6136, -inf
    %v6168 = vsel %vm1606, %v6137, -inf
    %v6169 = vsel %vm1607, %v6138, -inf
    %v6170 = vsel %vm1608, %v6139, -inf
    %v6171 = vsel %vm1609, %v6140, -inf
    %v6172 = vsel %vm1610, %v6125, -inf
    %v6173 = vmax.f32 %v6141, %v6157
    %v6174 = vmax.f32 %v6142, %v6158
    %v6175 = vmax.f32 %v6143, %v6159
    %v6176 = vmax.f32 %v6144, %v6160
    %v6177 = vmax.f32 %v6145, %v6161
    %v6178 = vmax.f32 %v6146, %v6162
    %v6179 = vmax.f32 %v6147, %v6163
    %v6180 = vmax.f32 %v6148, %v6164
    %v6181 = vmax.f32 %v6149, %v6165
    %v6182 = vmax.f32 %v6150, %v6166
    %v6183 = vmax.f32 %v6151, %v6167
    %v6184 = vmax.f32 %v6152, %v6168
    %v6185 = vmax.f32 %v6153, %v6169
    %v6186 = vmax.f32 %v6154, %v6170
    %v6187 = vmax.f32 %v6155, %v6171
    %v6188 = vmax.f32 %v6156, %v6172
    %v6189 = vmax.f32 %v6125, %v6173
    %v6190 = vmax.f32 %v6126, %v6174
    %v6191 = vmax.f32 %v6127, %v6175
    %v6192 = vmax.f32 %v6128, %v6176
    %v6193 = vmax.f32 %v6129, %v6177
    %v6194 = vmax.f32 %v6130, %v6178
    %v6195 = vmax.f32 %v6131, %v6179
    %v6196 = vmax.f32 %v6132, %v6180
    %v6197 = vmax.f32 %v6133, %v6181
    %v6198 = vmax.f32 %v6134, %v6182
    %v6199 = vmax.f32 %v6135, %v6183
    %v6200 = vmax.f32 %v6136, %v6184
    %v6201 = vmax.f32 %v6137, %v6185
    %v6202 = vmax.f32 %v6138, %v6186
    %v6203 = vmax.f32 %v6139, %v6187
    %v6204 = vmax.f32 %v6140, %v6188
    %v6205 = vpack.c.bf16 %v6190, %v6189
    %v6206 = vpack.c.bf16 %v6192, %v6191
    %v6207 = vpack.c.bf16 %v6194, %v6193
    %v6208 = vpack.c.bf16 %v6196, %v6195
    %v6209 = vpack.c.bf16 %v6198, %v6197
    %v6210 = vpack.c.bf16 %v6200, %v6199
    %v6211 = vpack.c.bf16 %v6202, %v6201
    %v6212 = vpack.c.bf16 %v6204, %v6203
    %v6213 = vld [vmem:[%s19] sm:$0xf]
    %v6214 = vld [vmem:[%s19 + $0x4] sm:$0xf]
    %v6215 = vld [vmem:[%s19 + $0x8] sm:$0xf]
    %v6216 = vld [vmem:[%s19 + $0xc] sm:$0xf]
    %v6217 = vld [vmem:[%s19 + $0x10] sm:$0xf]
    %v6218 = vld [vmem:[%s19 + $0x14] sm:$0xf]
    %v6219 = vld [vmem:[%s19 + $0x18] sm:$0xf]
    %v6220 = vld [vmem:[%s19 + $0x1c] sm:$0xf]
    %v6221 = vld [vmem:[%s19 + $0x20] sm:$0xf]
    %v6222 = vld [vmem:[%s19 + $0x24] sm:$0xf]
    %v6223 = vld [vmem:[%s19 + $0x28] sm:$0xf]
    %v6224 = vld [vmem:[%s19 + $0x2c] sm:$0xf]
    %v6225 = vld [vmem:[%s19 + $0x30] sm:$0xf]
    %v6226 = vld [vmem:[%s19 + $0x34] sm:$0xf]
    %v6227 = vld [vmem:[%s19 + $0x38] sm:$0xf]
    %v6228 = vld [vmem:[%s19 + $0x3c] sm:$0xf]
    %v6229 = vld [vmem:[%s20] sm:$0x1]
    %v6230 = vlaneseq
    %v6231 = vshrl.u32 %v6230, 7
    %v6232 = vsub.s32 0, %v6231
    %v6233 = vrot.slane %v6229, %v6232
    %v6250 = vunpack.c.l.b16 %v6213
    %v6251 = vunpack.c.l.b16 %v6214
    %v6252 = vunpack.c.l.b16 %v6215
    %v6253 = vunpack.c.l.b16 %v6216
    %v6254 = vunpack.c.l.b16 %v6217
    %v6255 = vunpack.c.l.b16 %v6218
    %v6256 = vunpack.c.l.b16 %v6219
    %v6257 = vunpack.c.l.b16 %v6220
    %v6258 = vunpack.c.l.b16 %v6221
    %v6259 = vunpack.c.l.b16 %v6222
    %v6260 = vunpack.c.l.b16 %v6223
    %v6261 = vunpack.c.l.b16 %v6224
    %v6262 = vunpack.c.l.b16 %v6225
    %v6263 = vunpack.c.l.b16 %v6226
    %v6264 = vunpack.c.l.b16 %v6227
    %v6265 = vunpack.c.l.b16 %v6228
    %v6266 = vpack.c.b16 %v6251, %v6250
    %v6267 = vpack.c.b16 %v6253, %v6252
    %v6268 = vpack.c.b16 %v6255, %v6254
    %v6269 = vpack.c.b16 %v6257, %v6256
    %v6270 = vpack.c.b16 %v6259, %v6258
    %v6271 = vpack.c.b16 %v6261, %v6260
    %v6272 = vpack.c.b16 %v6263, %v6262
    %v6273 = vpack.c.b16 %v6265, %v6264
    %6282 = vmatprep.subr.bf16.mxu0 0
    %6283 = vmatpush1.bf16.msra.mxu0 %v6273
    %6284 = vmatprep.subr.bf16.mxu0 0
    %6285 = vmatpush1.bf16.msra.mxu0 %v6272
    %6286 = vmatprep.subr.bf16.mxu0 0
    %6287 = vmatpush1.bf16.msra.mxu0 %v6271
    %6288 = vmatprep.subr.bf16.mxu0 0
    %6289 = vmatpush1.bf16.msra.mxu0 %v6270
    %6290 = vmatprep.subr.bf16.mxu0 0
    %6291 = vmatpush1.bf16.msra.mxu0 %v6269
    %6292 = vmatprep.subr.bf16.mxu0 0
    %6293 = vmatpush1.bf16.msra.mxu0 %v6268
    %6294 = vmatprep.subr.bf16.mxu0 0
    %6295 = vmatpush1.bf16.msra.mxu0 %v6267
    %6296 = vmatprep.subr.bf16.mxu0 0
    %6297 = vmatpush1.bf16.msra.mxu0 %v6266
    %6298 = vmatprep.subr.bf16.mxu0 0
    %6299 = vmatpush2.bf16.msra.mxu0 0
    %6300 = vmatprep.subr.bf16.mxu0 0
    %6301 = vmatpush2.bf16.msra.mxu0 0
    %6302 = vmatprep.subr.bf16.mxu0 0
    %6303 = vmatpush2.bf16.msra.mxu0 0
    %6304 = vmatprep.subr.bf16.mxu0 0
    %6305 = vmatpush2.bf16.msra.mxu0 0
    %6306 = vmatprep.subr.bf16.mxu0 0
    %6307 = vmatpush2.bf16.msra.mxu0 0
    %6308 = vmatprep.subr.bf16.mxu0 0
    %6309 = vmatpush2.bf16.msra.mxu0 0
    %6310 = vmatprep.subr.bf16.mxu0 0
    %6311 = vmatpush2.bf16.msra.mxu0 0
    %6312 = vmatprep.subr.bf16.mxu0 0
    %6313 = vmatpush2.bf16.msra.mxu0 0
    %6314 = vmatprep.mubr.bf16.mxu0 0
    %6315 = vmatmul.mubr.bf16.gmra.mxu0 %v6205
    %v6316 = vpop.f32.mrf.mxu0
    %v6317 = vadd.f32 %v6233, %v6316
    %v6318 = vpop.f32.mrf.mxu0
    %v6319 = vpop.f32.mrf.mxu0
    %v6320 = vadd.f32 %v6233, %v6319
    %v6321 = vpop.f32.mrf.mxu0
    %6322 = vmatprep.mubr.bf16.mxu0 0
    %6323 = vmatmul.mubr.bf16.gmra.mxu0 %v6206
    %v6324 = vpop.f32.mrf.mxu0
    %v6325 = vadd.f32 %v6233, %v6324
    %v6326 = vpop.f32.mrf.mxu0
    %v6327 = vpop.f32.mrf.mxu0
    %v6328 = vadd.f32 %v6233, %v6327
    %v6329 = vpop.f32.mrf.mxu0
    %6330 = vmatprep.mubr.bf16.mxu0 0
    %6331 = vmatmul.mubr.bf16.gmra.mxu0 %v6207
    %v6332 = vpop.f32.mrf.mxu0
    %v6333 = vadd.f32 %v6233, %v6332
    %v6334 = vpop.f32.mrf.mxu0
    %v6335 = vpop.f32.mrf.mxu0
    %v6336 = vadd.f32 %v6233, %v6335
    %v6337 = vpop.f32.mrf.mxu0
    %6338 = vmatprep.mubr.bf16.mxu0 0
    %6339 = vmatmul.mubr.bf16.gmra.mxu0 %v6208
    %v6340 = vpop.f32.mrf.mxu0
    %v6341 = vadd.f32 %v6233, %v6340
    %v6342 = vpop.f32.mrf.mxu0
    %v6343 = vpop.f32.mrf.mxu0
    %v6344 = vadd.f32 %v6233, %v6343
    %v6345 = vpop.f32.mrf.mxu0
    %6346 = vmatprep.mubr.bf16.mxu0 0
    %6347 = vmatmul.mubr.bf16.gmra.mxu0 %v6209
    %v6348 = vpop.f32.mrf.mxu0
    %v6349 = vadd.f32 %v6233, %v6348
    %v6350 = vpop.f32.mrf.mxu0
    %v6351 = vpop.f32.mrf.mxu0
    %v6352 = vadd.f32 %v6233, %v6351
    %v6353 = vpop.f32.mrf.mxu0
    %6354 = vmatprep.mubr.bf16.mxu0 0
    %6355 = vmatmul.mubr.bf16.gmra.mxu0 %v6210
    %v6356 = vpop.f32.mrf.mxu0
    %v6357 = vadd.f32 %v6233, %v6356
    %v6358 = vpop.f32.mrf.mxu0
    %v6359 = vpop.f32.mrf.mxu0
    %v6360 = vadd.f32 %v6233, %v6359
    %v6361 = vpop.f32.mrf.mxu0
    %6362 = vmatprep.mubr.bf16.mxu0 0
    %6363 = vmatmul.mubr.bf16.gmra.mxu0 %v6211
    %v6364 = vpop.f32.mrf.mxu0
    %v6365 = vadd.f32 %v6233, %v6364
    %v6366 = vpop.f32.mrf.mxu0
    %v6367 = vpop.f32.mrf.mxu0
    %v6368 = vadd.f32 %v6233, %v6367
    %v6369 = vpop.f32.mrf.mxu0
    %6370 = vmatprep.mubr.bf16.mxu0 0
    %6371 = vmatmul.mubr.bf16.gmra.mxu0 %v6212
    %v6372 = vpop.f32.mrf.mxu0
    %v6373 = vadd.f32 %v6233, %v6372
    %v6374 = vpop.f32.mrf.mxu0
    %v6375 = vpop.f32.mrf.mxu0
    %v6376 = vadd.f32 %v6233, %v6375
    %v6377 = vpop.f32.mrf.mxu0
    %6378 = vdwg.mxu0
    %v6379 = vmax.f32 %v6317, 0.0
    %v6380 = vmax.f32 %v6320, 0.0
    %v6381 = vmax.f32 %v6325, 0.0
    %v6382 = vmax.f32 %v6328, 0.0
    %v6383 = vmax.f32 %v6333, 0.0
    %v6384 = vmax.f32 %v6336, 0.0
    %v6385 = vmax.f32 %v6341, 0.0
    %v6386 = vmax.f32 %v6344, 0.0
    %v6387 = vmax.f32 %v6349, 0.0
    %v6388 = vmax.f32 %v6352, 0.0
    %v6389 = vmax.f32 %v6357, 0.0
    %v6390 = vmax.f32 %v6360, 0.0
    %v6391 = vmax.f32 %v6365, 0.0
    %v6392 = vmax.f32 %v6368, 0.0
    %v6393 = vmax.f32 %v6373, 0.0
    %v6394 = vmax.f32 %v6376, 0.0
    %v6395 = vld [vmem:[%s20 + $0x1] sm:$0x1]
    %v6396 = vlaneseq
    %v6397 = vshrl.u32 %v6396, 7
    %v6398 = vsub.s32 0, %v6397
    %v6399 = vrot.slane %v6395, %v6398
    %v6400 = vmul.f32 %v6379, %v6399
    %v6401 = vmul.f32 %v6380, %v6399
    %v6402 = vmul.f32 %v6381, %v6399
    %v6403 = vmul.f32 %v6382, %v6399
    %v6404 = vmul.f32 %v6383, %v6399
    %v6405 = vmul.f32 %v6384, %v6399
    %v6406 = vmul.f32 %v6385, %v6399
    %v6407 = vmul.f32 %v6386, %v6399
    %v6408 = vmul.f32 %v6387, %v6399
    %v6409 = vmul.f32 %v6388, %v6399
    %v6410 = vmul.f32 %v6389, %v6399
    %v6411 = vmul.f32 %v6390, %v6399
    %v6412 = vmul.f32 %v6391, %v6399
    %v6413 = vmul.f32 %v6392, %v6399
    %v6414 = vmul.f32 %v6393, %v6399
    %v6415 = vmul.f32 %v6394, %v6399
    %v6416 = vld [vmem:[%s20 + $0x2] sm:$0x1]
    %v6417 = vlaneseq
    %v6418 = vshrl.u32 %v6417, 7
    %v6419 = vsub.s32 0, %v6418
    %v6420 = vrot.slane %v6416, %v6419
    %v6421 = vadd.f32 %v6400, %v6420
    %v6422 = vadd.f32 %v6401, %v6420
    %v6423 = vadd.f32 %v6402, %v6420
    %v6424 = vadd.f32 %v6403, %v6420
    %v6425 = vadd.f32 %v6404, %v6420
    %v6426 = vadd.f32 %v6405, %v6420
    %v6427 = vadd.f32 %v6406, %v6420
    %v6428 = vadd.f32 %v6407, %v6420
    %v6429 = vadd.f32 %v6408, %v6420
    %v6430 = vadd.f32 %v6409, %v6420
    %v6431 = vadd.f32 %v6410, %v6420
    %v6432 = vadd.f32 %v6411, %v6420
    %v6433 = vadd.f32 %v6412, %v6420
    %v6434 = vadd.f32 %v6413, %v6420
    %v6435 = vadd.f32 %v6414, %v6420
    %v6436 = vadd.f32 %v6415, %v6420
    %6453 = vrot.lane.b32.xlu0 %v6421, 64
    %v6454 = vpop.permute.xlu0 %6453
    %6455 = vrot.lane.b32.xlu0 %v6422, 64
    %v6456 = vpop.permute.xlu0 %6455
    %6457 = vrot.lane.b32.xlu0 %v6423, 64
    %v6458 = vpop.permute.xlu0 %6457
    %6459 = vrot.lane.b32.xlu0 %v6424, 64
    %v6460 = vpop.permute.xlu0 %6459
    %6461 = vrot.lane.b32.xlu0 %v6425, 64
    %v6462 = vpop.permute.xlu0 %6461
    %6463 = vrot.lane.b32.xlu0 %v6426, 64
    %v6464 = vpop.permute.xlu0 %6463
    %6465 = vrot.lane.b32.xlu0 %v6427, 64
    %v6466 = vpop.permute.xlu0 %6465
    %6467 = vrot.lane.b32.xlu0 %v6428, 64
    %v6468 = vpop.permute.xlu0 %6467
    %6469 = vrot.lane.b32.xlu0 %v6429, 64
    %v6470 = vpop.permute.xlu0 %6469
    %6471 = vrot.lane.b32.xlu0 %v6430, 64
    %v6472 = vpop.permute.xlu0 %6471
    %6473 = vrot.lane.b32.xlu0 %v6431, 64
    %v6474 = vpop.permute.xlu0 %6473
    %6475 = vrot.lane.b32.xlu0 %v6432, 64
    %v6476 = vpop.permute.xlu0 %6475
    %6477 = vrot.lane.b32.xlu0 %v6433, 64
    %v6478 = vpop.permute.xlu0 %6477
    %6479 = vrot.lane.b32.xlu0 %v6434, 64
    %v6480 = vpop.permute.xlu0 %6479
    %6481 = vrot.lane.b32.xlu0 %v6435, 64
    %v6482 = vpop.permute.xlu0 %6481
    %6483 = vrot.lane.b32.xlu0 %v6436, 64
    %v6484 = vpop.permute.xlu0 %6483
    %vm6501 = vcmask 1048064
    %6502 = vst.msk [vmem:[#allocation2 + $0x18] sm:$0xff] %vm6501, %v6454
    %6503 = vst.msk [vmem:[#allocation2 + $0x38] sm:$0xff] %vm6501, %v6456
    %6504 = vst.msk [vmem:[#allocation2 + $0x58] sm:$0xff] %vm6501, %v6458
    %6505 = vst.msk [vmem:[#allocation2 + $0x78] sm:$0xff] %vm6501, %v6460
    %6506 = vst.msk [vmem:[#allocation2 + $0x98] sm:$0xff] %vm6501, %v6462
    %6507 = vst.msk [vmem:[#allocation2 + $0xb8] sm:$0xff] %vm6501, %v6464
    %6508 = vst.msk [vmem:[#allocation2 + $0xd8] sm:$0xff] %vm6501, %v6466
    %6509 = vst.msk [vmem:[#allocation2 + $0xf8] sm:$0xff] %vm6501, %v6468
    %6510 = vst.msk [vmem:[#allocation2 + $0x118] sm:$0xff] %vm6501, %v6470
    %6511 = vst.msk [vmem:[#allocation2 + $0x138] sm:$0xff] %vm6501, %v6472
    %6512 = vst.msk [vmem:[#allocation2 + $0x158] sm:$0xff] %vm6501, %v6474
    %6513 = vst.msk [vmem:[#allocation2 + $0x178] sm:$0xff] %vm6501, %v6476
    %6514 = vst.msk [vmem:[#allocation2 + $0x198] sm:$0xff] %vm6501, %v6478
    %6515 = vst.msk [vmem:[#allocation2 + $0x1b8] sm:$0xff] %vm6501, %v6480
    %6516 = vst.msk [vmem:[#allocation2 + $0x1d8] sm:$0xff] %vm6501, %v6482
    %6517 = vst.msk [vmem:[#allocation2 + $0x1f8] sm:$0xff] %vm6501, %v6484
    // Predicated region
    $region86: #{forward.1} parent=1 // pred_check
      _
    $region87: #{forward.1} parent=1 // pred_check_branch
      %6519 = sbr.rel (0) target = $region89
    $region88: #{forward.1} parent=1 // pred_region
      %s6521 = ssub.s32 8192, 8192
      %6522 = vsyncadd [#allocation3], %s6521
      %s6523 = sshll.u32 [#allocation2], 4
      %s6524 = int_to_ptr.vmem [resolvable:$true] %s6523
      %6529 = dma.vmem_to_hbm [thread:$0]  %s6524, 8192, %s21, [#allocation3], 512, 512, 32
    $region89: #{forward.1} parent=1 // pred_fallthru
      _
    // Predicated region
    $region90: #{forward.1} parent=1 // pred_check
      _
    $region91: #{forward.1} parent=1 // pred_check_branch
      %6531 = sbr.rel (0) target = $region93
    $region92: #{forward.1} parent=1 // pred_region
      %6532 = dma.done [#allocation3], 8192
    $region93: #{forward.1} parent=1 // pred_fallthru
      _
    %6533 = vsyncpa [#allocation3], 1

</llo_original>
